<compile_context>
chip_gen: v7x
topology: tpu7x:2x2x1
jax: 0.10.0
libtpu: 0.0.40
codegen_flags: <defaults>
</compile_context>

<pallas_src>
import jax
import jax.numpy as jnp
from jax.experimental import pallas as pl
from jax.experimental.pallas import tpu as pltpu

K = 3        # conv kernel size of the substituted cnn()
STRIDE = 2   # conv stride of the substituted cnn()


# ----------------------------- fused kernel --------------------------------

def _make_disc_kernel(Ho1, Wo1, Ho2, Wo2):
    """Fused Discriminator forward for one batch element (one grid step)."""

    def kernel(p1_ref, a_ref,
               w1c_ref, b1c_ref,            # conv1 (pre-transposed)
               w2c_ref, b2c_ref,            # conv2 (per-tap (C1,C2) blocks)
               w1_ref, b1_ref,              # fc1   (per conv2-position blocks)
               w2a_ref, w2b_ref, b2_ref,    # fc2   (concat folded, pre-split)
               w3_ref, b3_ref,              # fc3   (row vector, VPU reduce)
               o_ref, y1_scr):
        f32, bf16 = jnp.float32, jnp.bfloat16

        # conv1: relu(patches1 @ W1c + b1c)   -> stays in VMEM scratch
        y1 = jnp.dot(p1_ref[...], w1c_ref[...], preferred_element_type=f32)
        y1_scr[...] = jnp.maximum(y1 + b1c_ref[...], 0.0)        # (Ho1*Wo1, C1)

        # conv2 + fc1 fused: accumulate fc1 pre-activation per conv2 position,
        # reading conv1's output straight out of VMEM (no im2col matrix, no
        # HBM round-trip, no layout transpose).  K = C*k*k is tiny (<=72) so
        # these layers are latency-bound, not MXU-bound; keep them resident.
        x1 = b1_ref[...]                                          # (1, h1) f32
        for oi in range(Ho2):
            for oj in range(Wo2):
                acc2 = b2c_ref[...]                               # (1, C2) f32
                for ki in range(K):
                    for kj in range(K):
                        off = (STRIDE * oi + ki) * Wo1 + (STRIDE * oj + kj)
                        xin = y1_scr[off:off + 1, :]              # (1, C1)
                        acc2 = acc2 + jnp.dot(
                            xin.astype(bf16), w2c_ref[ki * K + kj],
                            preferred_element_type=f32)
                y2 = jnp.maximum(acc2, 0.0)                       # relu(conv2)
                x1 = x1 + jnp.dot(
                    y2.astype(bf16), w1_ref[oi * Wo2 + oj],
                    preferred_element_type=f32)
        x1 = jnp.maximum(x1, 0.0)                                 # (1, h1)

        # fc2: relu(cat([x1, a]) @ W2.T + b2) == relu(x1@W2a + a@W2b + b2)
        x2 = (jnp.dot(x1.astype(bf16), w2a_ref[...], preferred_element_type=f32)
              + jnp.dot(a_ref[...].astype(bf16), w2b_ref[...],
                        preferred_element_type=f32)
              + b2_ref[...])
        x2 = jnp.maximum(x2, 0.0)                                 # (1, h2)

        # fc3 + sigmoid as a lane reduce (avoids an N=1 MXU matmul and a
        # fully masked store path).
        logit = jnp.sum(x2 * w3_ref[...], axis=-1, keepdims=True) + b3_ref[...]
        o_ref[...] = jax.nn.sigmoid(logit)                        # (1, 1)

    return kernel


# ------------------------- one-time weight prep -----------------------------

def prepare_params(params, H, W):
    """Hoisted, one-time layout prep (nothing here runs per forward call):
    pre-transpose weights (no in-kernel .T), permute fc1 columns into
    per-conv2-position blocks matching torch's NCHW flatten, split fc2 for the
    folded concat, reshape biases to (1, N), cast MXU operands to bf16."""
    cw1 = params["cw1"]; C1, Cin, k, _ = cw1.shape
    cw2 = params["cw2"]; C2 = cw2.shape[0]
    w1 = params["w1"];   h1 = w1.shape[0]
    w2 = params["w2"];   h2 = w2.shape[0]

    Ho1 = (H - k) // STRIDE + 1
    Wo1 = (W - k) // STRIDE + 1
    Ho2 = (Ho1 - k) // STRIDE + 1
    Wo2 = (Wo1 - k) // STRIDE + 1
    assert w1.shape[1] == C2 * Ho2 * Wo2

    # fc1 weight: (h1, C2*Ho2*Wo2) -> (Ho2*Wo2, C2, h1); torch flatten index is
    # c*Ho2*Wo2 + oi*Wo2 + oj, so block [oi*Wo2+oj][c, h] == w1[h, that index].
    w1_blk = w1.reshape(h1, C2, Ho2, Wo2).transpose(2, 3, 1, 0)
    w1_blk = w1_blk.reshape(Ho2 * Wo2, C2, h1)

    return dict(
        # conv1: (C1, Cin*k*k) -> (Cin*k*k, C1); rows in (c, ki, kj) order,
        # matching the wrapper-side im2col column order.
        w1c_t=cw1.reshape(C1, Cin * k * k).T.astype(jnp.bfloat16),
        b1c=params["cb1"].reshape(1, C1).astype(jnp.float32),
        # conv2: per-tap (ki*k+kj) blocks of shape (C1, C2)
        w2c_t=cw2.transpose(2, 3, 1, 0).reshape(k * k, C1, C2).astype(jnp.bfloat16),
        b2c=params["cb2"].reshape(1, C2).astype(jnp.float32),
        w1t=w1_blk.astype(jnp.bfloat16),
        b1=params["b1"].reshape(1, h1).astype(jnp.float32),
        # fc2 split for the folded concat
        w2a_t=w2[:, :h1].T.astype(jnp.bfloat16),
        w2b_t=w2[:, h1:].T.astype(jnp.bfloat16),
        b2=params["b2"].reshape(1, h2).astype(jnp.float32),
        # fc3 kept f32 (used in elementwise reduce, not MXU)
        w3row=params["w3"].reshape(1, h2).astype(jnp.float32),
        b3=params["b3"].reshape(1, 1).astype(jnp.float32),
    )


# --------------------------------- forward ----------------------------------

def discriminator_forward(pp, s, a):
    B, C, H, W = s.shape
    Ho1 = (H - K) // STRIDE + 1
    Wo1 = (W - K) // STRIDE + 1
    Ho2 = (Ho1 - K) // STRIDE + 1
    Wo2 = (Wo1 - K) // STRIDE + 1
    P1 = Ho1 * Wo1
    K1 = C * K * K
    C1 = pp["w1c_t"].shape[1]
    C2 = pp["w2c_t"].shape[2]
    h1 = pp["w1t"].shape[2]
    h2 = pp["w2a_t"].shape[1]
    action_dim = pp["w2b_t"].shape[0]

    # im2col for conv1 only (reads the raw HBM input; column order (c, ki, kj)
    # matches w1c_t rows).  conv2's patches are built inside the kernel.
    cols = []
    for ki in range(K):
        for kj in range(K):
            cols.append(s[:, :, ki:ki + STRIDE * Ho1:STRIDE,
                              kj:kj + STRIDE * Wo1:STRIDE])
    p1 = jnp.stack(cols, axis=2)                 # (B, C, K*K, Ho1, Wo1)
    p1 = p1.transpose(0, 3, 4, 1, 2)             # (B, Ho1, Wo1, C, K*K)
    p1 = p1.reshape(B, P1, K1).astype(jnp.bfloat16)
    a3 = a.reshape(B, 1, action_dim).astype(jnp.float32)

    kernel = _make_disc_kernel(Ho1, Wo1, Ho2, Wo2)

    grid_spec = pltpu.PrefetchScalarGridSpec(
        num_scalar_prefetch=0,
        grid=(B,),                               # batch grid: pipelined, and
        in_specs=[                               # megacore-sharded on v7x
            pl.BlockSpec((None, P1, K1), lambda b: (b, 0, 0)),         # patches1
            pl.BlockSpec((None, 1, action_dim), lambda b: (b, 0, 0)),  # a
            # weights/biases: constant index_map -> stay VMEM-resident
            pl.BlockSpec((K1, C1), lambda b: (0, 0)),                  # w1c_t
            pl.BlockSpec((1, C1), lambda b: (0, 0)),                   # b1c
            pl.BlockSpec((K * K, C1, C2), lambda b: (0, 0, 0)),        # w2c_t
            pl.BlockSpec((1, C2), lambda b: (0, 0)),                   # b2c
            pl.BlockSpec((Ho2 * Wo2, C2, h1), lambda b: (0, 0, 0)),    # w1t
            pl.BlockSpec((1, h1), lambda b: (0, 0)),                   # b1
            pl.BlockSpec((h1, h2), lambda b: (0, 0)),                  # w2a_t
            pl.BlockSpec((action_dim, h2), lambda b: (0, 0)),          # w2b_t
            pl.BlockSpec((1, h2), lambda b: (0, 0)),                   # b2
            pl.BlockSpec((1, h2), lambda b: (0, 0)),                   # w3row
            pl.BlockSpec((1, 1), lambda b: (0, 0)),                    # b3
        ],
        out_specs=pl.BlockSpec((None, 1, 1), lambda b: (b, 0, 0)),
        scratch_shapes=[pltpu.VMEM((P1, C1), jnp.float32)],            # conv1 act
    )

    out = pl.pallas_call(
        kernel,
        out_shape=jax.ShapeDtypeStruct((B, 1, 1), jnp.float32),
        grid_spec=grid_spec,
        compiler_params=pltpu.CompilerParams(
            dimension_semantics=("parallel",)),
    )(p1, a3,
      pp["w1c_t"], pp["b1c"], pp["w2c_t"], pp["b2c"],
      pp["w1t"], pp["b1"], pp["w2a_t"], pp["w2b_t"], pp["b2"],
      pp["w3row"], pp["b3"])
    return out.reshape(B, 1)


# ---------------------------- parameter init --------------------------------

def _uniform(key, shape, bound):
    return jax.random.uniform(key, shape, jnp.float32, -bound, bound)


def init_params(key, in_channels, action_dim, hidden_dims, H, W):
    ks = jax.random.split(key, 10)
    # conv1: in_channels -> 8, k=3, s=2 ; conv2: 8 -> 16, k=3, s=2
    c1_out, c2_out, k = 8, 16, K
    fan = in_channels * k * k
    cw1 = _uniform(ks[0], (c1_out, in_channels, k, k), 1.0 / jnp.sqrt(fan))
    cb1 = _uniform(ks[1], (c1_out,), 1.0 / jnp.sqrt(fan))
    fan = c1_out * k * k
    cw2 = _uniform(ks[2], (c2_out, c1_out, k, k), 1.0 / jnp.sqrt(fan))
    cb2 = _uniform(ks[3], (c2_out,), 1.0 / jnp.sqrt(fan))

    Ho1 = (H - k) // STRIDE + 1
    Wo1 = (W - k) // STRIDE + 1
    Ho2 = (Ho1 - k) // STRIDE + 1
    Wo2 = (Wo1 - k) // STRIDE + 1
    conv_output_size = c2_out * Ho2 * Wo2

    h1, h2 = hidden_dims
    w1 = _uniform(ks[4], (h1, conv_output_size), 1.0 / jnp.sqrt(conv_output_size))
    b1 = _uniform(ks[5], (h1,), 1.0 / jnp.sqrt(conv_output_size))
    w2 = _uniform(ks[6], (h2, h1 + action_dim), 1.0 / jnp.sqrt(h1 + action_dim))
    b2 = _uniform(ks[7], (h2,), 1.0 / jnp.sqrt(h1 + action_dim))
    w3 = _uniform(ks[8], (1, h2), 1.0 / jnp.sqrt(h2))
    b3 = _uniform(ks[9], (1,), 1.0 / jnp.sqrt(h2))

    params = dict(cw1=cw1, cb1=cb1, cw2=cw2, cb2=cb2,
                  w1=w1, b1=b1, w2=w2, b2=b2, w3=w3, b3=b3)
    return params, conv_output_size


# --------------------------------- main --------------------------------------

if __name__ == "__main__":
    B, C, H, W = 2, 4, 16, 16
    action_dim = 8
    hidden_dims = [128, 64]

    key = jax.random.PRNGKey(0)
    kp, ks, ka = jax.random.split(key, 3)
    params, conv_out = init_params(kp, C, action_dim, hidden_dims, H, W)
    pp = prepare_params(params, H, W)          # one-time layout/bf16 prep

    s = jax.random.normal(ks, (B, C, H, W), jnp.float32)
    a = jax.random.normal(ka, (B, action_dim), jnp.float32)

    fwd = jax.jit(discriminator_forward)
    out = fwd(pp, s, a)
    out = jax.block_until_ready(out)

    assert out.shape == (B, 1)
    assert bool(jnp.all((out > 0.0) & (out < 1.0)))
    print("KERNEL_OK")
</pallas_src>

<mosaic_0001>
module attributes {stable_mosaic.version = 11 : i64} {
  func.func @kernel(%arg0: i32, %arg1: memref<1x49x36xbf16, #tpu.memory_space<vmem>>, %arg2: memref<1x1x8xf32, #tpu.memory_space<vmem>>, %arg3: memref<36x8xbf16, #tpu.memory_space<vmem>>, %arg4: memref<1x8xf32, #tpu.memory_space<vmem>>, %arg5: memref<9x8x16xbf16, #tpu.memory_space<vmem>>, %arg6: memref<1x16xf32, #tpu.memory_space<vmem>>, %arg7: memref<9x16x128xbf16, #tpu.memory_space<vmem>>, %arg8: memref<1x128xf32, #tpu.memory_space<vmem>>, %arg9: memref<128x64xbf16, #tpu.memory_space<vmem>>, %arg10: memref<8x64xbf16, #tpu.memory_space<vmem>>, %arg11: memref<1x64xf32, #tpu.memory_space<vmem>>, %arg12: memref<1x64xf32, #tpu.memory_space<vmem>>, %arg13: memref<1x1xf32, #tpu.memory_space<vmem>>, %arg14: memref<1x1x1xf32, #tpu.memory_space<vmem>>, %arg15: memref<49x8xf32, #tpu.memory_space<vmem>>) attributes {dimension_semantics = [#tpu.dimension_semantics<parallel>], iteration_bounds = array<i64: 2>, scalar_prefetch = 0 : i64, scratch_operands = 1 : i64, tpu.core_type = #tpu.core_type<tc>, window_params = [{transform_indices = @transform_0, window_bounds = array<i64: 1, 49, 36>}, {transform_indices = @transform_1, window_bounds = array<i64: 1, 1, 8>}, {pipeline_mode = #tpu.pipeline_mode<synchronous>, transform_indices = @transform_2, window_bounds = array<i64: 36, 8>}, {pipeline_mode = #tpu.pipeline_mode<synchronous>, transform_indices = @transform_3, window_bounds = array<i64: 1, 8>}, {pipeline_mode = #tpu.pipeline_mode<synchronous>, transform_indices = @transform_4, window_bounds = array<i64: 9, 8, 16>}, {pipeline_mode = #tpu.pipeline_mode<synchronous>, transform_indices = @transform_5, window_bounds = array<i64: 1, 16>}, {pipeline_mode = #tpu.pipeline_mode<synchronous>, transform_indices = @transform_6, window_bounds = array<i64: 9, 16, 128>}, {pipeline_mode = #tpu.pipeline_mode<synchronous>, transform_indices = @transform_7, window_bounds = array<i64: 1, 128>}, {pipeline_mode = #tpu.pipeline_mode<synchronous>, transform_indices = @transform_8, window_bounds = array<i64: 128, 64>}, {pipeline_mode = #tpu.pipeline_mode<synchronous>, transform_indices = @transform_9, window_bounds = array<i64: 8, 64>}, {pipeline_mode = #tpu.pipeline_mode<synchronous>, transform_indices = @transform_10, window_bounds = array<i64: 1, 64>}, {pipeline_mode = #tpu.pipeline_mode<synchronous>, transform_indices = @transform_11, window_bounds = array<i64: 1, 64>}, {pipeline_mode = #tpu.pipeline_mode<synchronous>, transform_indices = @transform_12, window_bounds = array<i64: 1, 1>}, {transform_indices = @transform_13, window_bounds = array<i64: 1, 1, 1>}]} {
    %c0 = arith.constant 0 : index
    %c0_0 = arith.constant 0 : index
    %c0_1 = arith.constant 0 : index
    %0 = vector.load %arg1[%c0, %c0_0, %c0_1] : memref<1x49x36xbf16, #tpu.memory_space<vmem>>, vector<1x49x36xbf16>
    %1 = vector.shape_cast %0 : vector<1x49x36xbf16> to vector<49x36xbf16>
    %c0_2 = arith.constant 0 : index
    %c0_3 = arith.constant 0 : index
    %2 = vector.load %arg3[%c0_2, %c0_3] : memref<36x8xbf16, #tpu.memory_space<vmem>>, vector<36x8xbf16>
    %cst = arith.constant dense<0.000000e+00> : vector<49x8xf32>
    %3 = tpu.matmul %1, %2, %cst {dimension_numbers = #tpu.dot_dimension_numbers<[1], [0], [0], [1], [0, 0, 1, 1], [], []>} : vector<49x36xbf16>, vector<36x8xbf16>, vector<49x8xf32> -> vector<49x8xf32>
    %c0_4 = arith.constant 0 : index
    %c0_5 = arith.constant 0 : index
    %4 = vector.load %arg4[%c0_4, %c0_5] : memref<1x8xf32, #tpu.memory_space<vmem>>, vector<1x8xf32>
    %5 = vector.broadcast %4 : vector<1x8xf32> to vector<49x8xf32>
    %6 = arith.addf %3, %5 : vector<49x8xf32>
    %cst_6 = arith.constant 0.000000e+00 : f32
    %7 = vector.broadcast %cst_6 : f32 to vector<49x8xf32>
    %8 = arith.maximumf %6, %7 : vector<49x8xf32>
    %c0_7 = arith.constant 0 : index
    %c0_8 = arith.constant 0 : index
    %9 = vector.load %arg15[%c0_7, %c0_8] : memref<49x8xf32, #tpu.memory_space<vmem>>, vector<49x8xf32>
    tpu.vector_store %arg15[%c0_7, %c0_8], %8 {strides = array<i32>} : memref<49x8xf32, #tpu.memory_space<vmem>>, vector<49x8xf32>,
    %c0_9 = arith.constant 0 : index
    %c0_10 = arith.constant 0 : index
    %10 = vector.load %arg8[%c0_9, %c0_10] : memref<1x128xf32, #tpu.memory_space<vmem>>, vector<1x128xf32>
    %c0_11 = arith.constant 0 : index
    %c0_12 = arith.constant 0 : index
    %11 = vector.load %arg6[%c0_11, %c0_12] : memref<1x16xf32, #tpu.memory_space<vmem>>, vector<1x16xf32>
    %c0_13 = arith.constant 0 : index
    %c0_14 = arith.constant 0 : index
    %12 = vector.load %arg15[%c0_13, %c0_14] : memref<49x8xf32, #tpu.memory_space<vmem>>, vector<1x8xf32>
    %13 = arith.truncf %12 : vector<1x8xf32> to vector<1x8xbf16>
    %c0_15 = arith.constant 0 : index
    %c0_16 = arith.constant 0 : index
    %c0_17 = arith.constant 0 : index
    %14 = vector.load %arg5[%c0_15, %c0_16, %c0_17] : memref<9x8x16xbf16, #tpu.memory_space<vmem>>, vector<1x8x16xbf16>
    %15 = vector.shape_cast %14 : vector<1x8x16xbf16> to vector<8x16xbf16>
    %cst_18 = arith.constant dense<0.000000e+00> : vector<1x16xf32>
    %16 = tpu.matmul %13, %15, %cst_18 {dimension_numbers = #tpu.dot_dimension_numbers<[1], [0], [0], [1], [0, 0, 1, 1], [], []>} : vector<1x8xbf16>, vector<8x16xbf16>, vector<1x16xf32> -> vector<1x16xf32>
    %17 = arith.addf %11, %16 : vector<1x16xf32>
    %c1 = arith.constant 1 : index
    %c0_19 = arith.constant 0 : index
    %18 = vector.load %arg15[%c1, %c0_19] : memref<49x8xf32, #tpu.memory_space<vmem>>, vector<1x8xf32>
    %19 = arith.truncf %18 : vector<1x8xf32> to vector<1x8xbf16>
    %c1_20 = arith.constant 1 : index
    %c0_21 = arith.constant 0 : index
    %c0_22 = arith.constant 0 : index
    %20 = vector.load %arg5[%c1_20, %c0_21, %c0_22] : memref<9x8x16xbf16, #tpu.memory_space<vmem>>, vector<1x8x16xbf16>
    %21 = vector.shape_cast %20 : vector<1x8x16xbf16> to vector<8x16xbf16>
    %cst_23 = arith.constant dense<0.000000e+00> : vector<1x16xf32>
    %22 = tpu.matmul %19, %21, %cst_23 {dimension_numbers = #tpu.dot_dimension_numbers<[1], [0], [0], [1], [0, 0, 1, 1], [], []>} : vector<1x8xbf16>, vector<8x16xbf16>, vector<1x16xf32> -> vector<1x16xf32>
    %23 = arith.addf %17, %22 : vector<1x16xf32>
    %c2 = arith.constant 2 : index
    %c0_24 = arith.constant 0 : index
    %24 = vector.load %arg15[%c2, %c0_24] : memref<49x8xf32, #tpu.memory_space<vmem>>, vector<1x8xf32>
    %25 = arith.truncf %24 : vector<1x8xf32> to vector<1x8xbf16>
    %c2_25 = arith.constant 2 : index
    %c0_26 = arith.constant 0 : index
    %c0_27 = arith.constant 0 : index
    %26 = vector.load %arg5[%c2_25, %c0_26, %c0_27] : memref<9x8x16xbf16, #tpu.memory_space<vmem>>, vector<1x8x16xbf16>
    %27 = vector.shape_cast %26 : vector<1x8x16xbf16> to vector<8x16xbf16>
    %cst_28 = arith.constant dense<0.000000e+00> : vector<1x16xf32>
    %28 = tpu.matmul %25, %27, %cst_28 {dimension_numbers = #tpu.dot_dimension_numbers<[1], [0], [0], [1], [0, 0, 1, 1], [], []>} : vector<1x8xbf16>, vector<8x16xbf16>, vector<1x16xf32> -> vector<1x16xf32>
    %29 = arith.addf %23, %28 : vector<1x16xf32>
    %c7 = arith.constant 7 : index
    %c0_29 = arith.constant 0 : index
    %30 = vector.load %arg15[%c7, %c0_29] : memref<49x8xf32, #tpu.memory_space<vmem>>, vector<1x8xf32>
    %31 = arith.truncf %30 : vector<1x8xf32> to vector<1x8xbf16>
    %c3 = arith.constant 3 : index
    %c0_30 = arith.constant 0 : index
    %c0_31 = arith.constant 0 : index
    %32 = vector.load %arg5[%c3, %c0_30, %c0_31] : memref<9x8x16xbf16, #tpu.memory_space<vmem>>, vector<1x8x16xbf16>
    %33 = vector.shape_cast %32 : vector<1x8x16xbf16> to vector<8x16xbf16>
    %cst_32 = arith.constant dense<0.000000e+00> : vector<1x16xf32>
    %34 = tpu.matmul %31, %33, %cst_32 {dimension_numbers = #tpu.dot_dimension_numbers<[1], [0], [0], [1], [0, 0, 1, 1], [], []>} : vector<1x8xbf16>, vector<8x16xbf16>, vector<1x16xf32> -> vector<1x16xf32>
    %35 = arith.addf %29, %34 : vector<1x16xf32>
    %c8 = arith.constant 8 : index
    %c0_33 = arith.constant 0 : index
    %36 = vector.load %arg15[%c8, %c0_33] : memref<49x8xf32, #tpu.memory_space<vmem>>, vector<1x8xf32>
    %37 = arith.truncf %36 : vector<1x8xf32> to vector<1x8xbf16>
    %c4 = arith.constant 4 : index
    %c0_34 = arith.constant 0 : index
    %c0_35 = arith.constant 0 : index
    %38 = vector.load %arg5[%c4, %c0_34, %c0_35] : memref<9x8x16xbf16, #tpu.memory_space<vmem>>, vector<1x8x16xbf16>
    %39 = vector.shape_cast %38 : vector<1x8x16xbf16> to vector<8x16xbf16>
    %cst_36 = arith.constant dense<0.000000e+00> : vector<1x16xf32>
    %40 = tpu.matmul %37, %39, %cst_36 {dimension_numbers = #tpu.dot_dimension_numbers<[1], [0], [0], [1], [0, 0, 1, 1], [], []>} : vector<1x8xbf16>, vector<8x16xbf16>, vector<1x16xf32> -> vector<1x16xf32>
    %41 = arith.addf %35, %40 : vector<1x16xf32>
    %c9 = arith.constant 9 : index
    %c0_37 = arith.constant 0 : index
    %42 = vector.load %arg15[%c9, %c0_37] : memref<49x8xf32, #tpu.memory_space<vmem>>, vector<1x8xf32>
    %43 = arith.truncf %42 : vector<1x8xf32> to vector<1x8xbf16>
    %c5 = arith.constant 5 : index
    %c0_38 = arith.constant 0 : index
    %c0_39 = arith.constant 0 : index
    %44 = vector.load %arg5[%c5, %c0_38, %c0_39] : memref<9x8x16xbf16, #tpu.memory_space<vmem>>, vector<1x8x16xbf16>
    %45 = vector.shape_cast %44 : vector<1x8x16xbf16> to vector<8x16xbf16>
    %cst_40 = arith.constant dense<0.000000e+00> : vector<1x16xf32>
    %46 = tpu.matmul %43, %45, %cst_40 {dimension_numbers = #tpu.dot_dimension_numbers<[1], [0], [0], [1], [0, 0, 1, 1], [], []>} : vector<1x8xbf16>, vector<8x16xbf16>, vector<1x16xf32> -> vector<1x16xf32>
    %47 = arith.addf %41, %46 : vector<1x16xf32>
    %c14 = arith.constant 14 : index
    %c0_41 = arith.constant 0 : index
    %48 = vector.load %arg15[%c14, %c0_41] : memref<49x8xf32, #tpu.memory_space<vmem>>, vector<1x8xf32>
    %49 = arith.truncf %48 : vector<1x8xf32> to vector<1x8xbf16>
    %c6 = arith.constant 6 : index
    %c0_42 = arith.constant 0 : index
    %c0_43 = arith.constant 0 : index
    %50 = vector.load %arg5[%c6, %c0_42, %c0_43] : memref<9x8x16xbf16, #tpu.memory_space<vmem>>, vector<1x8x16xbf16>
    %51 = vector.shape_cast %50 : vector<1x8x16xbf16> to vector<8x16xbf16>
    %cst_44 = arith.constant dense<0.000000e+00> : vector<1x16xf32>
    %52 = tpu.matmul %49, %51, %cst_44 {dimension_numbers = #tpu.dot_dimension_numbers<[1], [0], [0], [1], [0, 0, 1, 1], [], []>} : vector<1x8xbf16>, vector<8x16xbf16>, vector<1x16xf32> -> vector<1x16xf32>
    %53 = arith.addf %47, %52 : vector<1x16xf32>
    %c15 = arith.constant 15 : index
    %c0_45 = arith.constant 0 : index
    %54 = vector.load %arg15[%c15, %c0_45] : memref<49x8xf32, #tpu.memory_space<vmem>>, vector<1x8xf32>
    %55 = arith.truncf %54 : vector<1x8xf32> to vector<1x8xbf16>
    %c7_46 = arith.constant 7 : index
    %c0_47 = arith.constant 0 : index
    %c0_48 = arith.constant 0 : index
    %56 = vector.load %arg5[%c7_46, %c0_47, %c0_48] : memref<9x8x16xbf16, #tpu.memory_space<vmem>>, vector<1x8x16xbf16>
    %57 = vector.shape_cast %56 : vector<1x8x16xbf16> to vector<8x16xbf16>
    %cst_49 = arith.constant dense<0.000000e+00> : vector<1x16xf32>
    %58 = tpu.matmul %55, %57, %cst_49 {dimension_numbers = #tpu.dot_dimension_numbers<[1], [0], [0], [1], [0, 0, 1, 1], [], []>} : vector<1x8xbf16>, vector<8x16xbf16>, vector<1x16xf32> -> vector<1x16xf32>
    %59 = arith.addf %53, %58 : vector<1x16xf32>
    %c16 = arith.constant 16 : index
    %c0_50 = arith.constant 0 : index
    %60 = vector.load %arg15[%c16, %c0_50] : memref<49x8xf32, #tpu.memory_space<vmem>>, vector<1x8xf32>
    %61 = arith.truncf %60 : vector<1x8xf32> to vector<1x8xbf16>
    %c8_51 = arith.constant 8 : index
    %c0_52 = arith.constant 0 : index
    %c0_53 = arith.constant 0 : index
    %62 = vector.load %arg5[%c8_51, %c0_52, %c0_53] : memref<9x8x16xbf16, #tpu.memory_space<vmem>>, vector<1x8x16xbf16>
    %63 = vector.shape_cast %62 : vector<1x8x16xbf16> to vector<8x16xbf16>
    %cst_54 = arith.constant dense<0.000000e+00> : vector<1x16xf32>
    %64 = tpu.matmul %61, %63, %cst_54 {dimension_numbers = #tpu.dot_dimension_numbers<[1], [0], [0], [1], [0, 0, 1, 1], [], []>} : vector<1x8xbf16>, vector<8x16xbf16>, vector<1x16xf32> -> vector<1x16xf32>
    %65 = arith.addf %59, %64 : vector<1x16xf32>
    %cst_55 = arith.constant 0.000000e+00 : f32
    %66 = vector.broadcast %cst_55 : f32 to vector<1x16xf32>
    %67 = arith.maximumf %65, %66 : vector<1x16xf32>
    %68 = arith.truncf %67 : vector<1x16xf32> to vector<1x16xbf16>
    %c0_56 = arith.constant 0 : index
    %c0_57 = arith.constant 0 : index
    %c0_58 = arith.constant 0 : index
    %69 = vector.load %arg7[%c0_56, %c0_57, %c0_58] : memref<9x16x128xbf16, #tpu.memory_space<vmem>>, vector<1x16x128xbf16>
    %70 = vector.shape_cast %69 : vector<1x16x128xbf16> to vector<16x128xbf16>
    %cst_59 = arith.constant dense<0.000000e+00> : vector<1x128xf32>
    %71 = tpu.matmul %68, %70, %cst_59 {dimension_numbers = #tpu.dot_dimension_numbers<[1], [0], [0], [1], [0, 0, 1, 1], [], []>} : vector<1x16xbf16>, vector<16x128xbf16>, vector<1x128xf32> -> vector<1x128xf32>
    %72 = arith.addf %10, %71 : vector<1x128xf32>
    %c0_60 = arith.constant 0 : index
    %c0_61 = arith.constant 0 : index
    %73 = vector.load %arg6[%c0_60, %c0_61] : memref<1x16xf32, #tpu.memory_space<vmem>>, vector<1x16xf32>
    %c2_62 = arith.constant 2 : index
    %c0_63 = arith.constant 0 : index
    %74 = vector.load %arg15[%c2_62, %c0_63] : memref<49x8xf32, #tpu.memory_space<vmem>>, vector<1x8xf32>
    %75 = arith.truncf %74 : vector<1x8xf32> to vector<1x8xbf16>
    %c0_64 = arith.constant 0 : index
    %c0_65 = arith.constant 0 : index
    %c0_66 = arith.constant 0 : index
    %76 = vector.load %arg5[%c0_64, %c0_65, %c0_66] : memref<9x8x16xbf16, #tpu.memory_space<vmem>>, vector<1x8x16xbf16>
    %77 = vector.shape_cast %76 : vector<1x8x16xbf16> to vector<8x16xbf16>
    %cst_67 = arith.constant dense<0.000000e+00> : vector<1x16xf32>
    %78 = tpu.matmul %75, %77, %cst_67 {dimension_numbers = #tpu.dot_dimension_numbers<[1], [0], [0], [1], [0, 0, 1, 1], [], []>} : vector<1x8xbf16>, vector<8x16xbf16>, vector<1x16xf32> -> vector<1x16xf32>
    %79 = arith.addf %73, %78 : vector<1x16xf32>
    %c3_68 = arith.constant 3 : index
    %c0_69 = arith.constant 0 : index
    %80 = vector.load %arg15[%c3_68, %c0_69] : memref<49x8xf32, #tpu.memory_space<vmem>>, vector<1x8xf32>
    %81 = arith.truncf %80 : vector<1x8xf32> to vector<1x8xbf16>
    %c1_70 = arith.constant 1 : index
    %c0_71 = arith.constant 0 : index
    %c0_72 = arith.constant 0 : index
    %82 = vector.load %arg5[%c1_70, %c0_71, %c0_72] : memref<9x8x16xbf16, #tpu.memory_space<vmem>>, vector<1x8x16xbf16>
    %83 = vector.shape_cast %82 : vector<1x8x16xbf16> to vector<8x16xbf16>
    %cst_73 = arith.constant dense<0.000000e+00> : vector<1x16xf32>
    %84 = tpu.matmul %81, %83, %cst_73 {dimension_numbers = #tpu.dot_dimension_numbers<[1], [0], [0], [1], [0, 0, 1, 1], [], []>} : vector<1x8xbf16>, vector<8x16xbf16>, vector<1x16xf32> -> vector<1x16xf32>
    %85 = arith.addf %79, %84 : vector<1x16xf32>
    %c4_74 = arith.constant 4 : index
    %c0_75 = arith.constant 0 : index
    %86 = vector.load %arg15[%c4_74, %c0_75] : memref<49x8xf32, #tpu.memory_space<vmem>>, vector<1x8xf32>
    %87 = arith.truncf %86 : vector<1x8xf32> to vector<1x8xbf16>
    %c2_76 = arith.constant 2 : index
    %c0_77 = arith.constant 0 : index
    %c0_78 = arith.constant 0 : index
    %88 = vector.load %arg5[%c2_76, %c0_77, %c0_78] : memref<9x8x16xbf16, #tpu.memory_space<vmem>>, vector<1x8x16xbf16>
    %89 = vector.shape_cast %88 : vector<1x8x16xbf16> to vector<8x16xbf16>
    %cst_79 = arith.constant dense<0.000000e+00> : vector<1x16xf32>
    %90 = tpu.matmul %87, %89, %cst_79 {dimension_numbers = #tpu.dot_dimension_numbers<[1], [0], [0], [1], [0, 0, 1, 1], [], []>} : vector<1x8xbf16>, vector<8x16xbf16>, vector<1x16xf32> -> vector<1x16xf32>
    %91 = arith.addf %85, %90 : vector<1x16xf32>
    %c9_80 = arith.constant 9 : index
    %c0_81 = arith.constant 0 : index
    %92 = vector.load %arg15[%c9_80, %c0_81] : memref<49x8xf32, #tpu.memory_space<vmem>>, vector<1x8xf32>
    %93 = arith.truncf %92 : vector<1x8xf32> to vector<1x8xbf16>
    %c3_82 = arith.constant 3 : index
    %c0_83 = arith.constant 0 : index
    %c0_84 = arith.constant 0 : index
    %94 = vector.load %arg5[%c3_82, %c0_83, %c0_84] : memref<9x8x16xbf16, #tpu.memory_space<vmem>>, vector<1x8x16xbf16>
    %95 = vector.shape_cast %94 : vector<1x8x16xbf16> to vector<8x16xbf16>
    %cst_85 = arith.constant dense<0.000000e+00> : vector<1x16xf32>
    %96 = tpu.matmul %93, %95, %cst_85 {dimension_numbers = #tpu.dot_dimension_numbers<[1], [0], [0], [1], [0, 0, 1, 1], [], []>} : vector<1x8xbf16>, vector<8x16xbf16>, vector<1x16xf32> -> vector<1x16xf32>
    %97 = arith.addf %91, %96 : vector<1x16xf32>
    %c10 = arith.constant 10 : index
    %c0_86 = arith.constant 0 : index
    %98 = vector.load %arg15[%c10, %c0_86] : memref<49x8xf32, #tpu.memory_space<vmem>>, vector<1x8xf32>
    %99 = arith.truncf %98 : vector<1x8xf32> to vector<1x8xbf16>
    %c4_87 = arith.constant 4 : index
    %c0_88 = arith.constant 0 : index
    %c0_89 = arith.constant 0 : index
    %100 = vector.load %arg5[%c4_87, %c0_88, %c0_89] : memref<9x8x16xbf16, #tpu.memory_space<vmem>>, vector<1x8x16xbf16>
    %101 = vector.shape_cast %100 : vector<1x8x16xbf16> to vector<8x16xbf16>
    %cst_90 = arith.constant dense<0.000000e+00> : vector<1x16xf32>
    %102 = tpu.matmul %99, %101, %cst_90 {dimension_numbers = #tpu.dot_dimension_numbers<[1], [0], [0], [1], [0, 0, 1, 1], [], []>} : vector<1x8xbf16>, vector<8x16xbf16>, vector<1x16xf32> -> vector<1x16xf32>
    %103 = arith.addf %97, %102 : vector<1x16xf32>
    %c11 = arith.constant 11 : index
    %c0_91 = arith.constant 0 : index
    %104 = vector.load %arg15[%c11, %c0_91] : memref<49x8xf32, #tpu.memory_space<vmem>>, vector<1x8xf32>
    %105 = arith.truncf %104 : vector<1x8xf32> to vector<1x8xbf16>
    %c5_92 = arith.constant 5 : index
    %c0_93 = arith.constant 0 : index
    %c0_94 = arith.constant 0 : index
    %106 = vector.load %arg5[%c5_92, %c0_93, %c0_94] : memref<9x8x16xbf16, #tpu.memory_space<vmem>>, vector<1x8x16xbf16>
    %107 = vector.shape_cast %106 : vector<1x8x16xbf16> to vector<8x16xbf16>
    %cst_95 = arith.constant dense<0.000000e+00> : vector<1x16xf32>
    %108 = tpu.matmul %105, %107, %cst_95 {dimension_numbers = #tpu.dot_dimension_numbers<[1], [0], [0], [1], [0, 0, 1, 1], [], []>} : vector<1x8xbf16>, vector<8x16xbf16>, vector<1x16xf32> -> vector<1x16xf32>
    %109 = arith.addf %103, %108 : vector<1x16xf32>
    %c16_96 = arith.constant 16 : index
    %c0_97 = arith.constant 0 : index
    %110 = vector.load %arg15[%c16_96, %c0_97] : memref<49x8xf32, #tpu.memory_space<vmem>>, vector<1x8xf32>
    %111 = arith.truncf %110 : vector<1x8xf32> to vector<1x8xbf16>
    %c6_98 = arith.constant 6 : index
    %c0_99 = arith.constant 0 : index
    %c0_100 = arith.constant 0 : index
    %112 = vector.load %arg5[%c6_98, %c0_99, %c0_100] : memref<9x8x16xbf16, #tpu.memory_space<vmem>>, vector<1x8x16xbf16>
    %113 = vector.shape_cast %112 : vector<1x8x16xbf16> to vector<8x16xbf16>
    %cst_101 = arith.constant dense<0.000000e+00> : vector<1x16xf32>
    %114 = tpu.matmul %111, %113, %cst_101 {dimension_numbers = #tpu.dot_dimension_numbers<[1], [0], [0], [1], [0, 0, 1, 1], [], []>} : vector<1x8xbf16>, vector<8x16xbf16>, vector<1x16xf32> -> vector<1x16xf32>
    %115 = arith.addf %109, %114 : vector<1x16xf32>
    %c17 = arith.constant 17 : index
    %c0_102 = arith.constant 0 : index
    %116 = vector.load %arg15[%c17, %c0_102] : memref<49x8xf32, #tpu.memory_space<vmem>>, vector<1x8xf32>
    %117 = arith.truncf %116 : vector<1x8xf32> to vector<1x8xbf16>
    %c7_103 = arith.constant 7 : index
    %c0_104 = arith.constant 0 : index
    %c0_105 = arith.constant 0 : index
    %118 = vector.load %arg5[%c7_103, %c0_104, %c0_105] : memref<9x8x16xbf16, #tpu.memory_space<vmem>>, vector<1x8x16xbf16>
    %119 = vector.shape_cast %118 : vector<1x8x16xbf16> to vector<8x16xbf16>
    %cst_106 = arith.constant dense<0.000000e+00> : vector<1x16xf32>
    %120 = tpu.matmul %117, %119, %cst_106 {dimension_numbers = #tpu.dot_dimension_numbers<[1], [0], [0], [1], [0, 0, 1, 1], [], []>} : vector<1x8xbf16>, vector<8x16xbf16>, vector<1x16xf32> -> vector<1x16xf32>
    %121 = arith.addf %115, %120 : vector<1x16xf32>
    %c18 = arith.constant 18 : index
    %c0_107 = arith.constant 0 : index
    %122 = vector.load %arg15[%c18, %c0_107] : memref<49x8xf32, #tpu.memory_space<vmem>>, vector<1x8xf32>
    %123 = arith.truncf %122 : vector<1x8xf32> to vector<1x8xbf16>
    %c8_108 = arith.constant 8 : index
    %c0_109 = arith.constant 0 : index
    %c0_110 = arith.constant 0 : index
    %124 = vector.load %arg5[%c8_108, %c0_109, %c0_110] : memref<9x8x16xbf16, #tpu.memory_space<vmem>>, vector<1x8x16xbf16>
    %125 = vector.shape_cast %124 : vector<1x8x16xbf16> to vector<8x16xbf16>
    %cst_111 = arith.constant dense<0.000000e+00> : vector<1x16xf32>
    %126 = tpu.matmul %123, %125, %cst_111 {dimension_numbers = #tpu.dot_dimension_numbers<[1], [0], [0], [1], [0, 0, 1, 1], [], []>} : vector<1x8xbf16>, vector<8x16xbf16>, vector<1x16xf32> -> vector<1x16xf32>
    %127 = arith.addf %121, %126 : vector<1x16xf32>
    %cst_112 = arith.constant 0.000000e+00 : f32
    %128 = vector.broadcast %cst_112 : f32 to vector<1x16xf32>
    %129 = arith.maximumf %127, %128 : vector<1x16xf32>
    %130 = arith.truncf %129 : vector<1x16xf32> to vector<1x16xbf16>
    %c1_113 = arith.constant 1 : index
    %c0_114 = arith.constant 0 : index
    %c0_115 = arith.constant 0 : index
    %131 = vector.load %arg7[%c1_113, %c0_114, %c0_115] : memref<9x16x128xbf16, #tpu.memory_space<vmem>>, vector<1x16x128xbf16>
    %132 = vector.shape_cast %131 : vector<1x16x128xbf16> to vector<16x128xbf16>
    %cst_116 = arith.constant dense<0.000000e+00> : vector<1x128xf32>
    %133 = tpu.matmul %130, %132, %cst_116 {dimension_numbers = #tpu.dot_dimension_numbers<[1], [0], [0], [1], [0, 0, 1, 1], [], []>} : vector<1x16xbf16>, vector<16x128xbf16>, vector<1x128xf32> -> vector<1x128xf32>
    %134 = arith.addf %72, %133 : vector<1x128xf32>
    %c0_117 = arith.constant 0 : index
    %c0_118 = arith.constant 0 : index
    %135 = vector.load %arg6[%c0_117, %c0_118] : memref<1x16xf32, #tpu.memory_space<vmem>>, vector<1x16xf32>
    %c4_119 = arith.constant 4 : index
    %c0_120 = arith.constant 0 : index
    %136 = vector.load %arg15[%c4_119, %c0_120] : memref<49x8xf32, #tpu.memory_space<vmem>>, vector<1x8xf32>
    %137 = arith.truncf %136 : vector<1x8xf32> to vector<1x8xbf16>
    %c0_121 = arith.constant 0 : index
    %c0_122 = arith.constant 0 : index
    %c0_123 = arith.constant 0 : index
    %138 = vector.load %arg5[%c0_121, %c0_122, %c0_123] : memref<9x8x16xbf16, #tpu.memory_space<vmem>>, vector<1x8x16xbf16>
    %139 = vector.shape_cast %138 : vector<1x8x16xbf16> to vector<8x16xbf16>
    %cst_124 = arith.constant dense<0.000000e+00> : vector<1x16xf32>
    %140 = tpu.matmul %137, %139, %cst_124 {dimension_numbers = #tpu.dot_dimension_numbers<[1], [0], [0], [1], [0, 0, 1, 1], [], []>} : vector<1x8xbf16>, vector<8x16xbf16>, vector<1x16xf32> -> vector<1x16xf32>
    %141 = arith.addf %135, %140 : vector<1x16xf32>
    %c5_125 = arith.constant 5 : index
    %c0_126 = arith.constant 0 : index
    %142 = vector.load %arg15[%c5_125, %c0_126] : memref<49x8xf32, #tpu.memory_space<vmem>>, vector<1x8xf32>
    %143 = arith.truncf %142 : vector<1x8xf32> to vector<1x8xbf16>
    %c1_127 = arith.constant 1 : index
    %c0_128 = arith.constant 0 : index
    %c0_129 = arith.constant 0 : index
    %144 = vector.load %arg5[%c1_127, %c0_128, %c0_129] : memref<9x8x16xbf16, #tpu.memory_space<vmem>>, vector<1x8x16xbf16>
    %145 = vector.shape_cast %144 : vector<1x8x16xbf16> to vector<8x16xbf16>
    %cst_130 = arith.constant dense<0.000000e+00> : vector<1x16xf32>
    %146 = tpu.matmul %143, %145, %cst_130 {dimension_numbers = #tpu.dot_dimension_numbers<[1], [0], [0], [1], [0, 0, 1, 1], [], []>} : vector<1x8xbf16>, vector<8x16xbf16>, vector<1x16xf32> -> vector<1x16xf32>
    %147 = arith.addf %141, %146 : vector<1x16xf32>
    %c6_131 = arith.constant 6 : index
    %c0_132 = arith.constant 0 : index
    %148 = vector.load %arg15[%c6_131, %c0_132] : memref<49x8xf32, #tpu.memory_space<vmem>>, vector<1x8xf32>
    %149 = arith.truncf %148 : vector<1x8xf32> to vector<1x8xbf16>
    %c2_133 = arith.constant 2 : index
    %c0_134 = arith.constant 0 : index
    %c0_135 = arith.constant 0 : index
    %150 = vector.load %arg5[%c2_133, %c0_134, %c0_135] : memref<9x8x16xbf16, #tpu.memory_space<vmem>>, vector<1x8x16xbf16>
    %151 = vector.shape_cast %150 : vector<1x8x16xbf16> to vector<8x16xbf16>
    %cst_136 = arith.constant dense<0.000000e+00> : vector<1x16xf32>
    %152 = tpu.matmul %149, %151, %cst_136 {dimension_numbers = #tpu.dot_dimension_numbers<[1], [0], [0], [1], [0, 0, 1, 1], [], []>} : vector<1x8xbf16>, vector<8x16xbf16>, vector<1x16xf32> -> vector<1x16xf32>
    %153 = arith.addf %147, %152 : vector<1x16xf32>
    %c11_137 = arith.constant 11 : index
    %c0_138 = arith.constant 0 : index
    %154 = vector.load %arg15[%c11_137, %c0_138] : memref<49x8xf32, #tpu.memory_space<vmem>>, vector<1x8xf32>
    %155 = arith.truncf %154 : vector<1x8xf32> to vector<1x8xbf16>
    %c3_139 = arith.constant 3 : index
    %c0_140 = arith.constant 0 : index
    %c0_141 = arith.constant 0 : index
    %156 = vector.load %arg5[%c3_139, %c0_140, %c0_141] : memref<9x8x16xbf16, #tpu.memory_space<vmem>>, vector<1x8x16xbf16>
    %157 = vector.shape_cast %156 : vector<1x8x16xbf16> to vector<8x16xbf16>
    %cst_142 = arith.constant dense<0.000000e+00> : vector<1x16xf32>
    %158 = tpu.matmul %155, %157, %cst_142 {dimension_numbers = #tpu.dot_dimension_numbers<[1], [0], [0], [1], [0, 0, 1, 1], [], []>} : vector<1x8xbf16>, vector<8x16xbf16>, vector<1x16xf32> -> vector<1x16xf32>
    %159 = arith.addf %153, %158 : vector<1x16xf32>
    %c12 = arith.constant 12 : index
    %c0_143 = arith.constant 0 : index
    %160 = vector.load %arg15[%c12, %c0_143] : memref<49x8xf32, #tpu.memory_space<vmem>>, vector<1x8xf32>
    %161 = arith.truncf %160 : vector<1x8xf32> to vector<1x8xbf16>
    %c4_144 = arith.constant 4 : index
    %c0_145 = arith.constant 0 : index
    %c0_146 = arith.constant 0 : index
    %162 = vector.load %arg5[%c4_144, %c0_145, %c0_146] : memref<9x8x16xbf16, #tpu.memory_space<vmem>>, vector<1x8x16xbf16>
    %163 = vector.shape_cast %162 : vector<1x8x16xbf16> to vector<8x16xbf16>
    %cst_147 = arith.constant dense<0.000000e+00> : vector<1x16xf32>
    %164 = tpu.matmul %161, %163, %cst_147 {dimension_numbers = #tpu.dot_dimension_numbers<[1], [0], [0], [1], [0, 0, 1, 1], [], []>} : vector<1x8xbf16>, vector<8x16xbf16>, vector<1x16xf32> -> vector<1x16xf32>
    %165 = arith.addf %159, %164 : vector<1x16xf32>
    %c13 = arith.constant 13 : index
    %c0_148 = arith.constant 0 : index
    %166 = vector.load %arg15[%c13, %c0_148] : memref<49x8xf32, #tpu.memory_space<vmem>>, vector<1x8xf32>
    %167 = arith.truncf %166 : vector<1x8xf32> to vector<1x8xbf16>
    %c5_149 = arith.constant 5 : index
    %c0_150 = arith.constant 0 : index
    %c0_151 = arith.constant 0 : index
    %168 = vector.load %arg5[%c5_149, %c0_150, %c0_151] : memref<9x8x16xbf16, #tpu.memory_space<vmem>>, vector<1x8x16xbf16>
    %169 = vector.shape_cast %168 : vector<1x8x16xbf16> to vector<8x16xbf16>
    %cst_152 = arith.constant dense<0.000000e+00> : vector<1x16xf32>
    %170 = tpu.matmul %167, %169, %cst_152 {dimension_numbers = #tpu.dot_dimension_numbers<[1], [0], [0], [1], [0, 0, 1, 1], [], []>} : vector<1x8xbf16>, vector<8x16xbf16>, vector<1x16xf32> -> vector<1x16xf32>
    %171 = arith.addf %165, %170 : vector<1x16xf32>
    %c18_153 = arith.constant 18 : index
    %c0_154 = arith.constant 0 : index
    %172 = vector.load %arg15[%c18_153, %c0_154] : memref<49x8xf32, #tpu.memory_space<vmem>>, vector<1x8xf32>
    %173 = arith.truncf %172 : vector<1x8xf32> to vector<1x8xbf16>
    %c6_155 = arith.constant 6 : index
    %c0_156 = arith.constant 0 : index
    %c0_157 = arith.constant 0 : index
    %174 = vector.load %arg5[%c6_155, %c0_156, %c0_157] : memref<9x8x16xbf16, #tpu.memory_space<vmem>>, vector<1x8x16xbf16>
    %175 = vector.shape_cast %174 : vector<1x8x16xbf16> to vector<8x16xbf16>
    %cst_158 = arith.constant dense<0.000000e+00> : vector<1x16xf32>
    %176 = tpu.matmul %173, %175, %cst_158 {dimension_numbers = #tpu.dot_dimension_numbers<[1], [0], [0], [1], [0, 0, 1, 1], [], []>} : vector<1x8xbf16>, vector<8x16xbf16>, vector<1x16xf32> -> vector<1x16xf32>
    %177 = arith.addf %171, %176 : vector<1x16xf32>
    %c19 = arith.constant 19 : index
    %c0_159 = arith.constant 0 : index
    %178 = vector.load %arg15[%c19, %c0_159] : memref<49x8xf32, #tpu.memory_space<vmem>>, vector<1x8xf32>
    %179 = arith.truncf %178 : vector<1x8xf32> to vector<1x8xbf16>
    %c7_160 = arith.constant 7 : index
    %c0_161 = arith.constant 0 : index
    %c0_162 = arith.constant 0 : index
    %180 = vector.load %arg5[%c7_160, %c0_161, %c0_162] : memref<9x8x16xbf16, #tpu.memory_space<vmem>>, vector<1x8x16xbf16>
    %181 = vector.shape_cast %180 : vector<1x8x16xbf16> to vector<8x16xbf16>
    %cst_163 = arith.constant dense<0.000000e+00> : vector<1x16xf32>
    %182 = tpu.matmul %179, %181, %cst_163 {dimension_numbers = #tpu.dot_dimension_numbers<[1], [0], [0], [1], [0, 0, 1, 1], [], []>} : vector<1x8xbf16>, vector<8x16xbf16>, vector<1x16xf32> -> vector<1x16xf32>
    %183 = arith.addf %177, %182 : vector<1x16xf32>
    %c20 = arith.constant 20 : index
    %c0_164 = arith.constant 0 : index
    %184 = vector.load %arg15[%c20, %c0_164] : memref<49x8xf32, #tpu.memory_space<vmem>>, vector<1x8xf32>
    %185 = arith.truncf %184 : vector<1x8xf32> to vector<1x8xbf16>
    %c8_165 = arith.constant 8 : index
    %c0_166 = arith.constant 0 : index
    %c0_167 = arith.constant 0 : index
    %186 = vector.load %arg5[%c8_165, %c0_166, %c0_167] : memref<9x8x16xbf16, #tpu.memory_space<vmem>>, vector<1x8x16xbf16>
    %187 = vector.shape_cast %186 : vector<1x8x16xbf16> to vector<8x16xbf16>
    %cst_168 = arith.constant dense<0.000000e+00> : vector<1x16xf32>
    %188 = tpu.matmul %185, %187, %cst_168 {dimension_numbers = #tpu.dot_dimension_numbers<[1], [0], [0], [1], [0, 0, 1, 1], [], []>} : vector<1x8xbf16>, vector<8x16xbf16>, vector<1x16xf32> -> vector<1x16xf32>
    %189 = arith.addf %183, %188 : vector<1x16xf32>
    %cst_169 = arith.constant 0.000000e+00 : f32
    %190 = vector.broadcast %cst_169 : f32 to vector<1x16xf32>
    %191 = arith.maximumf %189, %190 : vector<1x16xf32>
    %192 = arith.truncf %191 : vector<1x16xf32> to vector<1x16xbf16>
    %c2_170 = arith.constant 2 : index
    %c0_171 = arith.constant 0 : index
    %c0_172 = arith.constant 0 : index
    %193 = vector.load %arg7[%c2_170, %c0_171, %c0_172] : memref<9x16x128xbf16, #tpu.memory_space<vmem>>, vector<1x16x128xbf16>
    %194 = vector.shape_cast %193 : vector<1x16x128xbf16> to vector<16x128xbf16>
    %cst_173 = arith.constant dense<0.000000e+00> : vector<1x128xf32>
    %195 = tpu.matmul %192, %194, %cst_173 {dimension_numbers = #tpu.dot_dimension_numbers<[1], [0], [0], [1], [0, 0, 1, 1], [], []>} : vector<1x16xbf16>, vector<16x128xbf16>, vector<1x128xf32> -> vector<1x128xf32>
    %196 = arith.addf %134, %195 : vector<1x128xf32>
    %c0_174 = arith.constant 0 : index
    %c0_175 = arith.constant 0 : index
    %197 = vector.load %arg6[%c0_174, %c0_175] : memref<1x16xf32, #tpu.memory_space<vmem>>, vector<1x16xf32>
    %c14_176 = arith.constant 14 : index
    %c0_177 = arith.constant 0 : index
    %198 = vector.load %arg15[%c14_176, %c0_177] : memref<49x8xf32, #tpu.memory_space<vmem>>, vector<1x8xf32>
    %199 = arith.truncf %198 : vector<1x8xf32> to vector<1x8xbf16>
    %c0_178 = arith.constant 0 : index
    %c0_179 = arith.constant 0 : index
    %c0_180 = arith.constant 0 : index
    %200 = vector.load %arg5[%c0_178, %c0_179, %c0_180] : memref<9x8x16xbf16, #tpu.memory_space<vmem>>, vector<1x8x16xbf16>
    %201 = vector.shape_cast %200 : vector<1x8x16xbf16> to vector<8x16xbf16>
    %cst_181 = arith.constant dense<0.000000e+00> : vector<1x16xf32>
    %202 = tpu.matmul %199, %201, %cst_181 {dimension_numbers = #tpu.dot_dimension_numbers<[1], [0], [0], [1], [0, 0, 1, 1], [], []>} : vector<1x8xbf16>, vector<8x16xbf16>, vector<1x16xf32> -> vector<1x16xf32>
    %203 = arith.addf %197, %202 : vector<1x16xf32>
    %c15_182 = arith.constant 15 : index
    %c0_183 = arith.constant 0 : index
    %204 = vector.load %arg15[%c15_182, %c0_183] : memref<49x8xf32, #tpu.memory_space<vmem>>, vector<1x8xf32>
    %205 = arith.truncf %204 : vector<1x8xf32> to vector<1x8xbf16>
    %c1_184 = arith.constant 1 : index
    %c0_185 = arith.constant 0 : index
    %c0_186 = arith.constant 0 : index
    %206 = vector.load %arg5[%c1_184, %c0_185, %c0_186] : memref<9x8x16xbf16, #tpu.memory_space<vmem>>, vector<1x8x16xbf16>
    %207 = vector.shape_cast %206 : vector<1x8x16xbf16> to vector<8x16xbf16>
    %cst_187 = arith.constant dense<0.000000e+00> : vector<1x16xf32>
    %208 = tpu.matmul %205, %207, %cst_187 {dimension_numbers = #tpu.dot_dimension_numbers<[1], [0], [0], [1], [0, 0, 1, 1], [], []>} : vector<1x8xbf16>, vector<8x16xbf16>, vector<1x16xf32> -> vector<1x16xf32>
    %209 = arith.addf %203, %208 : vector<1x16xf32>
    %c16_188 = arith.constant 16 : index
    %c0_189 = arith.constant 0 : index
    %210 = vector.load %arg15[%c16_188, %c0_189] : memref<49x8xf32, #tpu.memory_space<vmem>>, vector<1x8xf32>
    %211 = arith.truncf %210 : vector<1x8xf32> to vector<1x8xbf16>
    %c2_190 = arith.constant 2 : index
    %c0_191 = arith.constant 0 : index
    %c0_192 = arith.constant 0 : index
    %212 = vector.load %arg5[%c2_190, %c0_191, %c0_192] : memref<9x8x16xbf16, #tpu.memory_space<vmem>>, vector<1x8x16xbf16>
    %213 = vector.shape_cast %212 : vector<1x8x16xbf16> to vector<8x16xbf16>
    %cst_193 = arith.constant dense<0.000000e+00> : vector<1x16xf32>
    %214 = tpu.matmul %211, %213, %cst_193 {dimension_numbers = #tpu.dot_dimension_numbers<[1], [0], [0], [1], [0, 0, 1, 1], [], []>} : vector<1x8xbf16>, vector<8x16xbf16>, vector<1x16xf32> -> vector<1x16xf32>
    %215 = arith.addf %209, %214 : vector<1x16xf32>
    %c21 = arith.constant 21 : index
    %c0_194 = arith.constant 0 : index
    %216 = vector.load %arg15[%c21, %c0_194] : memref<49x8xf32, #tpu.memory_space<vmem>>, vector<1x8xf32>
    %217 = arith.truncf %216 : vector<1x8xf32> to vector<1x8xbf16>
    %c3_195 = arith.constant 3 : index
    %c0_196 = arith.constant 0 : index
    %c0_197 = arith.constant 0 : index
    %218 = vector.load %arg5[%c3_195, %c0_196, %c0_197] : memref<9x8x16xbf16, #tpu.memory_space<vmem>>, vector<1x8x16xbf16>
    %219 = vector.shape_cast %218 : vector<1x8x16xbf16> to vector<8x16xbf16>
    %cst_198 = arith.constant dense<0.000000e+00> : vector<1x16xf32>
    %220 = tpu.matmul %217, %219, %cst_198 {dimension_numbers = #tpu.dot_dimension_numbers<[1], [0], [0], [1], [0, 0, 1, 1], [], []>} : vector<1x8xbf16>, vector<8x16xbf16>, vector<1x16xf32> -> vector<1x16xf32>
    %221 = arith.addf %215, %220 : vector<1x16xf32>
    %c22 = arith.constant 22 : index
    %c0_199 = arith.constant 0 : index
    %222 = vector.load %arg15[%c22, %c0_199] : memref<49x8xf32, #tpu.memory_space<vmem>>, vector<1x8xf32>
    %223 = arith.truncf %222 : vector<1x8xf32> to vector<1x8xbf16>
    %c4_200 = arith.constant 4 : index
    %c0_201 = arith.constant 0 : index
    %c0_202 = arith.constant 0 : index
    %224 = vector.load %arg5[%c4_200, %c0_201, %c0_202] : memref<9x8x16xbf16, #tpu.memory_space<vmem>>, vector<1x8x16xbf16>
    %225 = vector.shape_cast %224 : vector<1x8x16xbf16> to vector<8x16xbf16>
    %cst_203 = arith.constant dense<0.000000e+00> : vector<1x16xf32>
    %226 = tpu.matmul %223, %225, %cst_203 {dimension_numbers = #tpu.dot_dimension_numbers<[1], [0], [0], [1], [0, 0, 1, 1], [], []>} : vector<1x8xbf16>, vector<8x16xbf16>, vector<1x16xf32> -> vector<1x16xf32>
    %227 = arith.addf %221, %226 : vector<1x16xf32>
    %c23 = arith.constant 23 : index
    %c0_204 = arith.constant 0 : index
    %228 = vector.load %arg15[%c23, %c0_204] : memref<49x8xf32, #tpu.memory_space<vmem>>, vector<1x8xf32>
    %229 = arith.truncf %228 : vector<1x8xf32> to vector<1x8xbf16>
    %c5_205 = arith.constant 5 : index
    %c0_206 = arith.constant 0 : index
    %c0_207 = arith.constant 0 : index
    %230 = vector.load %arg5[%c5_205, %c0_206, %c0_207] : memref<9x8x16xbf16, #tpu.memory_space<vmem>>, vector<1x8x16xbf16>
    %231 = vector.shape_cast %230 : vector<1x8x16xbf16> to vector<8x16xbf16>
    %cst_208 = arith.constant dense<0.000000e+00> : vector<1x16xf32>
    %232 = tpu.matmul %229, %231, %cst_208 {dimension_numbers = #tpu.dot_dimension_numbers<[1], [0], [0], [1], [0, 0, 1, 1], [], []>} : vector<1x8xbf16>, vector<8x16xbf16>, vector<1x16xf32> -> vector<1x16xf32>
    %233 = arith.addf %227, %232 : vector<1x16xf32>
    %c28 = arith.constant 28 : index
    %c0_209 = arith.constant 0 : index
    %234 = vector.load %arg15[%c28, %c0_209] : memref<49x8xf32, #tpu.memory_space<vmem>>, vector<1x8xf32>
    %235 = arith.truncf %234 : vector<1x8xf32> to vector<1x8xbf16>
    %c6_210 = arith.constant 6 : index
    %c0_211 = arith.constant 0 : index
    %c0_212 = arith.constant 0 : index
    %236 = vector.load %arg5[%c6_210, %c0_211, %c0_212] : memref<9x8x16xbf16, #tpu.memory_space<vmem>>, vector<1x8x16xbf16>
    %237 = vector.shape_cast %236 : vector<1x8x16xbf16> to vector<8x16xbf16>
    %cst_213 = arith.constant dense<0.000000e+00> : vector<1x16xf32>
    %238 = tpu.matmul %235, %237, %cst_213 {dimension_numbers = #tpu.dot_dimension_numbers<[1], [0], [0], [1], [0, 0, 1, 1], [], []>} : vector<1x8xbf16>, vector<8x16xbf16>, vector<1x16xf32> -> vector<1x16xf32>
    %239 = arith.addf %233, %238 : vector<1x16xf32>
    %c29 = arith.constant 29 : index
    %c0_214 = arith.constant 0 : index
    %240 = vector.load %arg15[%c29, %c0_214] : memref<49x8xf32, #tpu.memory_space<vmem>>, vector<1x8xf32>
    %241 = arith.truncf %240 : vector<1x8xf32> to vector<1x8xbf16>
    %c7_215 = arith.constant 7 : index
    %c0_216 = arith.constant 0 : index
    %c0_217 = arith.constant 0 : index
    %242 = vector.load %arg5[%c7_215, %c0_216, %c0_217] : memref<9x8x16xbf16, #tpu.memory_space<vmem>>, vector<1x8x16xbf16>
    %243 = vector.shape_cast %242 : vector<1x8x16xbf16> to vector<8x16xbf16>
    %cst_218 = arith.constant dense<0.000000e+00> : vector<1x16xf32>
    %244 = tpu.matmul %241, %243, %cst_218 {dimension_numbers = #tpu.dot_dimension_numbers<[1], [0], [0], [1], [0, 0, 1, 1], [], []>} : vector<1x8xbf16>, vector<8x16xbf16>, vector<1x16xf32> -> vector<1x16xf32>
    %245 = arith.addf %239, %244 : vector<1x16xf32>
    %c30 = arith.constant 30 : index
    %c0_219 = arith.constant 0 : index
    %246 = vector.load %arg15[%c30, %c0_219] : memref<49x8xf32, #tpu.memory_space<vmem>>, vector<1x8xf32>
    %247 = arith.truncf %246 : vector<1x8xf32> to vector<1x8xbf16>
    %c8_220 = arith.constant 8 : index
    %c0_221 = arith.constant 0 : index
    %c0_222 = arith.constant 0 : index
    %248 = vector.load %arg5[%c8_220, %c0_221, %c0_222] : memref<9x8x16xbf16, #tpu.memory_space<vmem>>, vector<1x8x16xbf16>
    %249 = vector.shape_cast %248 : vector<1x8x16xbf16> to vector<8x16xbf16>
    %cst_223 = arith.constant dense<0.000000e+00> : vector<1x16xf32>
    %250 = tpu.matmul %247, %249, %cst_223 {dimension_numbers = #tpu.dot_dimension_numbers<[1], [0], [0], [1], [0, 0, 1, 1], [], []>} : vector<1x8xbf16>, vector<8x16xbf16>, vector<1x16xf32> -> vector<1x16xf32>
    %251 = arith.addf %245, %250 : vector<1x16xf32>
    %cst_224 = arith.constant 0.000000e+00 : f32
    %252 = vector.broadcast %cst_224 : f32 to vector<1x16xf32>
    %253 = arith.maximumf %251, %252 : vector<1x16xf32>
    %254 = arith.truncf %253 : vector<1x16xf32> to vector<1x16xbf16>
    %c3_225 = arith.constant 3 : index
    %c0_226 = arith.constant 0 : index
    %c0_227 = arith.constant 0 : index
    %255 = vector.load %arg7[%c3_225, %c0_226, %c0_227] : memref<9x16x128xbf16, #tpu.memory_space<vmem>>, vector<1x16x128xbf16>
    %256 = vector.shape_cast %255 : vector<1x16x128xbf16> to vector<16x128xbf16>
    %cst_228 = arith.constant dense<0.000000e+00> : vector<1x128xf32>
    %257 = tpu.matmul %254, %256, %cst_228 {dimension_numbers = #tpu.dot_dimension_numbers<[1], [0], [0], [1], [0, 0, 1, 1], [], []>} : vector<1x16xbf16>, vector<16x128xbf16>, vector<1x128xf32> -> vector<1x128xf32>
    %258 = arith.addf %196, %257 : vector<1x128xf32>
    %c0_229 = arith.constant 0 : index
    %c0_230 = arith.constant 0 : index
    %259 = vector.load %arg6[%c0_229, %c0_230] : memref<1x16xf32, #tpu.memory_space<vmem>>, vector<1x16xf32>
    %c16_231 = arith.constant 16 : index
    %c0_232 = arith.constant 0 : index
    %260 = vector.load %arg15[%c16_231, %c0_232] : memref<49x8xf32, #tpu.memory_space<vmem>>, vector<1x8xf32>
    %261 = arith.truncf %260 : vector<1x8xf32> to vector<1x8xbf16>
    %c0_233 = arith.constant 0 : index
    %c0_234 = arith.constant 0 : index
    %c0_235 = arith.constant 0 : index
    %262 = vector.load %arg5[%c0_233, %c0_234, %c0_235] : memref<9x8x16xbf16, #tpu.memory_space<vmem>>, vector<1x8x16xbf16>
    %263 = vector.shape_cast %262 : vector<1x8x16xbf16> to vector<8x16xbf16>
    %cst_236 = arith.constant dense<0.000000e+00> : vector<1x16xf32>
    %264 = tpu.matmul %261, %263, %cst_236 {dimension_numbers = #tpu.dot_dimension_numbers<[1], [0], [0], [1], [0, 0, 1, 1], [], []>} : vector<1x8xbf16>, vector<8x16xbf16>, vector<1x16xf32> -> vector<1x16xf32>
    %265 = arith.addf %259, %264 : vector<1x16xf32>
    %c17_237 = arith.constant 17 : index
    %c0_238 = arith.constant 0 : index
    %266 = vector.load %arg15[%c17_237, %c0_238] : memref<49x8xf32, #tpu.memory_space<vmem>>, vector<1x8xf32>
    %267 = arith.truncf %266 : vector<1x8xf32> to vector<1x8xbf16>
    %c1_239 = arith.constant 1 : index
    %c0_240 = arith.constant 0 : index
    %c0_241 = arith.constant 0 : index
    %268 = vector.load %arg5[%c1_239, %c0_240, %c0_241] : memref<9x8x16xbf16, #tpu.memory_space<vmem>>, vector<1x8x16xbf16>
    %269 = vector.shape_cast %268 : vector<1x8x16xbf16> to vector<8x16xbf16>
    %cst_242 = arith.constant dense<0.000000e+00> : vector<1x16xf32>
    %270 = tpu.matmul %267, %269, %cst_242 {dimension_numbers = #tpu.dot_dimension_numbers<[1], [0], [0], [1], [0, 0, 1, 1], [], []>} : vector<1x8xbf16>, vector<8x16xbf16>, vector<1x16xf32> -> vector<1x16xf32>
    %271 = arith.addf %265, %270 : vector<1x16xf32>
    %c18_243 = arith.constant 18 : index
    %c0_244 = arith.constant 0 : index
    %272 = vector.load %arg15[%c18_243, %c0_244] : memref<49x8xf32, #tpu.memory_space<vmem>>, vector<1x8xf32>
    %273 = arith.truncf %272 : vector<1x8xf32> to vector<1x8xbf16>
    %c2_245 = arith.constant 2 : index
    %c0_246 = arith.constant 0 : index
    %c0_247 = arith.constant 0 : index
    %274 = vector.load %arg5[%c2_245, %c0_246, %c0_247] : memref<9x8x16xbf16, #tpu.memory_space<vmem>>, vector<1x8x16xbf16>
    %275 = vector.shape_cast %274 : vector<1x8x16xbf16> to vector<8x16xbf16>
    %cst_248 = arith.constant dense<0.000000e+00> : vector<1x16xf32>
    %276 = tpu.matmul %273, %275, %cst_248 {dimension_numbers = #tpu.dot_dimension_numbers<[1], [0], [0], [1], [0, 0, 1, 1], [], []>} : vector<1x8xbf16>, vector<8x16xbf16>, vector<1x16xf32> -> vector<1x16xf32>
    %277 = arith.addf %271, %276 : vector<1x16xf32>
    %c23_249 = arith.constant 23 : index
    %c0_250 = arith.constant 0 : index
    %278 = vector.load %arg15[%c23_249, %c0_250] : memref<49x8xf32, #tpu.memory_space<vmem>>, vector<1x8xf32>
    %279 = arith.truncf %278 : vector<1x8xf32> to vector<1x8xbf16>
    %c3_251 = arith.constant 3 : index
    %c0_252 = arith.constant 0 : index
    %c0_253 = arith.constant 0 : index
    %280 = vector.load %arg5[%c3_251, %c0_252, %c0_253] : memref<9x8x16xbf16, #tpu.memory_space<vmem>>, vector<1x8x16xbf16>
    %281 = vector.shape_cast %280 : vector<1x8x16xbf16> to vector<8x16xbf16>
    %cst_254 = arith.constant dense<0.000000e+00> : vector<1x16xf32>
    %282 = tpu.matmul %279, %281, %cst_254 {dimension_numbers = #tpu.dot_dimension_numbers<[1], [0], [0], [1], [0, 0, 1, 1], [], []>} : vector<1x8xbf16>, vector<8x16xbf16>, vector<1x16xf32> -> vector<1x16xf32>
    %283 = arith.addf %277, %282 : vector<1x16xf32>
    %c24 = arith.constant 24 : index
    %c0_255 = arith.constant 0 : index
    %284 = vector.load %arg15[%c24, %c0_255] : memref<49x8xf32, #tpu.memory_space<vmem>>, vector<1x8xf32>
    %285 = arith.truncf %284 : vector<1x8xf32> to vector<1x8xbf16>
    %c4_256 = arith.constant 4 : index
    %c0_257 = arith.constant 0 : index
    %c0_258 = arith.constant 0 : index
    %286 = vector.load %arg5[%c4_256, %c0_257, %c0_258] : memref<9x8x16xbf16, #tpu.memory_space<vmem>>, vector<1x8x16xbf16>
    %287 = vector.shape_cast %286 : vector<1x8x16xbf16> to vector<8x16xbf16>
    %cst_259 = arith.constant dense<0.000000e+00> : vector<1x16xf32>
    %288 = tpu.matmul %285, %287, %cst_259 {dimension_numbers = #tpu.dot_dimension_numbers<[1], [0], [0], [1], [0, 0, 1, 1], [], []>} : vector<1x8xbf16>, vector<8x16xbf16>, vector<1x16xf32> -> vector<1x16xf32>
    %289 = arith.addf %283, %288 : vector<1x16xf32>
    %c25 = arith.constant 25 : index
    %c0_260 = arith.constant 0 : index
    %290 = vector.load %arg15[%c25, %c0_260] : memref<49x8xf32, #tpu.memory_space<vmem>>, vector<1x8xf32>
    %291 = arith.truncf %290 : vector<1x8xf32> to vector<1x8xbf16>
    %c5_261 = arith.constant 5 : index
    %c0_262 = arith.constant 0 : index
    %c0_263 = arith.constant 0 : index
    %292 = vector.load %arg5[%c5_261, %c0_262, %c0_263] : memref<9x8x16xbf16, #tpu.memory_space<vmem>>, vector<1x8x16xbf16>
    %293 = vector.shape_cast %292 : vector<1x8x16xbf16> to vector<8x16xbf16>
    %cst_264 = arith.constant dense<0.000000e+00> : vector<1x16xf32>
    %294 = tpu.matmul %291, %293, %cst_264 {dimension_numbers = #tpu.dot_dimension_numbers<[1], [0], [0], [1], [0, 0, 1, 1], [], []>} : vector<1x8xbf16>, vector<8x16xbf16>, vector<1x16xf32> -> vector<1x16xf32>
    %295 = arith.addf %289, %294 : vector<1x16xf32>
    %c30_265 = arith.constant 30 : index
    %c0_266 = arith.constant 0 : index
    %296 = vector.load %arg15[%c30_265, %c0_266] : memref<49x8xf32, #tpu.memory_space<vmem>>, vector<1x8xf32>
    %297 = arith.truncf %296 : vector<1x8xf32> to vector<1x8xbf16>
    %c6_267 = arith.constant 6 : index
    %c0_268 = arith.constant 0 : index
    %c0_269 = arith.constant 0 : index
    %298 = vector.load %arg5[%c6_267, %c0_268, %c0_269] : memref<9x8x16xbf16, #tpu.memory_space<vmem>>, vector<1x8x16xbf16>
    %299 = vector.shape_cast %298 : vector<1x8x16xbf16> to vector<8x16xbf16>
    %cst_270 = arith.constant dense<0.000000e+00> : vector<1x16xf32>
    %300 = tpu.matmul %297, %299, %cst_270 {dimension_numbers = #tpu.dot_dimension_numbers<[1], [0], [0], [1], [0, 0, 1, 1], [], []>} : vector<1x8xbf16>, vector<8x16xbf16>, vector<1x16xf32> -> vector<1x16xf32>
    %301 = arith.addf %295, %300 : vector<1x16xf32>
    %c31 = arith.constant 31 : index
    %c0_271 = arith.constant 0 : index
    %302 = vector.load %arg15[%c31, %c0_271] : memref<49x8xf32, #tpu.memory_space<vmem>>, vector<1x8xf32>
    %303 = arith.truncf %302 : vector<1x8xf32> to vector<1x8xbf16>
    %c7_272 = arith.constant 7 : index
    %c0_273 = arith.constant 0 : index
    %c0_274 = arith.constant 0 : index
    %304 = vector.load %arg5[%c7_272, %c0_273, %c0_274] : memref<9x8x16xbf16, #tpu.memory_space<vmem>>, vector<1x8x16xbf16>
    %305 = vector.shape_cast %304 : vector<1x8x16xbf16> to vector<8x16xbf16>
    %cst_275 = arith.constant dense<0.000000e+00> : vector<1x16xf32>
    %306 = tpu.matmul %303, %305, %cst_275 {dimension_numbers = #tpu.dot_dimension_numbers<[1], [0], [0], [1], [0, 0, 1, 1], [], []>} : vector<1x8xbf16>, vector<8x16xbf16>, vector<1x16xf32> -> vector<1x16xf32>
    %307 = arith.addf %301, %306 : vector<1x16xf32>
    %c32 = arith.constant 32 : index
    %c0_276 = arith.constant 0 : index
    %308 = vector.load %arg15[%c32, %c0_276] : memref<49x8xf32, #tpu.memory_space<vmem>>, vector<1x8xf32>
    %309 = arith.truncf %308 : vector<1x8xf32> to vector<1x8xbf16>
    %c8_277 = arith.constant 8 : index
    %c0_278 = arith.constant 0 : index
    %c0_279 = arith.constant 0 : index
    %310 = vector.load %arg5[%c8_277, %c0_278, %c0_279] : memref<9x8x16xbf16, #tpu.memory_space<vmem>>, vector<1x8x16xbf16>
    %311 = vector.shape_cast %310 : vector<1x8x16xbf16> to vector<8x16xbf16>
    %cst_280 = arith.constant dense<0.000000e+00> : vector<1x16xf32>
    %312 = tpu.matmul %309, %311, %cst_280 {dimension_numbers = #tpu.dot_dimension_numbers<[1], [0], [0], [1], [0, 0, 1, 1], [], []>} : vector<1x8xbf16>, vector<8x16xbf16>, vector<1x16xf32> -> vector<1x16xf32>
    %313 = arith.addf %307, %312 : vector<1x16xf32>
    %cst_281 = arith.constant 0.000000e+00 : f32
    %314 = vector.broadcast %cst_281 : f32 to vector<1x16xf32>
    %315 = arith.maximumf %313, %314 : vector<1x16xf32>
    %316 = arith.truncf %315 : vector<1x16xf32> to vector<1x16xbf16>
    %c4_282 = arith.constant 4 : index
    %c0_283 = arith.constant 0 : index
    %c0_284 = arith.constant 0 : index
    %317 = vector.load %arg7[%c4_282, %c0_283, %c0_284] : memref<9x16x128xbf16, #tpu.memory_space<vmem>>, vector<1x16x128xbf16>
    %318 = vector.shape_cast %317 : vector<1x16x128xbf16> to vector<16x128xbf16>
    %cst_285 = arith.constant dense<0.000000e+00> : vector<1x128xf32>
    %319 = tpu.matmul %316, %318, %cst_285 {dimension_numbers = #tpu.dot_dimension_numbers<[1], [0], [0], [1], [0, 0, 1, 1], [], []>} : vector<1x16xbf16>, vector<16x128xbf16>, vector<1x128xf32> -> vector<1x128xf32>
    %320 = arith.addf %258, %319 : vector<1x128xf32>
    %c0_286 = arith.constant 0 : index
    %c0_287 = arith.constant 0 : index
    %321 = vector.load %arg6[%c0_286, %c0_287] : memref<1x16xf32, #tpu.memory_space<vmem>>, vector<1x16xf32>
    %c18_288 = arith.constant 18 : index
    %c0_289 = arith.constant 0 : index
    %322 = vector.load %arg15[%c18_288, %c0_289] : memref<49x8xf32, #tpu.memory_space<vmem>>, vector<1x8xf32>
    %323 = arith.truncf %322 : vector<1x8xf32> to vector<1x8xbf16>
    %c0_290 = arith.constant 0 : index
    %c0_291 = arith.constant 0 : index
    %c0_292 = arith.constant 0 : index
    %324 = vector.load %arg5[%c0_290, %c0_291, %c0_292] : memref<9x8x16xbf16, #tpu.memory_space<vmem>>, vector<1x8x16xbf16>
    %325 = vector.shape_cast %324 : vector<1x8x16xbf16> to vector<8x16xbf16>
    %cst_293 = arith.constant dense<0.000000e+00> : vector<1x16xf32>
    %326 = tpu.matmul %323, %325, %cst_293 {dimension_numbers = #tpu.dot_dimension_numbers<[1], [0], [0], [1], [0, 0, 1, 1], [], []>} : vector<1x8xbf16>, vector<8x16xbf16>, vector<1x16xf32> -> vector<1x16xf32>
    %327 = arith.addf %321, %326 : vector<1x16xf32>
    %c19_294 = arith.constant 19 : index
    %c0_295 = arith.constant 0 : index
    %328 = vector.load %arg15[%c19_294, %c0_295] : memref<49x8xf32, #tpu.memory_space<vmem>>, vector<1x8xf32>
    %329 = arith.truncf %328 : vector<1x8xf32> to vector<1x8xbf16>
    %c1_296 = arith.constant 1 : index
    %c0_297 = arith.constant 0 : index
    %c0_298 = arith.constant 0 : index
    %330 = vector.load %arg5[%c1_296, %c0_297, %c0_298] : memref<9x8x16xbf16, #tpu.memory_space<vmem>>, vector<1x8x16xbf16>
    %331 = vector.shape_cast %330 : vector<1x8x16xbf16> to vector<8x16xbf16>
    %cst_299 = arith.constant dense<0.000000e+00> : vector<1x16xf32>
    %332 = tpu.matmul %329, %331, %cst_299 {dimension_numbers = #tpu.dot_dimension_numbers<[1], [0], [0], [1], [0, 0, 1, 1], [], []>} : vector<1x8xbf16>, vector<8x16xbf16>, vector<1x16xf32> -> vector<1x16xf32>
    %333 = arith.addf %327, %332 : vector<1x16xf32>
    %c20_300 = arith.constant 20 : index
    %c0_301 = arith.constant 0 : index
    %334 = vector.load %arg15[%c20_300, %c0_301] : memref<49x8xf32, #tpu.memory_space<vmem>>, vector<1x8xf32>
    %335 = arith.truncf %334 : vector<1x8xf32> to vector<1x8xbf16>
    %c2_302 = arith.constant 2 : index
    %c0_303 = arith.constant 0 : index
    %c0_304 = arith.constant 0 : index
    %336 = vector.load %arg5[%c2_302, %c0_303, %c0_304] : memref<9x8x16xbf16, #tpu.memory_space<vmem>>, vector<1x8x16xbf16>
    %337 = vector.shape_cast %336 : vector<1x8x16xbf16> to vector<8x16xbf16>
    %cst_305 = arith.constant dense<0.000000e+00> : vector<1x16xf32>
    %338 = tpu.matmul %335, %337, %cst_305 {dimension_numbers = #tpu.dot_dimension_numbers<[1], [0], [0], [1], [0, 0, 1, 1], [], []>} : vector<1x8xbf16>, vector<8x16xbf16>, vector<1x16xf32> -> vector<1x16xf32>
    %339 = arith.addf %333, %338 : vector<1x16xf32>
    %c25_306 = arith.constant 25 : index
    %c0_307 = arith.constant 0 : index
    %340 = vector.load %arg15[%c25_306, %c0_307] : memref<49x8xf32, #tpu.memory_space<vmem>>, vector<1x8xf32>
    %341 = arith.truncf %340 : vector<1x8xf32> to vector<1x8xbf16>
    %c3_308 = arith.constant 3 : index
    %c0_309 = arith.constant 0 : index
    %c0_310 = arith.constant 0 : index
    %342 = vector.load %arg5[%c3_308, %c0_309, %c0_310] : memref<9x8x16xbf16, #tpu.memory_space<vmem>>, vector<1x8x16xbf16>
    %343 = vector.shape_cast %342 : vector<1x8x16xbf16> to vector<8x16xbf16>
    %cst_311 = arith.constant dense<0.000000e+00> : vector<1x16xf32>
    %344 = tpu.matmul %341, %343, %cst_311 {dimension_numbers = #tpu.dot_dimension_numbers<[1], [0], [0], [1], [0, 0, 1, 1], [], []>} : vector<1x8xbf16>, vector<8x16xbf16>, vector<1x16xf32> -> vector<1x16xf32>
    %345 = arith.addf %339, %344 : vector<1x16xf32>
    %c26 = arith.constant 26 : index
    %c0_312 = arith.constant 0 : index
    %346 = vector.load %arg15[%c26, %c0_312] : memref<49x8xf32, #tpu.memory_space<vmem>>, vector<1x8xf32>
    %347 = arith.truncf %346 : vector<1x8xf32> to vector<1x8xbf16>
    %c4_313 = arith.constant 4 : index
    %c0_314 = arith.constant 0 : index
    %c0_315 = arith.constant 0 : index
    %348 = vector.load %arg5[%c4_313, %c0_314, %c0_315] : memref<9x8x16xbf16, #tpu.memory_space<vmem>>, vector<1x8x16xbf16>
    %349 = vector.shape_cast %348 : vector<1x8x16xbf16> to vector<8x16xbf16>
    %cst_316 = arith.constant dense<0.000000e+00> : vector<1x16xf32>
    %350 = tpu.matmul %347, %349, %cst_316 {dimension_numbers = #tpu.dot_dimension_numbers<[1], [0], [0], [1], [0, 0, 1, 1], [], []>} : vector<1x8xbf16>, vector<8x16xbf16>, vector<1x16xf32> -> vector<1x16xf32>
    %351 = arith.addf %345, %350 : vector<1x16xf32>
    %c27 = arith.constant 27 : index
    %c0_317 = arith.constant 0 : index
    %352 = vector.load %arg15[%c27, %c0_317] : memref<49x8xf32, #tpu.memory_space<vmem>>, vector<1x8xf32>
    %353 = arith.truncf %352 : vector<1x8xf32> to vector<1x8xbf16>
    %c5_318 = arith.constant 5 : index
    %c0_319 = arith.constant 0 : index
    %c0_320 = arith.constant 0 : index
    %354 = vector.load %arg5[%c5_318, %c0_319, %c0_320] : memref<9x8x16xbf16, #tpu.memory_space<vmem>>, vector<1x8x16xbf16>
    %355 = vector.shape_cast %354 : vector<1x8x16xbf16> to vector<8x16xbf16>
    %cst_321 = arith.constant dense<0.000000e+00> : vector<1x16xf32>
    %356 = tpu.matmul %353, %355, %cst_321 {dimension_numbers = #tpu.dot_dimension_numbers<[1], [0], [0], [1], [0, 0, 1, 1], [], []>} : vector<1x8xbf16>, vector<8x16xbf16>, vector<1x16xf32> -> vector<1x16xf32>
    %357 = arith.addf %351, %356 : vector<1x16xf32>
    %c32_322 = arith.constant 32 : index
    %c0_323 = arith.constant 0 : index
    %358 = vector.load %arg15[%c32_322, %c0_323] : memref<49x8xf32, #tpu.memory_space<vmem>>, vector<1x8xf32>
    %359 = arith.truncf %358 : vector<1x8xf32> to vector<1x8xbf16>
    %c6_324 = arith.constant 6 : index
    %c0_325 = arith.constant 0 : index
    %c0_326 = arith.constant 0 : index
    %360 = vector.load %arg5[%c6_324, %c0_325, %c0_326] : memref<9x8x16xbf16, #tpu.memory_space<vmem>>, vector<1x8x16xbf16>
    %361 = vector.shape_cast %360 : vector<1x8x16xbf16> to vector<8x16xbf16>
    %cst_327 = arith.constant dense<0.000000e+00> : vector<1x16xf32>
    %362 = tpu.matmul %359, %361, %cst_327 {dimension_numbers = #tpu.dot_dimension_numbers<[1], [0], [0], [1], [0, 0, 1, 1], [], []>} : vector<1x8xbf16>, vector<8x16xbf16>, vector<1x16xf32> -> vector<1x16xf32>
    %363 = arith.addf %357, %362 : vector<1x16xf32>
    %c33 = arith.constant 33 : index
    %c0_328 = arith.constant 0 : index
    %364 = vector.load %arg15[%c33, %c0_328] : memref<49x8xf32, #tpu.memory_space<vmem>>, vector<1x8xf32>
    %365 = arith.truncf %364 : vector<1x8xf32> to vector<1x8xbf16>
    %c7_329 = arith.constant 7 : index
    %c0_330 = arith.constant 0 : index
    %c0_331 = arith.constant 0 : index
    %366 = vector.load %arg5[%c7_329, %c0_330, %c0_331] : memref<9x8x16xbf16, #tpu.memory_space<vmem>>, vector<1x8x16xbf16>
    %367 = vector.shape_cast %366 : vector<1x8x16xbf16> to vector<8x16xbf16>
    %cst_332 = arith.constant dense<0.000000e+00> : vector<1x16xf32>
    %368 = tpu.matmul %365, %367, %cst_332 {dimension_numbers = #tpu.dot_dimension_numbers<[1], [0], [0], [1], [0, 0, 1, 1], [], []>} : vector<1x8xbf16>, vector<8x16xbf16>, vector<1x16xf32> -> vector<1x16xf32>
    %369 = arith.addf %363, %368 : vector<1x16xf32>
    %c34 = arith.constant 34 : index
    %c0_333 = arith.constant 0 : index
    %370 = vector.load %arg15[%c34, %c0_333] : memref<49x8xf32, #tpu.memory_space<vmem>>, vector<1x8xf32>
    %371 = arith.truncf %370 : vector<1x8xf32> to vector<1x8xbf16>
    %c8_334 = arith.constant 8 : index
    %c0_335 = arith.constant 0 : index
    %c0_336 = arith.constant 0 : index
    %372 = vector.load %arg5[%c8_334, %c0_335, %c0_336] : memref<9x8x16xbf16, #tpu.memory_space<vmem>>, vector<1x8x16xbf16>
    %373 = vector.shape_cast %372 : vector<1x8x16xbf16> to vector<8x16xbf16>
    %cst_337 = arith.constant dense<0.000000e+00> : vector<1x16xf32>
    %374 = tpu.matmul %371, %373, %cst_337 {dimension_numbers = #tpu.dot_dimension_numbers<[1], [0], [0], [1], [0, 0, 1, 1], [], []>} : vector<1x8xbf16>, vector<8x16xbf16>, vector<1x16xf32> -> vector<1x16xf32>
    %375 = arith.addf %369, %374 : vector<1x16xf32>
    %cst_338 = arith.constant 0.000000e+00 : f32
    %376 = vector.broadcast %cst_338 : f32 to vector<1x16xf32>
    %377 = arith.maximumf %375, %376 : vector<1x16xf32>
    %378 = arith.truncf %377 : vector<1x16xf32> to vector<1x16xbf16>
    %c5_339 = arith.constant 5 : index
    %c0_340 = arith.constant 0 : index
    %c0_341 = arith.constant 0 : index
    %379 = vector.load %arg7[%c5_339, %c0_340, %c0_341] : memref<9x16x128xbf16, #tpu.memory_space<vmem>>, vector<1x16x128xbf16>
    %380 = vector.shape_cast %379 : vector<1x16x128xbf16> to vector<16x128xbf16>
    %cst_342 = arith.constant dense<0.000000e+00> : vector<1x128xf32>
    %381 = tpu.matmul %378, %380, %cst_342 {dimension_numbers = #tpu.dot_dimension_numbers<[1], [0], [0], [1], [0, 0, 1, 1], [], []>} : vector<1x16xbf16>, vector<16x128xbf16>, vector<1x128xf32> -> vector<1x128xf32>
    %382 = arith.addf %320, %381 : vector<1x128xf32>
    %c0_343 = arith.constant 0 : index
    %c0_344 = arith.constant 0 : index
    %383 = vector.load %arg6[%c0_343, %c0_344] : memref<1x16xf32, #tpu.memory_space<vmem>>, vector<1x16xf32>
    %c28_345 = arith.constant 28 : index
    %c0_346 = arith.constant 0 : index
    %384 = vector.load %arg15[%c28_345, %c0_346] : memref<49x8xf32, #tpu.memory_space<vmem>>, vector<1x8xf32>
    %385 = arith.truncf %384 : vector<1x8xf32> to vector<1x8xbf16>
    %c0_347 = arith.constant 0 : index
    %c0_348 = arith.constant 0 : index
    %c0_349 = arith.constant 0 : index
    %386 = vector.load %arg5[%c0_347, %c0_348, %c0_349] : memref<9x8x16xbf16, #tpu.memory_space<vmem>>, vector<1x8x16xbf16>
    %387 = vector.shape_cast %386 : vector<1x8x16xbf16> to vector<8x16xbf16>
    %cst_350 = arith.constant dense<0.000000e+00> : vector<1x16xf32>
    %388 = tpu.matmul %385, %387, %cst_350 {dimension_numbers = #tpu.dot_dimension_numbers<[1], [0], [0], [1], [0, 0, 1, 1], [], []>} : vector<1x8xbf16>, vector<8x16xbf16>, vector<1x16xf32> -> vector<1x16xf32>
    %389 = arith.addf %383, %388 : vector<1x16xf32>
    %c29_351 = arith.constant 29 : index
    %c0_352 = arith.constant 0 : index
    %390 = vector.load %arg15[%c29_351, %c0_352] : memref<49x8xf32, #tpu.memory_space<vmem>>, vector<1x8xf32>
    %391 = arith.truncf %390 : vector<1x8xf32> to vector<1x8xbf16>
    %c1_353 = arith.constant 1 : index
    %c0_354 = arith.constant 0 : index
    %c0_355 = arith.constant 0 : index
    %392 = vector.load %arg5[%c1_353, %c0_354, %c0_355] : memref<9x8x16xbf16, #tpu.memory_space<vmem>>, vector<1x8x16xbf16>
    %393 = vector.shape_cast %392 : vector<1x8x16xbf16> to vector<8x16xbf16>
    %cst_356 = arith.constant dense<0.000000e+00> : vector<1x16xf32>
    %394 = tpu.matmul %391, %393, %cst_356 {dimension_numbers = #tpu.dot_dimension_numbers<[1], [0], [0], [1], [0, 0, 1, 1], [], []>} : vector<1x8xbf16>, vector<8x16xbf16>, vector<1x16xf32> -> vector<1x16xf32>
    %395 = arith.addf %389, %394 : vector<1x16xf32>
    %c30_357 = arith.constant 30 : index
    %c0_358 = arith.constant 0 : index
    %396 = vector.load %arg15[%c30_357, %c0_358] : memref<49x8xf32, #tpu.memory_space<vmem>>, vector<1x8xf32>
    %397 = arith.truncf %396 : vector<1x8xf32> to vector<1x8xbf16>
    %c2_359 = arith.constant 2 : index
    %c0_360 = arith.constant 0 : index
    %c0_361 = arith.constant 0 : index
    %398 = vector.load %arg5[%c2_359, %c0_360, %c0_361] : memref<9x8x16xbf16, #tpu.memory_space<vmem>>, vector<1x8x16xbf16>
    %399 = vector.shape_cast %398 : vector<1x8x16xbf16> to vector<8x16xbf16>
    %cst_362 = arith.constant dense<0.000000e+00> : vector<1x16xf32>
    %400 = tpu.matmul %397, %399, %cst_362 {dimension_numbers = #tpu.dot_dimension_numbers<[1], [0], [0], [1], [0, 0, 1, 1], [], []>} : vector<1x8xbf16>, vector<8x16xbf16>, vector<1x16xf32> -> vector<1x16xf32>
    %401 = arith.addf %395, %400 : vector<1x16xf32>
    %c35 = arith.constant 35 : index
    %c0_363 = arith.constant 0 : index
    %402 = vector.load %arg15[%c35, %c0_363] : memref<49x8xf32, #tpu.memory_space<vmem>>, vector<1x8xf32>
    %403 = arith.truncf %402 : vector<1x8xf32> to vector<1x8xbf16>
    %c3_364 = arith.constant 3 : index
    %c0_365 = arith.constant 0 : index
    %c0_366 = arith.constant 0 : index
    %404 = vector.load %arg5[%c3_364, %c0_365, %c0_366] : memref<9x8x16xbf16, #tpu.memory_space<vmem>>, vector<1x8x16xbf16>
    %405 = vector.shape_cast %404 : vector<1x8x16xbf16> to vector<8x16xbf16>
    %cst_367 = arith.constant dense<0.000000e+00> : vector<1x16xf32>
    %406 = tpu.matmul %403, %405, %cst_367 {dimension_numbers = #tpu.dot_dimension_numbers<[1], [0], [0], [1], [0, 0, 1, 1], [], []>} : vector<1x8xbf16>, vector<8x16xbf16>, vector<1x16xf32> -> vector<1x16xf32>
    %407 = arith.addf %401, %406 : vector<1x16xf32>
    %c36 = arith.constant 36 : index
    %c0_368 = arith.constant 0 : index
    %408 = vector.load %arg15[%c36, %c0_368] : memref<49x8xf32, #tpu.memory_space<vmem>>, vector<1x8xf32>
    %409 = arith.truncf %408 : vector<1x8xf32> to vector<1x8xbf16>
    %c4_369 = arith.constant 4 : index
    %c0_370 = arith.constant 0 : index
    %c0_371 = arith.constant 0 : index
    %410 = vector.load %arg5[%c4_369, %c0_370, %c0_371] : memref<9x8x16xbf16, #tpu.memory_space<vmem>>, vector<1x8x16xbf16>
    %411 = vector.shape_cast %410 : vector<1x8x16xbf16> to vector<8x16xbf16>
    %cst_372 = arith.constant dense<0.000000e+00> : vector<1x16xf32>
    %412 = tpu.matmul %409, %411, %cst_372 {dimension_numbers = #tpu.dot_dimension_numbers<[1], [0], [0], [1], [0, 0, 1, 1], [], []>} : vector<1x8xbf16>, vector<8x16xbf16>, vector<1x16xf32> -> vector<1x16xf32>
    %413 = arith.addf %407, %412 : vector<1x16xf32>
    %c37 = arith.constant 37 : index
    %c0_373 = arith.constant 0 : index
    %414 = vector.load %arg15[%c37, %c0_373] : memref<49x8xf32, #tpu.memory_space<vmem>>, vector<1x8xf32>
    %415 = arith.truncf %414 : vector<1x8xf32> to vector<1x8xbf16>
    %c5_374 = arith.constant 5 : index
    %c0_375 = arith.constant 0 : index
    %c0_376 = arith.constant 0 : index
    %416 = vector.load %arg5[%c5_374, %c0_375, %c0_376] : memref<9x8x16xbf16, #tpu.memory_space<vmem>>, vector<1x8x16xbf16>
    %417 = vector.shape_cast %416 : vector<1x8x16xbf16> to vector<8x16xbf16>
    %cst_377 = arith.constant dense<0.000000e+00> : vector<1x16xf32>
    %418 = tpu.matmul %415, %417, %cst_377 {dimension_numbers = #tpu.dot_dimension_numbers<[1], [0], [0], [1], [0, 0, 1, 1], [], []>} : vector<1x8xbf16>, vector<8x16xbf16>, vector<1x16xf32> -> vector<1x16xf32>
    %419 = arith.addf %413, %418 : vector<1x16xf32>
    %c42 = arith.constant 42 : index
    %c0_378 = arith.constant 0 : index
    %420 = vector.load %arg15[%c42, %c0_378] : memref<49x8xf32, #tpu.memory_space<vmem>>, vector<1x8xf32>
    %421 = arith.truncf %420 : vector<1x8xf32> to vector<1x8xbf16>
    %c6_379 = arith.constant 6 : index
    %c0_380 = arith.constant 0 : index
    %c0_381 = arith.constant 0 : index
    %422 = vector.load %arg5[%c6_379, %c0_380, %c0_381] : memref<9x8x16xbf16, #tpu.memory_space<vmem>>, vector<1x8x16xbf16>
    %423 = vector.shape_cast %422 : vector<1x8x16xbf16> to vector<8x16xbf16>
    %cst_382 = arith.constant dense<0.000000e+00> : vector<1x16xf32>
    %424 = tpu.matmul %421, %423, %cst_382 {dimension_numbers = #tpu.dot_dimension_numbers<[1], [0], [0], [1], [0, 0, 1, 1], [], []>} : vector<1x8xbf16>, vector<8x16xbf16>, vector<1x16xf32> -> vector<1x16xf32>
    %425 = arith.addf %419, %424 : vector<1x16xf32>
    %c43 = arith.constant 43 : index
    %c0_383 = arith.constant 0 : index
    %426 = vector.load %arg15[%c43, %c0_383] : memref<49x8xf32, #tpu.memory_space<vmem>>, vector<1x8xf32>
    %427 = arith.truncf %426 : vector<1x8xf32> to vector<1x8xbf16>
    %c7_384 = arith.constant 7 : index
    %c0_385 = arith.constant 0 : index
    %c0_386 = arith.constant 0 : index
    %428 = vector.load %arg5[%c7_384, %c0_385, %c0_386] : memref<9x8x16xbf16, #tpu.memory_space<vmem>>, vector<1x8x16xbf16>
    %429 = vector.shape_cast %428 : vector<1x8x16xbf16> to vector<8x16xbf16>
    %cst_387 = arith.constant dense<0.000000e+00> : vector<1x16xf32>
    %430 = tpu.matmul %427, %429, %cst_387 {dimension_numbers = #tpu.dot_dimension_numbers<[1], [0], [0], [1], [0, 0, 1, 1], [], []>} : vector<1x8xbf16>, vector<8x16xbf16>, vector<1x16xf32> -> vector<1x16xf32>
    %431 = arith.addf %425, %430 : vector<1x16xf32>
    %c44 = arith.constant 44 : index
    %c0_388 = arith.constant 0 : index
    %432 = vector.load %arg15[%c44, %c0_388] : memref<49x8xf32, #tpu.memory_space<vmem>>, vector<1x8xf32>
    %433 = arith.truncf %432 : vector<1x8xf32> to vector<1x8xbf16>
    %c8_389 = arith.constant 8 : index
    %c0_390 = arith.constant 0 : index
    %c0_391 = arith.constant 0 : index
    %434 = vector.load %arg5[%c8_389, %c0_390, %c0_391] : memref<9x8x16xbf16, #tpu.memory_space<vmem>>, vector<1x8x16xbf16>
    %435 = vector.shape_cast %434 : vector<1x8x16xbf16> to vector<8x16xbf16>
    %cst_392 = arith.constant dense<0.000000e+00> : vector<1x16xf32>
    %436 = tpu.matmul %433, %435, %cst_392 {dimension_numbers = #tpu.dot_dimension_numbers<[1], [0], [0], [1], [0, 0, 1, 1], [], []>} : vector<1x8xbf16>, vector<8x16xbf16>, vector<1x16xf32> -> vector<1x16xf32>
    %437 = arith.addf %431, %436 : vector<1x16xf32>
    %cst_393 = arith.constant 0.000000e+00 : f32
    %438 = vector.broadcast %cst_393 : f32 to vector<1x16xf32>
    %439 = arith.maximumf %437, %438 : vector<1x16xf32>
    %440 = arith.truncf %439 : vector<1x16xf32> to vector<1x16xbf16>
    %c6_394 = arith.constant 6 : index
    %c0_395 = arith.constant 0 : index
    %c0_396 = arith.constant 0 : index
    %441 = vector.load %arg7[%c6_394, %c0_395, %c0_396] : memref<9x16x128xbf16, #tpu.memory_space<vmem>>, vector<1x16x128xbf16>
    %442 = vector.shape_cast %441 : vector<1x16x128xbf16> to vector<16x128xbf16>
    %cst_397 = arith.constant dense<0.000000e+00> : vector<1x128xf32>
    %443 = tpu.matmul %440, %442, %cst_397 {dimension_numbers = #tpu.dot_dimension_numbers<[1], [0], [0], [1], [0, 0, 1, 1], [], []>} : vector<1x16xbf16>, vector<16x128xbf16>, vector<1x128xf32> -> vector<1x128xf32>
    %444 = arith.addf %382, %443 : vector<1x128xf32>
    %c0_398 = arith.constant 0 : index
    %c0_399 = arith.constant 0 : index
    %445 = vector.load %arg6[%c0_398, %c0_399] : memref<1x16xf32, #tpu.memory_space<vmem>>, vector<1x16xf32>
    %c30_400 = arith.constant 30 : index
    %c0_401 = arith.constant 0 : index
    %446 = vector.load %arg15[%c30_400, %c0_401] : memref<49x8xf32, #tpu.memory_space<vmem>>, vector<1x8xf32>
    %447 = arith.truncf %446 : vector<1x8xf32> to vector<1x8xbf16>
    %c0_402 = arith.constant 0 : index
    %c0_403 = arith.constant 0 : index
    %c0_404 = arith.constant 0 : index
    %448 = vector.load %arg5[%c0_402, %c0_403, %c0_404] : memref<9x8x16xbf16, #tpu.memory_space<vmem>>, vector<1x8x16xbf16>
    %449 = vector.shape_cast %448 : vector<1x8x16xbf16> to vector<8x16xbf16>
    %cst_405 = arith.constant dense<0.000000e+00> : vector<1x16xf32>
    %450 = tpu.matmul %447, %449, %cst_405 {dimension_numbers = #tpu.dot_dimension_numbers<[1], [0], [0], [1], [0, 0, 1, 1], [], []>} : vector<1x8xbf16>, vector<8x16xbf16>, vector<1x16xf32> -> vector<1x16xf32>
    %451 = arith.addf %445, %450 : vector<1x16xf32>
    %c31_406 = arith.constant 31 : index
    %c0_407 = arith.constant 0 : index
    %452 = vector.load %arg15[%c31_406, %c0_407] : memref<49x8xf32, #tpu.memory_space<vmem>>, vector<1x8xf32>
    %453 = arith.truncf %452 : vector<1x8xf32> to vector<1x8xbf16>
    %c1_408 = arith.constant 1 : index
    %c0_409 = arith.constant 0 : index
    %c0_410 = arith.constant 0 : index
    %454 = vector.load %arg5[%c1_408, %c0_409, %c0_410] : memref<9x8x16xbf16, #tpu.memory_space<vmem>>, vector<1x8x16xbf16>
    %455 = vector.shape_cast %454 : vector<1x8x16xbf16> to vector<8x16xbf16>
    %cst_411 = arith.constant dense<0.000000e+00> : vector<1x16xf32>
    %456 = tpu.matmul %453, %455, %cst_411 {dimension_numbers = #tpu.dot_dimension_numbers<[1], [0], [0], [1], [0, 0, 1, 1], [], []>} : vector<1x8xbf16>, vector<8x16xbf16>, vector<1x16xf32> -> vector<1x16xf32>
    %457 = arith.addf %451, %456 : vector<1x16xf32>
    %c32_412 = arith.constant 32 : index
    %c0_413 = arith.constant 0 : index
    %458 = vector.load %arg15[%c32_412, %c0_413] : memref<49x8xf32, #tpu.memory_space<vmem>>, vector<1x8xf32>
    %459 = arith.truncf %458 : vector<1x8xf32> to vector<1x8xbf16>
    %c2_414 = arith.constant 2 : index
    %c0_415 = arith.constant 0 : index
    %c0_416 = arith.constant 0 : index
    %460 = vector.load %arg5[%c2_414, %c0_415, %c0_416] : memref<9x8x16xbf16, #tpu.memory_space<vmem>>, vector<1x8x16xbf16>
    %461 = vector.shape_cast %460 : vector<1x8x16xbf16> to vector<8x16xbf16>
    %cst_417 = arith.constant dense<0.000000e+00> : vector<1x16xf32>
    %462 = tpu.matmul %459, %461, %cst_417 {dimension_numbers = #tpu.dot_dimension_numbers<[1], [0], [0], [1], [0, 0, 1, 1], [], []>} : vector<1x8xbf16>, vector<8x16xbf16>, vector<1x16xf32> -> vector<1x16xf32>
    %463 = arith.addf %457, %462 : vector<1x16xf32>
    %c37_418 = arith.constant 37 : index
    %c0_419 = arith.constant 0 : index
    %464 = vector.load %arg15[%c37_418, %c0_419] : memref<49x8xf32, #tpu.memory_space<vmem>>, vector<1x8xf32>
    %465 = arith.truncf %464 : vector<1x8xf32> to vector<1x8xbf16>
    %c3_420 = arith.constant 3 : index
    %c0_421 = arith.constant 0 : index
    %c0_422 = arith.constant 0 : index
    %466 = vector.load %arg5[%c3_420, %c0_421, %c0_422] : memref<9x8x16xbf16, #tpu.memory_space<vmem>>, vector<1x8x16xbf16>
    %467 = vector.shape_cast %466 : vector<1x8x16xbf16> to vector<8x16xbf16>
    %cst_423 = arith.constant dense<0.000000e+00> : vector<1x16xf32>
    %468 = tpu.matmul %465, %467, %cst_423 {dimension_numbers = #tpu.dot_dimension_numbers<[1], [0], [0], [1], [0, 0, 1, 1], [], []>} : vector<1x8xbf16>, vector<8x16xbf16>, vector<1x16xf32> -> vector<1x16xf32>
    %469 = arith.addf %463, %468 : vector<1x16xf32>
    %c38 = arith.constant 38 : index
    %c0_424 = arith.constant 0 : index
    %470 = vector.load %arg15[%c38, %c0_424] : memref<49x8xf32, #tpu.memory_space<vmem>>, vector<1x8xf32>
    %471 = arith.truncf %470 : vector<1x8xf32> to vector<1x8xbf16>
    %c4_425 = arith.constant 4 : index
    %c0_426 = arith.constant 0 : index
    %c0_427 = arith.constant 0 : index
    %472 = vector.load %arg5[%c4_425, %c0_426, %c0_427] : memref<9x8x16xbf16, #tpu.memory_space<vmem>>, vector<1x8x16xbf16>
    %473 = vector.shape_cast %472 : vector<1x8x16xbf16> to vector<8x16xbf16>
    %cst_428 = arith.constant dense<0.000000e+00> : vector<1x16xf32>
    %474 = tpu.matmul %471, %473, %cst_428 {dimension_numbers = #tpu.dot_dimension_numbers<[1], [0], [0], [1], [0, 0, 1, 1], [], []>} : vector<1x8xbf16>, vector<8x16xbf16>, vector<1x16xf32> -> vector<1x16xf32>
    %475 = arith.addf %469, %474 : vector<1x16xf32>
    %c39 = arith.constant 39 : index
    %c0_429 = arith.constant 0 : index
    %476 = vector.load %arg15[%c39, %c0_429] : memref<49x8xf32, #tpu.memory_space<vmem>>, vector<1x8xf32>
    %477 = arith.truncf %476 : vector<1x8xf32> to vector<1x8xbf16>
    %c5_430 = arith.constant 5 : index
    %c0_431 = arith.constant 0 : index
    %c0_432 = arith.constant 0 : index
    %478 = vector.load %arg5[%c5_430, %c0_431, %c0_432] : memref<9x8x16xbf16, #tpu.memory_space<vmem>>, vector<1x8x16xbf16>
    %479 = vector.shape_cast %478 : vector<1x8x16xbf16> to vector<8x16xbf16>
    %cst_433 = arith.constant dense<0.000000e+00> : vector<1x16xf32>
    %480 = tpu.matmul %477, %479, %cst_433 {dimension_numbers = #tpu.dot_dimension_numbers<[1], [0], [0], [1], [0, 0, 1, 1], [], []>} : vector<1x8xbf16>, vector<8x16xbf16>, vector<1x16xf32> -> vector<1x16xf32>
    %481 = arith.addf %475, %480 : vector<1x16xf32>
    %c44_434 = arith.constant 44 : index
    %c0_435 = arith.constant 0 : index
    %482 = vector.load %arg15[%c44_434, %c0_435] : memref<49x8xf32, #tpu.memory_space<vmem>>, vector<1x8xf32>
    %483 = arith.truncf %482 : vector<1x8xf32> to vector<1x8xbf16>
    %c6_436 = arith.constant 6 : index
    %c0_437 = arith.constant 0 : index
    %c0_438 = arith.constant 0 : index
    %484 = vector.load %arg5[%c6_436, %c0_437, %c0_438] : memref<9x8x16xbf16, #tpu.memory_space<vmem>>, vector<1x8x16xbf16>
    %485 = vector.shape_cast %484 : vector<1x8x16xbf16> to vector<8x16xbf16>
    %cst_439 = arith.constant dense<0.000000e+00> : vector<1x16xf32>
    %486 = tpu.matmul %483, %485, %cst_439 {dimension_numbers = #tpu.dot_dimension_numbers<[1], [0], [0], [1], [0, 0, 1, 1], [], []>} : vector<1x8xbf16>, vector<8x16xbf16>, vector<1x16xf32> -> vector<1x16xf32>
    %487 = arith.addf %481, %486 : vector<1x16xf32>
    %c45 = arith.constant 45 : index
    %c0_440 = arith.constant 0 : index
    %488 = vector.load %arg15[%c45, %c0_440] : memref<49x8xf32, #tpu.memory_space<vmem>>, vector<1x8xf32>
    %489 = arith.truncf %488 : vector<1x8xf32> to vector<1x8xbf16>
    %c7_441 = arith.constant 7 : index
    %c0_442 = arith.constant 0 : index
    %c0_443 = arith.constant 0 : index
    %490 = vector.load %arg5[%c7_441, %c0_442, %c0_443] : memref<9x8x16xbf16, #tpu.memory_space<vmem>>, vector<1x8x16xbf16>
    %491 = vector.shape_cast %490 : vector<1x8x16xbf16> to vector<8x16xbf16>
    %cst_444 = arith.constant dense<0.000000e+00> : vector<1x16xf32>
    %492 = tpu.matmul %489, %491, %cst_444 {dimension_numbers = #tpu.dot_dimension_numbers<[1], [0], [0], [1], [0, 0, 1, 1], [], []>} : vector<1x8xbf16>, vector<8x16xbf16>, vector<1x16xf32> -> vector<1x16xf32>
    %493 = arith.addf %487, %492 : vector<1x16xf32>
    %c46 = arith.constant 46 : index
    %c0_445 = arith.constant 0 : index
    %494 = vector.load %arg15[%c46, %c0_445] : memref<49x8xf32, #tpu.memory_space<vmem>>, vector<1x8xf32>
    %495 = arith.truncf %494 : vector<1x8xf32> to vector<1x8xbf16>
    %c8_446 = arith.constant 8 : index
    %c0_447 = arith.constant 0 : index
    %c0_448 = arith.constant 0 : index
    %496 = vector.load %arg5[%c8_446, %c0_447, %c0_448] : memref<9x8x16xbf16, #tpu.memory_space<vmem>>, vector<1x8x16xbf16>
    %497 = vector.shape_cast %496 : vector<1x8x16xbf16> to vector<8x16xbf16>
    %cst_449 = arith.constant dense<0.000000e+00> : vector<1x16xf32>
    %498 = tpu.matmul %495, %497, %cst_449 {dimension_numbers = #tpu.dot_dimension_numbers<[1], [0], [0], [1], [0, 0, 1, 1], [], []>} : vector<1x8xbf16>, vector<8x16xbf16>, vector<1x16xf32> -> vector<1x16xf32>
    %499 = arith.addf %493, %498 : vector<1x16xf32>
    %cst_450 = arith.constant 0.000000e+00 : f32
    %500 = vector.broadcast %cst_450 : f32 to vector<1x16xf32>
    %501 = arith.maximumf %499, %500 : vector<1x16xf32>
    %502 = arith.truncf %501 : vector<1x16xf32> to vector<1x16xbf16>
    %c7_451 = arith.constant 7 : index
    %c0_452 = arith.constant 0 : index
    %c0_453 = arith.constant 0 : index
    %503 = vector.load %arg7[%c7_451, %c0_452, %c0_453] : memref<9x16x128xbf16, #tpu.memory_space<vmem>>, vector<1x16x128xbf16>
    %504 = vector.shape_cast %503 : vector<1x16x128xbf16> to vector<16x128xbf16>
    %cst_454 = arith.constant dense<0.000000e+00> : vector<1x128xf32>
    %505 = tpu.matmul %502, %504, %cst_454 {dimension_numbers = #tpu.dot_dimension_numbers<[1], [0], [0], [1], [0, 0, 1, 1], [], []>} : vector<1x16xbf16>, vector<16x128xbf16>, vector<1x128xf32> -> vector<1x128xf32>
    %506 = arith.addf %444, %505 : vector<1x128xf32>
    %c0_455 = arith.constant 0 : index
    %c0_456 = arith.constant 0 : index
    %507 = vector.load %arg6[%c0_455, %c0_456] : memref<1x16xf32, #tpu.memory_space<vmem>>, vector<1x16xf32>
    %c32_457 = arith.constant 32 : index
    %c0_458 = arith.constant 0 : index
    %508 = vector.load %arg15[%c32_457, %c0_458] : memref<49x8xf32, #tpu.memory_space<vmem>>, vector<1x8xf32>
    %509 = arith.truncf %508 : vector<1x8xf32> to vector<1x8xbf16>
    %c0_459 = arith.constant 0 : index
    %c0_460 = arith.constant 0 : index
    %c0_461 = arith.constant 0 : index
    %510 = vector.load %arg5[%c0_459, %c0_460, %c0_461] : memref<9x8x16xbf16, #tpu.memory_space<vmem>>, vector<1x8x16xbf16>
    %511 = vector.shape_cast %510 : vector<1x8x16xbf16> to vector<8x16xbf16>
    %cst_462 = arith.constant dense<0.000000e+00> : vector<1x16xf32>
    %512 = tpu.matmul %509, %511, %cst_462 {dimension_numbers = #tpu.dot_dimension_numbers<[1], [0], [0], [1], [0, 0, 1, 1], [], []>} : vector<1x8xbf16>, vector<8x16xbf16>, vector<1x16xf32> -> vector<1x16xf32>
    %513 = arith.addf %507, %512 : vector<1x16xf32>
    %c33_463 = arith.constant 33 : index
    %c0_464 = arith.constant 0 : index
    %514 = vector.load %arg15[%c33_463, %c0_464] : memref<49x8xf32, #tpu.memory_space<vmem>>, vector<1x8xf32>
    %515 = arith.truncf %514 : vector<1x8xf32> to vector<1x8xbf16>
    %c1_465 = arith.constant 1 : index
    %c0_466 = arith.constant 0 : index
    %c0_467 = arith.constant 0 : index
    %516 = vector.load %arg5[%c1_465, %c0_466, %c0_467] : memref<9x8x16xbf16, #tpu.memory_space<vmem>>, vector<1x8x16xbf16>
    %517 = vector.shape_cast %516 : vector<1x8x16xbf16> to vector<8x16xbf16>
    %cst_468 = arith.constant dense<0.000000e+00> : vector<1x16xf32>
    %518 = tpu.matmul %515, %517, %cst_468 {dimension_numbers = #tpu.dot_dimension_numbers<[1], [0], [0], [1], [0, 0, 1, 1], [], []>} : vector<1x8xbf16>, vector<8x16xbf16>, vector<1x16xf32> -> vector<1x16xf32>
    %519 = arith.addf %513, %518 : vector<1x16xf32>
    %c34_469 = arith.constant 34 : index
    %c0_470 = arith.constant 0 : index
    %520 = vector.load %arg15[%c34_469, %c0_470] : memref<49x8xf32, #tpu.memory_space<vmem>>, vector<1x8xf32>
    %521 = arith.truncf %520 : vector<1x8xf32> to vector<1x8xbf16>
    %c2_471 = arith.constant 2 : index
    %c0_472 = arith.constant 0 : index
    %c0_473 = arith.constant 0 : index
    %522 = vector.load %arg5[%c2_471, %c0_472, %c0_473] : memref<9x8x16xbf16, #tpu.memory_space<vmem>>, vector<1x8x16xbf16>
    %523 = vector.shape_cast %522 : vector<1x8x16xbf16> to vector<8x16xbf16>
    %cst_474 = arith.constant dense<0.000000e+00> : vector<1x16xf32>
    %524 = tpu.matmul %521, %523, %cst_474 {dimension_numbers = #tpu.dot_dimension_numbers<[1], [0], [0], [1], [0, 0, 1, 1], [], []>} : vector<1x8xbf16>, vector<8x16xbf16>, vector<1x16xf32> -> vector<1x16xf32>
    %525 = arith.addf %519, %524 : vector<1x16xf32>
    %c39_475 = arith.constant 39 : index
    %c0_476 = arith.constant 0 : index
    %526 = vector.load %arg15[%c39_475, %c0_476] : memref<49x8xf32, #tpu.memory_space<vmem>>, vector<1x8xf32>
    %527 = arith.truncf %526 : vector<1x8xf32> to vector<1x8xbf16>
    %c3_477 = arith.constant 3 : index
    %c0_478 = arith.constant 0 : index
    %c0_479 = arith.constant 0 : index
    %528 = vector.load %arg5[%c3_477, %c0_478, %c0_479] : memref<9x8x16xbf16, #tpu.memory_space<vmem>>, vector<1x8x16xbf16>
    %529 = vector.shape_cast %528 : vector<1x8x16xbf16> to vector<8x16xbf16>
    %cst_480 = arith.constant dense<0.000000e+00> : vector<1x16xf32>
    %530 = tpu.matmul %527, %529, %cst_480 {dimension_numbers = #tpu.dot_dimension_numbers<[1], [0], [0], [1], [0, 0, 1, 1], [], []>} : vector<1x8xbf16>, vector<8x16xbf16>, vector<1x16xf32> -> vector<1x16xf32>
    %531 = arith.addf %525, %530 : vector<1x16xf32>
    %c40 = arith.constant 40 : index
    %c0_481 = arith.constant 0 : index
    %532 = vector.load %arg15[%c40, %c0_481] : memref<49x8xf32, #tpu.memory_space<vmem>>, vector<1x8xf32>
    %533 = arith.truncf %532 : vector<1x8xf32> to vector<1x8xbf16>
    %c4_482 = arith.constant 4 : index
    %c0_483 = arith.constant 0 : index
    %c0_484 = arith.constant 0 : index
    %534 = vector.load %arg5[%c4_482, %c0_483, %c0_484] : memref<9x8x16xbf16, #tpu.memory_space<vmem>>, vector<1x8x16xbf16>
    %535 = vector.shape_cast %534 : vector<1x8x16xbf16> to vector<8x16xbf16>
    %cst_485 = arith.constant dense<0.000000e+00> : vector<1x16xf32>
    %536 = tpu.matmul %533, %535, %cst_485 {dimension_numbers = #tpu.dot_dimension_numbers<[1], [0], [0], [1], [0, 0, 1, 1], [], []>} : vector<1x8xbf16>, vector<8x16xbf16>, vector<1x16xf32> -> vector<1x16xf32>
    %537 = arith.addf %531, %536 : vector<1x16xf32>
    %c41 = arith.constant 41 : index
    %c0_486 = arith.constant 0 : index
    %538 = vector.load %arg15[%c41, %c0_486] : memref<49x8xf32, #tpu.memory_space<vmem>>, vector<1x8xf32>
    %539 = arith.truncf %538 : vector<1x8xf32> to vector<1x8xbf16>
    %c5_487 = arith.constant 5 : index
    %c0_488 = arith.constant 0 : index
    %c0_489 = arith.constant 0 : index
    %540 = vector.load %arg5[%c5_487, %c0_488, %c0_489] : memref<9x8x16xbf16, #tpu.memory_space<vmem>>, vector<1x8x16xbf16>
    %541 = vector.shape_cast %540 : vector<1x8x16xbf16> to vector<8x16xbf16>
    %cst_490 = arith.constant dense<0.000000e+00> : vector<1x16xf32>
    %542 = tpu.matmul %539, %541, %cst_490 {dimension_numbers = #tpu.dot_dimension_numbers<[1], [0], [0], [1], [0, 0, 1, 1], [], []>} : vector<1x8xbf16>, vector<8x16xbf16>, vector<1x16xf32> -> vector<1x16xf32>
    %543 = arith.addf %537, %542 : vector<1x16xf32>
    %c46_491 = arith.constant 46 : index
    %c0_492 = arith.constant 0 : index
    %544 = vector.load %arg15[%c46_491, %c0_492] : memref<49x8xf32, #tpu.memory_space<vmem>>, vector<1x8xf32>
    %545 = arith.truncf %544 : vector<1x8xf32> to vector<1x8xbf16>
    %c6_493 = arith.constant 6 : index
    %c0_494 = arith.constant 0 : index
    %c0_495 = arith.constant 0 : index
    %546 = vector.load %arg5[%c6_493, %c0_494, %c0_495] : memref<9x8x16xbf16, #tpu.memory_space<vmem>>, vector<1x8x16xbf16>
    %547 = vector.shape_cast %546 : vector<1x8x16xbf16> to vector<8x16xbf16>
    %cst_496 = arith.constant dense<0.000000e+00> : vector<1x16xf32>
    %548 = tpu.matmul %545, %547, %cst_496 {dimension_numbers = #tpu.dot_dimension_numbers<[1], [0], [0], [1], [0, 0, 1, 1], [], []>} : vector<1x8xbf16>, vector<8x16xbf16>, vector<1x16xf32> -> vector<1x16xf32>
    %549 = arith.addf %543, %548 : vector<1x16xf32>
    %c47 = arith.constant 47 : index
    %c0_497 = arith.constant 0 : index
    %550 = vector.load %arg15[%c47, %c0_497] : memref<49x8xf32, #tpu.memory_space<vmem>>, vector<1x8xf32>
    %551 = arith.truncf %550 : vector<1x8xf32> to vector<1x8xbf16>
    %c7_498 = arith.constant 7 : index
    %c0_499 = arith.constant 0 : index
    %c0_500 = arith.constant 0 : index
    %552 = vector.load %arg5[%c7_498, %c0_499, %c0_500] : memref<9x8x16xbf16, #tpu.memory_space<vmem>>, vector<1x8x16xbf16>
    %553 = vector.shape_cast %552 : vector<1x8x16xbf16> to vector<8x16xbf16>
    %cst_501 = arith.constant dense<0.000000e+00> : vector<1x16xf32>
    %554 = tpu.matmul %551, %553, %cst_501 {dimension_numbers = #tpu.dot_dimension_numbers<[1], [0], [0], [1], [0, 0, 1, 1], [], []>} : vector<1x8xbf16>, vector<8x16xbf16>, vector<1x16xf32> -> vector<1x16xf32>
    %555 = arith.addf %549, %554 : vector<1x16xf32>
    %c48 = arith.constant 48 : index
    %c0_502 = arith.constant 0 : index
    %556 = vector.load %arg15[%c48, %c0_502] : memref<49x8xf32, #tpu.memory_space<vmem>>, vector<1x8xf32>
    %557 = arith.truncf %556 : vector<1x8xf32> to vector<1x8xbf16>
    %c8_503 = arith.constant 8 : index
    %c0_504 = arith.constant 0 : index
    %c0_505 = arith.constant 0 : index
    %558 = vector.load %arg5[%c8_503, %c0_504, %c0_505] : memref<9x8x16xbf16, #tpu.memory_space<vmem>>, vector<1x8x16xbf16>
    %559 = vector.shape_cast %558 : vector<1x8x16xbf16> to vector<8x16xbf16>
    %cst_506 = arith.constant dense<0.000000e+00> : vector<1x16xf32>
    %560 = tpu.matmul %557, %559, %cst_506 {dimension_numbers = #tpu.dot_dimension_numbers<[1], [0], [0], [1], [0, 0, 1, 1], [], []>} : vector<1x8xbf16>, vector<8x16xbf16>, vector<1x16xf32> -> vector<1x16xf32>
    %561 = arith.addf %555, %560 : vector<1x16xf32>
    %cst_507 = arith.constant 0.000000e+00 : f32
    %562 = vector.broadcast %cst_507 : f32 to vector<1x16xf32>
    %563 = arith.maximumf %561, %562 : vector<1x16xf32>
    %564 = arith.truncf %563 : vector<1x16xf32> to vector<1x16xbf16>
    %c8_508 = arith.constant 8 : index
    %c0_509 = arith.constant 0 : index
    %c0_510 = arith.constant 0 : index
    %565 = vector.load %arg7[%c8_508, %c0_509, %c0_510] : memref<9x16x128xbf16, #tpu.memory_space<vmem>>, vector<1x16x128xbf16>
    %566 = vector.shape_cast %565 : vector<1x16x128xbf16> to vector<16x128xbf16>
    %cst_511 = arith.constant dense<0.000000e+00> : vector<1x128xf32>
    %567 = tpu.matmul %564, %566, %cst_511 {dimension_numbers = #tpu.dot_dimension_numbers<[1], [0], [0], [1], [0, 0, 1, 1], [], []>} : vector<1x16xbf16>, vector<16x128xbf16>, vector<1x128xf32> -> vector<1x128xf32>
    %568 = arith.addf %506, %567 : vector<1x128xf32>
    %cst_512 = arith.constant 0.000000e+00 : f32
    %569 = vector.broadcast %cst_512 : f32 to vector<1x128xf32>
    %570 = arith.maximumf %568, %569 : vector<1x128xf32>
    %571 = arith.truncf %570 : vector<1x128xf32> to vector<1x128xbf16>
    %c0_513 = arith.constant 0 : index
    %c0_514 = arith.constant 0 : index
    %572 = vector.load %arg9[%c0_513, %c0_514] : memref<128x64xbf16, #tpu.memory_space<vmem>>, vector<128x64xbf16>
    %cst_515 = arith.constant dense<0.000000e+00> : vector<1x64xf32>
    %573 = tpu.matmul %571, %572, %cst_515 {dimension_numbers = #tpu.dot_dimension_numbers<[1], [0], [0], [1], [0, 0, 1, 1], [], []>} : vector<1x128xbf16>, vector<128x64xbf16>, vector<1x64xf32> -> vector<1x64xf32>
    %c0_516 = arith.constant 0 : index
    %c0_517 = arith.constant 0 : index
    %c0_518 = arith.constant 0 : index
    %574 = vector.load %arg2[%c0_516, %c0_517, %c0_518] : memref<1x1x8xf32, #tpu.memory_space<vmem>>, vector<1x1x8xf32>
    %575 = vector.shape_cast %574 : vector<1x1x8xf32> to vector<1x8xf32>
    %576 = arith.truncf %575 : vector<1x8xf32> to vector<1x8xbf16>
    %c0_519 = arith.constant 0 : index
    %c0_520 = arith.constant 0 : index
    %577 = vector.load %arg10[%c0_519, %c0_520] : memref<8x64xbf16, #tpu.memory_space<vmem>>, vector<8x64xbf16>
    %cst_521 = arith.constant dense<0.000000e+00> : vector<1x64xf32>
    %578 = tpu.matmul %576, %577, %cst_521 {dimension_numbers = #tpu.dot_dimension_numbers<[1], [0], [0], [1], [0, 0, 1, 1], [], []>} : vector<1x8xbf16>, vector<8x64xbf16>, vector<1x64xf32> -> vector<1x64xf32>
    %579 = arith.addf %573, %578 : vector<1x64xf32>
    %c0_522 = arith.constant 0 : index
    %c0_523 = arith.constant 0 : index
    %580 = vector.load %arg11[%c0_522, %c0_523] : memref<1x64xf32, #tpu.memory_space<vmem>>, vector<1x64xf32>
    %581 = arith.addf %579, %580 : vector<1x64xf32>
    %cst_524 = arith.constant 0.000000e+00 : f32
    %582 = vector.broadcast %cst_524 : f32 to vector<1x64xf32>
    %583 = arith.maximumf %581, %582 : vector<1x64xf32>
    %c0_525 = arith.constant 0 : index
    %c0_526 = arith.constant 0 : index
    %584 = vector.load %arg12[%c0_525, %c0_526] : memref<1x64xf32, #tpu.memory_space<vmem>>, vector<1x64xf32>
    %585 = arith.mulf %583, %584 : vector<1x64xf32>
    %cst_527 = arith.constant dense<0.000000e+00> : vector<1xf32>
    %586 = vector.multi_reduction <add>, %585, %cst_527 [1] : vector<1x64xf32> to vector<1xf32>
    %587 = vector.shape_cast %586 : vector<1xf32> to vector<1x1xf32>
    %c0_528 = arith.constant 0 : index
    %c0_529 = arith.constant 0 : index
    %588 = vector.load %arg13[%c0_528, %c0_529] : memref<1x1xf32, #tpu.memory_space<vmem>>, vector<1x1xf32>
    %589 = arith.addf %587, %588 : vector<1x1xf32>
    %590 = arith.negf %589 : vector<1x1xf32>
    %591 = math.exp %590 : vector<1x1xf32>
    %cst_530 = arith.constant 1.000000e+00 : f32
    %592 = vector.broadcast %cst_530 : f32 to vector<1x1xf32>
    %593 = arith.addf %592, %591 : vector<1x1xf32>
    %594 = arith.divf %592, %593 : vector<1x1xf32>
    %c0_531 = arith.constant 0 : index
    %c0_532 = arith.constant 0 : index
    %c0_533 = arith.constant 0 : index
    %595 = vector.load %arg14[%c0_531, %c0_532, %c0_533] : memref<1x1x1xf32, #tpu.memory_space<vmem>>, vector<1x1x1xf32>
    %596 = vector.shape_cast %595 : vector<1x1x1xf32> to vector<1x1xf32>
    %597 = vector.shape_cast %594 : vector<1x1xf32> to vector<1x1x1xf32>
    tpu.vector_store %arg14[%c0_531, %c0_532, %c0_533], %597 {strides = array<i32>} : memref<1x1x1xf32, #tpu.memory_space<vmem>>, vector<1x1x1xf32>,
    return
  }
  func.func @transform_0(%arg0: i32) -> (i32, i32, i32) {
    %c0_i32 = arith.constant 0 : i32
    %c0_i32_0 = arith.constant 0 : i32
    %c0_i32_1 = arith.constant 0 : i32
    return %arg0, %c0_i32, %c0_i32_0 : i32, i32, i32
  }
  func.func @transform_1(%arg0: i32) -> (i32, i32, i32) {
    %c0_i32 = arith.constant 0 : i32
    %c0_i32_0 = arith.constant 0 : i32
    %c0_i32_1 = arith.constant 0 : i32
    return %arg0, %c0_i32, %c0_i32_0 : i32, i32, i32
  }
  func.func @transform_2(%arg0: i32) -> (i32, i32) {
    %c0_i32 = arith.constant 0 : i32
    %c0_i32_0 = arith.constant 0 : i32
    %c0_i32_1 = arith.constant 0 : i32
    return %c0_i32, %c0_i32_0 : i32, i32
  }
  func.func @transform_3(%arg0: i32) -> (i32, i32) {
    %c0_i32 = arith.constant 0 : i32
    %c0_i32_0 = arith.constant 0 : i32
    %c0_i32_1 = arith.constant 0 : i32
    return %c0_i32, %c0_i32_0 : i32, i32
  }
  func.func @transform_4(%arg0: i32) -> (i32, i32, i32) {
    %c0_i32 = arith.constant 0 : i32
    %c0_i32_0 = arith.constant 0 : i32
    %c0_i32_1 = arith.constant 0 : i32
    %c0_i32_2 = arith.constant 0 : i32
    return %c0_i32, %c0_i32_0, %c0_i32_1 : i32, i32, i32
  }
  func.func @transform_5(%arg0: i32) -> (i32, i32) {
    %c0_i32 = arith.constant 0 : i32
    %c0_i32_0 = arith.constant 0 : i32
    %c0_i32_1 = arith.constant 0 : i32
    return %c0_i32, %c0_i32_0 : i32, i32
  }
  func.func @transform_6(%arg0: i32) -> (i32, i32, i32) {
    %c0_i32 = arith.constant 0 : i32
    %c0_i32_0 = arith.constant 0 : i32
    %c0_i32_1 = arith.constant 0 : i32
    %c0_i32_2 = arith.constant 0 : i32
    return %c0_i32, %c0_i32_0, %c0_i32_1 : i32, i32, i32
  }
  func.func @transform_7(%arg0: i32) -> (i32, i32) {
    %c0_i32 = arith.constant 0 : i32
    %c0_i32_0 = arith.constant 0 : i32
    %c0_i32_1 = arith.constant 0 : i32
    return %c0_i32, %c0_i32_0 : i32, i32
  }
  func.func @transform_8(%arg0: i32) -> (i32, i32) {
    %c0_i32 = arith.constant 0 : i32
    %c0_i32_0 = arith.constant 0 : i32
    %c0_i32_1 = arith.constant 0 : i32
    return %c0_i32, %c0_i32_0 : i32, i32
  }
  func.func @transform_9(%arg0: i32) -> (i32, i32) {
    %c0_i32 = arith.constant 0 : i32
    %c0_i32_0 = arith.constant 0 : i32
    %c0_i32_1 = arith.constant 0 : i32
    return %c0_i32, %c0_i32_0 : i32, i32
  }
  func.func @transform_10(%arg0: i32) -> (i32, i32) {
    %c0_i32 = arith.constant 0 : i32
    %c0_i32_0 = arith.constant 0 : i32
    %c0_i32_1 = arith.constant 0 : i32
    return %c0_i32, %c0_i32_0 : i32, i32
  }
  func.func @transform_11(%arg0: i32) -> (i32, i32) {
    %c0_i32 = arith.constant 0 : i32
    %c0_i32_0 = arith.constant 0 : i32
    %c0_i32_1 = arith.constant 0 : i32
    return %c0_i32, %c0_i32_0 : i32, i32
  }
  func.func @transform_12(%arg0: i32) -> (i32, i32) {
    %c0_i32 = arith.constant 0 : i32
    %c0_i32_0 = arith.constant 0 : i32
    %c0_i32_1 = arith.constant 0 : i32
    return %c0_i32, %c0_i32_0 : i32, i32
  }
  func.func @transform_13(%arg0: i32) -> (i32, i32, i32) {
    %c0_i32 = arith.constant 0 : i32
    %c0_i32_0 = arith.constant 0 : i32
    %c0_i32_1 = arith.constant 0 : i32
    return %arg0, %c0_i32, %c0_i32_0 : i32, i32, i32
  }
}

</mosaic_0001>

<llo_original>
// kernel: discriminator_forward.1
$region0: #{discriminator_forward.1}
  #allocation0 [shape = 'u32[]', space=smem, size = 0x4, offset = 0x4, fixed_abs, tag = 'smem constant byte address 0x4 - core index']
  #allocation1 [shape = 'u32[144,128]{1,0:T(1,128)}', space=vmem, size = 0x12000, scoped, tag = 'internal scratch']
  #allocation2 [shape = 'f32[49,8]{1,0:T(8,128)}', space=vmem, size = 0x7000, scoped, tag = 'scratch operand']
  #allocation3 [shape = 'f32[1,1]{1,0:T(1,128)S(1)}', space=vmem, size = 0x200, scoped, tag = 'scoped memory for discriminator_forward.1']
  %s0 = inlined_call_operand.vmem [shape: bf16[2,49,36], index: 0, kind: input, shape index: {}]
  %s1 = inlined_call_operand.vmem [shape: f32[2,1,8], index: 1, kind: input, shape index: {}]
  %s2 = inlined_call_operand.vmem [shape: bf16[36,8], index: 2, kind: input, shape index: {}]
  %s3 = inlined_call_operand.vmem [shape: f32[1,8], index: 3, kind: input, shape index: {}]
  %s4 = inlined_call_operand.vmem [shape: bf16[9,8,16], index: 4, kind: input, shape index: {}]
  %s5 = inlined_call_operand.vmem [shape: f32[1,16], index: 5, kind: input, shape index: {}]
  %s6 = inlined_call_operand.vmem [shape: bf16[9,16,128], index: 6, kind: input, shape index: {}]
  %s7 = inlined_call_operand.vmem [shape: f32[1,128], index: 7, kind: input, shape index: {}]
  %s8 = inlined_call_operand.vmem [shape: bf16[128,64], index: 8, kind: input, shape index: {}]
  %s9 = inlined_call_operand.vmem [shape: bf16[8,64], index: 9, kind: input, shape index: {}]
  %s10 = inlined_call_operand.vmem [shape: f32[1,64], index: 10, kind: input, shape index: {}]
  %s11 = inlined_call_operand.vmem [shape: f32[1,64], index: 11, kind: input, shape index: {}]
  %s12 = inlined_call_operand.<no memory space> [shape: f32[1,1], index: 12, kind: input, shape index: {}]
  %s13 = inlined_call_operand.vmem [shape: f32[2,1,1], index: 13, kind: output, shape index: {}]
  %s14 = sld [smem:[#allocation0]]
  $region85: #{discriminator_forward.1} parent=0
    _
  %s16 = ssub.s32 1, %s14
  %s17 = scalar_select 0, %s16, %s14
  %v18 = vstv %s12
  %19 = vst [vmem:[#allocation3] sm:$0x1] %v18
  loop: start=0, step=1, limit=4
  $region2: #{discriminator_forward.1} parent=0 // loop_pre_header
    _
  $region3: #{discriminator_forward.1} parent=0 // loop_header
    %s21 = sphi 0, %s25
    %p22 = scmp.ge.s32.totalorder %s21, 4
    %s31 = sphi 0, %s33
    %s34 = sphi 0, %s31
    %s35 = sphi 0, %s34
    %s51 = sphi 0, %s35
    %s57 = sphi 0, %s59
    %s60 = sphi 0, %s57
    %s61 = sphi 0, %s60
    %s77 = sphi 0, %s61
    %s81 = sphi 0, %s81
    %s83 = sphi 0, %s81
    %s84 = sphi 0, %s83
    %s98 = sphi 0, %s84
    %s102 = sphi 0, %s102
    %s104 = sphi 0, %s102
    %s105 = sphi 0, %s104
    %s119 = sphi 0, %s105
    %s123 = sphi 0, %s123
    %s125 = sphi 0, %s123
    %s126 = sphi 0, %s125
    %s140 = sphi 0, %s126
    %s144 = sphi 0, %s144
    %s146 = sphi 0, %s144
    %s147 = sphi 0, %s146
    %s161 = sphi 0, %s147
    %s165 = sphi 0, %s165
    %s167 = sphi 0, %s165
    %s168 = sphi 0, %s167
    %s182 = sphi 0, %s168
    %s186 = sphi 0, %s186
    %s188 = sphi 0, %s186
    %s189 = sphi 0, %s188
    %s203 = sphi 0, %s189
    %s207 = sphi 0, %s207
    %s209 = sphi 0, %s207
    %s210 = sphi 0, %s209
    %s224 = sphi 0, %s210
    %s228 = sphi 0, %s228
    %s230 = sphi 0, %s228
    %s231 = sphi 0, %s230
    %s245 = sphi 0, %s231
    %s249 = sphi 0, %s249
    %s251 = sphi 0, %s249
    %s252 = sphi 0, %s251
    %s266 = sphi 0, %s252
    %s270 = sphi 0, %s270
    %s272 = sphi 0, %s270
    %s273 = sphi 0, %s272
    %s287 = sphi 0, %s273
    %s291 = sphi 0, %s291
    %s293 = sphi 0, %s291
    %s294 = sphi 0, %s293
    %s308 = sphi 0, %s294
    %s314 = sphi 0, %s316
    %s317 = sphi 0, %s314
    %s318 = sphi 0, %s317
    %s334 = sphi 0, %s318
  $region4: #{discriminator_forward.1} parent=0 // loop_header_branch
    %24 = sbr.rel (%p22) target = $region8
  $region5: #{discriminator_forward.1} parent=0 // loop_body
    %s26 = ssub.s32 %s21, 1
    %s27 = ssub.s32 %s21, 2
    %s28 = sadd.s32 %s21, 1
    %s29 = ssub.s32 %s21, %s28
    %p30 = scmp.eq.s32.totalorder %s29, 0
    %s32 = sadd.s32 %s31, 1
    %s33 = scalar_select %p30, %s31, %s32
    %p36 = pneg %p30
    %p37 = scmp.eq.s32.totalorder %s21, 1
    %p38 = por %p36, %p37
    %p39 = scmp.ne.s32.totalorder %s31, %s34
    %p40 = scmp.eq.s32.totalorder %s21, 0
    %p41 = por %p39, %p40
    %p42 = scmp.ne.s32.totalorder %s31, %s34
    %p43 = scmp.eq.s32.totalorder %s26, 1
    %p44 = por %p42, %p43
    %p45 = scmp.ne.s32.totalorder %s34, %s35
    %p46 = scmp.eq.s32.totalorder %s26, 0
    %p47 = por %p45, %p46
    %p48 = scmp.ne.s32.totalorder %s34, %s35
    %p49 = scmp.eq.s32.totalorder %s27, 1
    %p50 = por %p48, %p49
    %p52 = scmp.ne.s32.totalorder %s35, %s51
    %p53 = scmp.eq.s32.totalorder %s27, 0
    %p54 = por %p52, %p53
    %s55 = ssub.s32 %s21, %s28
    %p56 = scmp.eq.s32.totalorder %s55, 0
    %s58 = sadd.s32 %s57, 1
    %s59 = scalar_select %p56, %s57, %s58
    %p62 = pneg %p56
    %p63 = scmp.eq.s32.totalorder %s21, 1
    %p64 = por %p62, %p63
    %p65 = scmp.ne.s32.totalorder %s57, %s60
    %p66 = scmp.eq.s32.totalorder %s21, 0
    %p67 = por %p65, %p66
    %p68 = scmp.ne.s32.totalorder %s57, %s60
    %p69 = scmp.eq.s32.totalorder %s26, 1
    %p70 = por %p68, %p69
    %p71 = scmp.ne.s32.totalorder %s60, %s61
    %p72 = scmp.eq.s32.totalorder %s26, 0
    %p73 = por %p71, %p72
    %p74 = scmp.ne.s32.totalorder %s60, %s61
    %p75 = scmp.eq.s32.totalorder %s27, 1
    %p76 = por %p74, %p75
    %p78 = scmp.ne.s32.totalorder %s61, %s77
    %p79 = scmp.eq.s32.totalorder %s27, 0
    %p80 = por %p78, %p79
    %s82 = sadd.s32 %s81, 1
    %p85 = scmp.eq.s32.totalorder %s21, 1
    %p86 = scmp.ne.s32.totalorder %s81, %s83
    %p87 = scmp.eq.s32.totalorder %s21, 0
    %p88 = por %p86, %p87
    %p89 = scmp.ne.s32.totalorder %s81, %s83
    %p90 = scmp.eq.s32.totalorder %s26, 1
    %p91 = por %p89, %p90
    %p92 = scmp.ne.s32.totalorder %s83, %s84
    %p93 = scmp.eq.s32.totalorder %s26, 0
    %p94 = por %p92, %p93
    %p95 = scmp.ne.s32.totalorder %s83, %s84
    %p96 = scmp.eq.s32.totalorder %s27, 1
    %p97 = por %p95, %p96
    %p99 = scmp.ne.s32.totalorder %s84, %s98
    %p100 = scmp.eq.s32.totalorder %s27, 0
    %p101 = por %p99, %p100
    %s103 = sadd.s32 %s102, 1
    %p106 = scmp.eq.s32.totalorder %s21, 1
    %p107 = scmp.ne.s32.totalorder %s102, %s104
    %p108 = scmp.eq.s32.totalorder %s21, 0
    %p109 = por %p107, %p108
    %p110 = scmp.ne.s32.totalorder %s102, %s104
    %p111 = scmp.eq.s32.totalorder %s26, 1
    %p112 = por %p110, %p111
    %p113 = scmp.ne.s32.totalorder %s104, %s105
    %p114 = scmp.eq.s32.totalorder %s26, 0
    %p115 = por %p113, %p114
    %p116 = scmp.ne.s32.totalorder %s104, %s105
    %p117 = scmp.eq.s32.totalorder %s27, 1
    %p118 = por %p116, %p117
    %p120 = scmp.ne.s32.totalorder %s105, %s119
    %p121 = scmp.eq.s32.totalorder %s27, 0
    %p122 = por %p120, %p121
    %s124 = sadd.s32 %s123, 1
    %p127 = scmp.eq.s32.totalorder %s21, 1
    %p128 = scmp.ne.s32.totalorder %s123, %s125
    %p129 = scmp.eq.s32.totalorder %s21, 0
    %p130 = por %p128, %p129
    %p131 = scmp.ne.s32.totalorder %s123, %s125
    %p132 = scmp.eq.s32.totalorder %s26, 1
    %p133 = por %p131, %p132
    %p134 = scmp.ne.s32.totalorder %s125, %s126
    %p135 = scmp.eq.s32.totalorder %s26, 0
    %p136 = por %p134, %p135
    %p137 = scmp.ne.s32.totalorder %s125, %s126
    %p138 = scmp.eq.s32.totalorder %s27, 1
    %p139 = por %p137, %p138
    %p141 = scmp.ne.s32.totalorder %s126, %s140
    %p142 = scmp.eq.s32.totalorder %s27, 0
    %p143 = por %p141, %p142
    %s145 = sadd.s32 %s144, 1
    %p148 = scmp.eq.s32.totalorder %s21, 1
    %p149 = scmp.ne.s32.totalorder %s144, %s146
    %p150 = scmp.eq.s32.totalorder %s21, 0
    %p151 = por %p149, %p150
    %p152 = scmp.ne.s32.totalorder %s144, %s146
    %p153 = scmp.eq.s32.totalorder %s26, 1
    %p154 = por %p152, %p153
    %p155 = scmp.ne.s32.totalorder %s146, %s147
    %p156 = scmp.eq.s32.totalorder %s26, 0
    %p157 = por %p155, %p156
    %p158 = scmp.ne.s32.totalorder %s146, %s147
    %p159 = scmp.eq.s32.totalorder %s27, 1
    %p160 = por %p158, %p159
    %p162 = scmp.ne.s32.totalorder %s147, %s161
    %p163 = scmp.eq.s32.totalorder %s27, 0
    %p164 = por %p162, %p163
    %s166 = sadd.s32 %s165, 1
    %p169 = scmp.eq.s32.totalorder %s21, 1
    %p170 = scmp.ne.s32.totalorder %s165, %s167
    %p171 = scmp.eq.s32.totalorder %s21, 0
    %p172 = por %p170, %p171
    %p173 = scmp.ne.s32.totalorder %s165, %s167
    %p174 = scmp.eq.s32.totalorder %s26, 1
    %p175 = por %p173, %p174
    %p176 = scmp.ne.s32.totalorder %s167, %s168
    %p177 = scmp.eq.s32.totalorder %s26, 0
    %p178 = por %p176, %p177
    %p179 = scmp.ne.s32.totalorder %s167, %s168
    %p180 = scmp.eq.s32.totalorder %s27, 1
    %p181 = por %p179, %p180
    %p183 = scmp.ne.s32.totalorder %s168, %s182
    %p184 = scmp.eq.s32.totalorder %s27, 0
    %p185 = por %p183, %p184
    %s187 = sadd.s32 %s186, 1
    %p190 = scmp.eq.s32.totalorder %s21, 1
    %p191 = scmp.ne.s32.totalorder %s186, %s188
    %p192 = scmp.eq.s32.totalorder %s21, 0
    %p193 = por %p191, %p192
    %p194 = scmp.ne.s32.totalorder %s186, %s188
    %p195 = scmp.eq.s32.totalorder %s26, 1
    %p196 = por %p194, %p195
    %p197 = scmp.ne.s32.totalorder %s188, %s189
    %p198 = scmp.eq.s32.totalorder %s26, 0
    %p199 = por %p197, %p198
    %p200 = scmp.ne.s32.totalorder %s188, %s189
    %p201 = scmp.eq.s32.totalorder %s27, 1
    %p202 = por %p200, %p201
    %p204 = scmp.ne.s32.totalorder %s189, %s203
    %p205 = scmp.eq.s32.totalorder %s27, 0
    %p206 = por %p204, %p205
    %s208 = sadd.s32 %s207, 1
    %p211 = scmp.eq.s32.totalorder %s21, 1
    %p212 = scmp.ne.s32.totalorder %s207, %s209
    %p213 = scmp.eq.s32.totalorder %s21, 0
    %p214 = por %p212, %p213
    %p215 = scmp.ne.s32.totalorder %s207, %s209
    %p216 = scmp.eq.s32.totalorder %s26, 1
    %p217 = por %p215, %p216
    %p218 = scmp.ne.s32.totalorder %s209, %s210
    %p219 = scmp.eq.s32.totalorder %s26, 0
    %p220 = por %p218, %p219
    %p221 = scmp.ne.s32.totalorder %s209, %s210
    %p222 = scmp.eq.s32.totalorder %s27, 1
    %p223 = por %p221, %p222
    %p225 = scmp.ne.s32.totalorder %s210, %s224
    %p226 = scmp.eq.s32.totalorder %s27, 0
    %p227 = por %p225, %p226
    %s229 = sadd.s32 %s228, 1
    %p232 = scmp.eq.s32.totalorder %s21, 1
    %p233 = scmp.ne.s32.totalorder %s228, %s230
    %p234 = scmp.eq.s32.totalorder %s21, 0
    %p235 = por %p233, %p234
    %p236 = scmp.ne.s32.totalorder %s228, %s230
    %p237 = scmp.eq.s32.totalorder %s26, 1
    %p238 = por %p236, %p237
    %p239 = scmp.ne.s32.totalorder %s230, %s231
    %p240 = scmp.eq.s32.totalorder %s26, 0
    %p241 = por %p239, %p240
    %p242 = scmp.ne.s32.totalorder %s230, %s231
    %p243 = scmp.eq.s32.totalorder %s27, 1
    %p244 = por %p242, %p243
    %p246 = scmp.ne.s32.totalorder %s231, %s245
    %p247 = scmp.eq.s32.totalorder %s27, 0
    %p248 = por %p246, %p247
    %s250 = sadd.s32 %s249, 1
    %p253 = scmp.eq.s32.totalorder %s21, 1
    %p254 = scmp.ne.s32.totalorder %s249, %s251
    %p255 = scmp.eq.s32.totalorder %s21, 0
    %p256 = por %p254, %p255
    %p257 = scmp.ne.s32.totalorder %s249, %s251
    %p258 = scmp.eq.s32.totalorder %s26, 1
    %p259 = por %p257, %p258
    %p260 = scmp.ne.s32.totalorder %s251, %s252
    %p261 = scmp.eq.s32.totalorder %s26, 0
    %p262 = por %p260, %p261
    %p263 = scmp.ne.s32.totalorder %s251, %s252
    %p264 = scmp.eq.s32.totalorder %s27, 1
    %p265 = por %p263, %p264
    %p267 = scmp.ne.s32.totalorder %s252, %s266
    %p268 = scmp.eq.s32.totalorder %s27, 0
    %p269 = por %p267, %p268
    %s271 = sadd.s32 %s270, 1
    %p274 = scmp.eq.s32.totalorder %s21, 1
    %p275 = scmp.ne.s32.totalorder %s270, %s272
    %p276 = scmp.eq.s32.totalorder %s21, 0
    %p277 = por %p275, %p276
    %p278 = scmp.ne.s32.totalorder %s270, %s272
    %p279 = scmp.eq.s32.totalorder %s26, 1
    %p280 = por %p278, %p279
    %p281 = scmp.ne.s32.totalorder %s272, %s273
    %p282 = scmp.eq.s32.totalorder %s26, 0
    %p283 = por %p281, %p282
    %p284 = scmp.ne.s32.totalorder %s272, %s273
    %p285 = scmp.eq.s32.totalorder %s27, 1
    %p286 = por %p284, %p285
    %p288 = scmp.ne.s32.totalorder %s273, %s287
    %p289 = scmp.eq.s32.totalorder %s27, 0
    %p290 = por %p288, %p289
    %s292 = sadd.s32 %s291, 1
    %p295 = scmp.eq.s32.totalorder %s21, 1
    %p296 = scmp.ne.s32.totalorder %s291, %s293
    %p297 = scmp.eq.s32.totalorder %s21, 0
    %p298 = por %p296, %p297
    %p299 = scmp.ne.s32.totalorder %s291, %s293
    %p300 = scmp.eq.s32.totalorder %s26, 1
    %p301 = por %p299, %p300
    %p302 = scmp.ne.s32.totalorder %s293, %s294
    %p303 = scmp.eq.s32.totalorder %s26, 0
    %p304 = por %p302, %p303
    %p305 = scmp.ne.s32.totalorder %s293, %s294
    %p306 = scmp.eq.s32.totalorder %s27, 1
    %p307 = por %p305, %p306
    %p309 = scmp.ne.s32.totalorder %s294, %s308
    %p310 = scmp.eq.s32.totalorder %s27, 0
    %p311 = por %p309, %p310
    %s312 = ssub.s32 %s21, %s28
    %p313 = scmp.eq.s32.totalorder %s312, 0
    %s315 = sadd.s32 %s314, 1
    %s316 = scalar_select %p313, %s314, %s315
    %p319 = pneg %p313
    %p320 = scmp.eq.s32.totalorder %s21, 1
    %p321 = por %p319, %p320
    %p322 = scmp.ne.s32.totalorder %s314, %s317
    %p323 = scmp.eq.s32.totalorder %s21, 0
    %p324 = por %p322, %p323
    %p325 = scmp.ne.s32.totalorder %s314, %s317
    %p326 = scmp.eq.s32.totalorder %s26, 1
    %p327 = por %p325, %p326
    %p328 = scmp.ne.s32.totalorder %s317, %s318
    %p329 = scmp.eq.s32.totalorder %s26, 0
    %p330 = por %p328, %p329
    %p331 = scmp.ne.s32.totalorder %s317, %s318
    %p332 = scmp.eq.s32.totalorder %s27, 1
    %p333 = por %p331, %p332
    %p335 = scmp.ne.s32.totalorder %s318, %s334
    %p336 = scmp.eq.s32.totalorder %s27, 0
    %p337 = por %p335, %p336
    %p338 = scmp.le.s32.totalorder 1, %s21
    %p339 = scmp.lt.s32.totalorder %s21, 3
    %p340 = pnand %p338, %p339
    %p341 = pneg %p340
    // Predicated region
    $region9: #{discriminator_forward.1} parent=5 // pred_check
      _
    $region10: #{discriminator_forward.1} parent=5 // pred_check_branch
      %343 = sbr.rel (%p340) target = $region12
    $region11: #{discriminator_forward.1} parent=5 // pred_region
      %s344 = ssub.s32 %s21, 1
      // Predicated region
      $region13: #{discriminator_forward.1} parent=11 // pred_check
        %p345 = pneg %p94
      $region14: #{discriminator_forward.1} parent=11 // pred_check_branch
        %347 = sbr.rel (%p345) target = $region16
      $region15: #{discriminator_forward.1} parent=11 // pred_region
        _
      $region16: #{discriminator_forward.1} parent=11 // pred_fallthru
        _
      // Predicated region
      $region17: #{discriminator_forward.1} parent=11 // pred_check
        %p348 = pneg %p115
      $region18: #{discriminator_forward.1} parent=11 // pred_check_branch
        %350 = sbr.rel (%p348) target = $region20
      $region19: #{discriminator_forward.1} parent=11 // pred_region
        _
      $region20: #{discriminator_forward.1} parent=11 // pred_fallthru
        _
      // Predicated region
      $region21: #{discriminator_forward.1} parent=11 // pred_check
        %p351 = pneg %p136
      $region22: #{discriminator_forward.1} parent=11 // pred_check_branch
        %353 = sbr.rel (%p351) target = $region24
      $region23: #{discriminator_forward.1} parent=11 // pred_region
        _
      $region24: #{discriminator_forward.1} parent=11 // pred_fallthru
        _
      // Predicated region
      $region25: #{discriminator_forward.1} parent=11 // pred_check
        %p354 = pneg %p157
      $region26: #{discriminator_forward.1} parent=11 // pred_check_branch
        %356 = sbr.rel (%p354) target = $region28
      $region27: #{discriminator_forward.1} parent=11 // pred_region
        _
      $region28: #{discriminator_forward.1} parent=11 // pred_fallthru
        _
      // Predicated region
      $region29: #{discriminator_forward.1} parent=11 // pred_check
        %p357 = pneg %p178
      $region30: #{discriminator_forward.1} parent=11 // pred_check_branch
        %359 = sbr.rel (%p357) target = $region32
      $region31: #{discriminator_forward.1} parent=11 // pred_region
        _
      $region32: #{discriminator_forward.1} parent=11 // pred_fallthru
        _
      // Predicated region
      $region33: #{discriminator_forward.1} parent=11 // pred_check
        %p360 = pneg %p199
      $region34: #{discriminator_forward.1} parent=11 // pred_check_branch
        %362 = sbr.rel (%p360) target = $region36
      $region35: #{discriminator_forward.1} parent=11 // pred_region
        _
      $region36: #{discriminator_forward.1} parent=11 // pred_fallthru
        _
      // Predicated region
      $region37: #{discriminator_forward.1} parent=11 // pred_check
        %p363 = pneg %p220
      $region38: #{discriminator_forward.1} parent=11 // pred_check_branch
        %365 = sbr.rel (%p363) target = $region40
      $region39: #{discriminator_forward.1} parent=11 // pred_region
        _
      $region40: #{discriminator_forward.1} parent=11 // pred_fallthru
        _
      // Predicated region
      $region41: #{discriminator_forward.1} parent=11 // pred_check
        %p366 = pneg %p241
      $region42: #{discriminator_forward.1} parent=11 // pred_check_branch
        %368 = sbr.rel (%p366) target = $region44
      $region43: #{discriminator_forward.1} parent=11 // pred_region
        _
      $region44: #{discriminator_forward.1} parent=11 // pred_fallthru
        _
      // Predicated region
      $region45: #{discriminator_forward.1} parent=11 // pred_check
        %p369 = pneg %p262
      $region46: #{discriminator_forward.1} parent=11 // pred_check_branch
        %371 = sbr.rel (%p369) target = $region48
      $region47: #{discriminator_forward.1} parent=11 // pred_region
        _
      $region48: #{discriminator_forward.1} parent=11 // pred_fallthru
        _
      // Predicated region
      $region49: #{discriminator_forward.1} parent=11 // pred_check
        %p372 = pneg %p283
      $region50: #{discriminator_forward.1} parent=11 // pred_check_branch
        %374 = sbr.rel (%p372) target = $region52
      $region51: #{discriminator_forward.1} parent=11 // pred_region
        _
      $region52: #{discriminator_forward.1} parent=11 // pred_fallthru
        _
      // Predicated region
      $region53: #{discriminator_forward.1} parent=11 // pred_check
        %p375 = pneg %p304
      $region54: #{discriminator_forward.1} parent=11 // pred_check_branch
        %377 = sbr.rel (%p375) target = $region56
      $region55: #{discriminator_forward.1} parent=11 // pred_region
        _
      $region56: #{discriminator_forward.1} parent=11 // pred_fallthru
        _
    $region12: #{discriminator_forward.1} parent=5 // pred_fallthru
      _
    %p378 = scmp.lt.s32.totalorder %s21, 2
    // Predicated region
    $region57: #{discriminator_forward.1} parent=5 // pred_check
      %p379 = pneg %p378
    $region58: #{discriminator_forward.1} parent=5 // pred_check_branch
      %381 = sbr.rel (%p379) target = $region60
    $region59: #{discriminator_forward.1} parent=5 // pred_region
      // Predicated region
      $region61: #{discriminator_forward.1} parent=59 // pred_check
        %p382 = pneg %p41
      $region62: #{discriminator_forward.1} parent=59 // pred_check_branch
        %384 = sbr.rel (%p382) target = $region64
      $region63: #{discriminator_forward.1} parent=59 // pred_region
        %p385 = scmp.lt.s32.totalorder %s21, 1
        %s386 = scalar_select %p385, %s21, 1
        %s387 = smul.addr %s386, 7
        %s388 = smul.addr %s387, 4
        %s389 = scalar_lea.vmem %s0, %s388
      $region64: #{discriminator_forward.1} parent=59 // pred_fallthru
        _
      // Predicated region
      $region65: #{discriminator_forward.1} parent=59 // pred_check
        %p390 = pneg %p67
      $region66: #{discriminator_forward.1} parent=59 // pred_check_branch
        %392 = sbr.rel (%p390) target = $region68
      $region67: #{discriminator_forward.1} parent=59 // pred_region
        %p393 = scmp.lt.s32.totalorder %s21, 1
        %s394 = scalar_select %p393, %s21, 1
        %s395 = scalar_lea.vmem %s1, %s394
      $region68: #{discriminator_forward.1} parent=59 // pred_fallthru
        _
    $region60: #{discriminator_forward.1} parent=5 // pred_fallthru
      _
    %p396 = scmp.le.s32.totalorder 1, %s21
    %p397 = scmp.lt.s32.totalorder %s21, 3
    %p398 = pnand %p396, %p397
    %p399 = pneg %p398
    // Predicated region
    $region69: #{discriminator_forward.1} parent=5 // pred_check
      _
    $region70: #{discriminator_forward.1} parent=5 // pred_check_branch
      %401 = sbr.rel (%p398) target = $region72
    $region71: #{discriminator_forward.1} parent=5 // pred_region
      %s402 = ssub.s32 %s21, 1
      %p403 = scmp.lt.s32.totalorder %s26, 1
      %s404 = scalar_select %p403, %s26, 1
      %s405 = smul.addr %s404, 7
      %s406 = smul.addr %s405, 4
      %s407 = scalar_lea.vmem %s0, %s406
      %p408 = pneg %p47
      %p409 = pneg %p44
      %p410 = scmp.lt.s32.totalorder %s26, 1
      %s411 = scalar_select %p410, %s26, 1
      %s412 = scalar_lea.vmem %s1, %s411
      %p413 = pneg %p73
      %p414 = pneg %p70
      %p415 = pneg %p94
      %p416 = pneg %p91
      %p417 = pneg %p115
      %p418 = pneg %p112
      %p419 = pneg %p136
      %p420 = pneg %p133
      %p421 = pneg %p157
      %p422 = pneg %p154
      %p423 = pneg %p178
      %p424 = pneg %p175
      %p425 = pneg %p199
      %p426 = pneg %p196
      %p427 = pneg %p220
      %p428 = pneg %p217
      %p429 = pneg %p241
      %p430 = pneg %p238
      %p431 = pneg %p262
      %p432 = pneg %p259
      %p433 = pneg %p283
      %p434 = pneg %p280
      %p435 = pneg %p304
      %p436 = pneg %p301
      %p437 = pneg %p330
      %p438 = pneg %p327
      %p439 = scmp.lt.s32.totalorder %s26, 1
      %s440 = scalar_select %p439, %s26, 1
      %s441 = scalar_lea.vmem %s13, %s440
      %p442 = scmp.lt.s32.totalorder %s26, 1
      %s443 = scalar_select %p442, %s26, 1
      %s444 = smul.addr %s443, 7
      %s445 = smul.addr %s444, 4
      %s446 = scalar_lea.vmem %s0, %s445
      %p447 = scmp.lt.s32.totalorder %s26, 1
      %s448 = scalar_select %p447, %s26, 1
      %s449 = scalar_lea.vmem %s1, %s448
      %p450 = scmp.lt.s32.totalorder %s26, 1
      %s451 = scalar_select %p450, %s26, 1
      %s452 = scalar_lea.vmem %s13, %s451
      %v454 = vld [vmem:[%s446] sm:$0xf]
      %v455 = vld [vmem:[%s446 + $0x4] sm:$0xf]
      %v456 = vld [vmem:[%s446 + $0x8] sm:$0xf]
      %v457 = vld [vmem:[%s446 + $0xc] sm:$0xf]
      %v458 = vld [vmem:[%s446 + $0x10] sm:$0xf]
      %v459 = vld [vmem:[%s446 + $0x14] sm:$0xf]
      %v460 = vld [vmem:[%s446 + $0x18] sm:$0x1]
      %v461 = vld [vmem:[%s2] sm:$0xf]
      %v462 = vld [vmem:[%s2 + $0x4] sm:$0xf]
      %v463 = vld [vmem:[%s2 + $0x8] sm:$0xf]
      %v464 = vld [vmem:[%s2 + $0xc] sm:$0xf]
      %v465 = vld [vmem:[%s2 + $0x10] sm:$0x3]
      %v466 = vld [vmem:[%s3] sm:$0x1]
      %v468 = vlaneseq
      %v469 = vshrl.u32 %v468, 7
      %v470 = vsub.s32 0, %v469
      %v471 = vrot.slane %v466, %v470
      %v480 = vunpack.c.l.b16 %v454
      %v481 = vunpack.c.l.b16 %v455
      %v482 = vunpack.c.l.b16 %v456
      %v483 = vunpack.c.l.b16 %v457
      %v484 = vunpack.c.l.b16 %v458
      %v485 = vunpack.c.l.b16 %v459
      %v486 = vunpack.c.l.b16 %v460
      %v487 = vpack.c.b16 %v481, %v480
      %v488 = vpack.c.b16 %v483, %v482
      %v489 = vpack.c.b16 %v485, %v484
      %v490 = vpack.c.b16 %v486, %v486
      %v496 = vunpack.c.l.b16 %v461
      %v497 = vunpack.c.l.b16 %v462
      %v498 = vunpack.c.l.b16 %v463
      %v499 = vunpack.c.l.b16 %v464
      %v500 = vunpack.c.l.b16 %v465
      %v501 = vpack.c.b16 %v497, %v496
      %v502 = vpack.c.b16 %v499, %v498
      %v503 = vpack.c.b16 %v500, %v500
      %vm506 = vcmask 293888
      %v508 = vsel %vm506, %v487, 0
      %v511 = vsel %vm506, %v488, 0
      %v514 = vsel %vm506, %v489, 0
      %v517 = vsel %vm506, %v490, 0
      %vm519 = vcmask 1041408
      %v521 = vsel %vm519, %v503, 0
      %523 = vmatprep.subr.bf16.mxu0 0
      %524 = vmatpush1.bf16.msra.mxu0 %v501
      %525 = vmatprep.subr.bf16.mxu0 0
      %526 = vmatpush1.bf16.msra.mxu0 %v502
      %527 = vmatprep.subr.bf16.mxu0 0
      %528 = vmatpush1.bf16.msra.mxu0 %v521
      %529 = vmatprep.subr.bf16.mxu0 0
      %530 = vmatpush1.bf16.msra.mxu0 0
      %531 = vmatprep.subr.bf16.mxu0 0
      %532 = vmatpush1.bf16.msra.mxu0 0
      %533 = vmatprep.subr.bf16.mxu0 0
      %534 = vmatpush1.bf16.msra.mxu0 0
      %535 = vmatprep.subr.bf16.mxu0 0
      %536 = vmatpush1.bf16.msra.mxu0 0
      %537 = vmatprep.subr.bf16.mxu0 0
      %538 = vmatpush1.bf16.msra.mxu0 0
      %539 = vmatprep.subr.bf16.mxu0 0
      %540 = vmatpush1.bf16.msra.mxu0 0
      %541 = vmatprep.subr.bf16.mxu0 0
      %542 = vmatpush1.bf16.msra.mxu0 0
      %543 = vmatprep.subr.bf16.mxu0 0
      %544 = vmatpush1.bf16.msra.mxu0 0
      %545 = vmatprep.subr.bf16.mxu0 0
      %546 = vmatpush1.bf16.msra.mxu0 0
      %547 = vmatprep.subr.bf16.mxu0 0
      %548 = vmatpush1.bf16.msra.mxu0 0
      %549 = vmatprep.subr.bf16.mxu0 0
      %550 = vmatpush1.bf16.msra.mxu0 0
      %551 = vmatprep.subr.bf16.mxu0 0
      %552 = vmatpush1.bf16.msra.mxu0 0
      %553 = vmatprep.subr.bf16.mxu0 0
      %554 = vmatpush1.bf16.msra.mxu0 0
      %555 = vmatprep.mubr.bf16.mxu0 0
      %556 = vmatmul.mubr.bf16.gmra.mrb[0].mxu0 %v508
      %v557 = vpop.f32.mrb[0].mxu0
      %v558 = vadd.f32 %v471, %v557
      %v559 = vpop.f32.mrb[0].mxu0
      %v560 = vpop.f32.mrb[0].mxu0
      %v561 = vadd.f32 %v471, %v560
      %v562 = vpop.f32.mrb[0].mxu0
      %563 = vmatprep.mubr.bf16.mxu0 0
      %564 = vmatmul.mubr.bf16.gmra.mrb[0].mxu0 %v511
      %v565 = vpop.f32.mrb[0].mxu0
      %v566 = vadd.f32 %v471, %v565
      %v567 = vpop.f32.mrb[0].mxu0
      %v568 = vpop.f32.mrb[0].mxu0
      %v569 = vadd.f32 %v471, %v568
      %v570 = vpop.f32.mrb[0].mxu0
      %571 = vmatprep.mubr.bf16.mxu0 0
      %572 = vmatmul.mubr.bf16.gmra.mrb[0].mxu0 %v514
      %v573 = vpop.f32.mrb[0].mxu0
      %v574 = vadd.f32 %v471, %v573
      %v575 = vpop.f32.mrb[0].mxu0
      %v576 = vpop.f32.mrb[0].mxu0
      %v577 = vadd.f32 %v471, %v576
      %v578 = vpop.f32.mrb[0].mxu0
      %579 = vmatprep.mubr.bf16.mxu0 0
      %580 = vmatmul.mubr.bf16.gmra.mrb[0].mxu0 %v517
      %v581 = vpop.f32.mrb[0].mxu0
      %v582 = vadd.f32 %v471, %v581
      %v583 = vpop.f32.mrb[0].mxu0
      %v584 = vpop.f32.mrb[0].mxu0
      %v585 = vpop.f32.mrb[0].mxu0
      %586 = vdwg.mxu0
      %v587 = vmax.f32 %v558, 0.0
      %v588 = vmax.f32 %v561, 0.0
      %v589 = vmax.f32 %v566, 0.0
      %v590 = vmax.f32 %v569, 0.0
      %v591 = vmax.f32 %v574, 0.0
      %v592 = vmax.f32 %v577, 0.0
      %v593 = vmax.f32 %v582, 0.0
      %vm594 = vcmask 64512
      %595 = vst.msk [vmem:[#allocation2] sm:$0xff] %vm594, %v587
      %596 = vst.msk [vmem:[#allocation2 + $0x8] sm:$0xff] %vm594, %v588
      %597 = vst.msk [vmem:[#allocation2 + $0x10] sm:$0xff] %vm594, %v589
      %598 = vst.msk [vmem:[#allocation2 + $0x18] sm:$0xff] %vm594, %v590
      %599 = vst.msk [vmem:[#allocation2 + $0x20] sm:$0xff] %vm594, %v591
      %600 = vst.msk [vmem:[#allocation2 + $0x28] sm:$0xff] %vm594, %v592
      %vm601 = vcmask 57344
      %602 = vst.msk [vmem:[#allocation2 + $0x30] sm:$0x1] %vm601, %v593
      %v603 = vld [vmem:[%s7] sm:$0x1]
      %v604 = vld [vmem:[%s5] sm:$0x1]
      %v605 = vld [vmem:[#allocation2] sm:$0x1]
      %v606 = vpack.c.bf16 %v605, %v605
      %v607 = vld [vmem:[%s4] sm:$0xf]
      %v609 = vsel %vm594, %v606, 0
      %vm611 = vcmask 1043456
      %v613 = vsel %vm611, %v607, 0
      %615 = vmatprep.subr.bf16.mxu0 0
      %616 = vmatpush1.bf16.msra.mxu0 %v613
      %617 = vmatprep.subr.bf16.mxu0 0
      %618 = vmatpush1.bf16.msra.mxu0 0
      %619 = vmatprep.subr.bf16.mxu0 0
      %620 = vmatpush1.bf16.msra.mxu0 0
      %621 = vmatprep.subr.bf16.mxu0 0
      %622 = vmatpush1.bf16.msra.mxu0 0
      %623 = vmatprep.subr.bf16.mxu0 0
      %624 = vmatpush1.bf16.msra.mxu0 0
      %625 = vmatprep.subr.bf16.mxu0 0
      %626 = vmatpush1.bf16.msra.mxu0 0
      %627 = vmatprep.subr.bf16.mxu0 0
      %628 = vmatpush1.bf16.msra.mxu0 0
      %629 = vmatprep.subr.bf16.mxu0 0
      %630 = vmatpush1.bf16.msra.mxu0 0
      %631 = vmatprep.subr.bf16.mxu0 0
      %632 = vmatpush1.bf16.msra.mxu0 0
      %633 = vmatprep.subr.bf16.mxu0 0
      %634 = vmatpush1.bf16.msra.mxu0 0
      %635 = vmatprep.subr.bf16.mxu0 0
      %636 = vmatpush1.bf16.msra.mxu0 0
      %637 = vmatprep.subr.bf16.mxu0 0
      %638 = vmatpush1.bf16.msra.mxu0 0
      %639 = vmatprep.subr.bf16.mxu0 0
      %640 = vmatpush1.bf16.msra.mxu0 0
      %641 = vmatprep.subr.bf16.mxu0 0
      %642 = vmatpush1.bf16.msra.mxu0 0
      %643 = vmatprep.subr.bf16.mxu0 0
      %644 = vmatpush1.bf16.msra.mxu0 0
      %645 = vmatprep.subr.bf16.mxu0 0
      %646 = vmatpush1.bf16.msra.mxu0 0
      %647 = vmatprep.mubr.bf16.mxu0 0
      %648 = vmatmul.mubr.bf16.gmra.mrb[0].mxu0 %v609
      %v649 = vpop.f32.mrb[0].mxu0
      %v650 = vadd.f32 0.0, %v649
      %v651 = vpop.f32.mrb[0].mxu0
      %v652 = vpop.f32.mrb[0].mxu0
      %v653 = vpop.f32.mrb[0].mxu0
      %654 = vdwg.mxu0
      %v655 = vadd.f32 %v604, %v650
      %v656 = vld [vmem:[#allocation2 + $0x1] sm:$0x1]
      %v657 = vpack.c.bf16 %v656, %v656
      %s658 = scalar_lea.vmem %s4, 4
      %v659 = vld [vmem:[%s658] sm:$0xf]
      %v661 = vsel %vm594, %v657, 0
      %v664 = vsel %vm611, %v659, 0
      %666 = vmatprep.subr.bf16.mxu0 0
      %667 = vmatpush1.bf16.msra.mxu0 %v664
      %668 = vmatprep.subr.bf16.mxu0 0
      %669 = vmatpush1.bf16.msra.mxu0 0
      %670 = vmatprep.subr.bf16.mxu0 0
      %671 = vmatpush1.bf16.msra.mxu0 0
      %672 = vmatprep.subr.bf16.mxu0 0
      %673 = vmatpush1.bf16.msra.mxu0 0
      %674 = vmatprep.subr.bf16.mxu0 0
      %675 = vmatpush1.bf16.msra.mxu0 0
      %676 = vmatprep.subr.bf16.mxu0 0
      %677 = vmatpush1.bf16.msra.mxu0 0
      %678 = vmatprep.subr.bf16.mxu0 0
      %679 = vmatpush1.bf16.msra.mxu0 0
      %680 = vmatprep.subr.bf16.mxu0 0
      %681 = vmatpush1.bf16.msra.mxu0 0
      %682 = vmatprep.subr.bf16.mxu0 0
      %683 = vmatpush1.bf16.msra.mxu0 0
      %684 = vmatprep.subr.bf16.mxu0 0
      %685 = vmatpush1.bf16.msra.mxu0 0
      %686 = vmatprep.subr.bf16.mxu0 0
      %687 = vmatpush1.bf16.msra.mxu0 0
      %688 = vmatprep.subr.bf16.mxu0 0
      %689 = vmatpush1.bf16.msra.mxu0 0
      %690 = vmatprep.subr.bf16.mxu0 0
      %691 = vmatpush1.bf16.msra.mxu0 0
      %692 = vmatprep.subr.bf16.mxu0 0
      %693 = vmatpush1.bf16.msra.mxu0 0
      %694 = vmatprep.subr.bf16.mxu0 0
      %695 = vmatpush1.bf16.msra.mxu0 0
      %696 = vmatprep.subr.bf16.mxu0 0
      %697 = vmatpush1.bf16.msra.mxu0 0
      %698 = vmatprep.mubr.bf16.mxu0 0
      %699 = vmatmul.mubr.bf16.gmra.mrb[0].mxu0 %v661
      %v700 = vpop.f32.mrb[0].mxu0
      %v701 = vadd.f32 0.0, %v700
      %v702 = vpop.f32.mrb[0].mxu0
      %v703 = vpop.f32.mrb[0].mxu0
      %v704 = vpop.f32.mrb[0].mxu0
      %705 = vdwg.mxu0
      %v706 = vadd.f32 %v655, %v701
      %v707 = vld [vmem:[#allocation2 + $0x2] sm:$0x1]
      %v708 = vpack.c.bf16 %v707, %v707
      %s709 = scalar_lea.vmem %s4, 8
      %v710 = vld [vmem:[%s709] sm:$0xf]
      %v712 = vsel %vm594, %v708, 0
      %v715 = vsel %vm611, %v710, 0
      %717 = vmatprep.subr.bf16.mxu0 0
      %718 = vmatpush1.bf16.msra.mxu0 %v715
      %719 = vmatprep.subr.bf16.mxu0 0
      %720 = vmatpush1.bf16.msra.mxu0 0
      %721 = vmatprep.subr.bf16.mxu0 0
      %722 = vmatpush1.bf16.msra.mxu0 0
      %723 = vmatprep.subr.bf16.mxu0 0
      %724 = vmatpush1.bf16.msra.mxu0 0
      %725 = vmatprep.subr.bf16.mxu0 0
      %726 = vmatpush1.bf16.msra.mxu0 0
      %727 = vmatprep.subr.bf16.mxu0 0
      %728 = vmatpush1.bf16.msra.mxu0 0
      %729 = vmatprep.subr.bf16.mxu0 0
      %730 = vmatpush1.bf16.msra.mxu0 0
      %731 = vmatprep.subr.bf16.mxu0 0
      %732 = vmatpush1.bf16.msra.mxu0 0
      %733 = vmatprep.subr.bf16.mxu0 0
      %734 = vmatpush1.bf16.msra.mxu0 0
      %735 = vmatprep.subr.bf16.mxu0 0
      %736 = vmatpush1.bf16.msra.mxu0 0
      %737 = vmatprep.subr.bf16.mxu0 0
      %738 = vmatpush1.bf16.msra.mxu0 0
      %739 = vmatprep.subr.bf16.mxu0 0
      %740 = vmatpush1.bf16.msra.mxu0 0
      %741 = vmatprep.subr.bf16.mxu0 0
      %742 = vmatpush1.bf16.msra.mxu0 0
      %743 = vmatprep.subr.bf16.mxu0 0
      %744 = vmatpush1.bf16.msra.mxu0 0
      %745 = vmatprep.subr.bf16.mxu0 0
      %746 = vmatpush1.bf16.msra.mxu0 0
      %747 = vmatprep.subr.bf16.mxu0 0
      %748 = vmatpush1.bf16.msra.mxu0 0
      %749 = vmatprep.mubr.bf16.mxu0 0
      %750 = vmatmul.mubr.bf16.gmra.mrb[0].mxu0 %v712
      %v751 = vpop.f32.mrb[0].mxu0
      %v752 = vadd.f32 0.0, %v751
      %v753 = vpop.f32.mrb[0].mxu0
      %v754 = vpop.f32.mrb[0].mxu0
      %v755 = vpop.f32.mrb[0].mxu0
      %756 = vdwg.mxu0
      %v757 = vadd.f32 %v706, %v752
      %v758 = vld [vmem:[#allocation2 + $0x7] sm:$0x1]
      %v759 = vpack.c.bf16 %v758, %v758
      %s760 = scalar_lea.vmem %s4, 12
      %v761 = vld [vmem:[%s760] sm:$0xf]
      %v763 = vsel %vm594, %v759, 0
      %v766 = vsel %vm611, %v761, 0
      %768 = vmatprep.subr.bf16.mxu0 0
      %769 = vmatpush1.bf16.msra.mxu0 %v766
      %770 = vmatprep.subr.bf16.mxu0 0
      %771 = vmatpush1.bf16.msra.mxu0 0
      %772 = vmatprep.subr.bf16.mxu0 0
      %773 = vmatpush1.bf16.msra.mxu0 0
      %774 = vmatprep.subr.bf16.mxu0 0
      %775 = vmatpush1.bf16.msra.mxu0 0
      %776 = vmatprep.subr.bf16.mxu0 0
      %777 = vmatpush1.bf16.msra.mxu0 0
      %778 = vmatprep.subr.bf16.mxu0 0
      %779 = vmatpush1.bf16.msra.mxu0 0
      %780 = vmatprep.subr.bf16.mxu0 0
      %781 = vmatpush1.bf16.msra.mxu0 0
      %782 = vmatprep.subr.bf16.mxu0 0
      %783 = vmatpush1.bf16.msra.mxu0 0
      %784 = vmatprep.subr.bf16.mxu0 0
      %785 = vmatpush1.bf16.msra.mxu0 0
      %786 = vmatprep.subr.bf16.mxu0 0
      %787 = vmatpush1.bf16.msra.mxu0 0
      %788 = vmatprep.subr.bf16.mxu0 0
      %789 = vmatpush1.bf16.msra.mxu0 0
      %790 = vmatprep.subr.bf16.mxu0 0
      %791 = vmatpush1.bf16.msra.mxu0 0
      %792 = vmatprep.subr.bf16.mxu0 0
      %793 = vmatpush1.bf16.msra.mxu0 0
      %794 = vmatprep.subr.bf16.mxu0 0
      %795 = vmatpush1.bf16.msra.mxu0 0
      %796 = vmatprep.subr.bf16.mxu0 0
      %797 = vmatpush1.bf16.msra.mxu0 0
      %798 = vmatprep.subr.bf16.mxu0 0
      %799 = vmatpush1.bf16.msra.mxu0 0
      %800 = vmatprep.mubr.bf16.mxu0 0
      %801 = vmatmul.mubr.bf16.gmra.mrb[0].mxu0 %v763
      %v802 = vpop.f32.mrb[0].mxu0
      %v803 = vadd.f32 0.0, %v802
      %v804 = vpop.f32.mrb[0].mxu0
      %v805 = vpop.f32.mrb[0].mxu0
      %v806 = vpop.f32.mrb[0].mxu0
      %807 = vdwg.mxu0
      %v808 = vadd.f32 %v757, %v803
      %v809 = vld [vmem:[#allocation2 + $0x8] sm:$0x1]
      %v810 = vpack.c.bf16 %v809, %v809
      %s811 = scalar_lea.vmem %s4, 16
      %v812 = vld [vmem:[%s811] sm:$0xf]
      %v814 = vsel %vm594, %v810, 0
      %v817 = vsel %vm611, %v812, 0
      %819 = vmatprep.subr.bf16.mxu0 0
      %820 = vmatpush1.bf16.msra.mxu0 %v817
      %821 = vmatprep.subr.bf16.mxu0 0
      %822 = vmatpush1.bf16.msra.mxu0 0
      %823 = vmatprep.subr.bf16.mxu0 0
      %824 = vmatpush1.bf16.msra.mxu0 0
      %825 = vmatprep.subr.bf16.mxu0 0
      %826 = vmatpush1.bf16.msra.mxu0 0
      %827 = vmatprep.subr.bf16.mxu0 0
      %828 = vmatpush1.bf16.msra.mxu0 0
      %829 = vmatprep.subr.bf16.mxu0 0
      %830 = vmatpush1.bf16.msra.mxu0 0
      %831 = vmatprep.subr.bf16.mxu0 0
      %832 = vmatpush1.bf16.msra.mxu0 0
      %833 = vmatprep.subr.bf16.mxu0 0
      %834 = vmatpush1.bf16.msra.mxu0 0
      %835 = vmatprep.subr.bf16.mxu0 0
      %836 = vmatpush1.bf16.msra.mxu0 0
      %837 = vmatprep.subr.bf16.mxu0 0
      %838 = vmatpush1.bf16.msra.mxu0 0
      %839 = vmatprep.subr.bf16.mxu0 0
      %840 = vmatpush1.bf16.msra.mxu0 0
      %841 = vmatprep.subr.bf16.mxu0 0
      %842 = vmatpush1.bf16.msra.mxu0 0
      %843 = vmatprep.subr.bf16.mxu0 0
      %844 = vmatpush1.bf16.msra.mxu0 0
      %845 = vmatprep.subr.bf16.mxu0 0
      %846 = vmatpush1.bf16.msra.mxu0 0
      %847 = vmatprep.subr.bf16.mxu0 0
      %848 = vmatpush1.bf16.msra.mxu0 0
      %849 = vmatprep.subr.bf16.mxu0 0
      %850 = vmatpush1.bf16.msra.mxu0 0
      %851 = vmatprep.mubr.bf16.mxu0 0
      %852 = vmatmul.mubr.bf16.gmra.mrb[0].mxu0 %v814
      %v853 = vpop.f32.mrb[0].mxu0
      %v854 = vadd.f32 0.0, %v853
      %v855 = vpop.f32.mrb[0].mxu0
      %v856 = vpop.f32.mrb[0].mxu0
      %v857 = vpop.f32.mrb[0].mxu0
      %858 = vdwg.mxu0
      %v859 = vadd.f32 %v808, %v854
      %v860 = vld [vmem:[#allocation2 + $0x9] sm:$0x1]
      %v861 = vpack.c.bf16 %v860, %v860
      %s862 = scalar_lea.vmem %s4, 20
      %v863 = vld [vmem:[%s862] sm:$0xf]
      %v865 = vsel %vm594, %v861, 0
      %v868 = vsel %vm611, %v863, 0
      %870 = vmatprep.subr.bf16.mxu0 0
      %871 = vmatpush1.bf16.msra.mxu0 %v868
      %872 = vmatprep.subr.bf16.mxu0 0
      %873 = vmatpush1.bf16.msra.mxu0 0
      %874 = vmatprep.subr.bf16.mxu0 0
      %875 = vmatpush1.bf16.msra.mxu0 0
      %876 = vmatprep.subr.bf16.mxu0 0
      %877 = vmatpush1.bf16.msra.mxu0 0
      %878 = vmatprep.subr.bf16.mxu0 0
      %879 = vmatpush1.bf16.msra.mxu0 0
      %880 = vmatprep.subr.bf16.mxu0 0
      %881 = vmatpush1.bf16.msra.mxu0 0
      %882 = vmatprep.subr.bf16.mxu0 0
      %883 = vmatpush1.bf16.msra.mxu0 0
      %884 = vmatprep.subr.bf16.mxu0 0
      %885 = vmatpush1.bf16.msra.mxu0 0
      %886 = vmatprep.subr.bf16.mxu0 0
      %887 = vmatpush1.bf16.msra.mxu0 0
      %888 = vmatprep.subr.bf16.mxu0 0
      %889 = vmatpush1.bf16.msra.mxu0 0
      %890 = vmatprep.subr.bf16.mxu0 0
      %891 = vmatpush1.bf16.msra.mxu0 0
      %892 = vmatprep.subr.bf16.mxu0 0
      %893 = vmatpush1.bf16.msra.mxu0 0
      %894 = vmatprep.subr.bf16.mxu0 0
      %895 = vmatpush1.bf16.msra.mxu0 0
      %896 = vmatprep.subr.bf16.mxu0 0
      %897 = vmatpush1.bf16.msra.mxu0 0
      %898 = vmatprep.subr.bf16.mxu0 0
      %899 = vmatpush1.bf16.msra.mxu0 0
      %900 = vmatprep.subr.bf16.mxu0 0
      %901 = vmatpush1.bf16.msra.mxu0 0
      %902 = vmatprep.mubr.bf16.mxu0 0
      %903 = vmatmul.mubr.bf16.gmra.mrb[0].mxu0 %v865
      %v904 = vpop.f32.mrb[0].mxu0
      %v905 = vadd.f32 0.0, %v904
      %v906 = vpop.f32.mrb[0].mxu0
      %v907 = vpop.f32.mrb[0].mxu0
      %v908 = vpop.f32.mrb[0].mxu0
      %909 = vdwg.mxu0
      %v910 = vadd.f32 %v859, %v905
      %v911 = vld [vmem:[#allocation2 + $0xe] sm:$0x1]
      %v912 = vpack.c.bf16 %v911, %v911
      %s913 = scalar_lea.vmem %s4, 24
      %v914 = vld [vmem:[%s913] sm:$0xf]
      %v916 = vsel %vm594, %v912, 0
      %v919 = vsel %vm611, %v914, 0
      %921 = vmatprep.subr.bf16.mxu0 0
      %922 = vmatpush1.bf16.msra.mxu0 %v919
      %923 = vmatprep.subr.bf16.mxu0 0
      %924 = vmatpush1.bf16.msra.mxu0 0
      %925 = vmatprep.subr.bf16.mxu0 0
      %926 = vmatpush1.bf16.msra.mxu0 0
      %927 = vmatprep.subr.bf16.mxu0 0
      %928 = vmatpush1.bf16.msra.mxu0 0
      %929 = vmatprep.subr.bf16.mxu0 0
      %930 = vmatpush1.bf16.msra.mxu0 0
      %931 = vmatprep.subr.bf16.mxu0 0
      %932 = vmatpush1.bf16.msra.mxu0 0
      %933 = vmatprep.subr.bf16.mxu0 0
      %934 = vmatpush1.bf16.msra.mxu0 0
      %935 = vmatprep.subr.bf16.mxu0 0
      %936 = vmatpush1.bf16.msra.mxu0 0
      %937 = vmatprep.subr.bf16.mxu0 0
      %938 = vmatpush1.bf16.msra.mxu0 0
      %939 = vmatprep.subr.bf16.mxu0 0
      %940 = vmatpush1.bf16.msra.mxu0 0
      %941 = vmatprep.subr.bf16.mxu0 0
      %942 = vmatpush1.bf16.msra.mxu0 0
      %943 = vmatprep.subr.bf16.mxu0 0
      %944 = vmatpush1.bf16.msra.mxu0 0
      %945 = vmatprep.subr.bf16.mxu0 0
      %946 = vmatpush1.bf16.msra.mxu0 0
      %947 = vmatprep.subr.bf16.mxu0 0
      %948 = vmatpush1.bf16.msra.mxu0 0
      %949 = vmatprep.subr.bf16.mxu0 0
      %950 = vmatpush1.bf16.msra.mxu0 0
      %951 = vmatprep.subr.bf16.mxu0 0
      %952 = vmatpush1.bf16.msra.mxu0 0
      %953 = vmatprep.mubr.bf16.mxu0 0
      %954 = vmatmul.mubr.bf16.gmra.mrb[0].mxu0 %v916
      %v955 = vpop.f32.mrb[0].mxu0
      %v956 = vadd.f32 0.0, %v955
      %v957 = vpop.f32.mrb[0].mxu0
      %v958 = vpop.f32.mrb[0].mxu0
      %v959 = vpop.f32.mrb[0].mxu0
      %960 = vdwg.mxu0
      %v961 = vadd.f32 %v910, %v956
      %v962 = vld [vmem:[#allocation2 + $0xf] sm:$0x1]
      %v963 = vpack.c.bf16 %v962, %v962
      %s964 = scalar_lea.vmem %s4, 28
      %v965 = vld [vmem:[%s964] sm:$0xf]
      %v967 = vsel %vm594, %v963, 0
      %v970 = vsel %vm611, %v965, 0
      %972 = vmatprep.subr.bf16.mxu0 0
      %973 = vmatpush1.bf16.msra.mxu0 %v970
      %974 = vmatprep.subr.bf16.mxu0 0
      %975 = vmatpush1.bf16.msra.mxu0 0
      %976 = vmatprep.subr.bf16.mxu0 0
      %977 = vmatpush1.bf16.msra.mxu0 0
      %978 = vmatprep.subr.bf16.mxu0 0
      %979 = vmatpush1.bf16.msra.mxu0 0
      %980 = vmatprep.subr.bf16.mxu0 0
      %981 = vmatpush1.bf16.msra.mxu0 0
      %982 = vmatprep.subr.bf16.mxu0 0
      %983 = vmatpush1.bf16.msra.mxu0 0
      %984 = vmatprep.subr.bf16.mxu0 0
      %985 = vmatpush1.bf16.msra.mxu0 0
      %986 = vmatprep.subr.bf16.mxu0 0
      %987 = vmatpush1.bf16.msra.mxu0 0
      %988 = vmatprep.subr.bf16.mxu0 0
      %989 = vmatpush1.bf16.msra.mxu0 0
      %990 = vmatprep.subr.bf16.mxu0 0
      %991 = vmatpush1.bf16.msra.mxu0 0
      %992 = vmatprep.subr.bf16.mxu0 0
      %993 = vmatpush1.bf16.msra.mxu0 0
      %994 = vmatprep.subr.bf16.mxu0 0
      %995 = vmatpush1.bf16.msra.mxu0 0
      %996 = vmatprep.subr.bf16.mxu0 0
      %997 = vmatpush1.bf16.msra.mxu0 0
      %998 = vmatprep.subr.bf16.mxu0 0
      %999 = vmatpush1.bf16.msra.mxu0 0
      %1000 = vmatprep.subr.bf16.mxu0 0
      %1001 = vmatpush1.bf16.msra.mxu0 0
      %1002 = vmatprep.subr.bf16.mxu0 0
      %1003 = vmatpush1.bf16.msra.mxu0 0
      %1004 = vmatprep.mubr.bf16.mxu0 0
      %1005 = vmatmul.mubr.bf16.gmra.mrb[0].mxu0 %v967
      %v1006 = vpop.f32.mrb[0].mxu0
      %v1007 = vadd.f32 0.0, %v1006
      %v1008 = vpop.f32.mrb[0].mxu0
      %v1009 = vpop.f32.mrb[0].mxu0
      %v1010 = vpop.f32.mrb[0].mxu0
      %1011 = vdwg.mxu0
      %v1012 = vadd.f32 %v961, %v1007
      %v1013 = vld [vmem:[#allocation2 + $0x10] sm:$0x1]
      %v1014 = vpack.c.bf16 %v1013, %v1013
      %s1015 = scalar_lea.vmem %s4, 32
      %v1016 = vld [vmem:[%s1015] sm:$0xf]
      %v1018 = vsel %vm594, %v1014, 0
      %v1021 = vsel %vm611, %v1016, 0
      %1023 = vmatprep.subr.bf16.mxu0 0
      %1024 = vmatpush1.bf16.msra.mxu0 %v1021
      %1025 = vmatprep.subr.bf16.mxu0 0
      %1026 = vmatpush1.bf16.msra.mxu0 0
      %1027 = vmatprep.subr.bf16.mxu0 0
      %1028 = vmatpush1.bf16.msra.mxu0 0
      %1029 = vmatprep.subr.bf16.mxu0 0
      %1030 = vmatpush1.bf16.msra.mxu0 0
      %1031 = vmatprep.subr.bf16.mxu0 0
      %1032 = vmatpush1.bf16.msra.mxu0 0
      %1033 = vmatprep.subr.bf16.mxu0 0
      %1034 = vmatpush1.bf16.msra.mxu0 0
      %1035 = vmatprep.subr.bf16.mxu0 0
      %1036 = vmatpush1.bf16.msra.mxu0 0
      %1037 = vmatprep.subr.bf16.mxu0 0
      %1038 = vmatpush1.bf16.msra.mxu0 0
      %1039 = vmatprep.subr.bf16.mxu0 0
      %1040 = vmatpush1.bf16.msra.mxu0 0
      %1041 = vmatprep.subr.bf16.mxu0 0
      %1042 = vmatpush1.bf16.msra.mxu0 0
      %1043 = vmatprep.subr.bf16.mxu0 0
      %1044 = vmatpush1.bf16.msra.mxu0 0
      %1045 = vmatprep.subr.bf16.mxu0 0
      %1046 = vmatpush1.bf16.msra.mxu0 0
      %1047 = vmatprep.subr.bf16.mxu0 0
      %1048 = vmatpush1.bf16.msra.mxu0 0
      %1049 = vmatprep.subr.bf16.mxu0 0
      %1050 = vmatpush1.bf16.msra.mxu0 0
      %1051 = vmatprep.subr.bf16.mxu0 0
      %1052 = vmatpush1.bf16.msra.mxu0 0
      %1053 = vmatprep.subr.bf16.mxu0 0
      %1054 = vmatpush1.bf16.msra.mxu0 0
      %1055 = vmatprep.mubr.bf16.mxu0 0
      %1056 = vmatmul.mubr.bf16.gmra.mrb[0].mxu0 %v1018
      %v1057 = vpop.f32.mrb[0].mxu0
      %v1058 = vadd.f32 0.0, %v1057
      %v1059 = vpop.f32.mrb[0].mxu0
      %v1060 = vpop.f32.mrb[0].mxu0
      %v1061 = vpop.f32.mrb[0].mxu0
      %1062 = vdwg.mxu0
      %v1063 = vadd.f32 %v1012, %v1058
      %v1064 = vmax.f32 %v1063, 0.0
      %v1065 = vpack.c.bf16 %v1064, %v1064
      %v1066 = vld [vmem:[%s6] sm:$0xf]
      %v1067 = vld [vmem:[%s6 + $0x4] sm:$0xf]
      %v1070 = vunpack.c.l.b16 %v1066
      %v1071 = vunpack.c.l.b16 %v1067
      %v1072 = vpack.c.b16 %v1071, %v1070
      %vm1074 = vcmask 130048
      %v1076 = vsel %vm1074, %v1065, 0
      %1078 = vmatprep.subr.bf16.mxu0 0
      %1079 = vmatpush1.bf16.msra.mxu0 %v1072
      %1080 = vmatprep.subr.bf16.mxu0 0
      %1081 = vmatpush1.bf16.msra.mxu0 0
      %1082 = vmatprep.subr.bf16.mxu0 0
      %1083 = vmatpush1.bf16.msra.mxu0 0
      %1084 = vmatprep.subr.bf16.mxu0 0
      %1085 = vmatpush1.bf16.msra.mxu0 0
      %1086 = vmatprep.subr.bf16.mxu0 0
      %1087 = vmatpush1.bf16.msra.mxu0 0
      %1088 = vmatprep.subr.bf16.mxu0 0
      %1089 = vmatpush1.bf16.msra.mxu0 0
      %1090 = vmatprep.subr.bf16.mxu0 0
      %1091 = vmatpush1.bf16.msra.mxu0 0
      %1092 = vmatprep.subr.bf16.mxu0 0
      %1093 = vmatpush1.bf16.msra.mxu0 0
      %1094 = vmatprep.subr.bf16.mxu0 0
      %1095 = vmatpush1.bf16.msra.mxu0 0
      %1096 = vmatprep.subr.bf16.mxu0 0
      %1097 = vmatpush1.bf16.msra.mxu0 0
      %1098 = vmatprep.subr.bf16.mxu0 0
      %1099 = vmatpush1.bf16.msra.mxu0 0
      %1100 = vmatprep.subr.bf16.mxu0 0
      %1101 = vmatpush1.bf16.msra.mxu0 0
      %1102 = vmatprep.subr.bf16.mxu0 0
      %1103 = vmatpush1.bf16.msra.mxu0 0
      %1104 = vmatprep.subr.bf16.mxu0 0
      %1105 = vmatpush1.bf16.msra.mxu0 0
      %1106 = vmatprep.subr.bf16.mxu0 0
      %1107 = vmatpush1.bf16.msra.mxu0 0
      %1108 = vmatprep.subr.bf16.mxu0 0
      %1109 = vmatpush1.bf16.msra.mxu0 0
      %1110 = vmatprep.mubr.bf16.mxu0 0
      %1111 = vmatmul.mubr.bf16.gmra.mrb[0].mxu0 %v1076
      %v1112 = vpop.f32.mrb[0].mxu0
      %v1113 = vadd.f32 0.0, %v1112
      %v1114 = vpop.f32.mrb[0].mxu0
      %v1115 = vpop.f32.mrb[0].mxu0
      %v1116 = vpop.f32.mrb[0].mxu0
      %1117 = vdwg.mxu0
      %v1118 = vadd.f32 %v603, %v1113
      %1119 = vmatprep.subr.bf16.mxu0 0
      %1120 = vmatpush1.bf16.msra.mxu0 %v613
      %1121 = vmatprep.subr.bf16.mxu0 0
      %1122 = vmatpush1.bf16.msra.mxu0 0
      %1123 = vmatprep.subr.bf16.mxu0 0
      %1124 = vmatpush1.bf16.msra.mxu0 0
      %1125 = vmatprep.subr.bf16.mxu0 0
      %1126 = vmatpush1.bf16.msra.mxu0 0
      %1127 = vmatprep.subr.bf16.mxu0 0
      %1128 = vmatpush1.bf16.msra.mxu0 0
      %1129 = vmatprep.subr.bf16.mxu0 0
      %1130 = vmatpush1.bf16.msra.mxu0 0
      %1131 = vmatprep.subr.bf16.mxu0 0
      %1132 = vmatpush1.bf16.msra.mxu0 0
      %1133 = vmatprep.subr.bf16.mxu0 0
      %1134 = vmatpush1.bf16.msra.mxu0 0
      %1135 = vmatprep.subr.bf16.mxu0 0
      %1136 = vmatpush1.bf16.msra.mxu0 0
      %1137 = vmatprep.subr.bf16.mxu0 0
      %1138 = vmatpush1.bf16.msra.mxu0 0
      %1139 = vmatprep.subr.bf16.mxu0 0
      %1140 = vmatpush1.bf16.msra.mxu0 0
      %1141 = vmatprep.subr.bf16.mxu0 0
      %1142 = vmatpush1.bf16.msra.mxu0 0
      %1143 = vmatprep.subr.bf16.mxu0 0
      %1144 = vmatpush1.bf16.msra.mxu0 0
      %1145 = vmatprep.subr.bf16.mxu0 0
      %1146 = vmatpush1.bf16.msra.mxu0 0
      %1147 = vmatprep.subr.bf16.mxu0 0
      %1148 = vmatpush1.bf16.msra.mxu0 0
      %1149 = vmatprep.subr.bf16.mxu0 0
      %1150 = vmatpush1.bf16.msra.mxu0 0
      %1151 = vmatprep.mubr.bf16.mxu0 0
      %1152 = vmatmul.mubr.bf16.gmra.mrb[0].mxu0 %v712
      %v1153 = vpop.f32.mrb[0].mxu0
      %v1154 = vadd.f32 0.0, %v1153
      %v1155 = vpop.f32.mrb[0].mxu0
      %v1156 = vpop.f32.mrb[0].mxu0
      %v1157 = vpop.f32.mrb[0].mxu0
      %1158 = vdwg.mxu0
      %v1159 = vadd.f32 %v604, %v1154
      %v1160 = vld [vmem:[#allocation2 + $0x3] sm:$0x1]
      %v1161 = vpack.c.bf16 %v1160, %v1160
      %v1163 = vsel %vm594, %v1161, 0
      %1165 = vmatprep.subr.bf16.mxu0 0
      %1166 = vmatpush1.bf16.msra.mxu0 %v664
      %1167 = vmatprep.subr.bf16.mxu0 0
      %1168 = vmatpush1.bf16.msra.mxu0 0
      %1169 = vmatprep.subr.bf16.mxu0 0
      %1170 = vmatpush1.bf16.msra.mxu0 0
      %1171 = vmatprep.subr.bf16.mxu0 0
      %1172 = vmatpush1.bf16.msra.mxu0 0
      %1173 = vmatprep.subr.bf16.mxu0 0
      %1174 = vmatpush1.bf16.msra.mxu0 0
      %1175 = vmatprep.subr.bf16.mxu0 0
      %1176 = vmatpush1.bf16.msra.mxu0 0
      %1177 = vmatprep.subr.bf16.mxu0 0
      %1178 = vmatpush1.bf16.msra.mxu0 0
      %1179 = vmatprep.subr.bf16.mxu0 0
      %1180 = vmatpush1.bf16.msra.mxu0 0
      %1181 = vmatprep.subr.bf16.mxu0 0
      %1182 = vmatpush1.bf16.msra.mxu0 0
      %1183 = vmatprep.subr.bf16.mxu0 0
      %1184 = vmatpush1.bf16.msra.mxu0 0
      %1185 = vmatprep.subr.bf16.mxu0 0
      %1186 = vmatpush1.bf16.msra.mxu0 0
      %1187 = vmatprep.subr.bf16.mxu0 0
      %1188 = vmatpush1.bf16.msra.mxu0 0
      %1189 = vmatprep.subr.bf16.mxu0 0
      %1190 = vmatpush1.bf16.msra.mxu0 0
      %1191 = vmatprep.subr.bf16.mxu0 0
      %1192 = vmatpush1.bf16.msra.mxu0 0
      %1193 = vmatprep.subr.bf16.mxu0 0
      %1194 = vmatpush1.bf16.msra.mxu0 0
      %1195 = vmatprep.subr.bf16.mxu0 0
      %1196 = vmatpush1.bf16.msra.mxu0 0
      %1197 = vmatprep.mubr.bf16.mxu0 0
      %1198 = vmatmul.mubr.bf16.gmra.mrb[0].mxu0 %v1163
      %v1199 = vpop.f32.mrb[0].mxu0
      %v1200 = vadd.f32 0.0, %v1199
      %v1201 = vpop.f32.mrb[0].mxu0
      %v1202 = vpop.f32.mrb[0].mxu0
      %v1203 = vpop.f32.mrb[0].mxu0
      %1204 = vdwg.mxu0
      %v1205 = vadd.f32 %v1159, %v1200
      %v1206 = vld [vmem:[#allocation2 + $0x4] sm:$0x1]
      %v1207 = vpack.c.bf16 %v1206, %v1206
      %v1209 = vsel %vm594, %v1207, 0
      %1211 = vmatprep.subr.bf16.mxu0 0
      %1212 = vmatpush1.bf16.msra.mxu0 %v715
      %1213 = vmatprep.subr.bf16.mxu0 0
      %1214 = vmatpush1.bf16.msra.mxu0 0
      %1215 = vmatprep.subr.bf16.mxu0 0
      %1216 = vmatpush1.bf16.msra.mxu0 0
      %1217 = vmatprep.subr.bf16.mxu0 0
      %1218 = vmatpush1.bf16.msra.mxu0 0
      %1219 = vmatprep.subr.bf16.mxu0 0
      %1220 = vmatpush1.bf16.msra.mxu0 0
      %1221 = vmatprep.subr.bf16.mxu0 0
      %1222 = vmatpush1.bf16.msra.mxu0 0
      %1223 = vmatprep.subr.bf16.mxu0 0
      %1224 = vmatpush1.bf16.msra.mxu0 0
      %1225 = vmatprep.subr.bf16.mxu0 0
      %1226 = vmatpush1.bf16.msra.mxu0 0
      %1227 = vmatprep.subr.bf16.mxu0 0
      %1228 = vmatpush1.bf16.msra.mxu0 0
      %1229 = vmatprep.subr.bf16.mxu0 0
      %1230 = vmatpush1.bf16.msra.mxu0 0
      %1231 = vmatprep.subr.bf16.mxu0 0
      %1232 = vmatpush1.bf16.msra.mxu0 0
      %1233 = vmatprep.subr.bf16.mxu0 0
      %1234 = vmatpush1.bf16.msra.mxu0 0
      %1235 = vmatprep.subr.bf16.mxu0 0
      %1236 = vmatpush1.bf16.msra.mxu0 0
      %1237 = vmatprep.subr.bf16.mxu0 0
      %1238 = vmatpush1.bf16.msra.mxu0 0
      %1239 = vmatprep.subr.bf16.mxu0 0
      %1240 = vmatpush1.bf16.msra.mxu0 0
      %1241 = vmatprep.subr.bf16.mxu0 0
      %1242 = vmatpush1.bf16.msra.mxu0 0
      %1243 = vmatprep.mubr.bf16.mxu0 0
      %1244 = vmatmul.mubr.bf16.gmra.mrb[0].mxu0 %v1209
      %v1245 = vpop.f32.mrb[0].mxu0
      %v1246 = vadd.f32 0.0, %v1245
      %v1247 = vpop.f32.mrb[0].mxu0
      %v1248 = vpop.f32.mrb[0].mxu0
      %v1249 = vpop.f32.mrb[0].mxu0
      %1250 = vdwg.mxu0
      %v1251 = vadd.f32 %v1205, %v1246
      %1252 = vmatprep.subr.bf16.mxu0 0
      %1253 = vmatpush1.bf16.msra.mxu0 %v766
      %1254 = vmatprep.subr.bf16.mxu0 0
      %1255 = vmatpush1.bf16.msra.mxu0 0
      %1256 = vmatprep.subr.bf16.mxu0 0
      %1257 = vmatpush1.bf16.msra.mxu0 0
      %1258 = vmatprep.subr.bf16.mxu0 0
      %1259 = vmatpush1.bf16.msra.mxu0 0
      %1260 = vmatprep.subr.bf16.mxu0 0
      %1261 = vmatpush1.bf16.msra.mxu0 0
      %1262 = vmatprep.subr.bf16.mxu0 0
      %1263 = vmatpush1.bf16.msra.mxu0 0
      %1264 = vmatprep.subr.bf16.mxu0 0
      %1265 = vmatpush1.bf16.msra.mxu0 0
      %1266 = vmatprep.subr.bf16.mxu0 0
      %1267 = vmatpush1.bf16.msra.mxu0 0
      %1268 = vmatprep.subr.bf16.mxu0 0
      %1269 = vmatpush1.bf16.msra.mxu0 0
      %1270 = vmatprep.subr.bf16.mxu0 0
      %1271 = vmatpush1.bf16.msra.mxu0 0
      %1272 = vmatprep.subr.bf16.mxu0 0
      %1273 = vmatpush1.bf16.msra.mxu0 0
      %1274 = vmatprep.subr.bf16.mxu0 0
      %1275 = vmatpush1.bf16.msra.mxu0 0
      %1276 = vmatprep.subr.bf16.mxu0 0
      %1277 = vmatpush1.bf16.msra.mxu0 0
      %1278 = vmatprep.subr.bf16.mxu0 0
      %1279 = vmatpush1.bf16.msra.mxu0 0
      %1280 = vmatprep.subr.bf16.mxu0 0
      %1281 = vmatpush1.bf16.msra.mxu0 0
      %1282 = vmatprep.subr.bf16.mxu0 0
      %1283 = vmatpush1.bf16.msra.mxu0 0
      %1284 = vmatprep.mubr.bf16.mxu0 0
      %1285 = vmatmul.mubr.bf16.gmra.mrb[0].mxu0 %v865
      %v1286 = vpop.f32.mrb[0].mxu0
      %v1287 = vadd.f32 0.0, %v1286
      %v1288 = vpop.f32.mrb[0].mxu0
      %v1289 = vpop.f32.mrb[0].mxu0
      %v1290 = vpop.f32.mrb[0].mxu0
      %1291 = vdwg.mxu0
      %v1292 = vadd.f32 %v1251, %v1287
      %v1293 = vld [vmem:[#allocation2 + $0xa] sm:$0x1]
      %v1294 = vpack.c.bf16 %v1293, %v1293
      %v1296 = vsel %vm594, %v1294, 0
      %1298 = vmatprep.subr.bf16.mxu0 0
      %1299 = vmatpush1.bf16.msra.mxu0 %v817
      %1300 = vmatprep.subr.bf16.mxu0 0
      %1301 = vmatpush1.bf16.msra.mxu0 0
      %1302 = vmatprep.subr.bf16.mxu0 0
      %1303 = vmatpush1.bf16.msra.mxu0 0
      %1304 = vmatprep.subr.bf16.mxu0 0
      %1305 = vmatpush1.bf16.msra.mxu0 0
      %1306 = vmatprep.subr.bf16.mxu0 0
      %1307 = vmatpush1.bf16.msra.mxu0 0
      %1308 = vmatprep.subr.bf16.mxu0 0
      %1309 = vmatpush1.bf16.msra.mxu0 0
      %1310 = vmatprep.subr.bf16.mxu0 0
      %1311 = vmatpush1.bf16.msra.mxu0 0
      %1312 = vmatprep.subr.bf16.mxu0 0
      %1313 = vmatpush1.bf16.msra.mxu0 0
      %1314 = vmatprep.subr.bf16.mxu0 0
      %1315 = vmatpush1.bf16.msra.mxu0 0
      %1316 = vmatprep.subr.bf16.mxu0 0
      %1317 = vmatpush1.bf16.msra.mxu0 0
      %1318 = vmatprep.subr.bf16.mxu0 0
      %1319 = vmatpush1.bf16.msra.mxu0 0
      %1320 = vmatprep.subr.bf16.mxu0 0
      %1321 = vmatpush1.bf16.msra.mxu0 0
      %1322 = vmatprep.subr.bf16.mxu0 0
      %1323 = vmatpush1.bf16.msra.mxu0 0
      %1324 = vmatprep.subr.bf16.mxu0 0
      %1325 = vmatpush1.bf16.msra.mxu0 0
      %1326 = vmatprep.subr.bf16.mxu0 0
      %1327 = vmatpush1.bf16.msra.mxu0 0
      %1328 = vmatprep.subr.bf16.mxu0 0
      %1329 = vmatpush1.bf16.msra.mxu0 0
      %1330 = vmatprep.mubr.bf16.mxu0 0
      %1331 = vmatmul.mubr.bf16.gmra.mrb[0].mxu0 %v1296
      %v1332 = vpop.f32.mrb[0].mxu0
      %v1333 = vadd.f32 0.0, %v1332
      %v1334 = vpop.f32.mrb[0].mxu0
      %v1335 = vpop.f32.mrb[0].mxu0
      %v1336 = vpop.f32.mrb[0].mxu0
      %1337 = vdwg.mxu0
      %v1338 = vadd.f32 %v1292, %v1333
      %v1339 = vld [vmem:[#allocation2 + $0xb] sm:$0x1]
      %v1340 = vpack.c.bf16 %v1339, %v1339
      %v1342 = vsel %vm594, %v1340, 0
      %1344 = vmatprep.subr.bf16.mxu0 0
      %1345 = vmatpush1.bf16.msra.mxu0 %v868
      %1346 = vmatprep.subr.bf16.mxu0 0
      %1347 = vmatpush1.bf16.msra.mxu0 0
      %1348 = vmatprep.subr.bf16.mxu0 0
      %1349 = vmatpush1.bf16.msra.mxu0 0
      %1350 = vmatprep.subr.bf16.mxu0 0
      %1351 = vmatpush1.bf16.msra.mxu0 0
      %1352 = vmatprep.subr.bf16.mxu0 0
      %1353 = vmatpush1.bf16.msra.mxu0 0
      %1354 = vmatprep.subr.bf16.mxu0 0
      %1355 = vmatpush1.bf16.msra.mxu0 0
      %1356 = vmatprep.subr.bf16.mxu0 0
      %1357 = vmatpush1.bf16.msra.mxu0 0
      %1358 = vmatprep.subr.bf16.mxu0 0
      %1359 = vmatpush1.bf16.msra.mxu0 0
      %1360 = vmatprep.subr.bf16.mxu0 0
      %1361 = vmatpush1.bf16.msra.mxu0 0
      %1362 = vmatprep.subr.bf16.mxu0 0
      %1363 = vmatpush1.bf16.msra.mxu0 0
      %1364 = vmatprep.subr.bf16.mxu0 0
      %1365 = vmatpush1.bf16.msra.mxu0 0
      %1366 = vmatprep.subr.bf16.mxu0 0
      %1367 = vmatpush1.bf16.msra.mxu0 0
      %1368 = vmatprep.subr.bf16.mxu0 0
      %1369 = vmatpush1.bf16.msra.mxu0 0
      %1370 = vmatprep.subr.bf16.mxu0 0
      %1371 = vmatpush1.bf16.msra.mxu0 0
      %1372 = vmatprep.subr.bf16.mxu0 0
      %1373 = vmatpush1.bf16.msra.mxu0 0
      %1374 = vmatprep.subr.bf16.mxu0 0
      %1375 = vmatpush1.bf16.msra.mxu0 0
      %1376 = vmatprep.mubr.bf16.mxu0 0
      %1377 = vmatmul.mubr.bf16.gmra.mrb[0].mxu0 %v1342
      %v1378 = vpop.f32.mrb[0].mxu0
      %v1379 = vadd.f32 0.0, %v1378
      %v1380 = vpop.f32.mrb[0].mxu0
      %v1381 = vpop.f32.mrb[0].mxu0
      %v1382 = vpop.f32.mrb[0].mxu0
      %1383 = vdwg.mxu0
      %v1384 = vadd.f32 %v1338, %v1379
      %1385 = vmatprep.subr.bf16.mxu0 0
      %1386 = vmatpush1.bf16.msra.mxu0 %v919
      %1387 = vmatprep.subr.bf16.mxu0 0
      %1388 = vmatpush1.bf16.msra.mxu0 0
      %1389 = vmatprep.subr.bf16.mxu0 0
      %1390 = vmatpush1.bf16.msra.mxu0 0
      %1391 = vmatprep.subr.bf16.mxu0 0
      %1392 = vmatpush1.bf16.msra.mxu0 0
      %1393 = vmatprep.subr.bf16.mxu0 0
      %1394 = vmatpush1.bf16.msra.mxu0 0
      %1395 = vmatprep.subr.bf16.mxu0 0
      %1396 = vmatpush1.bf16.msra.mxu0 0
      %1397 = vmatprep.subr.bf16.mxu0 0
      %1398 = vmatpush1.bf16.msra.mxu0 0
      %1399 = vmatprep.subr.bf16.mxu0 0
      %1400 = vmatpush1.bf16.msra.mxu0 0
      %1401 = vmatprep.subr.bf16.mxu0 0
      %1402 = vmatpush1.bf16.msra.mxu0 0
      %1403 = vmatprep.subr.bf16.mxu0 0
      %1404 = vmatpush1.bf16.msra.mxu0 0
      %1405 = vmatprep.subr.bf16.mxu0 0
      %1406 = vmatpush1.bf16.msra.mxu0 0
      %1407 = vmatprep.subr.bf16.mxu0 0
      %1408 = vmatpush1.bf16.msra.mxu0 0
      %1409 = vmatprep.subr.bf16.mxu0 0
      %1410 = vmatpush1.bf16.msra.mxu0 0
      %1411 = vmatprep.subr.bf16.mxu0 0
      %1412 = vmatpush1.bf16.msra.mxu0 0
      %1413 = vmatprep.subr.bf16.mxu0 0
      %1414 = vmatpush1.bf16.msra.mxu0 0
      %1415 = vmatprep.subr.bf16.mxu0 0
      %1416 = vmatpush1.bf16.msra.mxu0 0
      %1417 = vmatprep.mubr.bf16.mxu0 0
      %1418 = vmatmul.mubr.bf16.gmra.mrb[0].mxu0 %v1018
      %v1419 = vpop.f32.mrb[0].mxu0
      %v1420 = vadd.f32 0.0, %v1419
      %v1421 = vpop.f32.mrb[0].mxu0
      %v1422 = vpop.f32.mrb[0].mxu0
      %v1423 = vpop.f32.mrb[0].mxu0
      %1424 = vdwg.mxu0
      %v1425 = vadd.f32 %v1384, %v1420
      %v1426 = vld [vmem:[#allocation2 + $0x11] sm:$0x1]
      %v1427 = vpack.c.bf16 %v1426, %v1426
      %v1429 = vsel %vm594, %v1427, 0
      %1431 = vmatprep.subr.bf16.mxu0 0
      %1432 = vmatpush1.bf16.msra.mxu0 %v970
      %1433 = vmatprep.subr.bf16.mxu0 0
      %1434 = vmatpush1.bf16.msra.mxu0 0
      %1435 = vmatprep.subr.bf16.mxu0 0
      %1436 = vmatpush1.bf16.msra.mxu0 0
      %1437 = vmatprep.subr.bf16.mxu0 0
      %1438 = vmatpush1.bf16.msra.mxu0 0
      %1439 = vmatprep.subr.bf16.mxu0 0
      %1440 = vmatpush1.bf16.msra.mxu0 0
      %1441 = vmatprep.subr.bf16.mxu0 0
      %1442 = vmatpush1.bf16.msra.mxu0 0
      %1443 = vmatprep.subr.bf16.mxu0 0
      %1444 = vmatpush1.bf16.msra.mxu0 0
      %1445 = vmatprep.subr.bf16.mxu0 0
      %1446 = vmatpush1.bf16.msra.mxu0 0
      %1447 = vmatprep.subr.bf16.mxu0 0
      %1448 = vmatpush1.bf16.msra.mxu0 0
      %1449 = vmatprep.subr.bf16.mxu0 0
      %1450 = vmatpush1.bf16.msra.mxu0 0
      %1451 = vmatprep.subr.bf16.mxu0 0
      %1452 = vmatpush1.bf16.msra.mxu0 0
      %1453 = vmatprep.subr.bf16.mxu0 0
      %1454 = vmatpush1.bf16.msra.mxu0 0
      %1455 = vmatprep.subr.bf16.mxu0 0
      %1456 = vmatpush1.bf16.msra.mxu0 0
      %1457 = vmatprep.subr.bf16.mxu0 0
      %1458 = vmatpush1.bf16.msra.mxu0 0
      %1459 = vmatprep.subr.bf16.mxu0 0
      %1460 = vmatpush1.bf16.msra.mxu0 0
      %1461 = vmatprep.subr.bf16.mxu0 0
      %1462 = vmatpush1.bf16.msra.mxu0 0
      %1463 = vmatprep.mubr.bf16.mxu0 0
      %1464 = vmatmul.mubr.bf16.gmra.mrb[0].mxu0 %v1429
      %v1465 = vpop.f32.mrb[0].mxu0
      %v1466 = vadd.f32 0.0, %v1465
      %v1467 = vpop.f32.mrb[0].mxu0
      %v1468 = vpop.f32.mrb[0].mxu0
      %v1469 = vpop.f32.mrb[0].mxu0
      %1470 = vdwg.mxu0
      %v1471 = vadd.f32 %v1425, %v1466
      %v1472 = vld [vmem:[#allocation2 + $0x12] sm:$0x1]
      %v1473 = vpack.c.bf16 %v1472, %v1472
      %v1475 = vsel %vm594, %v1473, 0
      %1477 = vmatprep.subr.bf16.mxu0 0
      %1478 = vmatpush1.bf16.msra.mxu0 %v1021
      %1479 = vmatprep.subr.bf16.mxu0 0
      %1480 = vmatpush1.bf16.msra.mxu0 0
      %1481 = vmatprep.subr.bf16.mxu0 0
      %1482 = vmatpush1.bf16.msra.mxu0 0
      %1483 = vmatprep.subr.bf16.mxu0 0
      %1484 = vmatpush1.bf16.msra.mxu0 0
      %1485 = vmatprep.subr.bf16.mxu0 0
      %1486 = vmatpush1.bf16.msra.mxu0 0
      %1487 = vmatprep.subr.bf16.mxu0 0
      %1488 = vmatpush1.bf16.msra.mxu0 0
      %1489 = vmatprep.subr.bf16.mxu0 0
      %1490 = vmatpush1.bf16.msra.mxu0 0
      %1491 = vmatprep.subr.bf16.mxu0 0
      %1492 = vmatpush1.bf16.msra.mxu0 0
      %1493 = vmatprep.subr.bf16.mxu0 0
      %1494 = vmatpush1.bf16.msra.mxu0 0
      %1495 = vmatprep.subr.bf16.mxu0 0
      %1496 = vmatpush1.bf16.msra.mxu0 0
      %1497 = vmatprep.subr.bf16.mxu0 0
      %1498 = vmatpush1.bf16.msra.mxu0 0
      %1499 = vmatprep.subr.bf16.mxu0 0
      %1500 = vmatpush1.bf16.msra.mxu0 0
      %1501 = vmatprep.subr.bf16.mxu0 0
      %1502 = vmatpush1.bf16.msra.mxu0 0
      %1503 = vmatprep.subr.bf16.mxu0 0
      %1504 = vmatpush1.bf16.msra.mxu0 0
      %1505 = vmatprep.subr.bf16.mxu0 0
      %1506 = vmatpush1.bf16.msra.mxu0 0
      %1507 = vmatprep.subr.bf16.mxu0 0
      %1508 = vmatpush1.bf16.msra.mxu0 0
      %1509 = vmatprep.mubr.bf16.mxu0 0
      %1510 = vmatmul.mubr.bf16.gmra.mrb[0].mxu0 %v1475
      %v1511 = vpop.f32.mrb[0].mxu0
      %v1512 = vadd.f32 0.0, %v1511
      %v1513 = vpop.f32.mrb[0].mxu0
      %v1514 = vpop.f32.mrb[0].mxu0
      %v1515 = vpop.f32.mrb[0].mxu0
      %1516 = vdwg.mxu0
      %v1517 = vadd.f32 %v1471, %v1512
      %v1518 = vmax.f32 %v1517, 0.0
      %v1519 = vpack.c.bf16 %v1518, %v1518
      %s1520 = scalar_lea.vmem %s6, 8
      %v1521 = vld [vmem:[%s1520] sm:$0xf]
      %v1522 = vld [vmem:[%s1520 + $0x4] sm:$0xf]
      %v1525 = vunpack.c.l.b16 %v1521
      %v1526 = vunpack.c.l.b16 %v1522
      %v1527 = vpack.c.b16 %v1526, %v1525
      %v1530 = vsel %vm1074, %v1519, 0
      %1532 = vmatprep.subr.bf16.mxu0 0
      %1533 = vmatpush1.bf16.msra.mxu0 %v1527
      %1534 = vmatprep.subr.bf16.mxu0 0
      %1535 = vmatpush1.bf16.msra.mxu0 0
      %1536 = vmatprep.subr.bf16.mxu0 0
      %1537 = vmatpush1.bf16.msra.mxu0 0
      %1538 = vmatprep.subr.bf16.mxu0 0
      %1539 = vmatpush1.bf16.msra.mxu0 0
      %1540 = vmatprep.subr.bf16.mxu0 0
      %1541 = vmatpush1.bf16.msra.mxu0 0
      %1542 = vmatprep.subr.bf16.mxu0 0
      %1543 = vmatpush1.bf16.msra.mxu0 0
      %1544 = vmatprep.subr.bf16.mxu0 0
      %1545 = vmatpush1.bf16.msra.mxu0 0
      %1546 = vmatprep.subr.bf16.mxu0 0
      %1547 = vmatpush1.bf16.msra.mxu0 0
      %1548 = vmatprep.subr.bf16.mxu0 0
      %1549 = vmatpush1.bf16.msra.mxu0 0
      %1550 = vmatprep.subr.bf16.mxu0 0
      %1551 = vmatpush1.bf16.msra.mxu0 0
      %1552 = vmatprep.subr.bf16.mxu0 0
      %1553 = vmatpush1.bf16.msra.mxu0 0
      %1554 = vmatprep.subr.bf16.mxu0 0
      %1555 = vmatpush1.bf16.msra.mxu0 0
      %1556 = vmatprep.subr.bf16.mxu0 0
      %1557 = vmatpush1.bf16.msra.mxu0 0
      %1558 = vmatprep.subr.bf16.mxu0 0
      %1559 = vmatpush1.bf16.msra.mxu0 0
      %1560 = vmatprep.subr.bf16.mxu0 0
      %1561 = vmatpush1.bf16.msra.mxu0 0
      %1562 = vmatprep.subr.bf16.mxu0 0
      %1563 = vmatpush1.bf16.msra.mxu0 0
      %1564 = vmatprep.mubr.bf16.mxu0 0
      %1565 = vmatmul.mubr.bf16.gmra.mrb[0].mxu0 %v1530
      %v1566 = vpop.f32.mrb[0].mxu0
      %v1567 = vadd.f32 0.0, %v1566
      %v1568 = vpop.f32.mrb[0].mxu0
      %v1569 = vpop.f32.mrb[0].mxu0
      %v1570 = vpop.f32.mrb[0].mxu0
      %1571 = vdwg.mxu0
      %v1572 = vadd.f32 %v1118, %v1567
      %1573 = vmatprep.subr.bf16.mxu0 0
      %1574 = vmatpush1.bf16.msra.mxu0 %v613
      %1575 = vmatprep.subr.bf16.mxu0 0
      %1576 = vmatpush1.bf16.msra.mxu0 0
      %1577 = vmatprep.subr.bf16.mxu0 0
      %1578 = vmatpush1.bf16.msra.mxu0 0
      %1579 = vmatprep.subr.bf16.mxu0 0
      %1580 = vmatpush1.bf16.msra.mxu0 0
      %1581 = vmatprep.subr.bf16.mxu0 0
      %1582 = vmatpush1.bf16.msra.mxu0 0
      %1583 = vmatprep.subr.bf16.mxu0 0
      %1584 = vmatpush1.bf16.msra.mxu0 0
      %1585 = vmatprep.subr.bf16.mxu0 0
      %1586 = vmatpush1.bf16.msra.mxu0 0
      %1587 = vmatprep.subr.bf16.mxu0 0
      %1588 = vmatpush1.bf16.msra.mxu0 0
      %1589 = vmatprep.subr.bf16.mxu0 0
      %1590 = vmatpush1.bf16.msra.mxu0 0
      %1591 = vmatprep.subr.bf16.mxu0 0
      %1592 = vmatpush1.bf16.msra.mxu0 0
      %1593 = vmatprep.subr.bf16.mxu0 0
      %1594 = vmatpush1.bf16.msra.mxu0 0
      %1595 = vmatprep.subr.bf16.mxu0 0
      %1596 = vmatpush1.bf16.msra.mxu0 0
      %1597 = vmatprep.subr.bf16.mxu0 0
      %1598 = vmatpush1.bf16.msra.mxu0 0
      %1599 = vmatprep.subr.bf16.mxu0 0
      %1600 = vmatpush1.bf16.msra.mxu0 0
      %1601 = vmatprep.subr.bf16.mxu0 0
      %1602 = vmatpush1.bf16.msra.mxu0 0
      %1603 = vmatprep.subr.bf16.mxu0 0
      %1604 = vmatpush1.bf16.msra.mxu0 0
      %1605 = vmatprep.mubr.bf16.mxu0 0
      %1606 = vmatmul.mubr.bf16.gmra.mrb[0].mxu0 %v1209
      %v1607 = vpop.f32.mrb[0].mxu0
      %v1608 = vadd.f32 0.0, %v1607
      %v1609 = vpop.f32.mrb[0].mxu0
      %v1610 = vpop.f32.mrb[0].mxu0
      %v1611 = vpop.f32.mrb[0].mxu0
      %1612 = vdwg.mxu0
      %v1613 = vadd.f32 %v604, %v1608
      %v1614 = vld [vmem:[#allocation2 + $0x5] sm:$0x1]
      %v1615 = vpack.c.bf16 %v1614, %v1614
      %v1617 = vsel %vm594, %v1615, 0
      %1619 = vmatprep.subr.bf16.mxu0 0
      %1620 = vmatpush1.bf16.msra.mxu0 %v664
      %1621 = vmatprep.subr.bf16.mxu0 0
      %1622 = vmatpush1.bf16.msra.mxu0 0
      %1623 = vmatprep.subr.bf16.mxu0 0
      %1624 = vmatpush1.bf16.msra.mxu0 0
      %1625 = vmatprep.subr.bf16.mxu0 0
      %1626 = vmatpush1.bf16.msra.mxu0 0
      %1627 = vmatprep.subr.bf16.mxu0 0
      %1628 = vmatpush1.bf16.msra.mxu0 0
      %1629 = vmatprep.subr.bf16.mxu0 0
      %1630 = vmatpush1.bf16.msra.mxu0 0
      %1631 = vmatprep.subr.bf16.mxu0 0
      %1632 = vmatpush1.bf16.msra.mxu0 0
      %1633 = vmatprep.subr.bf16.mxu0 0
      %1634 = vmatpush1.bf16.msra.mxu0 0
      %1635 = vmatprep.subr.bf16.mxu0 0
      %1636 = vmatpush1.bf16.msra.mxu0 0
      %1637 = vmatprep.subr.bf16.mxu0 0
      %1638 = vmatpush1.bf16.msra.mxu0 0
      %1639 = vmatprep.subr.bf16.mxu0 0
      %1640 = vmatpush1.bf16.msra.mxu0 0
      %1641 = vmatprep.subr.bf16.mxu0 0
      %1642 = vmatpush1.bf16.msra.mxu0 0
      %1643 = vmatprep.subr.bf16.mxu0 0
      %1644 = vmatpush1.bf16.msra.mxu0 0
      %1645 = vmatprep.subr.bf16.mxu0 0
      %1646 = vmatpush1.bf16.msra.mxu0 0
      %1647 = vmatprep.subr.bf16.mxu0 0
      %1648 = vmatpush1.bf16.msra.mxu0 0
      %1649 = vmatprep.subr.bf16.mxu0 0
      %1650 = vmatpush1.bf16.msra.mxu0 0
      %1651 = vmatprep.mubr.bf16.mxu0 0
      %1652 = vmatmul.mubr.bf16.gmra.mrb[0].mxu0 %v1617
      %v1653 = vpop.f32.mrb[0].mxu0
      %v1654 = vadd.f32 0.0, %v1653
      %v1655 = vpop.f32.mrb[0].mxu0
      %v1656 = vpop.f32.mrb[0].mxu0
      %v1657 = vpop.f32.mrb[0].mxu0
      %1658 = vdwg.mxu0
      %v1659 = vadd.f32 %v1613, %v1654
      %v1660 = vld [vmem:[#allocation2 + $0x6] sm:$0x1]
      %v1661 = vpack.c.bf16 %v1660, %v1660
      %v1663 = vsel %vm594, %v1661, 0
      %1665 = vmatprep.subr.bf16.mxu0 0
      %1666 = vmatpush1.bf16.msra.mxu0 %v715
      %1667 = vmatprep.subr.bf16.mxu0 0
      %1668 = vmatpush1.bf16.msra.mxu0 0
      %1669 = vmatprep.subr.bf16.mxu0 0
      %1670 = vmatpush1.bf16.msra.mxu0 0
      %1671 = vmatprep.subr.bf16.mxu0 0
      %1672 = vmatpush1.bf16.msra.mxu0 0
      %1673 = vmatprep.subr.bf16.mxu0 0
      %1674 = vmatpush1.bf16.msra.mxu0 0
      %1675 = vmatprep.subr.bf16.mxu0 0
      %1676 = vmatpush1.bf16.msra.mxu0 0
      %1677 = vmatprep.subr.bf16.mxu0 0
      %1678 = vmatpush1.bf16.msra.mxu0 0
      %1679 = vmatprep.subr.bf16.mxu0 0
      %1680 = vmatpush1.bf16.msra.mxu0 0
      %1681 = vmatprep.subr.bf16.mxu0 0
      %1682 = vmatpush1.bf16.msra.mxu0 0
      %1683 = vmatprep.subr.bf16.mxu0 0
      %1684 = vmatpush1.bf16.msra.mxu0 0
      %1685 = vmatprep.subr.bf16.mxu0 0
      %1686 = vmatpush1.bf16.msra.mxu0 0
      %1687 = vmatprep.subr.bf16.mxu0 0
      %1688 = vmatpush1.bf16.msra.mxu0 0
      %1689 = vmatprep.subr.bf16.mxu0 0
      %1690 = vmatpush1.bf16.msra.mxu0 0
      %1691 = vmatprep.subr.bf16.mxu0 0
      %1692 = vmatpush1.bf16.msra.mxu0 0
      %1693 = vmatprep.subr.bf16.mxu0 0
      %1694 = vmatpush1.bf16.msra.mxu0 0
      %1695 = vmatprep.subr.bf16.mxu0 0
      %1696 = vmatpush1.bf16.msra.mxu0 0
      %1697 = vmatprep.mubr.bf16.mxu0 0
      %1698 = vmatmul.mubr.bf16.gmra.mrb[0].mxu0 %v1663
      %v1699 = vpop.f32.mrb[0].mxu0
      %v1700 = vadd.f32 0.0, %v1699
      %v1701 = vpop.f32.mrb[0].mxu0
      %v1702 = vpop.f32.mrb[0].mxu0
      %v1703 = vpop.f32.mrb[0].mxu0
      %1704 = vdwg.mxu0
      %v1705 = vadd.f32 %v1659, %v1700
      %1706 = vmatprep.subr.bf16.mxu0 0
      %1707 = vmatpush1.bf16.msra.mxu0 %v766
      %1708 = vmatprep.subr.bf16.mxu0 0
      %1709 = vmatpush1.bf16.msra.mxu0 0
      %1710 = vmatprep.subr.bf16.mxu0 0
      %1711 = vmatpush1.bf16.msra.mxu0 0
      %1712 = vmatprep.subr.bf16.mxu0 0
      %1713 = vmatpush1.bf16.msra.mxu0 0
      %1714 = vmatprep.subr.bf16.mxu0 0
      %1715 = vmatpush1.bf16.msra.mxu0 0
      %1716 = vmatprep.subr.bf16.mxu0 0
      %1717 = vmatpush1.bf16.msra.mxu0 0
      %1718 = vmatprep.subr.bf16.mxu0 0
      %1719 = vmatpush1.bf16.msra.mxu0 0
      %1720 = vmatprep.subr.bf16.mxu0 0
      %1721 = vmatpush1.bf16.msra.mxu0 0
      %1722 = vmatprep.subr.bf16.mxu0 0
      %1723 = vmatpush1.bf16.msra.mxu0 0
      %1724 = vmatprep.subr.bf16.mxu0 0
      %1725 = vmatpush1.bf16.msra.mxu0 0
      %1726 = vmatprep.subr.bf16.mxu0 0
      %1727 = vmatpush1.bf16.msra.mxu0 0
      %1728 = vmatprep.subr.bf16.mxu0 0
      %1729 = vmatpush1.bf16.msra.mxu0 0
      %1730 = vmatprep.subr.bf16.mxu0 0
      %1731 = vmatpush1.bf16.msra.mxu0 0
      %1732 = vmatprep.subr.bf16.mxu0 0
      %1733 = vmatpush1.bf16.msra.mxu0 0
      %1734 = vmatprep.subr.bf16.mxu0 0
      %1735 = vmatpush1.bf16.msra.mxu0 0
      %1736 = vmatprep.subr.bf16.mxu0 0
      %1737 = vmatpush1.bf16.msra.mxu0 0
      %1738 = vmatprep.mubr.bf16.mxu0 0
      %1739 = vmatmul.mubr.bf16.gmra.mrb[0].mxu0 %v1342
      %v1740 = vpop.f32.mrb[0].mxu0
      %v1741 = vadd.f32 0.0, %v1740
      %v1742 = vpop.f32.mrb[0].mxu0
      %v1743 = vpop.f32.mrb[0].mxu0
      %v1744 = vpop.f32.mrb[0].mxu0
      %1745 = vdwg.mxu0
      %v1746 = vadd.f32 %v1705, %v1741
      %v1747 = vld [vmem:[#allocation2 + $0xc] sm:$0x1]
      %v1748 = vpack.c.bf16 %v1747, %v1747
      %v1750 = vsel %vm594, %v1748, 0
      %1752 = vmatprep.subr.bf16.mxu0 0
      %1753 = vmatpush1.bf16.msra.mxu0 %v817
      %1754 = vmatprep.subr.bf16.mxu0 0
      %1755 = vmatpush1.bf16.msra.mxu0 0
      %1756 = vmatprep.subr.bf16.mxu0 0
      %1757 = vmatpush1.bf16.msra.mxu0 0
      %1758 = vmatprep.subr.bf16.mxu0 0
      %1759 = vmatpush1.bf16.msra.mxu0 0
      %1760 = vmatprep.subr.bf16.mxu0 0
      %1761 = vmatpush1.bf16.msra.mxu0 0
      %1762 = vmatprep.subr.bf16.mxu0 0
      %1763 = vmatpush1.bf16.msra.mxu0 0
      %1764 = vmatprep.subr.bf16.mxu0 0
      %1765 = vmatpush1.bf16.msra.mxu0 0
      %1766 = vmatprep.subr.bf16.mxu0 0
      %1767 = vmatpush1.bf16.msra.mxu0 0
      %1768 = vmatprep.subr.bf16.mxu0 0
      %1769 = vmatpush1.bf16.msra.mxu0 0
      %1770 = vmatprep.subr.bf16.mxu0 0
      %1771 = vmatpush1.bf16.msra.mxu0 0
      %1772 = vmatprep.subr.bf16.mxu0 0
      %1773 = vmatpush1.bf16.msra.mxu0 0
      %1774 = vmatprep.subr.bf16.mxu0 0
      %1775 = vmatpush1.bf16.msra.mxu0 0
      %1776 = vmatprep.subr.bf16.mxu0 0
      %1777 = vmatpush1.bf16.msra.mxu0 0
      %1778 = vmatprep.subr.bf16.mxu0 0
      %1779 = vmatpush1.bf16.msra.mxu0 0
      %1780 = vmatprep.subr.bf16.mxu0 0
      %1781 = vmatpush1.bf16.msra.mxu0 0
      %1782 = vmatprep.subr.bf16.mxu0 0
      %1783 = vmatpush1.bf16.msra.mxu0 0
      %1784 = vmatprep.mubr.bf16.mxu0 0
      %1785 = vmatmul.mubr.bf16.gmra.mrb[0].mxu0 %v1750
      %v1786 = vpop.f32.mrb[0].mxu0
      %v1787 = vadd.f32 0.0, %v1786
      %v1788 = vpop.f32.mrb[0].mxu0
      %v1789 = vpop.f32.mrb[0].mxu0
      %v1790 = vpop.f32.mrb[0].mxu0
      %1791 = vdwg.mxu0
      %v1792 = vadd.f32 %v1746, %v1787
      %v1793 = vld [vmem:[#allocation2 + $0xd] sm:$0x1]
      %v1794 = vpack.c.bf16 %v1793, %v1793
      %v1796 = vsel %vm594, %v1794, 0
      %1798 = vmatprep.subr.bf16.mxu0 0
      %1799 = vmatpush1.bf16.msra.mxu0 %v868
      %1800 = vmatprep.subr.bf16.mxu0 0
      %1801 = vmatpush1.bf16.msra.mxu0 0
      %1802 = vmatprep.subr.bf16.mxu0 0
      %1803 = vmatpush1.bf16.msra.mxu0 0
      %1804 = vmatprep.subr.bf16.mxu0 0
      %1805 = vmatpush1.bf16.msra.mxu0 0
      %1806 = vmatprep.subr.bf16.mxu0 0
      %1807 = vmatpush1.bf16.msra.mxu0 0
      %1808 = vmatprep.subr.bf16.mxu0 0
      %1809 = vmatpush1.bf16.msra.mxu0 0
      %1810 = vmatprep.subr.bf16.mxu0 0
      %1811 = vmatpush1.bf16.msra.mxu0 0
      %1812 = vmatprep.subr.bf16.mxu0 0
      %1813 = vmatpush1.bf16.msra.mxu0 0
      %1814 = vmatprep.subr.bf16.mxu0 0
      %1815 = vmatpush1.bf16.msra.mxu0 0
      %1816 = vmatprep.subr.bf16.mxu0 0
      %1817 = vmatpush1.bf16.msra.mxu0 0
      %1818 = vmatprep.subr.bf16.mxu0 0
      %1819 = vmatpush1.bf16.msra.mxu0 0
      %1820 = vmatprep.subr.bf16.mxu0 0
      %1821 = vmatpush1.bf16.msra.mxu0 0
      %1822 = vmatprep.subr.bf16.mxu0 0
      %1823 = vmatpush1.bf16.msra.mxu0 0
      %1824 = vmatprep.subr.bf16.mxu0 0
      %1825 = vmatpush1.bf16.msra.mxu0 0
      %1826 = vmatprep.subr.bf16.mxu0 0
      %1827 = vmatpush1.bf16.msra.mxu0 0
      %1828 = vmatprep.subr.bf16.mxu0 0
      %1829 = vmatpush1.bf16.msra.mxu0 0
      %1830 = vmatprep.mubr.bf16.mxu0 0
      %1831 = vmatmul.mubr.bf16.gmra.mrb[0].mxu0 %v1796
      %v1832 = vpop.f32.mrb[0].mxu0
      %v1833 = vadd.f32 0.0, %v1832
      %v1834 = vpop.f32.mrb[0].mxu0
      %v1835 = vpop.f32.mrb[0].mxu0
      %v1836 = vpop.f32.mrb[0].mxu0
      %1837 = vdwg.mxu0
      %v1838 = vadd.f32 %v1792, %v1833
      %1839 = vmatprep.subr.bf16.mxu0 0
      %1840 = vmatpush1.bf16.msra.mxu0 %v919
      %1841 = vmatprep.subr.bf16.mxu0 0
      %1842 = vmatpush1.bf16.msra.mxu0 0
      %1843 = vmatprep.subr.bf16.mxu0 0
      %1844 = vmatpush1.bf16.msra.mxu0 0
      %1845 = vmatprep.subr.bf16.mxu0 0
      %1846 = vmatpush1.bf16.msra.mxu0 0
      %1847 = vmatprep.subr.bf16.mxu0 0
      %1848 = vmatpush1.bf16.msra.mxu0 0
      %1849 = vmatprep.subr.bf16.mxu0 0
      %1850 = vmatpush1.bf16.msra.mxu0 0
      %1851 = vmatprep.subr.bf16.mxu0 0
      %1852 = vmatpush1.bf16.msra.mxu0 0
      %1853 = vmatprep.subr.bf16.mxu0 0
      %1854 = vmatpush1.bf16.msra.mxu0 0
      %1855 = vmatprep.subr.bf16.mxu0 0
      %1856 = vmatpush1.bf16.msra.mxu0 0
      %1857 = vmatprep.subr.bf16.mxu0 0
      %1858 = vmatpush1.bf16.msra.mxu0 0
      %1859 = vmatprep.subr.bf16.mxu0 0
      %1860 = vmatpush1.bf16.msra.mxu0 0
      %1861 = vmatprep.subr.bf16.mxu0 0
      %1862 = vmatpush1.bf16.msra.mxu0 0
      %1863 = vmatprep.subr.bf16.mxu0 0
      %1864 = vmatpush1.bf16.msra.mxu0 0
      %1865 = vmatprep.subr.bf16.mxu0 0
      %1866 = vmatpush1.bf16.msra.mxu0 0
      %1867 = vmatprep.subr.bf16.mxu0 0
      %1868 = vmatpush1.bf16.msra.mxu0 0
      %1869 = vmatprep.subr.bf16.mxu0 0
      %1870 = vmatpush1.bf16.msra.mxu0 0
      %1871 = vmatprep.mubr.bf16.mxu0 0
      %1872 = vmatmul.mubr.bf16.gmra.mrb[0].mxu0 %v1475
      %v1873 = vpop.f32.mrb[0].mxu0
      %v1874 = vadd.f32 0.0, %v1873
      %v1875 = vpop.f32.mrb[0].mxu0
      %v1876 = vpop.f32.mrb[0].mxu0
      %v1877 = vpop.f32.mrb[0].mxu0
      %1878 = vdwg.mxu0
      %v1879 = vadd.f32 %v1838, %v1874
      %v1880 = vld [vmem:[#allocation2 + $0x13] sm:$0x1]
      %v1881 = vpack.c.bf16 %v1880, %v1880
      %v1883 = vsel %vm594, %v1881, 0
      %1885 = vmatprep.subr.bf16.mxu0 0
      %1886 = vmatpush1.bf16.msra.mxu0 %v970
      %1887 = vmatprep.subr.bf16.mxu0 0
      %1888 = vmatpush1.bf16.msra.mxu0 0
      %1889 = vmatprep.subr.bf16.mxu0 0
      %1890 = vmatpush1.bf16.msra.mxu0 0
      %1891 = vmatprep.subr.bf16.mxu0 0
      %1892 = vmatpush1.bf16.msra.mxu0 0
      %1893 = vmatprep.subr.bf16.mxu0 0
      %1894 = vmatpush1.bf16.msra.mxu0 0
      %1895 = vmatprep.subr.bf16.mxu0 0
      %1896 = vmatpush1.bf16.msra.mxu0 0
      %1897 = vmatprep.subr.bf16.mxu0 0
      %1898 = vmatpush1.bf16.msra.mxu0 0
      %1899 = vmatprep.subr.bf16.mxu0 0
      %1900 = vmatpush1.bf16.msra.mxu0 0
      %1901 = vmatprep.subr.bf16.mxu0 0
      %1902 = vmatpush1.bf16.msra.mxu0 0
      %1903 = vmatprep.subr.bf16.mxu0 0
      %1904 = vmatpush1.bf16.msra.mxu0 0
      %1905 = vmatprep.subr.bf16.mxu0 0
      %1906 = vmatpush1.bf16.msra.mxu0 0
      %1907 = vmatprep.subr.bf16.mxu0 0
      %1908 = vmatpush1.bf16.msra.mxu0 0
      %1909 = vmatprep.subr.bf16.mxu0 0
      %1910 = vmatpush1.bf16.msra.mxu0 0
      %1911 = vmatprep.subr.bf16.mxu0 0
      %1912 = vmatpush1.bf16.msra.mxu0 0
      %1913 = vmatprep.subr.bf16.mxu0 0
      %1914 = vmatpush1.bf16.msra.mxu0 0
      %1915 = vmatprep.subr.bf16.mxu0 0
      %1916 = vmatpush1.bf16.msra.mxu0 0
      %1917 = vmatprep.mubr.bf16.mxu0 0
      %1918 = vmatmul.mubr.bf16.gmra.mrb[0].mxu0 %v1883
      %v1919 = vpop.f32.mrb[0].mxu0
      %v1920 = vadd.f32 0.0, %v1919
      %v1921 = vpop.f32.mrb[0].mxu0
      %v1922 = vpop.f32.mrb[0].mxu0
      %v1923 = vpop.f32.mrb[0].mxu0
      %1924 = vdwg.mxu0
      %v1925 = vadd.f32 %v1879, %v1920
      %v1926 = vld [vmem:[#allocation2 + $0x14] sm:$0x1]
      %v1927 = vpack.c.bf16 %v1926, %v1926
      %v1929 = vsel %vm594, %v1927, 0
      %1931 = vmatprep.subr.bf16.mxu0 0
      %1932 = vmatpush1.bf16.msra.mxu0 %v1021
      %1933 = vmatprep.subr.bf16.mxu0 0
      %1934 = vmatpush1.bf16.msra.mxu0 0
      %1935 = vmatprep.subr.bf16.mxu0 0
      %1936 = vmatpush1.bf16.msra.mxu0 0
      %1937 = vmatprep.subr.bf16.mxu0 0
      %1938 = vmatpush1.bf16.msra.mxu0 0
      %1939 = vmatprep.subr.bf16.mxu0 0
      %1940 = vmatpush1.bf16.msra.mxu0 0
      %1941 = vmatprep.subr.bf16.mxu0 0
      %1942 = vmatpush1.bf16.msra.mxu0 0
      %1943 = vmatprep.subr.bf16.mxu0 0
      %1944 = vmatpush1.bf16.msra.mxu0 0
      %1945 = vmatprep.subr.bf16.mxu0 0
      %1946 = vmatpush1.bf16.msra.mxu0 0
      %1947 = vmatprep.subr.bf16.mxu0 0
      %1948 = vmatpush1.bf16.msra.mxu0 0
      %1949 = vmatprep.subr.bf16.mxu0 0
      %1950 = vmatpush1.bf16.msra.mxu0 0
      %1951 = vmatprep.subr.bf16.mxu0 0
      %1952 = vmatpush1.bf16.msra.mxu0 0
      %1953 = vmatprep.subr.bf16.mxu0 0
      %1954 = vmatpush1.bf16.msra.mxu0 0
      %1955 = vmatprep.subr.bf16.mxu0 0
      %1956 = vmatpush1.bf16.msra.mxu0 0
      %1957 = vmatprep.subr.bf16.mxu0 0
      %1958 = vmatpush1.bf16.msra.mxu0 0
      %1959 = vmatprep.subr.bf16.mxu0 0
      %1960 = vmatpush1.bf16.msra.mxu0 0
      %1961 = vmatprep.subr.bf16.mxu0 0
      %1962 = vmatpush1.bf16.msra.mxu0 0
      %1963 = vmatprep.mubr.bf16.mxu0 0
      %1964 = vmatmul.mubr.bf16.gmra.mrb[0].mxu0 %v1929
      %v1965 = vpop.f32.mrb[0].mxu0
      %v1966 = vadd.f32 0.0, %v1965
      %v1967 = vpop.f32.mrb[0].mxu0
      %v1968 = vpop.f32.mrb[0].mxu0
      %v1969 = vpop.f32.mrb[0].mxu0
      %1970 = vdwg.mxu0
      %v1971 = vadd.f32 %v1925, %v1966
      %v1972 = vmax.f32 %v1971, 0.0
      %v1973 = vpack.c.bf16 %v1972, %v1972
      %s1974 = scalar_lea.vmem %s6, 16
      %v1975 = vld [vmem:[%s1974] sm:$0xf]
      %v1976 = vld [vmem:[%s1974 + $0x4] sm:$0xf]
      %v1979 = vunpack.c.l.b16 %v1975
      %v1980 = vunpack.c.l.b16 %v1976
      %v1981 = vpack.c.b16 %v1980, %v1979
      %v1984 = vsel %vm1074, %v1973, 0
      %1986 = vmatprep.subr.bf16.mxu0 0
      %1987 = vmatpush1.bf16.msra.mxu0 %v1981
      %1988 = vmatprep.subr.bf16.mxu0 0
      %1989 = vmatpush1.bf16.msra.mxu0 0
      %1990 = vmatprep.subr.bf16.mxu0 0
      %1991 = vmatpush1.bf16.msra.mxu0 0
      %1992 = vmatprep.subr.bf16.mxu0 0
      %1993 = vmatpush1.bf16.msra.mxu0 0
      %1994 = vmatprep.subr.bf16.mxu0 0
      %1995 = vmatpush1.bf16.msra.mxu0 0
      %1996 = vmatprep.subr.bf16.mxu0 0
      %1997 = vmatpush1.bf16.msra.mxu0 0
      %1998 = vmatprep.subr.bf16.mxu0 0
      %1999 = vmatpush1.bf16.msra.mxu0 0
      %2000 = vmatprep.subr.bf16.mxu0 0
      %2001 = vmatpush1.bf16.msra.mxu0 0
      %2002 = vmatprep.subr.bf16.mxu0 0
      %2003 = vmatpush1.bf16.msra.mxu0 0
      %2004 = vmatprep.subr.bf16.mxu0 0
      %2005 = vmatpush1.bf16.msra.mxu0 0
      %2006 = vmatprep.subr.bf16.mxu0 0
      %2007 = vmatpush1.bf16.msra.mxu0 0
      %2008 = vmatprep.subr.bf16.mxu0 0
      %2009 = vmatpush1.bf16.msra.mxu0 0
      %2010 = vmatprep.subr.bf16.mxu0 0
      %2011 = vmatpush1.bf16.msra.mxu0 0
      %2012 = vmatprep.subr.bf16.mxu0 0
      %2013 = vmatpush1.bf16.msra.mxu0 0
      %2014 = vmatprep.subr.bf16.mxu0 0
      %2015 = vmatpush1.bf16.msra.mxu0 0
      %2016 = vmatprep.subr.bf16.mxu0 0
      %2017 = vmatpush1.bf16.msra.mxu0 0
      %2018 = vmatprep.mubr.bf16.mxu0 0
      %2019 = vmatmul.mubr.bf16.gmra.mrb[0].mxu0 %v1984
      %v2020 = vpop.f32.mrb[0].mxu0
      %v2021 = vadd.f32 0.0, %v2020
      %v2022 = vpop.f32.mrb[0].mxu0
      %v2023 = vpop.f32.mrb[0].mxu0
      %v2024 = vpop.f32.mrb[0].mxu0
      %2025 = vdwg.mxu0
      %v2026 = vadd.f32 %v1572, %v2021
      %2027 = vmatprep.subr.bf16.mxu0 0
      %2028 = vmatpush1.bf16.msra.mxu0 %v613
      %2029 = vmatprep.subr.bf16.mxu0 0
      %2030 = vmatpush1.bf16.msra.mxu0 0
      %2031 = vmatprep.subr.bf16.mxu0 0
      %2032 = vmatpush1.bf16.msra.mxu0 0
      %2033 = vmatprep.subr.bf16.mxu0 0
      %2034 = vmatpush1.bf16.msra.mxu0 0
      %2035 = vmatprep.subr.bf16.mxu0 0
      %2036 = vmatpush1.bf16.msra.mxu0 0
      %2037 = vmatprep.subr.bf16.mxu0 0
      %2038 = vmatpush1.bf16.msra.mxu0 0
      %2039 = vmatprep.subr.bf16.mxu0 0
      %2040 = vmatpush1.bf16.msra.mxu0 0
      %2041 = vmatprep.subr.bf16.mxu0 0
      %2042 = vmatpush1.bf16.msra.mxu0 0
      %2043 = vmatprep.subr.bf16.mxu0 0
      %2044 = vmatpush1.bf16.msra.mxu0 0
      %2045 = vmatprep.subr.bf16.mxu0 0
      %2046 = vmatpush1.bf16.msra.mxu0 0
      %2047 = vmatprep.subr.bf16.mxu0 0
      %2048 = vmatpush1.bf16.msra.mxu0 0
      %2049 = vmatprep.subr.bf16.mxu0 0
      %2050 = vmatpush1.bf16.msra.mxu0 0
      %2051 = vmatprep.subr.bf16.mxu0 0
      %2052 = vmatpush1.bf16.msra.mxu0 0
      %2053 = vmatprep.subr.bf16.mxu0 0
      %2054 = vmatpush1.bf16.msra.mxu0 0
      %2055 = vmatprep.subr.bf16.mxu0 0
      %2056 = vmatpush1.bf16.msra.mxu0 0
      %2057 = vmatprep.subr.bf16.mxu0 0
      %2058 = vmatpush1.bf16.msra.mxu0 0
      %2059 = vmatprep.mubr.bf16.mxu0 0
      %2060 = vmatmul.mubr.bf16.gmra.mrb[0].mxu0 %v916
      %v2061 = vpop.f32.mrb[0].mxu0
      %v2062 = vadd.f32 0.0, %v2061
      %v2063 = vpop.f32.mrb[0].mxu0
      %v2064 = vpop.f32.mrb[0].mxu0
      %v2065 = vpop.f32.mrb[0].mxu0
      %2066 = vdwg.mxu0
      %v2067 = vadd.f32 %v604, %v2062
      %2068 = vmatprep.subr.bf16.mxu0 0
      %2069 = vmatpush1.bf16.msra.mxu0 %v664
      %2070 = vmatprep.subr.bf16.mxu0 0
      %2071 = vmatpush1.bf16.msra.mxu0 0
      %2072 = vmatprep.subr.bf16.mxu0 0
      %2073 = vmatpush1.bf16.msra.mxu0 0
      %2074 = vmatprep.subr.bf16.mxu0 0
      %2075 = vmatpush1.bf16.msra.mxu0 0
      %2076 = vmatprep.subr.bf16.mxu0 0
      %2077 = vmatpush1.bf16.msra.mxu0 0
      %2078 = vmatprep.subr.bf16.mxu0 0
      %2079 = vmatpush1.bf16.msra.mxu0 0
      %2080 = vmatprep.subr.bf16.mxu0 0
      %2081 = vmatpush1.bf16.msra.mxu0 0
      %2082 = vmatprep.subr.bf16.mxu0 0
      %2083 = vmatpush1.bf16.msra.mxu0 0
      %2084 = vmatprep.subr.bf16.mxu0 0
      %2085 = vmatpush1.bf16.msra.mxu0 0
      %2086 = vmatprep.subr.bf16.mxu0 0
      %2087 = vmatpush1.bf16.msra.mxu0 0
      %2088 = vmatprep.subr.bf16.mxu0 0
      %2089 = vmatpush1.bf16.msra.mxu0 0
      %2090 = vmatprep.subr.bf16.mxu0 0
      %2091 = vmatpush1.bf16.msra.mxu0 0
      %2092 = vmatprep.subr.bf16.mxu0 0
      %2093 = vmatpush1.bf16.msra.mxu0 0
      %2094 = vmatprep.subr.bf16.mxu0 0
      %2095 = vmatpush1.bf16.msra.mxu0 0
      %2096 = vmatprep.subr.bf16.mxu0 0
      %2097 = vmatpush1.bf16.msra.mxu0 0
      %2098 = vmatprep.subr.bf16.mxu0 0
      %2099 = vmatpush1.bf16.msra.mxu0 0
      %2100 = vmatprep.mubr.bf16.mxu0 0
      %2101 = vmatmul.mubr.bf16.gmra.mrb[0].mxu0 %v967
      %v2102 = vpop.f32.mrb[0].mxu0
      %v2103 = vadd.f32 0.0, %v2102
      %v2104 = vpop.f32.mrb[0].mxu0
      %v2105 = vpop.f32.mrb[0].mxu0
      %v2106 = vpop.f32.mrb[0].mxu0
      %2107 = vdwg.mxu0
      %v2108 = vadd.f32 %v2067, %v2103
      %2109 = vmatprep.subr.bf16.mxu0 0
      %2110 = vmatpush1.bf16.msra.mxu0 %v715
      %2111 = vmatprep.subr.bf16.mxu0 0
      %2112 = vmatpush1.bf16.msra.mxu0 0
      %2113 = vmatprep.subr.bf16.mxu0 0
      %2114 = vmatpush1.bf16.msra.mxu0 0
      %2115 = vmatprep.subr.bf16.mxu0 0
      %2116 = vmatpush1.bf16.msra.mxu0 0
      %2117 = vmatprep.subr.bf16.mxu0 0
      %2118 = vmatpush1.bf16.msra.mxu0 0
      %2119 = vmatprep.subr.bf16.mxu0 0
      %2120 = vmatpush1.bf16.msra.mxu0 0
      %2121 = vmatprep.subr.bf16.mxu0 0
      %2122 = vmatpush1.bf16.msra.mxu0 0
      %2123 = vmatprep.subr.bf16.mxu0 0
      %2124 = vmatpush1.bf16.msra.mxu0 0
      %2125 = vmatprep.subr.bf16.mxu0 0
      %2126 = vmatpush1.bf16.msra.mxu0 0
      %2127 = vmatprep.subr.bf16.mxu0 0
      %2128 = vmatpush1.bf16.msra.mxu0 0
      %2129 = vmatprep.subr.bf16.mxu0 0
      %2130 = vmatpush1.bf16.msra.mxu0 0
      %2131 = vmatprep.subr.bf16.mxu0 0
      %2132 = vmatpush1.bf16.msra.mxu0 0
      %2133 = vmatprep.subr.bf16.mxu0 0
      %2134 = vmatpush1.bf16.msra.mxu0 0
      %2135 = vmatprep.subr.bf16.mxu0 0
      %2136 = vmatpush1.bf16.msra.mxu0 0
      %2137 = vmatprep.subr.bf16.mxu0 0
      %2138 = vmatpush1.bf16.msra.mxu0 0
      %2139 = vmatprep.subr.bf16.mxu0 0
      %2140 = vmatpush1.bf16.msra.mxu0 0
      %2141 = vmatprep.mubr.bf16.mxu0 0
      %2142 = vmatmul.mubr.bf16.gmra.mrb[0].mxu0 %v1018
      %v2143 = vpop.f32.mrb[0].mxu0
      %v2144 = vadd.f32 0.0, %v2143
      %v2145 = vpop.f32.mrb[0].mxu0
      %v2146 = vpop.f32.mrb[0].mxu0
      %v2147 = vpop.f32.mrb[0].mxu0
      %2148 = vdwg.mxu0
      %v2149 = vadd.f32 %v2108, %v2144
      %v2150 = vld [vmem:[#allocation2 + $0x15] sm:$0x1]
      %v2151 = vpack.c.bf16 %v2150, %v2150
      %v2153 = vsel %vm594, %v2151, 0
      %2155 = vmatprep.subr.bf16.mxu0 0
      %2156 = vmatpush1.bf16.msra.mxu0 %v766
      %2157 = vmatprep.subr.bf16.mxu0 0
      %2158 = vmatpush1.bf16.msra.mxu0 0
      %2159 = vmatprep.subr.bf16.mxu0 0
      %2160 = vmatpush1.bf16.msra.mxu0 0
      %2161 = vmatprep.subr.bf16.mxu0 0
      %2162 = vmatpush1.bf16.msra.mxu0 0
      %2163 = vmatprep.subr.bf16.mxu0 0
      %2164 = vmatpush1.bf16.msra.mxu0 0
      %2165 = vmatprep.subr.bf16.mxu0 0
      %2166 = vmatpush1.bf16.msra.mxu0 0
      %2167 = vmatprep.subr.bf16.mxu0 0
      %2168 = vmatpush1.bf16.msra.mxu0 0
      %2169 = vmatprep.subr.bf16.mxu0 0
      %2170 = vmatpush1.bf16.msra.mxu0 0
      %2171 = vmatprep.subr.bf16.mxu0 0
      %2172 = vmatpush1.bf16.msra.mxu0 0
      %2173 = vmatprep.subr.bf16.mxu0 0
      %2174 = vmatpush1.bf16.msra.mxu0 0
      %2175 = vmatprep.subr.bf16.mxu0 0
      %2176 = vmatpush1.bf16.msra.mxu0 0
      %2177 = vmatprep.subr.bf16.mxu0 0
      %2178 = vmatpush1.bf16.msra.mxu0 0
      %2179 = vmatprep.subr.bf16.mxu0 0
      %2180 = vmatpush1.bf16.msra.mxu0 0
      %2181 = vmatprep.subr.bf16.mxu0 0
      %2182 = vmatpush1.bf16.msra.mxu0 0
      %2183 = vmatprep.subr.bf16.mxu0 0
      %2184 = vmatpush1.bf16.msra.mxu0 0
      %2185 = vmatprep.subr.bf16.mxu0 0
      %2186 = vmatpush1.bf16.msra.mxu0 0
      %2187 = vmatprep.mubr.bf16.mxu0 0
      %2188 = vmatmul.mubr.bf16.gmra.mrb[0].mxu0 %v2153
      %v2189 = vpop.f32.mrb[0].mxu0
      %v2190 = vadd.f32 0.0, %v2189
      %v2191 = vpop.f32.mrb[0].mxu0
      %v2192 = vpop.f32.mrb[0].mxu0
      %v2193 = vpop.f32.mrb[0].mxu0
      %2194 = vdwg.mxu0
      %v2195 = vadd.f32 %v2149, %v2190
      %v2196 = vld [vmem:[#allocation2 + $0x16] sm:$0x1]
      %v2197 = vpack.c.bf16 %v2196, %v2196
      %v2199 = vsel %vm594, %v2197, 0
      %2201 = vmatprep.subr.bf16.mxu0 0
      %2202 = vmatpush1.bf16.msra.mxu0 %v817
      %2203 = vmatprep.subr.bf16.mxu0 0
      %2204 = vmatpush1.bf16.msra.mxu0 0
      %2205 = vmatprep.subr.bf16.mxu0 0
      %2206 = vmatpush1.bf16.msra.mxu0 0
      %2207 = vmatprep.subr.bf16.mxu0 0
      %2208 = vmatpush1.bf16.msra.mxu0 0
      %2209 = vmatprep.subr.bf16.mxu0 0
      %2210 = vmatpush1.bf16.msra.mxu0 0
      %2211 = vmatprep.subr.bf16.mxu0 0
      %2212 = vmatpush1.bf16.msra.mxu0 0
      %2213 = vmatprep.subr.bf16.mxu0 0
      %2214 = vmatpush1.bf16.msra.mxu0 0
      %2215 = vmatprep.subr.bf16.mxu0 0
      %2216 = vmatpush1.bf16.msra.mxu0 0
      %2217 = vmatprep.subr.bf16.mxu0 0
      %2218 = vmatpush1.bf16.msra.mxu0 0
      %2219 = vmatprep.subr.bf16.mxu0 0
      %2220 = vmatpush1.bf16.msra.mxu0 0
      %2221 = vmatprep.subr.bf16.mxu0 0
      %2222 = vmatpush1.bf16.msra.mxu0 0
      %2223 = vmatprep.subr.bf16.mxu0 0
      %2224 = vmatpush1.bf16.msra.mxu0 0
      %2225 = vmatprep.subr.bf16.mxu0 0
      %2226 = vmatpush1.bf16.msra.mxu0 0
      %2227 = vmatprep.subr.bf16.mxu0 0
      %2228 = vmatpush1.bf16.msra.mxu0 0
      %2229 = vmatprep.subr.bf16.mxu0 0
      %2230 = vmatpush1.bf16.msra.mxu0 0
      %2231 = vmatprep.subr.bf16.mxu0 0
      %2232 = vmatpush1.bf16.msra.mxu0 0
      %2233 = vmatprep.mubr.bf16.mxu0 0
      %2234 = vmatmul.mubr.bf16.gmra.mrb[0].mxu0 %v2199
      %v2235 = vpop.f32.mrb[0].mxu0
      %v2236 = vadd.f32 0.0, %v2235
      %v2237 = vpop.f32.mrb[0].mxu0
      %v2238 = vpop.f32.mrb[0].mxu0
      %v2239 = vpop.f32.mrb[0].mxu0
      %2240 = vdwg.mxu0
      %v2241 = vadd.f32 %v2195, %v2236
      %v2242 = vld [vmem:[#allocation2 + $0x17] sm:$0x1]
      %v2243 = vpack.c.bf16 %v2242, %v2242
      %v2245 = vsel %vm594, %v2243, 0
      %2247 = vmatprep.subr.bf16.mxu0 0
      %2248 = vmatpush1.bf16.msra.mxu0 %v868
      %2249 = vmatprep.subr.bf16.mxu0 0
      %2250 = vmatpush1.bf16.msra.mxu0 0
      %2251 = vmatprep.subr.bf16.mxu0 0
      %2252 = vmatpush1.bf16.msra.mxu0 0
      %2253 = vmatprep.subr.bf16.mxu0 0
      %2254 = vmatpush1.bf16.msra.mxu0 0
      %2255 = vmatprep.subr.bf16.mxu0 0
      %2256 = vmatpush1.bf16.msra.mxu0 0
      %2257 = vmatprep.subr.bf16.mxu0 0
      %2258 = vmatpush1.bf16.msra.mxu0 0
      %2259 = vmatprep.subr.bf16.mxu0 0
      %2260 = vmatpush1.bf16.msra.mxu0 0
      %2261 = vmatprep.subr.bf16.mxu0 0
      %2262 = vmatpush1.bf16.msra.mxu0 0
      %2263 = vmatprep.subr.bf16.mxu0 0
      %2264 = vmatpush1.bf16.msra.mxu0 0
      %2265 = vmatprep.subr.bf16.mxu0 0
      %2266 = vmatpush1.bf16.msra.mxu0 0
      %2267 = vmatprep.subr.bf16.mxu0 0
      %2268 = vmatpush1.bf16.msra.mxu0 0
      %2269 = vmatprep.subr.bf16.mxu0 0
      %2270 = vmatpush1.bf16.msra.mxu0 0
      %2271 = vmatprep.subr.bf16.mxu0 0
      %2272 = vmatpush1.bf16.msra.mxu0 0
      %2273 = vmatprep.subr.bf16.mxu0 0
      %2274 = vmatpush1.bf16.msra.mxu0 0
      %2275 = vmatprep.subr.bf16.mxu0 0
      %2276 = vmatpush1.bf16.msra.mxu0 0
      %2277 = vmatprep.subr.bf16.mxu0 0
      %2278 = vmatpush1.bf16.msra.mxu0 0
      %2279 = vmatprep.mubr.bf16.mxu0 0
      %2280 = vmatmul.mubr.bf16.gmra.mrb[0].mxu0 %v2245
      %v2281 = vpop.f32.mrb[0].mxu0
      %v2282 = vadd.f32 0.0, %v2281
      %v2283 = vpop.f32.mrb[0].mxu0
      %v2284 = vpop.f32.mrb[0].mxu0
      %v2285 = vpop.f32.mrb[0].mxu0
      %2286 = vdwg.mxu0
      %v2287 = vadd.f32 %v2241, %v2282
      %v2288 = vld [vmem:[#allocation2 + $0x1c] sm:$0x1]
      %v2289 = vpack.c.bf16 %v2288, %v2288
      %v2291 = vsel %vm594, %v2289, 0
      %2293 = vmatprep.subr.bf16.mxu0 0
      %2294 = vmatpush1.bf16.msra.mxu0 %v919
      %2295 = vmatprep.subr.bf16.mxu0 0
      %2296 = vmatpush1.bf16.msra.mxu0 0
      %2297 = vmatprep.subr.bf16.mxu0 0
      %2298 = vmatpush1.bf16.msra.mxu0 0
      %2299 = vmatprep.subr.bf16.mxu0 0
      %2300 = vmatpush1.bf16.msra.mxu0 0
      %2301 = vmatprep.subr.bf16.mxu0 0
      %2302 = vmatpush1.bf16.msra.mxu0 0
      %2303 = vmatprep.subr.bf16.mxu0 0
      %2304 = vmatpush1.bf16.msra.mxu0 0
      %2305 = vmatprep.subr.bf16.mxu0 0
      %2306 = vmatpush1.bf16.msra.mxu0 0
      %2307 = vmatprep.subr.bf16.mxu0 0
      %2308 = vmatpush1.bf16.msra.mxu0 0
      %2309 = vmatprep.subr.bf16.mxu0 0
      %2310 = vmatpush1.bf16.msra.mxu0 0
      %2311 = vmatprep.subr.bf16.mxu0 0
      %2312 = vmatpush1.bf16.msra.mxu0 0
      %2313 = vmatprep.subr.bf16.mxu0 0
      %2314 = vmatpush1.bf16.msra.mxu0 0
      %2315 = vmatprep.subr.bf16.mxu0 0
      %2316 = vmatpush1.bf16.msra.mxu0 0
      %2317 = vmatprep.subr.bf16.mxu0 0
      %2318 = vmatpush1.bf16.msra.mxu0 0
      %2319 = vmatprep.subr.bf16.mxu0 0
      %2320 = vmatpush1.bf16.msra.mxu0 0
      %2321 = vmatprep.subr.bf16.mxu0 0
      %2322 = vmatpush1.bf16.msra.mxu0 0
      %2323 = vmatprep.subr.bf16.mxu0 0
      %2324 = vmatpush1.bf16.msra.mxu0 0
      %2325 = vmatprep.mubr.bf16.mxu0 0
      %2326 = vmatmul.mubr.bf16.gmra.mrb[0].mxu0 %v2291
      %v2327 = vpop.f32.mrb[0].mxu0
      %v2328 = vadd.f32 0.0, %v2327
      %v2329 = vpop.f32.mrb[0].mxu0
      %v2330 = vpop.f32.mrb[0].mxu0
      %v2331 = vpop.f32.mrb[0].mxu0
      %2332 = vdwg.mxu0
      %v2333 = vadd.f32 %v2287, %v2328
      %v2334 = vld [vmem:[#allocation2 + $0x1d] sm:$0x1]
      %v2335 = vpack.c.bf16 %v2334, %v2334
      %v2337 = vsel %vm594, %v2335, 0
      %2339 = vmatprep.subr.bf16.mxu0 0
      %2340 = vmatpush1.bf16.msra.mxu0 %v970
      %2341 = vmatprep.subr.bf16.mxu0 0
      %2342 = vmatpush1.bf16.msra.mxu0 0
      %2343 = vmatprep.subr.bf16.mxu0 0
      %2344 = vmatpush1.bf16.msra.mxu0 0
      %2345 = vmatprep.subr.bf16.mxu0 0
      %2346 = vmatpush1.bf16.msra.mxu0 0
      %2347 = vmatprep.subr.bf16.mxu0 0
      %2348 = vmatpush1.bf16.msra.mxu0 0
      %2349 = vmatprep.subr.bf16.mxu0 0
      %2350 = vmatpush1.bf16.msra.mxu0 0
      %2351 = vmatprep.subr.bf16.mxu0 0
      %2352 = vmatpush1.bf16.msra.mxu0 0
      %2353 = vmatprep.subr.bf16.mxu0 0
      %2354 = vmatpush1.bf16.msra.mxu0 0
      %2355 = vmatprep.subr.bf16.mxu0 0
      %2356 = vmatpush1.bf16.msra.mxu0 0
      %2357 = vmatprep.subr.bf16.mxu0 0
      %2358 = vmatpush1.bf16.msra.mxu0 0
      %2359 = vmatprep.subr.bf16.mxu0 0
      %2360 = vmatpush1.bf16.msra.mxu0 0
      %2361 = vmatprep.subr.bf16.mxu0 0
      %2362 = vmatpush1.bf16.msra.mxu0 0
      %2363 = vmatprep.subr.bf16.mxu0 0
      %2364 = vmatpush1.bf16.msra.mxu0 0
      %2365 = vmatprep.subr.bf16.mxu0 0
      %2366 = vmatpush1.bf16.msra.mxu0 0
      %2367 = vmatprep.subr.bf16.mxu0 0
      %2368 = vmatpush1.bf16.msra.mxu0 0
      %2369 = vmatprep.subr.bf16.mxu0 0
      %2370 = vmatpush1.bf16.msra.mxu0 0
      %2371 = vmatprep.mubr.bf16.mxu0 0
      %2372 = vmatmul.mubr.bf16.gmra.mrb[0].mxu0 %v2337
      %v2373 = vpop.f32.mrb[0].mxu0
      %v2374 = vadd.f32 0.0, %v2373
      %v2375 = vpop.f32.mrb[0].mxu0
      %v2376 = vpop.f32.mrb[0].mxu0
      %v2377 = vpop.f32.mrb[0].mxu0
      %2378 = vdwg.mxu0
      %v2379 = vadd.f32 %v2333, %v2374
      %v2380 = vld [vmem:[#allocation2 + $0x1e] sm:$0x1]
      %v2381 = vpack.c.bf16 %v2380, %v2380
      %v2383 = vsel %vm594, %v2381, 0
      %2385 = vmatprep.subr.bf16.mxu0 0
      %2386 = vmatpush1.bf16.msra.mxu0 %v1021
      %2387 = vmatprep.subr.bf16.mxu0 0
      %2388 = vmatpush1.bf16.msra.mxu0 0
      %2389 = vmatprep.subr.bf16.mxu0 0
      %2390 = vmatpush1.bf16.msra.mxu0 0
      %2391 = vmatprep.subr.bf16.mxu0 0
      %2392 = vmatpush1.bf16.msra.mxu0 0
      %2393 = vmatprep.subr.bf16.mxu0 0
      %2394 = vmatpush1.bf16.msra.mxu0 0
      %2395 = vmatprep.subr.bf16.mxu0 0
      %2396 = vmatpush1.bf16.msra.mxu0 0
      %2397 = vmatprep.subr.bf16.mxu0 0
      %2398 = vmatpush1.bf16.msra.mxu0 0
      %2399 = vmatprep.subr.bf16.mxu0 0
      %2400 = vmatpush1.bf16.msra.mxu0 0
      %2401 = vmatprep.subr.bf16.mxu0 0
      %2402 = vmatpush1.bf16.msra.mxu0 0
      %2403 = vmatprep.subr.bf16.mxu0 0
      %2404 = vmatpush1.bf16.msra.mxu0 0
      %2405 = vmatprep.subr.bf16.mxu0 0
      %2406 = vmatpush1.bf16.msra.mxu0 0
      %2407 = vmatprep.subr.bf16.mxu0 0
      %2408 = vmatpush1.bf16.msra.mxu0 0
      %2409 = vmatprep.subr.bf16.mxu0 0
      %2410 = vmatpush1.bf16.msra.mxu0 0
      %2411 = vmatprep.subr.bf16.mxu0 0
      %2412 = vmatpush1.bf16.msra.mxu0 0
      %2413 = vmatprep.subr.bf16.mxu0 0
      %2414 = vmatpush1.bf16.msra.mxu0 0
      %2415 = vmatprep.subr.bf16.mxu0 0
      %2416 = vmatpush1.bf16.msra.mxu0 0
      %2417 = vmatprep.mubr.bf16.mxu0 0
      %2418 = vmatmul.mubr.bf16.gmra.mrb[0].mxu0 %v2383
      %v2419 = vpop.f32.mrb[0].mxu0
      %v2420 = vadd.f32 0.0, %v2419
      %v2421 = vpop.f32.mrb[0].mxu0
      %v2422 = vpop.f32.mrb[0].mxu0
      %v2423 = vpop.f32.mrb[0].mxu0
      %2424 = vdwg.mxu0
      %v2425 = vadd.f32 %v2379, %v2420
      %v2426 = vmax.f32 %v2425, 0.0
      %v2427 = vpack.c.bf16 %v2426, %v2426
      %s2428 = scalar_lea.vmem %s6, 24
      %v2429 = vld [vmem:[%s2428] sm:$0xf]
      %v2430 = vld [vmem:[%s2428 + $0x4] sm:$0xf]
      %v2433 = vunpack.c.l.b16 %v2429
      %v2434 = vunpack.c.l.b16 %v2430
      %v2435 = vpack.c.b16 %v2434, %v2433
      %v2438 = vsel %vm1074, %v2427, 0
      %2440 = vmatprep.subr.bf16.mxu0 0
      %2441 = vmatpush1.bf16.msra.mxu0 %v2435
      %2442 = vmatprep.subr.bf16.mxu0 0
      %2443 = vmatpush1.bf16.msra.mxu0 0
      %2444 = vmatprep.subr.bf16.mxu0 0
      %2445 = vmatpush1.bf16.msra.mxu0 0
      %2446 = vmatprep.subr.bf16.mxu0 0
      %2447 = vmatpush1.bf16.msra.mxu0 0
      %2448 = vmatprep.subr.bf16.mxu0 0
      %2449 = vmatpush1.bf16.msra.mxu0 0
      %2450 = vmatprep.subr.bf16.mxu0 0
      %2451 = vmatpush1.bf16.msra.mxu0 0
      %2452 = vmatprep.subr.bf16.mxu0 0
      %2453 = vmatpush1.bf16.msra.mxu0 0
      %2454 = vmatprep.subr.bf16.mxu0 0
      %2455 = vmatpush1.bf16.msra.mxu0 0
      %2456 = vmatprep.subr.bf16.mxu0 0
      %2457 = vmatpush1.bf16.msra.mxu0 0
      %2458 = vmatprep.subr.bf16.mxu0 0
      %2459 = vmatpush1.bf16.msra.mxu0 0
      %2460 = vmatprep.subr.bf16.mxu0 0
      %2461 = vmatpush1.bf16.msra.mxu0 0
      %2462 = vmatprep.subr.bf16.mxu0 0
      %2463 = vmatpush1.bf16.msra.mxu0 0
      %2464 = vmatprep.subr.bf16.mxu0 0
      %2465 = vmatpush1.bf16.msra.mxu0 0
      %2466 = vmatprep.subr.bf16.mxu0 0
      %2467 = vmatpush1.bf16.msra.mxu0 0
      %2468 = vmatprep.subr.bf16.mxu0 0
      %2469 = vmatpush1.bf16.msra.mxu0 0
      %2470 = vmatprep.subr.bf16.mxu0 0
      %2471 = vmatpush1.bf16.msra.mxu0 0
      %2472 = vmatprep.mubr.bf16.mxu0 0
      %2473 = vmatmul.mubr.bf16.gmra.mrb[0].mxu0 %v2438
      %v2474 = vpop.f32.mrb[0].mxu0
      %v2475 = vadd.f32 0.0, %v2474
      %v2476 = vpop.f32.mrb[0].mxu0
      %v2477 = vpop.f32.mrb[0].mxu0
      %v2478 = vpop.f32.mrb[0].mxu0
      %2479 = vdwg.mxu0
      %v2480 = vadd.f32 %v2026, %v2475
      %2481 = vmatprep.subr.bf16.mxu0 0
      %2482 = vmatpush1.bf16.msra.mxu0 %v613
      %2483 = vmatprep.subr.bf16.mxu0 0
      %2484 = vmatpush1.bf16.msra.mxu0 0
      %2485 = vmatprep.subr.bf16.mxu0 0
      %2486 = vmatpush1.bf16.msra.mxu0 0
      %2487 = vmatprep.subr.bf16.mxu0 0
      %2488 = vmatpush1.bf16.msra.mxu0 0
      %2489 = vmatprep.subr.bf16.mxu0 0
      %2490 = vmatpush1.bf16.msra.mxu0 0
      %2491 = vmatprep.subr.bf16.mxu0 0
      %2492 = vmatpush1.bf16.msra.mxu0 0
      %2493 = vmatprep.subr.bf16.mxu0 0
      %2494 = vmatpush1.bf16.msra.mxu0 0
      %2495 = vmatprep.subr.bf16.mxu0 0
      %2496 = vmatpush1.bf16.msra.mxu0 0
      %2497 = vmatprep.subr.bf16.mxu0 0
      %2498 = vmatpush1.bf16.msra.mxu0 0
      %2499 = vmatprep.subr.bf16.mxu0 0
      %2500 = vmatpush1.bf16.msra.mxu0 0
      %2501 = vmatprep.subr.bf16.mxu0 0
      %2502 = vmatpush1.bf16.msra.mxu0 0
      %2503 = vmatprep.subr.bf16.mxu0 0
      %2504 = vmatpush1.bf16.msra.mxu0 0
      %2505 = vmatprep.subr.bf16.mxu0 0
      %2506 = vmatpush1.bf16.msra.mxu0 0
      %2507 = vmatprep.subr.bf16.mxu0 0
      %2508 = vmatpush1.bf16.msra.mxu0 0
      %2509 = vmatprep.subr.bf16.mxu0 0
      %2510 = vmatpush1.bf16.msra.mxu0 0
      %2511 = vmatprep.subr.bf16.mxu0 0
      %2512 = vmatpush1.bf16.msra.mxu0 0
      %2513 = vmatprep.mubr.bf16.mxu0 0
      %2514 = vmatmul.mubr.bf16.gmra.mrb[0].mxu0 %v1018
      %v2515 = vpop.f32.mrb[0].mxu0
      %v2516 = vadd.f32 0.0, %v2515
      %v2517 = vpop.f32.mrb[0].mxu0
      %v2518 = vpop.f32.mrb[0].mxu0
      %v2519 = vpop.f32.mrb[0].mxu0
      %2520 = vdwg.mxu0
      %v2521 = vadd.f32 %v604, %v2516
      %2522 = vmatprep.subr.bf16.mxu0 0
      %2523 = vmatpush1.bf16.msra.mxu0 %v664
      %2524 = vmatprep.subr.bf16.mxu0 0
      %2525 = vmatpush1.bf16.msra.mxu0 0
      %2526 = vmatprep.subr.bf16.mxu0 0
      %2527 = vmatpush1.bf16.msra.mxu0 0
      %2528 = vmatprep.subr.bf16.mxu0 0
      %2529 = vmatpush1.bf16.msra.mxu0 0
      %2530 = vmatprep.subr.bf16.mxu0 0
      %2531 = vmatpush1.bf16.msra.mxu0 0
      %2532 = vmatprep.subr.bf16.mxu0 0
      %2533 = vmatpush1.bf16.msra.mxu0 0
      %2534 = vmatprep.subr.bf16.mxu0 0
      %2535 = vmatpush1.bf16.msra.mxu0 0
      %2536 = vmatprep.subr.bf16.mxu0 0
      %2537 = vmatpush1.bf16.msra.mxu0 0
      %2538 = vmatprep.subr.bf16.mxu0 0
      %2539 = vmatpush1.bf16.msra.mxu0 0
      %2540 = vmatprep.subr.bf16.mxu0 0
      %2541 = vmatpush1.bf16.msra.mxu0 0
      %2542 = vmatprep.subr.bf16.mxu0 0
      %2543 = vmatpush1.bf16.msra.mxu0 0
      %2544 = vmatprep.subr.bf16.mxu0 0
      %2545 = vmatpush1.bf16.msra.mxu0 0
      %2546 = vmatprep.subr.bf16.mxu0 0
      %2547 = vmatpush1.bf16.msra.mxu0 0
      %2548 = vmatprep.subr.bf16.mxu0 0
      %2549 = vmatpush1.bf16.msra.mxu0 0
      %2550 = vmatprep.subr.bf16.mxu0 0
      %2551 = vmatpush1.bf16.msra.mxu0 0
      %2552 = vmatprep.subr.bf16.mxu0 0
      %2553 = vmatpush1.bf16.msra.mxu0 0
      %2554 = vmatprep.mubr.bf16.mxu0 0
      %2555 = vmatmul.mubr.bf16.gmra.mrb[0].mxu0 %v1429
      %v2556 = vpop.f32.mrb[0].mxu0
      %v2557 = vadd.f32 0.0, %v2556
      %v2558 = vpop.f32.mrb[0].mxu0
      %v2559 = vpop.f32.mrb[0].mxu0
      %v2560 = vpop.f32.mrb[0].mxu0
      %2561 = vdwg.mxu0
      %v2562 = vadd.f32 %v2521, %v2557
      %2563 = vmatprep.subr.bf16.mxu0 0
      %2564 = vmatpush1.bf16.msra.mxu0 %v715
      %2565 = vmatprep.subr.bf16.mxu0 0
      %2566 = vmatpush1.bf16.msra.mxu0 0
      %2567 = vmatprep.subr.bf16.mxu0 0
      %2568 = vmatpush1.bf16.msra.mxu0 0
      %2569 = vmatprep.subr.bf16.mxu0 0
      %2570 = vmatpush1.bf16.msra.mxu0 0
      %2571 = vmatprep.subr.bf16.mxu0 0
      %2572 = vmatpush1.bf16.msra.mxu0 0
      %2573 = vmatprep.subr.bf16.mxu0 0
      %2574 = vmatpush1.bf16.msra.mxu0 0
      %2575 = vmatprep.subr.bf16.mxu0 0
      %2576 = vmatpush1.bf16.msra.mxu0 0
      %2577 = vmatprep.subr.bf16.mxu0 0
      %2578 = vmatpush1.bf16.msra.mxu0 0
      %2579 = vmatprep.subr.bf16.mxu0 0
      %2580 = vmatpush1.bf16.msra.mxu0 0
      %2581 = vmatprep.subr.bf16.mxu0 0
      %2582 = vmatpush1.bf16.msra.mxu0 0
      %2583 = vmatprep.subr.bf16.mxu0 0
      %2584 = vmatpush1.bf16.msra.mxu0 0
      %2585 = vmatprep.subr.bf16.mxu0 0
      %2586 = vmatpush1.bf16.msra.mxu0 0
      %2587 = vmatprep.subr.bf16.mxu0 0
      %2588 = vmatpush1.bf16.msra.mxu0 0
      %2589 = vmatprep.subr.bf16.mxu0 0
      %2590 = vmatpush1.bf16.msra.mxu0 0
      %2591 = vmatprep.subr.bf16.mxu0 0
      %2592 = vmatpush1.bf16.msra.mxu0 0
      %2593 = vmatprep.subr.bf16.mxu0 0
      %2594 = vmatpush1.bf16.msra.mxu0 0
      %2595 = vmatprep.mubr.bf16.mxu0 0
      %2596 = vmatmul.mubr.bf16.gmra.mrb[0].mxu0 %v1475
      %v2597 = vpop.f32.mrb[0].mxu0
      %v2598 = vadd.f32 0.0, %v2597
      %v2599 = vpop.f32.mrb[0].mxu0
      %v2600 = vpop.f32.mrb[0].mxu0
      %v2601 = vpop.f32.mrb[0].mxu0
      %2602 = vdwg.mxu0
      %v2603 = vadd.f32 %v2562, %v2598
      %2604 = vmatprep.subr.bf16.mxu0 0
      %2605 = vmatpush1.bf16.msra.mxu0 %v766
      %2606 = vmatprep.subr.bf16.mxu0 0
      %2607 = vmatpush1.bf16.msra.mxu0 0
      %2608 = vmatprep.subr.bf16.mxu0 0
      %2609 = vmatpush1.bf16.msra.mxu0 0
      %2610 = vmatprep.subr.bf16.mxu0 0
      %2611 = vmatpush1.bf16.msra.mxu0 0
      %2612 = vmatprep.subr.bf16.mxu0 0
      %2613 = vmatpush1.bf16.msra.mxu0 0
      %2614 = vmatprep.subr.bf16.mxu0 0
      %2615 = vmatpush1.bf16.msra.mxu0 0
      %2616 = vmatprep.subr.bf16.mxu0 0
      %2617 = vmatpush1.bf16.msra.mxu0 0
      %2618 = vmatprep.subr.bf16.mxu0 0
      %2619 = vmatpush1.bf16.msra.mxu0 0
      %2620 = vmatprep.subr.bf16.mxu0 0
      %2621 = vmatpush1.bf16.msra.mxu0 0
      %2622 = vmatprep.subr.bf16.mxu0 0
      %2623 = vmatpush1.bf16.msra.mxu0 0
      %2624 = vmatprep.subr.bf16.mxu0 0
      %2625 = vmatpush1.bf16.msra.mxu0 0
      %2626 = vmatprep.subr.bf16.mxu0 0
      %2627 = vmatpush1.bf16.msra.mxu0 0
      %2628 = vmatprep.subr.bf16.mxu0 0
      %2629 = vmatpush1.bf16.msra.mxu0 0
      %2630 = vmatprep.subr.bf16.mxu0 0
      %2631 = vmatpush1.bf16.msra.mxu0 0
      %2632 = vmatprep.subr.bf16.mxu0 0
      %2633 = vmatpush1.bf16.msra.mxu0 0
      %2634 = vmatprep.subr.bf16.mxu0 0
      %2635 = vmatpush1.bf16.msra.mxu0 0
      %2636 = vmatprep.mubr.bf16.mxu0 0
      %2637 = vmatmul.mubr.bf16.gmra.mrb[0].mxu0 %v2245
      %v2638 = vpop.f32.mrb[0].mxu0
      %v2639 = vadd.f32 0.0, %v2638
      %v2640 = vpop.f32.mrb[0].mxu0
      %v2641 = vpop.f32.mrb[0].mxu0
      %v2642 = vpop.f32.mrb[0].mxu0
      %2643 = vdwg.mxu0
      %v2644 = vadd.f32 %v2603, %v2639
      %v2645 = vld [vmem:[#allocation2 + $0x18] sm:$0x1]
      %v2646 = vpack.c.bf16 %v2645, %v2645
      %v2648 = vsel %vm594, %v2646, 0
      %2650 = vmatprep.subr.bf16.mxu0 0
      %2651 = vmatpush1.bf16.msra.mxu0 %v817
      %2652 = vmatprep.subr.bf16.mxu0 0
      %2653 = vmatpush1.bf16.msra.mxu0 0
      %2654 = vmatprep.subr.bf16.mxu0 0
      %2655 = vmatpush1.bf16.msra.mxu0 0
      %2656 = vmatprep.subr.bf16.mxu0 0
      %2657 = vmatpush1.bf16.msra.mxu0 0
      %2658 = vmatprep.subr.bf16.mxu0 0
      %2659 = vmatpush1.bf16.msra.mxu0 0
      %2660 = vmatprep.subr.bf16.mxu0 0
      %2661 = vmatpush1.bf16.msra.mxu0 0
      %2662 = vmatprep.subr.bf16.mxu0 0
      %2663 = vmatpush1.bf16.msra.mxu0 0
      %2664 = vmatprep.subr.bf16.mxu0 0
      %2665 = vmatpush1.bf16.msra.mxu0 0
      %2666 = vmatprep.subr.bf16.mxu0 0
      %2667 = vmatpush1.bf16.msra.mxu0 0
      %2668 = vmatprep.subr.bf16.mxu0 0
      %2669 = vmatpush1.bf16.msra.mxu0 0
      %2670 = vmatprep.subr.bf16.mxu0 0
      %2671 = vmatpush1.bf16.msra.mxu0 0
      %2672 = vmatprep.subr.bf16.mxu0 0
      %2673 = vmatpush1.bf16.msra.mxu0 0
      %2674 = vmatprep.subr.bf16.mxu0 0
      %2675 = vmatpush1.bf16.msra.mxu0 0
      %2676 = vmatprep.subr.bf16.mxu0 0
      %2677 = vmatpush1.bf16.msra.mxu0 0
      %2678 = vmatprep.subr.bf16.mxu0 0
      %2679 = vmatpush1.bf16.msra.mxu0 0
      %2680 = vmatprep.subr.bf16.mxu0 0
      %2681 = vmatpush1.bf16.msra.mxu0 0
      %2682 = vmatprep.mubr.bf16.mxu0 0
      %2683 = vmatmul.mubr.bf16.gmra.mrb[0].mxu0 %v2648
      %v2684 = vpop.f32.mrb[0].mxu0
      %v2685 = vadd.f32 0.0, %v2684
      %v2686 = vpop.f32.mrb[0].mxu0
      %v2687 = vpop.f32.mrb[0].mxu0
      %v2688 = vpop.f32.mrb[0].mxu0
      %2689 = vdwg.mxu0
      %v2690 = vadd.f32 %v2644, %v2685
      %v2691 = vld [vmem:[#allocation2 + $0x19] sm:$0x1]
      %v2692 = vpack.c.bf16 %v2691, %v2691
      %v2694 = vsel %vm594, %v2692, 0
      %2696 = vmatprep.subr.bf16.mxu0 0
      %2697 = vmatpush1.bf16.msra.mxu0 %v868
      %2698 = vmatprep.subr.bf16.mxu0 0
      %2699 = vmatpush1.bf16.msra.mxu0 0
      %2700 = vmatprep.subr.bf16.mxu0 0
      %2701 = vmatpush1.bf16.msra.mxu0 0
      %2702 = vmatprep.subr.bf16.mxu0 0
      %2703 = vmatpush1.bf16.msra.mxu0 0
      %2704 = vmatprep.subr.bf16.mxu0 0
      %2705 = vmatpush1.bf16.msra.mxu0 0
      %2706 = vmatprep.subr.bf16.mxu0 0
      %2707 = vmatpush1.bf16.msra.mxu0 0
      %2708 = vmatprep.subr.bf16.mxu0 0
      %2709 = vmatpush1.bf16.msra.mxu0 0
      %2710 = vmatprep.subr.bf16.mxu0 0
      %2711 = vmatpush1.bf16.msra.mxu0 0
      %2712 = vmatprep.subr.bf16.mxu0 0
      %2713 = vmatpush1.bf16.msra.mxu0 0
      %2714 = vmatprep.subr.bf16.mxu0 0
      %2715 = vmatpush1.bf16.msra.mxu0 0
      %2716 = vmatprep.subr.bf16.mxu0 0
      %2717 = vmatpush1.bf16.msra.mxu0 0
      %2718 = vmatprep.subr.bf16.mxu0 0
      %2719 = vmatpush1.bf16.msra.mxu0 0
      %2720 = vmatprep.subr.bf16.mxu0 0
      %2721 = vmatpush1.bf16.msra.mxu0 0
      %2722 = vmatprep.subr.bf16.mxu0 0
      %2723 = vmatpush1.bf16.msra.mxu0 0
      %2724 = vmatprep.subr.bf16.mxu0 0
      %2725 = vmatpush1.bf16.msra.mxu0 0
      %2726 = vmatprep.subr.bf16.mxu0 0
      %2727 = vmatpush1.bf16.msra.mxu0 0
      %2728 = vmatprep.mubr.bf16.mxu0 0
      %2729 = vmatmul.mubr.bf16.gmra.mrb[0].mxu0 %v2694
      %v2730 = vpop.f32.mrb[0].mxu0
      %v2731 = vadd.f32 0.0, %v2730
      %v2732 = vpop.f32.mrb[0].mxu0
      %v2733 = vpop.f32.mrb[0].mxu0
      %v2734 = vpop.f32.mrb[0].mxu0
      %2735 = vdwg.mxu0
      %v2736 = vadd.f32 %v2690, %v2731
      %2737 = vmatprep.subr.bf16.mxu0 0
      %2738 = vmatpush1.bf16.msra.mxu0 %v919
      %2739 = vmatprep.subr.bf16.mxu0 0
      %2740 = vmatpush1.bf16.msra.mxu0 0
      %2741 = vmatprep.subr.bf16.mxu0 0
      %2742 = vmatpush1.bf16.msra.mxu0 0
      %2743 = vmatprep.subr.bf16.mxu0 0
      %2744 = vmatpush1.bf16.msra.mxu0 0
      %2745 = vmatprep.subr.bf16.mxu0 0
      %2746 = vmatpush1.bf16.msra.mxu0 0
      %2747 = vmatprep.subr.bf16.mxu0 0
      %2748 = vmatpush1.bf16.msra.mxu0 0
      %2749 = vmatprep.subr.bf16.mxu0 0
      %2750 = vmatpush1.bf16.msra.mxu0 0
      %2751 = vmatprep.subr.bf16.mxu0 0
      %2752 = vmatpush1.bf16.msra.mxu0 0
      %2753 = vmatprep.subr.bf16.mxu0 0
      %2754 = vmatpush1.bf16.msra.mxu0 0
      %2755 = vmatprep.subr.bf16.mxu0 0
      %2756 = vmatpush1.bf16.msra.mxu0 0
      %2757 = vmatprep.subr.bf16.mxu0 0
      %2758 = vmatpush1.bf16.msra.mxu0 0
      %2759 = vmatprep.subr.bf16.mxu0 0
      %2760 = vmatpush1.bf16.msra.mxu0 0
      %2761 = vmatprep.subr.bf16.mxu0 0
      %2762 = vmatpush1.bf16.msra.mxu0 0
      %2763 = vmatprep.subr.bf16.mxu0 0
      %2764 = vmatpush1.bf16.msra.mxu0 0
      %2765 = vmatprep.subr.bf16.mxu0 0
      %2766 = vmatpush1.bf16.msra.mxu0 0
      %2767 = vmatprep.subr.bf16.mxu0 0
      %2768 = vmatpush1.bf16.msra.mxu0 0
      %2769 = vmatprep.mubr.bf16.mxu0 0
      %2770 = vmatmul.mubr.bf16.gmra.mrb[0].mxu0 %v2383
      %v2771 = vpop.f32.mrb[0].mxu0
      %v2772 = vadd.f32 0.0, %v2771
      %v2773 = vpop.f32.mrb[0].mxu0
      %v2774 = vpop.f32.mrb[0].mxu0
      %v2775 = vpop.f32.mrb[0].mxu0
      %2776 = vdwg.mxu0
      %v2777 = vadd.f32 %v2736, %v2772
      %v2778 = vld [vmem:[#allocation2 + $0x1f] sm:$0x1]
      %v2779 = vpack.c.bf16 %v2778, %v2778
      %v2781 = vsel %vm594, %v2779, 0
      %2783 = vmatprep.subr.bf16.mxu0 0
      %2784 = vmatpush1.bf16.msra.mxu0 %v970
      %2785 = vmatprep.subr.bf16.mxu0 0
      %2786 = vmatpush1.bf16.msra.mxu0 0
      %2787 = vmatprep.subr.bf16.mxu0 0
      %2788 = vmatpush1.bf16.msra.mxu0 0
      %2789 = vmatprep.subr.bf16.mxu0 0
      %2790 = vmatpush1.bf16.msra.mxu0 0
      %2791 = vmatprep.subr.bf16.mxu0 0
      %2792 = vmatpush1.bf16.msra.mxu0 0
      %2793 = vmatprep.subr.bf16.mxu0 0
      %2794 = vmatpush1.bf16.msra.mxu0 0
      %2795 = vmatprep.subr.bf16.mxu0 0
      %2796 = vmatpush1.bf16.msra.mxu0 0
      %2797 = vmatprep.subr.bf16.mxu0 0
      %2798 = vmatpush1.bf16.msra.mxu0 0
      %2799 = vmatprep.subr.bf16.mxu0 0
      %2800 = vmatpush1.bf16.msra.mxu0 0
      %2801 = vmatprep.subr.bf16.mxu0 0
      %2802 = vmatpush1.bf16.msra.mxu0 0
      %2803 = vmatprep.subr.bf16.mxu0 0
      %2804 = vmatpush1.bf16.msra.mxu0 0
      %2805 = vmatprep.subr.bf16.mxu0 0
      %2806 = vmatpush1.bf16.msra.mxu0 0
      %2807 = vmatprep.subr.bf16.mxu0 0
      %2808 = vmatpush1.bf16.msra.mxu0 0
      %2809 = vmatprep.subr.bf16.mxu0 0
      %2810 = vmatpush1.bf16.msra.mxu0 0
      %2811 = vmatprep.subr.bf16.mxu0 0
      %2812 = vmatpush1.bf16.msra.mxu0 0
      %2813 = vmatprep.subr.bf16.mxu0 0
      %2814 = vmatpush1.bf16.msra.mxu0 0
      %2815 = vmatprep.mubr.bf16.mxu0 0
      %2816 = vmatmul.mubr.bf16.gmra.mrb[0].mxu0 %v2781
      %v2817 = vpop.f32.mrb[0].mxu0
      %v2818 = vadd.f32 0.0, %v2817
      %v2819 = vpop.f32.mrb[0].mxu0
      %v2820 = vpop.f32.mrb[0].mxu0
      %v2821 = vpop.f32.mrb[0].mxu0
      %2822 = vdwg.mxu0
      %v2823 = vadd.f32 %v2777, %v2818
      %v2824 = vld [vmem:[#allocation2 + $0x20] sm:$0x1]
      %v2825 = vpack.c.bf16 %v2824, %v2824
      %v2827 = vsel %vm594, %v2825, 0
      %2829 = vmatprep.subr.bf16.mxu0 0
      %2830 = vmatpush1.bf16.msra.mxu0 %v1021
      %2831 = vmatprep.subr.bf16.mxu0 0
      %2832 = vmatpush1.bf16.msra.mxu0 0
      %2833 = vmatprep.subr.bf16.mxu0 0
      %2834 = vmatpush1.bf16.msra.mxu0 0
      %2835 = vmatprep.subr.bf16.mxu0 0
      %2836 = vmatpush1.bf16.msra.mxu0 0
      %2837 = vmatprep.subr.bf16.mxu0 0
      %2838 = vmatpush1.bf16.msra.mxu0 0
      %2839 = vmatprep.subr.bf16.mxu0 0
      %2840 = vmatpush1.bf16.msra.mxu0 0
      %2841 = vmatprep.subr.bf16.mxu0 0
      %2842 = vmatpush1.bf16.msra.mxu0 0
      %2843 = vmatprep.subr.bf16.mxu0 0
      %2844 = vmatpush1.bf16.msra.mxu0 0
      %2845 = vmatprep.subr.bf16.mxu0 0
      %2846 = vmatpush1.bf16.msra.mxu0 0
      %2847 = vmatprep.subr.bf16.mxu0 0
      %2848 = vmatpush1.bf16.msra.mxu0 0
      %2849 = vmatprep.subr.bf16.mxu0 0
      %2850 = vmatpush1.bf16.msra.mxu0 0
      %2851 = vmatprep.subr.bf16.mxu0 0
      %2852 = vmatpush1.bf16.msra.mxu0 0
      %2853 = vmatprep.subr.bf16.mxu0 0
      %2854 = vmatpush1.bf16.msra.mxu0 0
      %2855 = vmatprep.subr.bf16.mxu0 0
      %2856 = vmatpush1.bf16.msra.mxu0 0
      %2857 = vmatprep.subr.bf16.mxu0 0
      %2858 = vmatpush1.bf16.msra.mxu0 0
      %2859 = vmatprep.subr.bf16.mxu0 0
      %2860 = vmatpush1.bf16.msra.mxu0 0
      %2861 = vmatprep.mubr.bf16.mxu0 0
      %2862 = vmatmul.mubr.bf16.gmra.mrb[0].mxu0 %v2827
      %v2863 = vpop.f32.mrb[0].mxu0
      %v2864 = vadd.f32 0.0, %v2863
      %v2865 = vpop.f32.mrb[0].mxu0
      %v2866 = vpop.f32.mrb[0].mxu0
      %v2867 = vpop.f32.mrb[0].mxu0
      %2868 = vdwg.mxu0
      %v2869 = vadd.f32 %v2823, %v2864
      %v2870 = vmax.f32 %v2869, 0.0
      %v2871 = vpack.c.bf16 %v2870, %v2870
      %s2872 = scalar_lea.vmem %s6, 32
      %v2873 = vld [vmem:[%s2872] sm:$0xf]
      %v2874 = vld [vmem:[%s2872 + $0x4] sm:$0xf]
      %v2877 = vunpack.c.l.b16 %v2873
      %v2878 = vunpack.c.l.b16 %v2874
      %v2879 = vpack.c.b16 %v2878, %v2877
      %v2882 = vsel %vm1074, %v2871, 0
      %2884 = vmatprep.subr.bf16.mxu0 0
      %2885 = vmatpush1.bf16.msra.mxu0 %v2879
      %2886 = vmatprep.subr.bf16.mxu0 0
      %2887 = vmatpush1.bf16.msra.mxu0 0
      %2888 = vmatprep.subr.bf16.mxu0 0
      %2889 = vmatpush1.bf16.msra.mxu0 0
      %2890 = vmatprep.subr.bf16.mxu0 0
      %2891 = vmatpush1.bf16.msra.mxu0 0
      %2892 = vmatprep.subr.bf16.mxu0 0
      %2893 = vmatpush1.bf16.msra.mxu0 0
      %2894 = vmatprep.subr.bf16.mxu0 0
      %2895 = vmatpush1.bf16.msra.mxu0 0
      %2896 = vmatprep.subr.bf16.mxu0 0
      %2897 = vmatpush1.bf16.msra.mxu0 0
      %2898 = vmatprep.subr.bf16.mxu0 0
      %2899 = vmatpush1.bf16.msra.mxu0 0
      %2900 = vmatprep.subr.bf16.mxu0 0
      %2901 = vmatpush1.bf16.msra.mxu0 0
      %2902 = vmatprep.subr.bf16.mxu0 0
      %2903 = vmatpush1.bf16.msra.mxu0 0
      %2904 = vmatprep.subr.bf16.mxu0 0
      %2905 = vmatpush1.bf16.msra.mxu0 0
      %2906 = vmatprep.subr.bf16.mxu0 0
      %2907 = vmatpush1.bf16.msra.mxu0 0
      %2908 = vmatprep.subr.bf16.mxu0 0
      %2909 = vmatpush1.bf16.msra.mxu0 0
      %2910 = vmatprep.subr.bf16.mxu0 0
      %2911 = vmatpush1.bf16.msra.mxu0 0
      %2912 = vmatprep.subr.bf16.mxu0 0
      %2913 = vmatpush1.bf16.msra.mxu0 0
      %2914 = vmatprep.subr.bf16.mxu0 0
      %2915 = vmatpush1.bf16.msra.mxu0 0
      %2916 = vmatprep.mubr.bf16.mxu0 0
      %2917 = vmatmul.mubr.bf16.gmra.mrb[0].mxu0 %v2882
      %v2918 = vpop.f32.mrb[0].mxu0
      %v2919 = vadd.f32 0.0, %v2918
      %v2920 = vpop.f32.mrb[0].mxu0
      %v2921 = vpop.f32.mrb[0].mxu0
      %v2922 = vpop.f32.mrb[0].mxu0
      %2923 = vdwg.mxu0
      %v2924 = vadd.f32 %v2480, %v2919
      %2925 = vmatprep.subr.bf16.mxu0 0
      %2926 = vmatpush1.bf16.msra.mxu0 %v613
      %2927 = vmatprep.subr.bf16.mxu0 0
      %2928 = vmatpush1.bf16.msra.mxu0 0
      %2929 = vmatprep.subr.bf16.mxu0 0
      %2930 = vmatpush1.bf16.msra.mxu0 0
      %2931 = vmatprep.subr.bf16.mxu0 0
      %2932 = vmatpush1.bf16.msra.mxu0 0
      %2933 = vmatprep.subr.bf16.mxu0 0
      %2934 = vmatpush1.bf16.msra.mxu0 0
      %2935 = vmatprep.subr.bf16.mxu0 0
      %2936 = vmatpush1.bf16.msra.mxu0 0
      %2937 = vmatprep.subr.bf16.mxu0 0
      %2938 = vmatpush1.bf16.msra.mxu0 0
      %2939 = vmatprep.subr.bf16.mxu0 0
      %2940 = vmatpush1.bf16.msra.mxu0 0
      %2941 = vmatprep.subr.bf16.mxu0 0
      %2942 = vmatpush1.bf16.msra.mxu0 0
      %2943 = vmatprep.subr.bf16.mxu0 0
      %2944 = vmatpush1.bf16.msra.mxu0 0
      %2945 = vmatprep.subr.bf16.mxu0 0
      %2946 = vmatpush1.bf16.msra.mxu0 0
      %2947 = vmatprep.subr.bf16.mxu0 0
      %2948 = vmatpush1.bf16.msra.mxu0 0
      %2949 = vmatprep.subr.bf16.mxu0 0
      %2950 = vmatpush1.bf16.msra.mxu0 0
      %2951 = vmatprep.subr.bf16.mxu0 0
      %2952 = vmatpush1.bf16.msra.mxu0 0
      %2953 = vmatprep.subr.bf16.mxu0 0
      %2954 = vmatpush1.bf16.msra.mxu0 0
      %2955 = vmatprep.subr.bf16.mxu0 0
      %2956 = vmatpush1.bf16.msra.mxu0 0
      %2957 = vmatprep.mubr.bf16.mxu0 0
      %2958 = vmatmul.mubr.bf16.gmra.mrb[0].mxu0 %v1475
      %v2959 = vpop.f32.mrb[0].mxu0
      %v2960 = vadd.f32 0.0, %v2959
      %v2961 = vpop.f32.mrb[0].mxu0
      %v2962 = vpop.f32.mrb[0].mxu0
      %v2963 = vpop.f32.mrb[0].mxu0
      %2964 = vdwg.mxu0
      %v2965 = vadd.f32 %v604, %v2960
      %2966 = vmatprep.subr.bf16.mxu0 0
      %2967 = vmatpush1.bf16.msra.mxu0 %v664
      %2968 = vmatprep.subr.bf16.mxu0 0
      %2969 = vmatpush1.bf16.msra.mxu0 0
      %2970 = vmatprep.subr.bf16.mxu0 0
      %2971 = vmatpush1.bf16.msra.mxu0 0
      %2972 = vmatprep.subr.bf16.mxu0 0
      %2973 = vmatpush1.bf16.msra.mxu0 0
      %2974 = vmatprep.subr.bf16.mxu0 0
      %2975 = vmatpush1.bf16.msra.mxu0 0
      %2976 = vmatprep.subr.bf16.mxu0 0
      %2977 = vmatpush1.bf16.msra.mxu0 0
      %2978 = vmatprep.subr.bf16.mxu0 0
      %2979 = vmatpush1.bf16.msra.mxu0 0
      %2980 = vmatprep.subr.bf16.mxu0 0
      %2981 = vmatpush1.bf16.msra.mxu0 0
      %2982 = vmatprep.subr.bf16.mxu0 0
      %2983 = vmatpush1.bf16.msra.mxu0 0
      %2984 = vmatprep.subr.bf16.mxu0 0
      %2985 = vmatpush1.bf16.msra.mxu0 0
      %2986 = vmatprep.subr.bf16.mxu0 0
      %2987 = vmatpush1.bf16.msra.mxu0 0
      %2988 = vmatprep.subr.bf16.mxu0 0
      %2989 = vmatpush1.bf16.msra.mxu0 0
      %2990 = vmatprep.subr.bf16.mxu0 0
      %2991 = vmatpush1.bf16.msra.mxu0 0
      %2992 = vmatprep.subr.bf16.mxu0 0
      %2993 = vmatpush1.bf16.msra.mxu0 0
      %2994 = vmatprep.subr.bf16.mxu0 0
      %2995 = vmatpush1.bf16.msra.mxu0 0
      %2996 = vmatprep.subr.bf16.mxu0 0
      %2997 = vmatpush1.bf16.msra.mxu0 0
      %2998 = vmatprep.mubr.bf16.mxu0 0
      %2999 = vmatmul.mubr.bf16.gmra.mrb[0].mxu0 %v1883
      %v3000 = vpop.f32.mrb[0].mxu0
      %v3001 = vadd.f32 0.0, %v3000
      %v3002 = vpop.f32.mrb[0].mxu0
      %v3003 = vpop.f32.mrb[0].mxu0
      %v3004 = vpop.f32.mrb[0].mxu0
      %3005 = vdwg.mxu0
      %v3006 = vadd.f32 %v2965, %v3001
      %3007 = vmatprep.subr.bf16.mxu0 0
      %3008 = vmatpush1.bf16.msra.mxu0 %v715
      %3009 = vmatprep.subr.bf16.mxu0 0
      %3010 = vmatpush1.bf16.msra.mxu0 0
      %3011 = vmatprep.subr.bf16.mxu0 0
      %3012 = vmatpush1.bf16.msra.mxu0 0
      %3013 = vmatprep.subr.bf16.mxu0 0
      %3014 = vmatpush1.bf16.msra.mxu0 0
      %3015 = vmatprep.subr.bf16.mxu0 0
      %3016 = vmatpush1.bf16.msra.mxu0 0
      %3017 = vmatprep.subr.bf16.mxu0 0
      %3018 = vmatpush1.bf16.msra.mxu0 0
      %3019 = vmatprep.subr.bf16.mxu0 0
      %3020 = vmatpush1.bf16.msra.mxu0 0
      %3021 = vmatprep.subr.bf16.mxu0 0
      %3022 = vmatpush1.bf16.msra.mxu0 0
      %3023 = vmatprep.subr.bf16.mxu0 0
      %3024 = vmatpush1.bf16.msra.mxu0 0
      %3025 = vmatprep.subr.bf16.mxu0 0
      %3026 = vmatpush1.bf16.msra.mxu0 0
      %3027 = vmatprep.subr.bf16.mxu0 0
      %3028 = vmatpush1.bf16.msra.mxu0 0
      %3029 = vmatprep.subr.bf16.mxu0 0
      %3030 = vmatpush1.bf16.msra.mxu0 0
      %3031 = vmatprep.subr.bf16.mxu0 0
      %3032 = vmatpush1.bf16.msra.mxu0 0
      %3033 = vmatprep.subr.bf16.mxu0 0
      %3034 = vmatpush1.bf16.msra.mxu0 0
      %3035 = vmatprep.subr.bf16.mxu0 0
      %3036 = vmatpush1.bf16.msra.mxu0 0
      %3037 = vmatprep.subr.bf16.mxu0 0
      %3038 = vmatpush1.bf16.msra.mxu0 0
      %3039 = vmatprep.mubr.bf16.mxu0 0
      %3040 = vmatmul.mubr.bf16.gmra.mrb[0].mxu0 %v1929
      %v3041 = vpop.f32.mrb[0].mxu0
      %v3042 = vadd.f32 0.0, %v3041
      %v3043 = vpop.f32.mrb[0].mxu0
      %v3044 = vpop.f32.mrb[0].mxu0
      %v3045 = vpop.f32.mrb[0].mxu0
      %3046 = vdwg.mxu0
      %v3047 = vadd.f32 %v3006, %v3042
      %3048 = vmatprep.subr.bf16.mxu0 0
      %3049 = vmatpush1.bf16.msra.mxu0 %v766
      %3050 = vmatprep.subr.bf16.mxu0 0
      %3051 = vmatpush1.bf16.msra.mxu0 0
      %3052 = vmatprep.subr.bf16.mxu0 0
      %3053 = vmatpush1.bf16.msra.mxu0 0
      %3054 = vmatprep.subr.bf16.mxu0 0
      %3055 = vmatpush1.bf16.msra.mxu0 0
      %3056 = vmatprep.subr.bf16.mxu0 0
      %3057 = vmatpush1.bf16.msra.mxu0 0
      %3058 = vmatprep.subr.bf16.mxu0 0
      %3059 = vmatpush1.bf16.msra.mxu0 0
      %3060 = vmatprep.subr.bf16.mxu0 0
      %3061 = vmatpush1.bf16.msra.mxu0 0
      %3062 = vmatprep.subr.bf16.mxu0 0
      %3063 = vmatpush1.bf16.msra.mxu0 0
      %3064 = vmatprep.subr.bf16.mxu0 0
      %3065 = vmatpush1.bf16.msra.mxu0 0
      %3066 = vmatprep.subr.bf16.mxu0 0
      %3067 = vmatpush1.bf16.msra.mxu0 0
      %3068 = vmatprep.subr.bf16.mxu0 0
      %3069 = vmatpush1.bf16.msra.mxu0 0
      %3070 = vmatprep.subr.bf16.mxu0 0
      %3071 = vmatpush1.bf16.msra.mxu0 0
      %3072 = vmatprep.subr.bf16.mxu0 0
      %3073 = vmatpush1.bf16.msra.mxu0 0
      %3074 = vmatprep.subr.bf16.mxu0 0
      %3075 = vmatpush1.bf16.msra.mxu0 0
      %3076 = vmatprep.subr.bf16.mxu0 0
      %3077 = vmatpush1.bf16.msra.mxu0 0
      %3078 = vmatprep.subr.bf16.mxu0 0
      %3079 = vmatpush1.bf16.msra.mxu0 0
      %3080 = vmatprep.mubr.bf16.mxu0 0
      %3081 = vmatmul.mubr.bf16.gmra.mrb[0].mxu0 %v2694
      %v3082 = vpop.f32.mrb[0].mxu0
      %v3083 = vadd.f32 0.0, %v3082
      %v3084 = vpop.f32.mrb[0].mxu0
      %v3085 = vpop.f32.mrb[0].mxu0
      %v3086 = vpop.f32.mrb[0].mxu0
      %3087 = vdwg.mxu0
      %v3088 = vadd.f32 %v3047, %v3083
      %v3089 = vld [vmem:[#allocation2 + $0x1a] sm:$0x1]
      %v3090 = vpack.c.bf16 %v3089, %v3089
      %v3092 = vsel %vm594, %v3090, 0
      %3094 = vmatprep.subr.bf16.mxu0 0
      %3095 = vmatpush1.bf16.msra.mxu0 %v817
      %3096 = vmatprep.subr.bf16.mxu0 0
      %3097 = vmatpush1.bf16.msra.mxu0 0
      %3098 = vmatprep.subr.bf16.mxu0 0
      %3099 = vmatpush1.bf16.msra.mxu0 0
      %3100 = vmatprep.subr.bf16.mxu0 0
      %3101 = vmatpush1.bf16.msra.mxu0 0
      %3102 = vmatprep.subr.bf16.mxu0 0
      %3103 = vmatpush1.bf16.msra.mxu0 0
      %3104 = vmatprep.subr.bf16.mxu0 0
      %3105 = vmatpush1.bf16.msra.mxu0 0
      %3106 = vmatprep.subr.bf16.mxu0 0
      %3107 = vmatpush1.bf16.msra.mxu0 0
      %3108 = vmatprep.subr.bf16.mxu0 0
      %3109 = vmatpush1.bf16.msra.mxu0 0
      %3110 = vmatprep.subr.bf16.mxu0 0
      %3111 = vmatpush1.bf16.msra.mxu0 0
      %3112 = vmatprep.subr.bf16.mxu0 0
      %3113 = vmatpush1.bf16.msra.mxu0 0
      %3114 = vmatprep.subr.bf16.mxu0 0
      %3115 = vmatpush1.bf16.msra.mxu0 0
      %3116 = vmatprep.subr.bf16.mxu0 0
      %3117 = vmatpush1.bf16.msra.mxu0 0
      %3118 = vmatprep.subr.bf16.mxu0 0
      %3119 = vmatpush1.bf16.msra.mxu0 0
      %3120 = vmatprep.subr.bf16.mxu0 0
      %3121 = vmatpush1.bf16.msra.mxu0 0
      %3122 = vmatprep.subr.bf16.mxu0 0
      %3123 = vmatpush1.bf16.msra.mxu0 0
      %3124 = vmatprep.subr.bf16.mxu0 0
      %3125 = vmatpush1.bf16.msra.mxu0 0
      %3126 = vmatprep.mubr.bf16.mxu0 0
      %3127 = vmatmul.mubr.bf16.gmra.mrb[0].mxu0 %v3092
      %v3128 = vpop.f32.mrb[0].mxu0
      %v3129 = vadd.f32 0.0, %v3128
      %v3130 = vpop.f32.mrb[0].mxu0
      %v3131 = vpop.f32.mrb[0].mxu0
      %v3132 = vpop.f32.mrb[0].mxu0
      %3133 = vdwg.mxu0
      %v3134 = vadd.f32 %v3088, %v3129
      %v3135 = vld [vmem:[#allocation2 + $0x1b] sm:$0x1]
      %v3136 = vpack.c.bf16 %v3135, %v3135
      %v3138 = vsel %vm594, %v3136, 0
      %3140 = vmatprep.subr.bf16.mxu0 0
      %3141 = vmatpush1.bf16.msra.mxu0 %v868
      %3142 = vmatprep.subr.bf16.mxu0 0
      %3143 = vmatpush1.bf16.msra.mxu0 0
      %3144 = vmatprep.subr.bf16.mxu0 0
      %3145 = vmatpush1.bf16.msra.mxu0 0
      %3146 = vmatprep.subr.bf16.mxu0 0
      %3147 = vmatpush1.bf16.msra.mxu0 0
      %3148 = vmatprep.subr.bf16.mxu0 0
      %3149 = vmatpush1.bf16.msra.mxu0 0
      %3150 = vmatprep.subr.bf16.mxu0 0
      %3151 = vmatpush1.bf16.msra.mxu0 0
      %3152 = vmatprep.subr.bf16.mxu0 0
      %3153 = vmatpush1.bf16.msra.mxu0 0
      %3154 = vmatprep.subr.bf16.mxu0 0
      %3155 = vmatpush1.bf16.msra.mxu0 0
      %3156 = vmatprep.subr.bf16.mxu0 0
      %3157 = vmatpush1.bf16.msra.mxu0 0
      %3158 = vmatprep.subr.bf16.mxu0 0
      %3159 = vmatpush1.bf16.msra.mxu0 0
      %3160 = vmatprep.subr.bf16.mxu0 0
      %3161 = vmatpush1.bf16.msra.mxu0 0
      %3162 = vmatprep.subr.bf16.mxu0 0
      %3163 = vmatpush1.bf16.msra.mxu0 0
      %3164 = vmatprep.subr.bf16.mxu0 0
      %3165 = vmatpush1.bf16.msra.mxu0 0
      %3166 = vmatprep.subr.bf16.mxu0 0
      %3167 = vmatpush1.bf16.msra.mxu0 0
      %3168 = vmatprep.subr.bf16.mxu0 0
      %3169 = vmatpush1.bf16.msra.mxu0 0
      %3170 = vmatprep.subr.bf16.mxu0 0
      %3171 = vmatpush1.bf16.msra.mxu0 0
      %3172 = vmatprep.mubr.bf16.mxu0 0
      %3173 = vmatmul.mubr.bf16.gmra.mrb[0].mxu0 %v3138
      %v3174 = vpop.f32.mrb[0].mxu0
      %v3175 = vadd.f32 0.0, %v3174
      %v3176 = vpop.f32.mrb[0].mxu0
      %v3177 = vpop.f32.mrb[0].mxu0
      %v3178 = vpop.f32.mrb[0].mxu0
      %3179 = vdwg.mxu0
      %v3180 = vadd.f32 %v3134, %v3175
      %3181 = vmatprep.subr.bf16.mxu0 0
      %3182 = vmatpush1.bf16.msra.mxu0 %v919
      %3183 = vmatprep.subr.bf16.mxu0 0
      %3184 = vmatpush1.bf16.msra.mxu0 0
      %3185 = vmatprep.subr.bf16.mxu0 0
      %3186 = vmatpush1.bf16.msra.mxu0 0
      %3187 = vmatprep.subr.bf16.mxu0 0
      %3188 = vmatpush1.bf16.msra.mxu0 0
      %3189 = vmatprep.subr.bf16.mxu0 0
      %3190 = vmatpush1.bf16.msra.mxu0 0
      %3191 = vmatprep.subr.bf16.mxu0 0
      %3192 = vmatpush1.bf16.msra.mxu0 0
      %3193 = vmatprep.subr.bf16.mxu0 0
      %3194 = vmatpush1.bf16.msra.mxu0 0
      %3195 = vmatprep.subr.bf16.mxu0 0
      %3196 = vmatpush1.bf16.msra.mxu0 0
      %3197 = vmatprep.subr.bf16.mxu0 0
      %3198 = vmatpush1.bf16.msra.mxu0 0
      %3199 = vmatprep.subr.bf16.mxu0 0
      %3200 = vmatpush1.bf16.msra.mxu0 0
      %3201 = vmatprep.subr.bf16.mxu0 0
      %3202 = vmatpush1.bf16.msra.mxu0 0
      %3203 = vmatprep.subr.bf16.mxu0 0
      %3204 = vmatpush1.bf16.msra.mxu0 0
      %3205 = vmatprep.subr.bf16.mxu0 0
      %3206 = vmatpush1.bf16.msra.mxu0 0
      %3207 = vmatprep.subr.bf16.mxu0 0
      %3208 = vmatpush1.bf16.msra.mxu0 0
      %3209 = vmatprep.subr.bf16.mxu0 0
      %3210 = vmatpush1.bf16.msra.mxu0 0
      %3211 = vmatprep.subr.bf16.mxu0 0
      %3212 = vmatpush1.bf16.msra.mxu0 0
      %3213 = vmatprep.mubr.bf16.mxu0 0
      %3214 = vmatmul.mubr.bf16.gmra.mrb[0].mxu0 %v2827
      %v3215 = vpop.f32.mrb[0].mxu0
      %v3216 = vadd.f32 0.0, %v3215
      %v3217 = vpop.f32.mrb[0].mxu0
      %v3218 = vpop.f32.mrb[0].mxu0
      %v3219 = vpop.f32.mrb[0].mxu0
      %3220 = vdwg.mxu0
      %v3221 = vadd.f32 %v3180, %v3216
      %v3222 = vld [vmem:[#allocation2 + $0x21] sm:$0x1]
      %v3223 = vpack.c.bf16 %v3222, %v3222
      %v3225 = vsel %vm594, %v3223, 0
      %3227 = vmatprep.subr.bf16.mxu0 0
      %3228 = vmatpush1.bf16.msra.mxu0 %v970
      %3229 = vmatprep.subr.bf16.mxu0 0
      %3230 = vmatpush1.bf16.msra.mxu0 0
      %3231 = vmatprep.subr.bf16.mxu0 0
      %3232 = vmatpush1.bf16.msra.mxu0 0
      %3233 = vmatprep.subr.bf16.mxu0 0
      %3234 = vmatpush1.bf16.msra.mxu0 0
      %3235 = vmatprep.subr.bf16.mxu0 0
      %3236 = vmatpush1.bf16.msra.mxu0 0
      %3237 = vmatprep.subr.bf16.mxu0 0
      %3238 = vmatpush1.bf16.msra.mxu0 0
      %3239 = vmatprep.subr.bf16.mxu0 0
      %3240 = vmatpush1.bf16.msra.mxu0 0
      %3241 = vmatprep.subr.bf16.mxu0 0
      %3242 = vmatpush1.bf16.msra.mxu0 0
      %3243 = vmatprep.subr.bf16.mxu0 0
      %3244 = vmatpush1.bf16.msra.mxu0 0
      %3245 = vmatprep.subr.bf16.mxu0 0
      %3246 = vmatpush1.bf16.msra.mxu0 0
      %3247 = vmatprep.subr.bf16.mxu0 0
      %3248 = vmatpush1.bf16.msra.mxu0 0
      %3249 = vmatprep.subr.bf16.mxu0 0
      %3250 = vmatpush1.bf16.msra.mxu0 0
      %3251 = vmatprep.subr.bf16.mxu0 0
      %3252 = vmatpush1.bf16.msra.mxu0 0
      %3253 = vmatprep.subr.bf16.mxu0 0
      %3254 = vmatpush1.bf16.msra.mxu0 0
      %3255 = vmatprep.subr.bf16.mxu0 0
      %3256 = vmatpush1.bf16.msra.mxu0 0
      %3257 = vmatprep.subr.bf16.mxu0 0
      %3258 = vmatpush1.bf16.msra.mxu0 0
      %3259 = vmatprep.mubr.bf16.mxu0 0
      %3260 = vmatmul.mubr.bf16.gmra.mrb[0].mxu0 %v3225
      %v3261 = vpop.f32.mrb[0].mxu0
      %v3262 = vadd.f32 0.0, %v3261
      %v3263 = vpop.f32.mrb[0].mxu0
      %v3264 = vpop.f32.mrb[0].mxu0
      %v3265 = vpop.f32.mrb[0].mxu0
      %3266 = vdwg.mxu0
      %v3267 = vadd.f32 %v3221, %v3262
      %v3268 = vld [vmem:[#allocation2 + $0x22] sm:$0x1]
      %v3269 = vpack.c.bf16 %v3268, %v3268
      %v3271 = vsel %vm594, %v3269, 0
      %3273 = vmatprep.subr.bf16.mxu0 0
      %3274 = vmatpush1.bf16.msra.mxu0 %v1021
      %3275 = vmatprep.subr.bf16.mxu0 0
      %3276 = vmatpush1.bf16.msra.mxu0 0
      %3277 = vmatprep.subr.bf16.mxu0 0
      %3278 = vmatpush1.bf16.msra.mxu0 0
      %3279 = vmatprep.subr.bf16.mxu0 0
      %3280 = vmatpush1.bf16.msra.mxu0 0
      %3281 = vmatprep.subr.bf16.mxu0 0
      %3282 = vmatpush1.bf16.msra.mxu0 0
      %3283 = vmatprep.subr.bf16.mxu0 0
      %3284 = vmatpush1.bf16.msra.mxu0 0
      %3285 = vmatprep.subr.bf16.mxu0 0
      %3286 = vmatpush1.bf16.msra.mxu0 0
      %3287 = vmatprep.subr.bf16.mxu0 0
      %3288 = vmatpush1.bf16.msra.mxu0 0
      %3289 = vmatprep.subr.bf16.mxu0 0
      %3290 = vmatpush1.bf16.msra.mxu0 0
      %3291 = vmatprep.subr.bf16.mxu0 0
      %3292 = vmatpush1.bf16.msra.mxu0 0
      %3293 = vmatprep.subr.bf16.mxu0 0
      %3294 = vmatpush1.bf16.msra.mxu0 0
      %3295 = vmatprep.subr.bf16.mxu0 0
      %3296 = vmatpush1.bf16.msra.mxu0 0
      %3297 = vmatprep.subr.bf16.mxu0 0
      %3298 = vmatpush1.bf16.msra.mxu0 0
      %3299 = vmatprep.subr.bf16.mxu0 0
      %3300 = vmatpush1.bf16.msra.mxu0 0
      %3301 = vmatprep.subr.bf16.mxu0 0
      %3302 = vmatpush1.bf16.msra.mxu0 0
      %3303 = vmatprep.subr.bf16.mxu0 0
      %3304 = vmatpush1.bf16.msra.mxu0 0
      %3305 = vmatprep.mubr.bf16.mxu0 0
      %3306 = vmatmul.mubr.bf16.gmra.mrb[0].mxu0 %v3271
      %v3307 = vpop.f32.mrb[0].mxu0
      %v3308 = vadd.f32 0.0, %v3307
      %v3309 = vpop.f32.mrb[0].mxu0
      %v3310 = vpop.f32.mrb[0].mxu0
      %v3311 = vpop.f32.mrb[0].mxu0
      %3312 = vdwg.mxu0
      %v3313 = vadd.f32 %v3267, %v3308
      %v3314 = vmax.f32 %v3313, 0.0
      %v3315 = vpack.c.bf16 %v3314, %v3314
      %s3316 = scalar_lea.vmem %s6, 40
      %v3317 = vld [vmem:[%s3316] sm:$0xf]
      %v3318 = vld [vmem:[%s3316 + $0x4] sm:$0xf]
      %v3321 = vunpack.c.l.b16 %v3317
      %v3322 = vunpack.c.l.b16 %v3318
      %v3323 = vpack.c.b16 %v3322, %v3321
      %v3326 = vsel %vm1074, %v3315, 0
      %3328 = vmatprep.subr.bf16.mxu0 0
      %3329 = vmatpush1.bf16.msra.mxu0 %v3323
      %3330 = vmatprep.subr.bf16.mxu0 0
      %3331 = vmatpush1.bf16.msra.mxu0 0
      %3332 = vmatprep.subr.bf16.mxu0 0
      %3333 = vmatpush1.bf16.msra.mxu0 0
      %3334 = vmatprep.subr.bf16.mxu0 0
      %3335 = vmatpush1.bf16.msra.mxu0 0
      %3336 = vmatprep.subr.bf16.mxu0 0
      %3337 = vmatpush1.bf16.msra.mxu0 0
      %3338 = vmatprep.subr.bf16.mxu0 0
      %3339 = vmatpush1.bf16.msra.mxu0 0
      %3340 = vmatprep.subr.bf16.mxu0 0
      %3341 = vmatpush1.bf16.msra.mxu0 0
      %3342 = vmatprep.subr.bf16.mxu0 0
      %3343 = vmatpush1.bf16.msra.mxu0 0
      %3344 = vmatprep.subr.bf16.mxu0 0
      %3345 = vmatpush1.bf16.msra.mxu0 0
      %3346 = vmatprep.subr.bf16.mxu0 0
      %3347 = vmatpush1.bf16.msra.mxu0 0
      %3348 = vmatprep.subr.bf16.mxu0 0
      %3349 = vmatpush1.bf16.msra.mxu0 0
      %3350 = vmatprep.subr.bf16.mxu0 0
      %3351 = vmatpush1.bf16.msra.mxu0 0
      %3352 = vmatprep.subr.bf16.mxu0 0
      %3353 = vmatpush1.bf16.msra.mxu0 0
      %3354 = vmatprep.subr.bf16.mxu0 0
      %3355 = vmatpush1.bf16.msra.mxu0 0
      %3356 = vmatprep.subr.bf16.mxu0 0
      %3357 = vmatpush1.bf16.msra.mxu0 0
      %3358 = vmatprep.subr.bf16.mxu0 0
      %3359 = vmatpush1.bf16.msra.mxu0 0
      %3360 = vmatprep.mubr.bf16.mxu0 0
      %3361 = vmatmul.mubr.bf16.gmra.mrb[0].mxu0 %v3326
      %v3362 = vpop.f32.mrb[0].mxu0
      %v3363 = vadd.f32 0.0, %v3362
      %v3364 = vpop.f32.mrb[0].mxu0
      %v3365 = vpop.f32.mrb[0].mxu0
      %v3366 = vpop.f32.mrb[0].mxu0
      %3367 = vdwg.mxu0
      %v3368 = vadd.f32 %v2924, %v3363
      %3369 = vmatprep.subr.bf16.mxu0 0
      %3370 = vmatpush1.bf16.msra.mxu0 %v613
      %3371 = vmatprep.subr.bf16.mxu0 0
      %3372 = vmatpush1.bf16.msra.mxu0 0
      %3373 = vmatprep.subr.bf16.mxu0 0
      %3374 = vmatpush1.bf16.msra.mxu0 0
      %3375 = vmatprep.subr.bf16.mxu0 0
      %3376 = vmatpush1.bf16.msra.mxu0 0
      %3377 = vmatprep.subr.bf16.mxu0 0
      %3378 = vmatpush1.bf16.msra.mxu0 0
      %3379 = vmatprep.subr.bf16.mxu0 0
      %3380 = vmatpush1.bf16.msra.mxu0 0
      %3381 = vmatprep.subr.bf16.mxu0 0
      %3382 = vmatpush1.bf16.msra.mxu0 0
      %3383 = vmatprep.subr.bf16.mxu0 0
      %3384 = vmatpush1.bf16.msra.mxu0 0
      %3385 = vmatprep.subr.bf16.mxu0 0
      %3386 = vmatpush1.bf16.msra.mxu0 0
      %3387 = vmatprep.subr.bf16.mxu0 0
      %3388 = vmatpush1.bf16.msra.mxu0 0
      %3389 = vmatprep.subr.bf16.mxu0 0
      %3390 = vmatpush1.bf16.msra.mxu0 0
      %3391 = vmatprep.subr.bf16.mxu0 0
      %3392 = vmatpush1.bf16.msra.mxu0 0
      %3393 = vmatprep.subr.bf16.mxu0 0
      %3394 = vmatpush1.bf16.msra.mxu0 0
      %3395 = vmatprep.subr.bf16.mxu0 0
      %3396 = vmatpush1.bf16.msra.mxu0 0
      %3397 = vmatprep.subr.bf16.mxu0 0
      %3398 = vmatpush1.bf16.msra.mxu0 0
      %3399 = vmatprep.subr.bf16.mxu0 0
      %3400 = vmatpush1.bf16.msra.mxu0 0
      %3401 = vmatprep.mubr.bf16.mxu0 0
      %3402 = vmatmul.mubr.bf16.gmra.mrb[0].mxu0 %v2291
      %v3403 = vpop.f32.mrb[0].mxu0
      %v3404 = vadd.f32 0.0, %v3403
      %v3405 = vpop.f32.mrb[0].mxu0
      %v3406 = vpop.f32.mrb[0].mxu0
      %v3407 = vpop.f32.mrb[0].mxu0
      %3408 = vdwg.mxu0
      %v3409 = vadd.f32 %v604, %v3404
      %3410 = vmatprep.subr.bf16.mxu0 0
      %3411 = vmatpush1.bf16.msra.mxu0 %v664
      %3412 = vmatprep.subr.bf16.mxu0 0
      %3413 = vmatpush1.bf16.msra.mxu0 0
      %3414 = vmatprep.subr.bf16.mxu0 0
      %3415 = vmatpush1.bf16.msra.mxu0 0
      %3416 = vmatprep.subr.bf16.mxu0 0
      %3417 = vmatpush1.bf16.msra.mxu0 0
      %3418 = vmatprep.subr.bf16.mxu0 0
      %3419 = vmatpush1.bf16.msra.mxu0 0
      %3420 = vmatprep.subr.bf16.mxu0 0
      %3421 = vmatpush1.bf16.msra.mxu0 0
      %3422 = vmatprep.subr.bf16.mxu0 0
      %3423 = vmatpush1.bf16.msra.mxu0 0
      %3424 = vmatprep.subr.bf16.mxu0 0
      %3425 = vmatpush1.bf16.msra.mxu0 0
      %3426 = vmatprep.subr.bf16.mxu0 0
      %3427 = vmatpush1.bf16.msra.mxu0 0
      %3428 = vmatprep.subr.bf16.mxu0 0
      %3429 = vmatpush1.bf16.msra.mxu0 0
      %3430 = vmatprep.subr.bf16.mxu0 0
      %3431 = vmatpush1.bf16.msra.mxu0 0
      %3432 = vmatprep.subr.bf16.mxu0 0
      %3433 = vmatpush1.bf16.msra.mxu0 0
      %3434 = vmatprep.subr.bf16.mxu0 0
      %3435 = vmatpush1.bf16.msra.mxu0 0
      %3436 = vmatprep.subr.bf16.mxu0 0
      %3437 = vmatpush1.bf16.msra.mxu0 0
      %3438 = vmatprep.subr.bf16.mxu0 0
      %3439 = vmatpush1.bf16.msra.mxu0 0
      %3440 = vmatprep.subr.bf16.mxu0 0
      %3441 = vmatpush1.bf16.msra.mxu0 0
      %3442 = vmatprep.mubr.bf16.mxu0 0
      %3443 = vmatmul.mubr.bf16.gmra.mrb[0].mxu0 %v2337
      %v3444 = vpop.f32.mrb[0].mxu0
      %v3445 = vadd.f32 0.0, %v3444
      %v3446 = vpop.f32.mrb[0].mxu0
      %v3447 = vpop.f32.mrb[0].mxu0
      %v3448 = vpop.f32.mrb[0].mxu0
      %3449 = vdwg.mxu0
      %v3450 = vadd.f32 %v3409, %v3445
      %3451 = vmatprep.subr.bf16.mxu0 0
      %3452 = vmatpush1.bf16.msra.mxu0 %v715
      %3453 = vmatprep.subr.bf16.mxu0 0
      %3454 = vmatpush1.bf16.msra.mxu0 0
      %3455 = vmatprep.subr.bf16.mxu0 0
      %3456 = vmatpush1.bf16.msra.mxu0 0
      %3457 = vmatprep.subr.bf16.mxu0 0
      %3458 = vmatpush1.bf16.msra.mxu0 0
      %3459 = vmatprep.subr.bf16.mxu0 0
      %3460 = vmatpush1.bf16.msra.mxu0 0
      %3461 = vmatprep.subr.bf16.mxu0 0
      %3462 = vmatpush1.bf16.msra.mxu0 0
      %3463 = vmatprep.subr.bf16.mxu0 0
      %3464 = vmatpush1.bf16.msra.mxu0 0
      %3465 = vmatprep.subr.bf16.mxu0 0
      %3466 = vmatpush1.bf16.msra.mxu0 0
      %3467 = vmatprep.subr.bf16.mxu0 0
      %3468 = vmatpush1.bf16.msra.mxu0 0
      %3469 = vmatprep.subr.bf16.mxu0 0
      %3470 = vmatpush1.bf16.msra.mxu0 0
      %3471 = vmatprep.subr.bf16.mxu0 0
      %3472 = vmatpush1.bf16.msra.mxu0 0
      %3473 = vmatprep.subr.bf16.mxu0 0
      %3474 = vmatpush1.bf16.msra.mxu0 0
      %3475 = vmatprep.subr.bf16.mxu0 0
      %3476 = vmatpush1.bf16.msra.mxu0 0
      %3477 = vmatprep.subr.bf16.mxu0 0
      %3478 = vmatpush1.bf16.msra.mxu0 0
      %3479 = vmatprep.subr.bf16.mxu0 0
      %3480 = vmatpush1.bf16.msra.mxu0 0
      %3481 = vmatprep.subr.bf16.mxu0 0
      %3482 = vmatpush1.bf16.msra.mxu0 0
      %3483 = vmatprep.mubr.bf16.mxu0 0
      %3484 = vmatmul.mubr.bf16.gmra.mrb[0].mxu0 %v2383
      %v3485 = vpop.f32.mrb[0].mxu0
      %v3486 = vadd.f32 0.0, %v3485
      %v3487 = vpop.f32.mrb[0].mxu0
      %v3488 = vpop.f32.mrb[0].mxu0
      %v3489 = vpop.f32.mrb[0].mxu0
      %3490 = vdwg.mxu0
      %v3491 = vadd.f32 %v3450, %v3486
      %v3492 = vld [vmem:[#allocation2 + $0x23] sm:$0x1]
      %v3493 = vpack.c.bf16 %v3492, %v3492
      %v3495 = vsel %vm594, %v3493, 0
      %3497 = vmatprep.subr.bf16.mxu0 0
      %3498 = vmatpush1.bf16.msra.mxu0 %v766
      %3499 = vmatprep.subr.bf16.mxu0 0
      %3500 = vmatpush1.bf16.msra.mxu0 0
      %3501 = vmatprep.subr.bf16.mxu0 0
      %3502 = vmatpush1.bf16.msra.mxu0 0
      %3503 = vmatprep.subr.bf16.mxu0 0
      %3504 = vmatpush1.bf16.msra.mxu0 0
      %3505 = vmatprep.subr.bf16.mxu0 0
      %3506 = vmatpush1.bf16.msra.mxu0 0
      %3507 = vmatprep.subr.bf16.mxu0 0
      %3508 = vmatpush1.bf16.msra.mxu0 0
      %3509 = vmatprep.subr.bf16.mxu0 0
      %3510 = vmatpush1.bf16.msra.mxu0 0
      %3511 = vmatprep.subr.bf16.mxu0 0
      %3512 = vmatpush1.bf16.msra.mxu0 0
      %3513 = vmatprep.subr.bf16.mxu0 0
      %3514 = vmatpush1.bf16.msra.mxu0 0
      %3515 = vmatprep.subr.bf16.mxu0 0
      %3516 = vmatpush1.bf16.msra.mxu0 0
      %3517 = vmatprep.subr.bf16.mxu0 0
      %3518 = vmatpush1.bf16.msra.mxu0 0
      %3519 = vmatprep.subr.bf16.mxu0 0
      %3520 = vmatpush1.bf16.msra.mxu0 0
      %3521 = vmatprep.subr.bf16.mxu0 0
      %3522 = vmatpush1.bf16.msra.mxu0 0
      %3523 = vmatprep.subr.bf16.mxu0 0
      %3524 = vmatpush1.bf16.msra.mxu0 0
      %3525 = vmatprep.subr.bf16.mxu0 0
      %3526 = vmatpush1.bf16.msra.mxu0 0
      %3527 = vmatprep.subr.bf16.mxu0 0
      %3528 = vmatpush1.bf16.msra.mxu0 0
      %3529 = vmatprep.mubr.bf16.mxu0 0
      %3530 = vmatmul.mubr.bf16.gmra.mrb[0].mxu0 %v3495
      %v3531 = vpop.f32.mrb[0].mxu0
      %v3532 = vadd.f32 0.0, %v3531
      %v3533 = vpop.f32.mrb[0].mxu0
      %v3534 = vpop.f32.mrb[0].mxu0
      %v3535 = vpop.f32.mrb[0].mxu0
      %3536 = vdwg.mxu0
      %v3537 = vadd.f32 %v3491, %v3532
      %v3538 = vld [vmem:[#allocation2 + $0x24] sm:$0x1]
      %v3539 = vpack.c.bf16 %v3538, %v3538
      %v3541 = vsel %vm594, %v3539, 0
      %3543 = vmatprep.subr.bf16.mxu0 0
      %3544 = vmatpush1.bf16.msra.mxu0 %v817
      %3545 = vmatprep.subr.bf16.mxu0 0
      %3546 = vmatpush1.bf16.msra.mxu0 0
      %3547 = vmatprep.subr.bf16.mxu0 0
      %3548 = vmatpush1.bf16.msra.mxu0 0
      %3549 = vmatprep.subr.bf16.mxu0 0
      %3550 = vmatpush1.bf16.msra.mxu0 0
      %3551 = vmatprep.subr.bf16.mxu0 0
      %3552 = vmatpush1.bf16.msra.mxu0 0
      %3553 = vmatprep.subr.bf16.mxu0 0
      %3554 = vmatpush1.bf16.msra.mxu0 0
      %3555 = vmatprep.subr.bf16.mxu0 0
      %3556 = vmatpush1.bf16.msra.mxu0 0
      %3557 = vmatprep.subr.bf16.mxu0 0
      %3558 = vmatpush1.bf16.msra.mxu0 0
      %3559 = vmatprep.subr.bf16.mxu0 0
      %3560 = vmatpush1.bf16.msra.mxu0 0
      %3561 = vmatprep.subr.bf16.mxu0 0
      %3562 = vmatpush1.bf16.msra.mxu0 0
      %3563 = vmatprep.subr.bf16.mxu0 0
      %3564 = vmatpush1.bf16.msra.mxu0 0
      %3565 = vmatprep.subr.bf16.mxu0 0
      %3566 = vmatpush1.bf16.msra.mxu0 0
      %3567 = vmatprep.subr.bf16.mxu0 0
      %3568 = vmatpush1.bf16.msra.mxu0 0
      %3569 = vmatprep.subr.bf16.mxu0 0
      %3570 = vmatpush1.bf16.msra.mxu0 0
      %3571 = vmatprep.subr.bf16.mxu0 0
      %3572 = vmatpush1.bf16.msra.mxu0 0
      %3573 = vmatprep.subr.bf16.mxu0 0
      %3574 = vmatpush1.bf16.msra.mxu0 0
      %3575 = vmatprep.mubr.bf16.mxu0 0
      %3576 = vmatmul.mubr.bf16.gmra.mrb[0].mxu0 %v3541
      %v3577 = vpop.f32.mrb[0].mxu0
      %v3578 = vadd.f32 0.0, %v3577
      %v3579 = vpop.f32.mrb[0].mxu0
      %v3580 = vpop.f32.mrb[0].mxu0
      %v3581 = vpop.f32.mrb[0].mxu0
      %3582 = vdwg.mxu0
      %v3583 = vadd.f32 %v3537, %v3578
      %v3584 = vld [vmem:[#allocation2 + $0x25] sm:$0x1]
      %v3585 = vpack.c.bf16 %v3584, %v3584
      %v3587 = vsel %vm594, %v3585, 0
      %3589 = vmatprep.subr.bf16.mxu0 0
      %3590 = vmatpush1.bf16.msra.mxu0 %v868
      %3591 = vmatprep.subr.bf16.mxu0 0
      %3592 = vmatpush1.bf16.msra.mxu0 0
      %3593 = vmatprep.subr.bf16.mxu0 0
      %3594 = vmatpush1.bf16.msra.mxu0 0
      %3595 = vmatprep.subr.bf16.mxu0 0
      %3596 = vmatpush1.bf16.msra.mxu0 0
      %3597 = vmatprep.subr.bf16.mxu0 0
      %3598 = vmatpush1.bf16.msra.mxu0 0
      %3599 = vmatprep.subr.bf16.mxu0 0
      %3600 = vmatpush1.bf16.msra.mxu0 0
      %3601 = vmatprep.subr.bf16.mxu0 0
      %3602 = vmatpush1.bf16.msra.mxu0 0
      %3603 = vmatprep.subr.bf16.mxu0 0
      %3604 = vmatpush1.bf16.msra.mxu0 0
      %3605 = vmatprep.subr.bf16.mxu0 0
      %3606 = vmatpush1.bf16.msra.mxu0 0
      %3607 = vmatprep.subr.bf16.mxu0 0
      %3608 = vmatpush1.bf16.msra.mxu0 0
      %3609 = vmatprep.subr.bf16.mxu0 0
      %3610 = vmatpush1.bf16.msra.mxu0 0
      %3611 = vmatprep.subr.bf16.mxu0 0
      %3612 = vmatpush1.bf16.msra.mxu0 0
      %3613 = vmatprep.subr.bf16.mxu0 0
      %3614 = vmatpush1.bf16.msra.mxu0 0
      %3615 = vmatprep.subr.bf16.mxu0 0
      %3616 = vmatpush1.bf16.msra.mxu0 0
      %3617 = vmatprep.subr.bf16.mxu0 0
      %3618 = vmatpush1.bf16.msra.mxu0 0
      %3619 = vmatprep.subr.bf16.mxu0 0
      %3620 = vmatpush1.bf16.msra.mxu0 0
      %3621 = vmatprep.mubr.bf16.mxu0 0
      %3622 = vmatmul.mubr.bf16.gmra.mrb[0].mxu0 %v3587
      %v3623 = vpop.f32.mrb[0].mxu0
      %v3624 = vadd.f32 0.0, %v3623
      %v3625 = vpop.f32.mrb[0].mxu0
      %v3626 = vpop.f32.mrb[0].mxu0
      %v3627 = vpop.f32.mrb[0].mxu0
      %3628 = vdwg.mxu0
      %v3629 = vadd.f32 %v3583, %v3624
      %v3630 = vld [vmem:[#allocation2 + $0x2a] sm:$0x1]
      %v3631 = vpack.c.bf16 %v3630, %v3630
      %v3633 = vsel %vm594, %v3631, 0
      %3635 = vmatprep.subr.bf16.mxu0 0
      %3636 = vmatpush1.bf16.msra.mxu0 %v919
      %3637 = vmatprep.subr.bf16.mxu0 0
      %3638 = vmatpush1.bf16.msra.mxu0 0
      %3639 = vmatprep.subr.bf16.mxu0 0
      %3640 = vmatpush1.bf16.msra.mxu0 0
      %3641 = vmatprep.subr.bf16.mxu0 0
      %3642 = vmatpush1.bf16.msra.mxu0 0
      %3643 = vmatprep.subr.bf16.mxu0 0
      %3644 = vmatpush1.bf16.msra.mxu0 0
      %3645 = vmatprep.subr.bf16.mxu0 0
      %3646 = vmatpush1.bf16.msra.mxu0 0
      %3647 = vmatprep.subr.bf16.mxu0 0
      %3648 = vmatpush1.bf16.msra.mxu0 0
      %3649 = vmatprep.subr.bf16.mxu0 0
      %3650 = vmatpush1.bf16.msra.mxu0 0
      %3651 = vmatprep.subr.bf16.mxu0 0
      %3652 = vmatpush1.bf16.msra.mxu0 0
      %3653 = vmatprep.subr.bf16.mxu0 0
      %3654 = vmatpush1.bf16.msra.mxu0 0
      %3655 = vmatprep.subr.bf16.mxu0 0
      %3656 = vmatpush1.bf16.msra.mxu0 0
      %3657 = vmatprep.subr.bf16.mxu0 0
      %3658 = vmatpush1.bf16.msra.mxu0 0
      %3659 = vmatprep.subr.bf16.mxu0 0
      %3660 = vmatpush1.bf16.msra.mxu0 0
      %3661 = vmatprep.subr.bf16.mxu0 0
      %3662 = vmatpush1.bf16.msra.mxu0 0
      %3663 = vmatprep.subr.bf16.mxu0 0
      %3664 = vmatpush1.bf16.msra.mxu0 0
      %3665 = vmatprep.subr.bf16.mxu0 0
      %3666 = vmatpush1.bf16.msra.mxu0 0
      %3667 = vmatprep.mubr.bf16.mxu0 0
      %3668 = vmatmul.mubr.bf16.gmra.mrb[0].mxu0 %v3633
      %v3669 = vpop.f32.mrb[0].mxu0
      %v3670 = vadd.f32 0.0, %v3669
      %v3671 = vpop.f32.mrb[0].mxu0
      %v3672 = vpop.f32.mrb[0].mxu0
      %v3673 = vpop.f32.mrb[0].mxu0
      %3674 = vdwg.mxu0
      %v3675 = vadd.f32 %v3629, %v3670
      %v3676 = vld [vmem:[#allocation2 + $0x2b] sm:$0x1]
      %v3677 = vpack.c.bf16 %v3676, %v3676
      %v3679 = vsel %vm594, %v3677, 0
      %3681 = vmatprep.subr.bf16.mxu0 0
      %3682 = vmatpush1.bf16.msra.mxu0 %v970
      %3683 = vmatprep.subr.bf16.mxu0 0
      %3684 = vmatpush1.bf16.msra.mxu0 0
      %3685 = vmatprep.subr.bf16.mxu0 0
      %3686 = vmatpush1.bf16.msra.mxu0 0
      %3687 = vmatprep.subr.bf16.mxu0 0
      %3688 = vmatpush1.bf16.msra.mxu0 0
      %3689 = vmatprep.subr.bf16.mxu0 0
      %3690 = vmatpush1.bf16.msra.mxu0 0
      %3691 = vmatprep.subr.bf16.mxu0 0
      %3692 = vmatpush1.bf16.msra.mxu0 0
      %3693 = vmatprep.subr.bf16.mxu0 0
      %3694 = vmatpush1.bf16.msra.mxu0 0
      %3695 = vmatprep.subr.bf16.mxu0 0
      %3696 = vmatpush1.bf16.msra.mxu0 0
      %3697 = vmatprep.subr.bf16.mxu0 0
      %3698 = vmatpush1.bf16.msra.mxu0 0
      %3699 = vmatprep.subr.bf16.mxu0 0
      %3700 = vmatpush1.bf16.msra.mxu0 0
      %3701 = vmatprep.subr.bf16.mxu0 0
      %3702 = vmatpush1.bf16.msra.mxu0 0
      %3703 = vmatprep.subr.bf16.mxu0 0
      %3704 = vmatpush1.bf16.msra.mxu0 0
      %3705 = vmatprep.subr.bf16.mxu0 0
      %3706 = vmatpush1.bf16.msra.mxu0 0
      %3707 = vmatprep.subr.bf16.mxu0 0
      %3708 = vmatpush1.bf16.msra.mxu0 0
      %3709 = vmatprep.subr.bf16.mxu0 0
      %3710 = vmatpush1.bf16.msra.mxu0 0
      %3711 = vmatprep.subr.bf16.mxu0 0
      %3712 = vmatpush1.bf16.msra.mxu0 0
      %3713 = vmatprep.mubr.bf16.mxu0 0
      %3714 = vmatmul.mubr.bf16.gmra.mrb[0].mxu0 %v3679
      %v3715 = vpop.f32.mrb[0].mxu0
      %v3716 = vadd.f32 0.0, %v3715
      %v3717 = vpop.f32.mrb[0].mxu0
      %v3718 = vpop.f32.mrb[0].mxu0
      %v3719 = vpop.f32.mrb[0].mxu0
      %3720 = vdwg.mxu0
      %v3721 = vadd.f32 %v3675, %v3716
      %v3722 = vld [vmem:[#allocation2 + $0x2c] sm:$0x1]
      %v3723 = vpack.c.bf16 %v3722, %v3722
      %v3725 = vsel %vm594, %v3723, 0
      %3727 = vmatprep.subr.bf16.mxu0 0
      %3728 = vmatpush1.bf16.msra.mxu0 %v1021
      %3729 = vmatprep.subr.bf16.mxu0 0
      %3730 = vmatpush1.bf16.msra.mxu0 0
      %3731 = vmatprep.subr.bf16.mxu0 0
      %3732 = vmatpush1.bf16.msra.mxu0 0
      %3733 = vmatprep.subr.bf16.mxu0 0
      %3734 = vmatpush1.bf16.msra.mxu0 0
      %3735 = vmatprep.subr.bf16.mxu0 0
      %3736 = vmatpush1.bf16.msra.mxu0 0
      %3737 = vmatprep.subr.bf16.mxu0 0
      %3738 = vmatpush1.bf16.msra.mxu0 0
      %3739 = vmatprep.subr.bf16.mxu0 0
      %3740 = vmatpush1.bf16.msra.mxu0 0
      %3741 = vmatprep.subr.bf16.mxu0 0
      %3742 = vmatpush1.bf16.msra.mxu0 0
      %3743 = vmatprep.subr.bf16.mxu0 0
      %3744 = vmatpush1.bf16.msra.mxu0 0
      %3745 = vmatprep.subr.bf16.mxu0 0
      %3746 = vmatpush1.bf16.msra.mxu0 0
      %3747 = vmatprep.subr.bf16.mxu0 0
      %3748 = vmatpush1.bf16.msra.mxu0 0
      %3749 = vmatprep.subr.bf16.mxu0 0
      %3750 = vmatpush1.bf16.msra.mxu0 0
      %3751 = vmatprep.subr.bf16.mxu0 0
      %3752 = vmatpush1.bf16.msra.mxu0 0
      %3753 = vmatprep.subr.bf16.mxu0 0
      %3754 = vmatpush1.bf16.msra.mxu0 0
      %3755 = vmatprep.subr.bf16.mxu0 0
      %3756 = vmatpush1.bf16.msra.mxu0 0
      %3757 = vmatprep.subr.bf16.mxu0 0
      %3758 = vmatpush1.bf16.msra.mxu0 0
      %3759 = vmatprep.mubr.bf16.mxu0 0
      %3760 = vmatmul.mubr.bf16.gmra.mrb[0].mxu0 %v3725
      %v3761 = vpop.f32.mrb[0].mxu0
      %v3762 = vadd.f32 0.0, %v3761
      %v3763 = vpop.f32.mrb[0].mxu0
      %v3764 = vpop.f32.mrb[0].mxu0
      %v3765 = vpop.f32.mrb[0].mxu0
      %3766 = vdwg.mxu0
      %v3767 = vadd.f32 %v3721, %v3762
      %v3768 = vmax.f32 %v3767, 0.0
      %v3769 = vpack.c.bf16 %v3768, %v3768
      %s3770 = scalar_lea.vmem %s6, 48
      %v3771 = vld [vmem:[%s3770] sm:$0xf]
      %v3772 = vld [vmem:[%s3770 + $0x4] sm:$0xf]
      %v3775 = vunpack.c.l.b16 %v3771
      %v3776 = vunpack.c.l.b16 %v3772
      %v3777 = vpack.c.b16 %v3776, %v3775
      %v3780 = vsel %vm1074, %v3769, 0
      %3782 = vmatprep.subr.bf16.mxu0 0
      %3783 = vmatpush1.bf16.msra.mxu0 %v3777
      %3784 = vmatprep.subr.bf16.mxu0 0
      %3785 = vmatpush1.bf16.msra.mxu0 0
      %3786 = vmatprep.subr.bf16.mxu0 0
      %3787 = vmatpush1.bf16.msra.mxu0 0
      %3788 = vmatprep.subr.bf16.mxu0 0
      %3789 = vmatpush1.bf16.msra.mxu0 0
      %3790 = vmatprep.subr.bf16.mxu0 0
      %3791 = vmatpush1.bf16.msra.mxu0 0
      %3792 = vmatprep.subr.bf16.mxu0 0
      %3793 = vmatpush1.bf16.msra.mxu0 0
      %3794 = vmatprep.subr.bf16.mxu0 0
      %3795 = vmatpush1.bf16.msra.mxu0 0
      %3796 = vmatprep.subr.bf16.mxu0 0
      %3797 = vmatpush1.bf16.msra.mxu0 0
      %3798 = vmatprep.subr.bf16.mxu0 0
      %3799 = vmatpush1.bf16.msra.mxu0 0
      %3800 = vmatprep.subr.bf16.mxu0 0
      %3801 = vmatpush1.bf16.msra.mxu0 0
      %3802 = vmatprep.subr.bf16.mxu0 0
      %3803 = vmatpush1.bf16.msra.mxu0 0
      %3804 = vmatprep.subr.bf16.mxu0 0
      %3805 = vmatpush1.bf16.msra.mxu0 0
      %3806 = vmatprep.subr.bf16.mxu0 0
      %3807 = vmatpush1.bf16.msra.mxu0 0
      %3808 = vmatprep.subr.bf16.mxu0 0
      %3809 = vmatpush1.bf16.msra.mxu0 0
      %3810 = vmatprep.subr.bf16.mxu0 0
      %3811 = vmatpush1.bf16.msra.mxu0 0
      %3812 = vmatprep.subr.bf16.mxu0 0
      %3813 = vmatpush1.bf16.msra.mxu0 0
      %3814 = vmatprep.mubr.bf16.mxu0 0
      %3815 = vmatmul.mubr.bf16.gmra.mrb[0].mxu0 %v3780
      %v3816 = vpop.f32.mrb[0].mxu0
      %v3817 = vadd.f32 0.0, %v3816
      %v3818 = vpop.f32.mrb[0].mxu0
      %v3819 = vpop.f32.mrb[0].mxu0
      %v3820 = vpop.f32.mrb[0].mxu0
      %3821 = vdwg.mxu0
      %v3822 = vadd.f32 %v3368, %v3817
      %3823 = vmatprep.subr.bf16.mxu0 0
      %3824 = vmatpush1.bf16.msra.mxu0 %v613
      %3825 = vmatprep.subr.bf16.mxu0 0
      %3826 = vmatpush1.bf16.msra.mxu0 0
      %3827 = vmatprep.subr.bf16.mxu0 0
      %3828 = vmatpush1.bf16.msra.mxu0 0
      %3829 = vmatprep.subr.bf16.mxu0 0
      %3830 = vmatpush1.bf16.msra.mxu0 0
      %3831 = vmatprep.subr.bf16.mxu0 0
      %3832 = vmatpush1.bf16.msra.mxu0 0
      %3833 = vmatprep.subr.bf16.mxu0 0
      %3834 = vmatpush1.bf16.msra.mxu0 0
      %3835 = vmatprep.subr.bf16.mxu0 0
      %3836 = vmatpush1.bf16.msra.mxu0 0
      %3837 = vmatprep.subr.bf16.mxu0 0
      %3838 = vmatpush1.bf16.msra.mxu0 0
      %3839 = vmatprep.subr.bf16.mxu0 0
      %3840 = vmatpush1.bf16.msra.mxu0 0
      %3841 = vmatprep.subr.bf16.mxu0 0
      %3842 = vmatpush1.bf16.msra.mxu0 0
      %3843 = vmatprep.subr.bf16.mxu0 0
      %3844 = vmatpush1.bf16.msra.mxu0 0
      %3845 = vmatprep.subr.bf16.mxu0 0
      %3846 = vmatpush1.bf16.msra.mxu0 0
      %3847 = vmatprep.subr.bf16.mxu0 0
      %3848 = vmatpush1.bf16.msra.mxu0 0
      %3849 = vmatprep.subr.bf16.mxu0 0
      %3850 = vmatpush1.bf16.msra.mxu0 0
      %3851 = vmatprep.subr.bf16.mxu0 0
      %3852 = vmatpush1.bf16.msra.mxu0 0
      %3853 = vmatprep.subr.bf16.mxu0 0
      %3854 = vmatpush1.bf16.msra.mxu0 0
      %3855 = vmatprep.mubr.bf16.mxu0 0
      %3856 = vmatmul.mubr.bf16.gmra.mrb[0].mxu0 %v2383
      %v3857 = vpop.f32.mrb[0].mxu0
      %v3858 = vadd.f32 0.0, %v3857
      %v3859 = vpop.f32.mrb[0].mxu0
      %v3860 = vpop.f32.mrb[0].mxu0
      %v3861 = vpop.f32.mrb[0].mxu0
      %3862 = vdwg.mxu0
      %v3863 = vadd.f32 %v604, %v3858
      %3864 = vmatprep.subr.bf16.mxu0 0
      %3865 = vmatpush1.bf16.msra.mxu0 %v664
      %3866 = vmatprep.subr.bf16.mxu0 0
      %3867 = vmatpush1.bf16.msra.mxu0 0
      %3868 = vmatprep.subr.bf16.mxu0 0
      %3869 = vmatpush1.bf16.msra.mxu0 0
      %3870 = vmatprep.subr.bf16.mxu0 0
      %3871 = vmatpush1.bf16.msra.mxu0 0
      %3872 = vmatprep.subr.bf16.mxu0 0
      %3873 = vmatpush1.bf16.msra.mxu0 0
      %3874 = vmatprep.subr.bf16.mxu0 0
      %3875 = vmatpush1.bf16.msra.mxu0 0
      %3876 = vmatprep.subr.bf16.mxu0 0
      %3877 = vmatpush1.bf16.msra.mxu0 0
      %3878 = vmatprep.subr.bf16.mxu0 0
      %3879 = vmatpush1.bf16.msra.mxu0 0
      %3880 = vmatprep.subr.bf16.mxu0 0
      %3881 = vmatpush1.bf16.msra.mxu0 0
      %3882 = vmatprep.subr.bf16.mxu0 0
      %3883 = vmatpush1.bf16.msra.mxu0 0
      %3884 = vmatprep.subr.bf16.mxu0 0
      %3885 = vmatpush1.bf16.msra.mxu0 0
      %3886 = vmatprep.subr.bf16.mxu0 0
      %3887 = vmatpush1.bf16.msra.mxu0 0
      %3888 = vmatprep.subr.bf16.mxu0 0
      %3889 = vmatpush1.bf16.msra.mxu0 0
      %3890 = vmatprep.subr.bf16.mxu0 0
      %3891 = vmatpush1.bf16.msra.mxu0 0
      %3892 = vmatprep.subr.bf16.mxu0 0
      %3893 = vmatpush1.bf16.msra.mxu0 0
      %3894 = vmatprep.subr.bf16.mxu0 0
      %3895 = vmatpush1.bf16.msra.mxu0 0
      %3896 = vmatprep.mubr.bf16.mxu0 0
      %3897 = vmatmul.mubr.bf16.gmra.mrb[0].mxu0 %v2781
      %v3898 = vpop.f32.mrb[0].mxu0
      %v3899 = vadd.f32 0.0, %v3898
      %v3900 = vpop.f32.mrb[0].mxu0
      %v3901 = vpop.f32.mrb[0].mxu0
      %v3902 = vpop.f32.mrb[0].mxu0
      %3903 = vdwg.mxu0
      %v3904 = vadd.f32 %v3863, %v3899
      %3905 = vmatprep.subr.bf16.mxu0 0
      %3906 = vmatpush1.bf16.msra.mxu0 %v715
      %3907 = vmatprep.subr.bf16.mxu0 0
      %3908 = vmatpush1.bf16.msra.mxu0 0
      %3909 = vmatprep.subr.bf16.mxu0 0
      %3910 = vmatpush1.bf16.msra.mxu0 0
      %3911 = vmatprep.subr.bf16.mxu0 0
      %3912 = vmatpush1.bf16.msra.mxu0 0
      %3913 = vmatprep.subr.bf16.mxu0 0
      %3914 = vmatpush1.bf16.msra.mxu0 0
      %3915 = vmatprep.subr.bf16.mxu0 0
      %3916 = vmatpush1.bf16.msra.mxu0 0
      %3917 = vmatprep.subr.bf16.mxu0 0
      %3918 = vmatpush1.bf16.msra.mxu0 0
      %3919 = vmatprep.subr.bf16.mxu0 0
      %3920 = vmatpush1.bf16.msra.mxu0 0
      %3921 = vmatprep.subr.bf16.mxu0 0
      %3922 = vmatpush1.bf16.msra.mxu0 0
      %3923 = vmatprep.subr.bf16.mxu0 0
      %3924 = vmatpush1.bf16.msra.mxu0 0
      %3925 = vmatprep.subr.bf16.mxu0 0
      %3926 = vmatpush1.bf16.msra.mxu0 0
      %3927 = vmatprep.subr.bf16.mxu0 0
      %3928 = vmatpush1.bf16.msra.mxu0 0
      %3929 = vmatprep.subr.bf16.mxu0 0
      %3930 = vmatpush1.bf16.msra.mxu0 0
      %3931 = vmatprep.subr.bf16.mxu0 0
      %3932 = vmatpush1.bf16.msra.mxu0 0
      %3933 = vmatprep.subr.bf16.mxu0 0
      %3934 = vmatpush1.bf16.msra.mxu0 0
      %3935 = vmatprep.subr.bf16.mxu0 0
      %3936 = vmatpush1.bf16.msra.mxu0 0
      %3937 = vmatprep.mubr.bf16.mxu0 0
      %3938 = vmatmul.mubr.bf16.gmra.mrb[0].mxu0 %v2827
      %v3939 = vpop.f32.mrb[0].mxu0
      %v3940 = vadd.f32 0.0, %v3939
      %v3941 = vpop.f32.mrb[0].mxu0
      %v3942 = vpop.f32.mrb[0].mxu0
      %v3943 = vpop.f32.mrb[0].mxu0
      %3944 = vdwg.mxu0
      %v3945 = vadd.f32 %v3904, %v3940
      %3946 = vmatprep.subr.bf16.mxu0 0
      %3947 = vmatpush1.bf16.msra.mxu0 %v766
      %3948 = vmatprep.subr.bf16.mxu0 0
      %3949 = vmatpush1.bf16.msra.mxu0 0
      %3950 = vmatprep.subr.bf16.mxu0 0
      %3951 = vmatpush1.bf16.msra.mxu0 0
      %3952 = vmatprep.subr.bf16.mxu0 0
      %3953 = vmatpush1.bf16.msra.mxu0 0
      %3954 = vmatprep.subr.bf16.mxu0 0
      %3955 = vmatpush1.bf16.msra.mxu0 0
      %3956 = vmatprep.subr.bf16.mxu0 0
      %3957 = vmatpush1.bf16.msra.mxu0 0
      %3958 = vmatprep.subr.bf16.mxu0 0
      %3959 = vmatpush1.bf16.msra.mxu0 0
      %3960 = vmatprep.subr.bf16.mxu0 0
      %3961 = vmatpush1.bf16.msra.mxu0 0
      %3962 = vmatprep.subr.bf16.mxu0 0
      %3963 = vmatpush1.bf16.msra.mxu0 0
      %3964 = vmatprep.subr.bf16.mxu0 0
      %3965 = vmatpush1.bf16.msra.mxu0 0
      %3966 = vmatprep.subr.bf16.mxu0 0
      %3967 = vmatpush1.bf16.msra.mxu0 0
      %3968 = vmatprep.subr.bf16.mxu0 0
      %3969 = vmatpush1.bf16.msra.mxu0 0
      %3970 = vmatprep.subr.bf16.mxu0 0
      %3971 = vmatpush1.bf16.msra.mxu0 0
      %3972 = vmatprep.subr.bf16.mxu0 0
      %3973 = vmatpush1.bf16.msra.mxu0 0
      %3974 = vmatprep.subr.bf16.mxu0 0
      %3975 = vmatpush1.bf16.msra.mxu0 0
      %3976 = vmatprep.subr.bf16.mxu0 0
      %3977 = vmatpush1.bf16.msra.mxu0 0
      %3978 = vmatprep.mubr.bf16.mxu0 0
      %3979 = vmatmul.mubr.bf16.gmra.mrb[0].mxu0 %v3587
      %v3980 = vpop.f32.mrb[0].mxu0
      %v3981 = vadd.f32 0.0, %v3980
      %v3982 = vpop.f32.mrb[0].mxu0
      %v3983 = vpop.f32.mrb[0].mxu0
      %v3984 = vpop.f32.mrb[0].mxu0
      %3985 = vdwg.mxu0
      %v3986 = vadd.f32 %v3945, %v3981
      %v3987 = vld [vmem:[#allocation2 + $0x26] sm:$0x1]
      %v3988 = vpack.c.bf16 %v3987, %v3987
      %v3990 = vsel %vm594, %v3988, 0
      %3992 = vmatprep.subr.bf16.mxu0 0
      %3993 = vmatpush1.bf16.msra.mxu0 %v817
      %3994 = vmatprep.subr.bf16.mxu0 0
      %3995 = vmatpush1.bf16.msra.mxu0 0
      %3996 = vmatprep.subr.bf16.mxu0 0
      %3997 = vmatpush1.bf16.msra.mxu0 0
      %3998 = vmatprep.subr.bf16.mxu0 0
      %3999 = vmatpush1.bf16.msra.mxu0 0
      %4000 = vmatprep.subr.bf16.mxu0 0
      %4001 = vmatpush1.bf16.msra.mxu0 0
      %4002 = vmatprep.subr.bf16.mxu0 0
      %4003 = vmatpush1.bf16.msra.mxu0 0
      %4004 = vmatprep.subr.bf16.mxu0 0
      %4005 = vmatpush1.bf16.msra.mxu0 0
      %4006 = vmatprep.subr.bf16.mxu0 0
      %4007 = vmatpush1.bf16.msra.mxu0 0
      %4008 = vmatprep.subr.bf16.mxu0 0
      %4009 = vmatpush1.bf16.msra.mxu0 0
      %4010 = vmatprep.subr.bf16.mxu0 0
      %4011 = vmatpush1.bf16.msra.mxu0 0
      %4012 = vmatprep.subr.bf16.mxu0 0
      %4013 = vmatpush1.bf16.msra.mxu0 0
      %4014 = vmatprep.subr.bf16.mxu0 0
      %4015 = vmatpush1.bf16.msra.mxu0 0
      %4016 = vmatprep.subr.bf16.mxu0 0
      %4017 = vmatpush1.bf16.msra.mxu0 0
      %4018 = vmatprep.subr.bf16.mxu0 0
      %4019 = vmatpush1.bf16.msra.mxu0 0
      %4020 = vmatprep.subr.bf16.mxu0 0
      %4021 = vmatpush1.bf16.msra.mxu0 0
      %4022 = vmatprep.subr.bf16.mxu0 0
      %4023 = vmatpush1.bf16.msra.mxu0 0
      %4024 = vmatprep.mubr.bf16.mxu0 0
      %4025 = vmatmul.mubr.bf16.gmra.mrb[0].mxu0 %v3990
      %v4026 = vpop.f32.mrb[0].mxu0
      %v4027 = vadd.f32 0.0, %v4026
      %v4028 = vpop.f32.mrb[0].mxu0
      %v4029 = vpop.f32.mrb[0].mxu0
      %v4030 = vpop.f32.mrb[0].mxu0
      %4031 = vdwg.mxu0
      %v4032 = vadd.f32 %v3986, %v4027
      %v4033 = vld [vmem:[#allocation2 + $0x27] sm:$0x1]
      %v4034 = vpack.c.bf16 %v4033, %v4033
      %v4036 = vsel %vm594, %v4034, 0
      %4038 = vmatprep.subr.bf16.mxu0 0
      %4039 = vmatpush1.bf16.msra.mxu0 %v868
      %4040 = vmatprep.subr.bf16.mxu0 0
      %4041 = vmatpush1.bf16.msra.mxu0 0
      %4042 = vmatprep.subr.bf16.mxu0 0
      %4043 = vmatpush1.bf16.msra.mxu0 0
      %4044 = vmatprep.subr.bf16.mxu0 0
      %4045 = vmatpush1.bf16.msra.mxu0 0
      %4046 = vmatprep.subr.bf16.mxu0 0
      %4047 = vmatpush1.bf16.msra.mxu0 0
      %4048 = vmatprep.subr.bf16.mxu0 0
      %4049 = vmatpush1.bf16.msra.mxu0 0
      %4050 = vmatprep.subr.bf16.mxu0 0
      %4051 = vmatpush1.bf16.msra.mxu0 0
      %4052 = vmatprep.subr.bf16.mxu0 0
      %4053 = vmatpush1.bf16.msra.mxu0 0
      %4054 = vmatprep.subr.bf16.mxu0 0
      %4055 = vmatpush1.bf16.msra.mxu0 0
      %4056 = vmatprep.subr.bf16.mxu0 0
      %4057 = vmatpush1.bf16.msra.mxu0 0
      %4058 = vmatprep.subr.bf16.mxu0 0
      %4059 = vmatpush1.bf16.msra.mxu0 0
      %4060 = vmatprep.subr.bf16.mxu0 0
      %4061 = vmatpush1.bf16.msra.mxu0 0
      %4062 = vmatprep.subr.bf16.mxu0 0
      %4063 = vmatpush1.bf16.msra.mxu0 0
      %4064 = vmatprep.subr.bf16.mxu0 0
      %4065 = vmatpush1.bf16.msra.mxu0 0
      %4066 = vmatprep.subr.bf16.mxu0 0
      %4067 = vmatpush1.bf16.msra.mxu0 0
      %4068 = vmatprep.subr.bf16.mxu0 0
      %4069 = vmatpush1.bf16.msra.mxu0 0
      %4070 = vmatprep.mubr.bf16.mxu0 0
      %4071 = vmatmul.mubr.bf16.gmra.mrb[0].mxu0 %v4036
      %v4072 = vpop.f32.mrb[0].mxu0
      %v4073 = vadd.f32 0.0, %v4072
      %v4074 = vpop.f32.mrb[0].mxu0
      %v4075 = vpop.f32.mrb[0].mxu0
      %v4076 = vpop.f32.mrb[0].mxu0
      %4077 = vdwg.mxu0
      %v4078 = vadd.f32 %v4032, %v4073
      %4079 = vmatprep.subr.bf16.mxu0 0
      %4080 = vmatpush1.bf16.msra.mxu0 %v919
      %4081 = vmatprep.subr.bf16.mxu0 0
      %4082 = vmatpush1.bf16.msra.mxu0 0
      %4083 = vmatprep.subr.bf16.mxu0 0
      %4084 = vmatpush1.bf16.msra.mxu0 0
      %4085 = vmatprep.subr.bf16.mxu0 0
      %4086 = vmatpush1.bf16.msra.mxu0 0
      %4087 = vmatprep.subr.bf16.mxu0 0
      %4088 = vmatpush1.bf16.msra.mxu0 0
      %4089 = vmatprep.subr.bf16.mxu0 0
      %4090 = vmatpush1.bf16.msra.mxu0 0
      %4091 = vmatprep.subr.bf16.mxu0 0
      %4092 = vmatpush1.bf16.msra.mxu0 0
      %4093 = vmatprep.subr.bf16.mxu0 0
      %4094 = vmatpush1.bf16.msra.mxu0 0
      %4095 = vmatprep.subr.bf16.mxu0 0
      %4096 = vmatpush1.bf16.msra.mxu0 0
      %4097 = vmatprep.subr.bf16.mxu0 0
      %4098 = vmatpush1.bf16.msra.mxu0 0
      %4099 = vmatprep.subr.bf16.mxu0 0
      %4100 = vmatpush1.bf16.msra.mxu0 0
      %4101 = vmatprep.subr.bf16.mxu0 0
      %4102 = vmatpush1.bf16.msra.mxu0 0
      %4103 = vmatprep.subr.bf16.mxu0 0
      %4104 = vmatpush1.bf16.msra.mxu0 0
      %4105 = vmatprep.subr.bf16.mxu0 0
      %4106 = vmatpush1.bf16.msra.mxu0 0
      %4107 = vmatprep.subr.bf16.mxu0 0
      %4108 = vmatpush1.bf16.msra.mxu0 0
      %4109 = vmatprep.subr.bf16.mxu0 0
      %4110 = vmatpush1.bf16.msra.mxu0 0
      %4111 = vmatprep.mubr.bf16.mxu0 0
      %4112 = vmatmul.mubr.bf16.gmra.mrb[0].mxu0 %v3725
      %v4113 = vpop.f32.mrb[0].mxu0
      %v4114 = vadd.f32 0.0, %v4113
      %v4115 = vpop.f32.mrb[0].mxu0
      %v4116 = vpop.f32.mrb[0].mxu0
      %v4117 = vpop.f32.mrb[0].mxu0
      %4118 = vdwg.mxu0
      %v4119 = vadd.f32 %v4078, %v4114
      %v4120 = vld [vmem:[#allocation2 + $0x2d] sm:$0x1]
      %v4121 = vpack.c.bf16 %v4120, %v4120
      %v4123 = vsel %vm594, %v4121, 0
      %4125 = vmatprep.subr.bf16.mxu0 0
      %4126 = vmatpush1.bf16.msra.mxu0 %v970
      %4127 = vmatprep.subr.bf16.mxu0 0
      %4128 = vmatpush1.bf16.msra.mxu0 0
      %4129 = vmatprep.subr.bf16.mxu0 0
      %4130 = vmatpush1.bf16.msra.mxu0 0
      %4131 = vmatprep.subr.bf16.mxu0 0
      %4132 = vmatpush1.bf16.msra.mxu0 0
      %4133 = vmatprep.subr.bf16.mxu0 0
      %4134 = vmatpush1.bf16.msra.mxu0 0
      %4135 = vmatprep.subr.bf16.mxu0 0
      %4136 = vmatpush1.bf16.msra.mxu0 0
      %4137 = vmatprep.subr.bf16.mxu0 0
      %4138 = vmatpush1.bf16.msra.mxu0 0
      %4139 = vmatprep.subr.bf16.mxu0 0
      %4140 = vmatpush1.bf16.msra.mxu0 0
      %4141 = vmatprep.subr.bf16.mxu0 0
      %4142 = vmatpush1.bf16.msra.mxu0 0
      %4143 = vmatprep.subr.bf16.mxu0 0
      %4144 = vmatpush1.bf16.msra.mxu0 0
      %4145 = vmatprep.subr.bf16.mxu0 0
      %4146 = vmatpush1.bf16.msra.mxu0 0
      %4147 = vmatprep.subr.bf16.mxu0 0
      %4148 = vmatpush1.bf16.msra.mxu0 0
      %4149 = vmatprep.subr.bf16.mxu0 0
      %4150 = vmatpush1.bf16.msra.mxu0 0
      %4151 = vmatprep.subr.bf16.mxu0 0
      %4152 = vmatpush1.bf16.msra.mxu0 0
      %4153 = vmatprep.subr.bf16.mxu0 0
      %4154 = vmatpush1.bf16.msra.mxu0 0
      %4155 = vmatprep.subr.bf16.mxu0 0
      %4156 = vmatpush1.bf16.msra.mxu0 0
      %4157 = vmatprep.mubr.bf16.mxu0 0
      %4158 = vmatmul.mubr.bf16.gmra.mrb[0].mxu0 %v4123
      %v4159 = vpop.f32.mrb[0].mxu0
      %v4160 = vadd.f32 0.0, %v4159
      %v4161 = vpop.f32.mrb[0].mxu0
      %v4162 = vpop.f32.mrb[0].mxu0
      %v4163 = vpop.f32.mrb[0].mxu0
      %4164 = vdwg.mxu0
      %v4165 = vadd.f32 %v4119, %v4160
      %v4166 = vld [vmem:[#allocation2 + $0x2e] sm:$0x1]
      %v4167 = vpack.c.bf16 %v4166, %v4166
      %v4169 = vsel %vm594, %v4167, 0
      %4171 = vmatprep.subr.bf16.mxu0 0
      %4172 = vmatpush1.bf16.msra.mxu0 %v1021
      %4173 = vmatprep.subr.bf16.mxu0 0
      %4174 = vmatpush1.bf16.msra.mxu0 0
      %4175 = vmatprep.subr.bf16.mxu0 0
      %4176 = vmatpush1.bf16.msra.mxu0 0
      %4177 = vmatprep.subr.bf16.mxu0 0
      %4178 = vmatpush1.bf16.msra.mxu0 0
      %4179 = vmatprep.subr.bf16.mxu0 0
      %4180 = vmatpush1.bf16.msra.mxu0 0
      %4181 = vmatprep.subr.bf16.mxu0 0
      %4182 = vmatpush1.bf16.msra.mxu0 0
      %4183 = vmatprep.subr.bf16.mxu0 0
      %4184 = vmatpush1.bf16.msra.mxu0 0
      %4185 = vmatprep.subr.bf16.mxu0 0
      %4186 = vmatpush1.bf16.msra.mxu0 0
      %4187 = vmatprep.subr.bf16.mxu0 0
      %4188 = vmatpush1.bf16.msra.mxu0 0
      %4189 = vmatprep.subr.bf16.mxu0 0
      %4190 = vmatpush1.bf16.msra.mxu0 0
      %4191 = vmatprep.subr.bf16.mxu0 0
      %4192 = vmatpush1.bf16.msra.mxu0 0
      %4193 = vmatprep.subr.bf16.mxu0 0
      %4194 = vmatpush1.bf16.msra.mxu0 0
      %4195 = vmatprep.subr.bf16.mxu0 0
      %4196 = vmatpush1.bf16.msra.mxu0 0
      %4197 = vmatprep.subr.bf16.mxu0 0
      %4198 = vmatpush1.bf16.msra.mxu0 0
      %4199 = vmatprep.subr.bf16.mxu0 0
      %4200 = vmatpush1.bf16.msra.mxu0 0
      %4201 = vmatprep.subr.bf16.mxu0 0
      %4202 = vmatpush1.bf16.msra.mxu0 0
      %4203 = vmatprep.mubr.bf16.mxu0 0
      %4204 = vmatmul.mubr.bf16.gmra.mrb[0].mxu0 %v4169
      %v4205 = vpop.f32.mrb[0].mxu0
      %v4206 = vadd.f32 0.0, %v4205
      %v4207 = vpop.f32.mrb[0].mxu0
      %v4208 = vpop.f32.mrb[0].mxu0
      %v4209 = vpop.f32.mrb[0].mxu0
      %4210 = vdwg.mxu0
      %v4211 = vadd.f32 %v4165, %v4206
      %v4212 = vmax.f32 %v4211, 0.0
      %v4213 = vpack.c.bf16 %v4212, %v4212
      %s4214 = scalar_lea.vmem %s6, 56
      %v4215 = vld [vmem:[%s4214] sm:$0xf]
      %v4216 = vld [vmem:[%s4214 + $0x4] sm:$0xf]
      %v4219 = vunpack.c.l.b16 %v4215
      %v4220 = vunpack.c.l.b16 %v4216
      %v4221 = vpack.c.b16 %v4220, %v4219
      %v4224 = vsel %vm1074, %v4213, 0
      %4226 = vmatprep.subr.bf16.mxu0 0
      %4227 = vmatpush1.bf16.msra.mxu0 %v4221
      %4228 = vmatprep.subr.bf16.mxu0 0
      %4229 = vmatpush1.bf16.msra.mxu0 0
      %4230 = vmatprep.subr.bf16.mxu0 0
      %4231 = vmatpush1.bf16.msra.mxu0 0
      %4232 = vmatprep.subr.bf16.mxu0 0
      %4233 = vmatpush1.bf16.msra.mxu0 0
      %4234 = vmatprep.subr.bf16.mxu0 0
      %4235 = vmatpush1.bf16.msra.mxu0 0
      %4236 = vmatprep.subr.bf16.mxu0 0
      %4237 = vmatpush1.bf16.msra.mxu0 0
      %4238 = vmatprep.subr.bf16.mxu0 0
      %4239 = vmatpush1.bf16.msra.mxu0 0
      %4240 = vmatprep.subr.bf16.mxu0 0
      %4241 = vmatpush1.bf16.msra.mxu0 0
      %4242 = vmatprep.subr.bf16.mxu0 0
      %4243 = vmatpush1.bf16.msra.mxu0 0
      %4244 = vmatprep.subr.bf16.mxu0 0
      %4245 = vmatpush1.bf16.msra.mxu0 0
      %4246 = vmatprep.subr.bf16.mxu0 0
      %4247 = vmatpush1.bf16.msra.mxu0 0
      %4248 = vmatprep.subr.bf16.mxu0 0
      %4249 = vmatpush1.bf16.msra.mxu0 0
      %4250 = vmatprep.subr.bf16.mxu0 0
      %4251 = vmatpush1.bf16.msra.mxu0 0
      %4252 = vmatprep.subr.bf16.mxu0 0
      %4253 = vmatpush1.bf16.msra.mxu0 0
      %4254 = vmatprep.subr.bf16.mxu0 0
      %4255 = vmatpush1.bf16.msra.mxu0 0
      %4256 = vmatprep.subr.bf16.mxu0 0
      %4257 = vmatpush1.bf16.msra.mxu0 0
      %4258 = vmatprep.mubr.bf16.mxu0 0
      %4259 = vmatmul.mubr.bf16.gmra.mrb[0].mxu0 %v4224
      %v4260 = vpop.f32.mrb[0].mxu0
      %v4261 = vadd.f32 0.0, %v4260
      %v4262 = vpop.f32.mrb[0].mxu0
      %v4263 = vpop.f32.mrb[0].mxu0
      %v4264 = vpop.f32.mrb[0].mxu0
      %4265 = vdwg.mxu0
      %v4266 = vadd.f32 %v3822, %v4261
      %4267 = vmatprep.subr.bf16.mxu0 0
      %4268 = vmatpush1.bf16.msra.mxu0 %v613
      %4269 = vmatprep.subr.bf16.mxu0 0
      %4270 = vmatpush1.bf16.msra.mxu0 0
      %4271 = vmatprep.subr.bf16.mxu0 0
      %4272 = vmatpush1.bf16.msra.mxu0 0
      %4273 = vmatprep.subr.bf16.mxu0 0
      %4274 = vmatpush1.bf16.msra.mxu0 0
      %4275 = vmatprep.subr.bf16.mxu0 0
      %4276 = vmatpush1.bf16.msra.mxu0 0
      %4277 = vmatprep.subr.bf16.mxu0 0
      %4278 = vmatpush1.bf16.msra.mxu0 0
      %4279 = vmatprep.subr.bf16.mxu0 0
      %4280 = vmatpush1.bf16.msra.mxu0 0
      %4281 = vmatprep.subr.bf16.mxu0 0
      %4282 = vmatpush1.bf16.msra.mxu0 0
      %4283 = vmatprep.subr.bf16.mxu0 0
      %4284 = vmatpush1.bf16.msra.mxu0 0
      %4285 = vmatprep.subr.bf16.mxu0 0
      %4286 = vmatpush1.bf16.msra.mxu0 0
      %4287 = vmatprep.subr.bf16.mxu0 0
      %4288 = vmatpush1.bf16.msra.mxu0 0
      %4289 = vmatprep.subr.bf16.mxu0 0
      %4290 = vmatpush1.bf16.msra.mxu0 0
      %4291 = vmatprep.subr.bf16.mxu0 0
      %4292 = vmatpush1.bf16.msra.mxu0 0
      %4293 = vmatprep.subr.bf16.mxu0 0
      %4294 = vmatpush1.bf16.msra.mxu0 0
      %4295 = vmatprep.subr.bf16.mxu0 0
      %4296 = vmatpush1.bf16.msra.mxu0 0
      %4297 = vmatprep.subr.bf16.mxu0 0
      %4298 = vmatpush1.bf16.msra.mxu0 0
      %4299 = vmatprep.mubr.bf16.mxu0 0
      %4300 = vmatmul.mubr.bf16.gmra.mrb[0].mxu0 %v2827
      %v4301 = vpop.f32.mrb[0].mxu0
      %v4302 = vadd.f32 0.0, %v4301
      %v4303 = vpop.f32.mrb[0].mxu0
      %v4304 = vpop.f32.mrb[0].mxu0
      %v4305 = vpop.f32.mrb[0].mxu0
      %4306 = vdwg.mxu0
      %v4307 = vadd.f32 %v604, %v4302
      %4308 = vmatprep.subr.bf16.mxu0 0
      %4309 = vmatpush1.bf16.msra.mxu0 %v664
      %4310 = vmatprep.subr.bf16.mxu0 0
      %4311 = vmatpush1.bf16.msra.mxu0 0
      %4312 = vmatprep.subr.bf16.mxu0 0
      %4313 = vmatpush1.bf16.msra.mxu0 0
      %4314 = vmatprep.subr.bf16.mxu0 0
      %4315 = vmatpush1.bf16.msra.mxu0 0
      %4316 = vmatprep.subr.bf16.mxu0 0
      %4317 = vmatpush1.bf16.msra.mxu0 0
      %4318 = vmatprep.subr.bf16.mxu0 0
      %4319 = vmatpush1.bf16.msra.mxu0 0
      %4320 = vmatprep.subr.bf16.mxu0 0
      %4321 = vmatpush1.bf16.msra.mxu0 0
      %4322 = vmatprep.subr.bf16.mxu0 0
      %4323 = vmatpush1.bf16.msra.mxu0 0
      %4324 = vmatprep.subr.bf16.mxu0 0
      %4325 = vmatpush1.bf16.msra.mxu0 0
      %4326 = vmatprep.subr.bf16.mxu0 0
      %4327 = vmatpush1.bf16.msra.mxu0 0
      %4328 = vmatprep.subr.bf16.mxu0 0
      %4329 = vmatpush1.bf16.msra.mxu0 0
      %4330 = vmatprep.subr.bf16.mxu0 0
      %4331 = vmatpush1.bf16.msra.mxu0 0
      %4332 = vmatprep.subr.bf16.mxu0 0
      %4333 = vmatpush1.bf16.msra.mxu0 0
      %4334 = vmatprep.subr.bf16.mxu0 0
      %4335 = vmatpush1.bf16.msra.mxu0 0
      %4336 = vmatprep.subr.bf16.mxu0 0
      %4337 = vmatpush1.bf16.msra.mxu0 0
      %4338 = vmatprep.subr.bf16.mxu0 0
      %4339 = vmatpush1.bf16.msra.mxu0 0
      %4340 = vmatprep.mubr.bf16.mxu0 0
      %4341 = vmatmul.mubr.bf16.gmra.mrb[0].mxu0 %v3225
      %v4342 = vpop.f32.mrb[0].mxu0
      %v4343 = vadd.f32 0.0, %v4342
      %v4344 = vpop.f32.mrb[0].mxu0
      %v4345 = vpop.f32.mrb[0].mxu0
      %v4346 = vpop.f32.mrb[0].mxu0
      %4347 = vdwg.mxu0
      %v4348 = vadd.f32 %v4307, %v4343
      %4349 = vmatprep.subr.bf16.mxu0 0
      %4350 = vmatpush1.bf16.msra.mxu0 %v715
      %4351 = vmatprep.subr.bf16.mxu0 0
      %4352 = vmatpush1.bf16.msra.mxu0 0
      %4353 = vmatprep.subr.bf16.mxu0 0
      %4354 = vmatpush1.bf16.msra.mxu0 0
      %4355 = vmatprep.subr.bf16.mxu0 0
      %4356 = vmatpush1.bf16.msra.mxu0 0
      %4357 = vmatprep.subr.bf16.mxu0 0
      %4358 = vmatpush1.bf16.msra.mxu0 0
      %4359 = vmatprep.subr.bf16.mxu0 0
      %4360 = vmatpush1.bf16.msra.mxu0 0
      %4361 = vmatprep.subr.bf16.mxu0 0
      %4362 = vmatpush1.bf16.msra.mxu0 0
      %4363 = vmatprep.subr.bf16.mxu0 0
      %4364 = vmatpush1.bf16.msra.mxu0 0
      %4365 = vmatprep.subr.bf16.mxu0 0
      %4366 = vmatpush1.bf16.msra.mxu0 0
      %4367 = vmatprep.subr.bf16.mxu0 0
      %4368 = vmatpush1.bf16.msra.mxu0 0
      %4369 = vmatprep.subr.bf16.mxu0 0
      %4370 = vmatpush1.bf16.msra.mxu0 0
      %4371 = vmatprep.subr.bf16.mxu0 0
      %4372 = vmatpush1.bf16.msra.mxu0 0
      %4373 = vmatprep.subr.bf16.mxu0 0
      %4374 = vmatpush1.bf16.msra.mxu0 0
      %4375 = vmatprep.subr.bf16.mxu0 0
      %4376 = vmatpush1.bf16.msra.mxu0 0
      %4377 = vmatprep.subr.bf16.mxu0 0
      %4378 = vmatpush1.bf16.msra.mxu0 0
      %4379 = vmatprep.subr.bf16.mxu0 0
      %4380 = vmatpush1.bf16.msra.mxu0 0
      %4381 = vmatprep.mubr.bf16.mxu0 0
      %4382 = vmatmul.mubr.bf16.gmra.mrb[0].mxu0 %v3271
      %v4383 = vpop.f32.mrb[0].mxu0
      %v4384 = vadd.f32 0.0, %v4383
      %v4385 = vpop.f32.mrb[0].mxu0
      %v4386 = vpop.f32.mrb[0].mxu0
      %v4387 = vpop.f32.mrb[0].mxu0
      %4388 = vdwg.mxu0
      %v4389 = vadd.f32 %v4348, %v4384
      %4390 = vmatprep.subr.bf16.mxu0 0
      %4391 = vmatpush1.bf16.msra.mxu0 %v766
      %4392 = vmatprep.subr.bf16.mxu0 0
      %4393 = vmatpush1.bf16.msra.mxu0 0
      %4394 = vmatprep.subr.bf16.mxu0 0
      %4395 = vmatpush1.bf16.msra.mxu0 0
      %4396 = vmatprep.subr.bf16.mxu0 0
      %4397 = vmatpush1.bf16.msra.mxu0 0
      %4398 = vmatprep.subr.bf16.mxu0 0
      %4399 = vmatpush1.bf16.msra.mxu0 0
      %4400 = vmatprep.subr.bf16.mxu0 0
      %4401 = vmatpush1.bf16.msra.mxu0 0
      %4402 = vmatprep.subr.bf16.mxu0 0
      %4403 = vmatpush1.bf16.msra.mxu0 0
      %4404 = vmatprep.subr.bf16.mxu0 0
      %4405 = vmatpush1.bf16.msra.mxu0 0
      %4406 = vmatprep.subr.bf16.mxu0 0
      %4407 = vmatpush1.bf16.msra.mxu0 0
      %4408 = vmatprep.subr.bf16.mxu0 0
      %4409 = vmatpush1.bf16.msra.mxu0 0
      %4410 = vmatprep.subr.bf16.mxu0 0
      %4411 = vmatpush1.bf16.msra.mxu0 0
      %4412 = vmatprep.subr.bf16.mxu0 0
      %4413 = vmatpush1.bf16.msra.mxu0 0
      %4414 = vmatprep.subr.bf16.mxu0 0
      %4415 = vmatpush1.bf16.msra.mxu0 0
      %4416 = vmatprep.subr.bf16.mxu0 0
      %4417 = vmatpush1.bf16.msra.mxu0 0
      %4418 = vmatprep.subr.bf16.mxu0 0
      %4419 = vmatpush1.bf16.msra.mxu0 0
      %4420 = vmatprep.subr.bf16.mxu0 0
      %4421 = vmatpush1.bf16.msra.mxu0 0
      %4422 = vmatprep.mubr.bf16.mxu0 0
      %4423 = vmatmul.mubr.bf16.gmra.mrb[0].mxu0 %v4036
      %v4424 = vpop.f32.mrb[0].mxu0
      %v4425 = vadd.f32 0.0, %v4424
      %v4426 = vpop.f32.mrb[0].mxu0
      %v4427 = vpop.f32.mrb[0].mxu0
      %v4428 = vpop.f32.mrb[0].mxu0
      %4429 = vdwg.mxu0
      %v4430 = vadd.f32 %v4389, %v4425
      %v4431 = vld [vmem:[#allocation2 + $0x28] sm:$0x1]
      %v4432 = vpack.c.bf16 %v4431, %v4431
      %v4434 = vsel %vm594, %v4432, 0
      %4436 = vmatprep.subr.bf16.mxu0 0
      %4437 = vmatpush1.bf16.msra.mxu0 %v817
      %4438 = vmatprep.subr.bf16.mxu0 0
      %4439 = vmatpush1.bf16.msra.mxu0 0
      %4440 = vmatprep.subr.bf16.mxu0 0
      %4441 = vmatpush1.bf16.msra.mxu0 0
      %4442 = vmatprep.subr.bf16.mxu0 0
      %4443 = vmatpush1.bf16.msra.mxu0 0
      %4444 = vmatprep.subr.bf16.mxu0 0
      %4445 = vmatpush1.bf16.msra.mxu0 0
      %4446 = vmatprep.subr.bf16.mxu0 0
      %4447 = vmatpush1.bf16.msra.mxu0 0
      %4448 = vmatprep.subr.bf16.mxu0 0
      %4449 = vmatpush1.bf16.msra.mxu0 0
      %4450 = vmatprep.subr.bf16.mxu0 0
      %4451 = vmatpush1.bf16.msra.mxu0 0
      %4452 = vmatprep.subr.bf16.mxu0 0
      %4453 = vmatpush1.bf16.msra.mxu0 0
      %4454 = vmatprep.subr.bf16.mxu0 0
      %4455 = vmatpush1.bf16.msra.mxu0 0
      %4456 = vmatprep.subr.bf16.mxu0 0
      %4457 = vmatpush1.bf16.msra.mxu0 0
      %4458 = vmatprep.subr.bf16.mxu0 0
      %4459 = vmatpush1.bf16.msra.mxu0 0
      %4460 = vmatprep.subr.bf16.mxu0 0
      %4461 = vmatpush1.bf16.msra.mxu0 0
      %4462 = vmatprep.subr.bf16.mxu0 0
      %4463 = vmatpush1.bf16.msra.mxu0 0
      %4464 = vmatprep.subr.bf16.mxu0 0
      %4465 = vmatpush1.bf16.msra.mxu0 0
      %4466 = vmatprep.subr.bf16.mxu0 0
      %4467 = vmatpush1.bf16.msra.mxu0 0
      %4468 = vmatprep.mubr.bf16.mxu0 0
      %4469 = vmatmul.mubr.bf16.gmra.mrb[0].mxu0 %v4434
      %v4470 = vpop.f32.mrb[0].mxu0
      %v4471 = vadd.f32 0.0, %v4470
      %v4472 = vpop.f32.mrb[0].mxu0
      %v4473 = vpop.f32.mrb[0].mxu0
      %v4474 = vpop.f32.mrb[0].mxu0
      %4475 = vdwg.mxu0
      %v4476 = vadd.f32 %v4430, %v4471
      %v4477 = vld [vmem:[#allocation2 + $0x29] sm:$0x1]
      %v4478 = vpack.c.bf16 %v4477, %v4477
      %v4480 = vsel %vm594, %v4478, 0
      %4482 = vmatprep.subr.bf16.mxu0 0
      %4483 = vmatpush1.bf16.msra.mxu0 %v868
      %4484 = vmatprep.subr.bf16.mxu0 0
      %4485 = vmatpush1.bf16.msra.mxu0 0
      %4486 = vmatprep.subr.bf16.mxu0 0
      %4487 = vmatpush1.bf16.msra.mxu0 0
      %4488 = vmatprep.subr.bf16.mxu0 0
      %4489 = vmatpush1.bf16.msra.mxu0 0
      %4490 = vmatprep.subr.bf16.mxu0 0
      %4491 = vmatpush1.bf16.msra.mxu0 0
      %4492 = vmatprep.subr.bf16.mxu0 0
      %4493 = vmatpush1.bf16.msra.mxu0 0
      %4494 = vmatprep.subr.bf16.mxu0 0
      %4495 = vmatpush1.bf16.msra.mxu0 0
      %4496 = vmatprep.subr.bf16.mxu0 0
      %4497 = vmatpush1.bf16.msra.mxu0 0
      %4498 = vmatprep.subr.bf16.mxu0 0
      %4499 = vmatpush1.bf16.msra.mxu0 0
      %4500 = vmatprep.subr.bf16.mxu0 0
      %4501 = vmatpush1.bf16.msra.mxu0 0
      %4502 = vmatprep.subr.bf16.mxu0 0
      %4503 = vmatpush1.bf16.msra.mxu0 0
      %4504 = vmatprep.subr.bf16.mxu0 0
      %4505 = vmatpush1.bf16.msra.mxu0 0
      %4506 = vmatprep.subr.bf16.mxu0 0
      %4507 = vmatpush1.bf16.msra.mxu0 0
      %4508 = vmatprep.subr.bf16.mxu0 0
      %4509 = vmatpush1.bf16.msra.mxu0 0
      %4510 = vmatprep.subr.bf16.mxu0 0
      %4511 = vmatpush1.bf16.msra.mxu0 0
      %4512 = vmatprep.subr.bf16.mxu0 0
      %4513 = vmatpush1.bf16.msra.mxu0 0
      %4514 = vmatprep.mubr.bf16.mxu0 0
      %4515 = vmatmul.mubr.bf16.gmra.mrb[0].mxu0 %v4480
      %v4516 = vpop.f32.mrb[0].mxu0
      %v4517 = vadd.f32 0.0, %v4516
      %v4518 = vpop.f32.mrb[0].mxu0
      %v4519 = vpop.f32.mrb[0].mxu0
      %v4520 = vpop.f32.mrb[0].mxu0
      %4521 = vdwg.mxu0
      %v4522 = vadd.f32 %v4476, %v4517
      %4523 = vmatprep.subr.bf16.mxu0 0
      %4524 = vmatpush1.bf16.msra.mxu0 %v919
      %4525 = vmatprep.subr.bf16.mxu0 0
      %4526 = vmatpush1.bf16.msra.mxu0 0
      %4527 = vmatprep.subr.bf16.mxu0 0
      %4528 = vmatpush1.bf16.msra.mxu0 0
      %4529 = vmatprep.subr.bf16.mxu0 0
      %4530 = vmatpush1.bf16.msra.mxu0 0
      %4531 = vmatprep.subr.bf16.mxu0 0
      %4532 = vmatpush1.bf16.msra.mxu0 0
      %4533 = vmatprep.subr.bf16.mxu0 0
      %4534 = vmatpush1.bf16.msra.mxu0 0
      %4535 = vmatprep.subr.bf16.mxu0 0
      %4536 = vmatpush1.bf16.msra.mxu0 0
      %4537 = vmatprep.subr.bf16.mxu0 0
      %4538 = vmatpush1.bf16.msra.mxu0 0
      %4539 = vmatprep.subr.bf16.mxu0 0
      %4540 = vmatpush1.bf16.msra.mxu0 0
      %4541 = vmatprep.subr.bf16.mxu0 0
      %4542 = vmatpush1.bf16.msra.mxu0 0
      %4543 = vmatprep.subr.bf16.mxu0 0
      %4544 = vmatpush1.bf16.msra.mxu0 0
      %4545 = vmatprep.subr.bf16.mxu0 0
      %4546 = vmatpush1.bf16.msra.mxu0 0
      %4547 = vmatprep.subr.bf16.mxu0 0
      %4548 = vmatpush1.bf16.msra.mxu0 0
      %4549 = vmatprep.subr.bf16.mxu0 0
      %4550 = vmatpush1.bf16.msra.mxu0 0
      %4551 = vmatprep.subr.bf16.mxu0 0
      %4552 = vmatpush1.bf16.msra.mxu0 0
      %4553 = vmatprep.subr.bf16.mxu0 0
      %4554 = vmatpush1.bf16.msra.mxu0 0
      %4555 = vmatprep.mubr.bf16.mxu0 0
      %4556 = vmatmul.mubr.bf16.gmra.mrb[0].mxu0 %v4169
      %v4557 = vpop.f32.mrb[0].mxu0
      %v4558 = vadd.f32 0.0, %v4557
      %v4559 = vpop.f32.mrb[0].mxu0
      %v4560 = vpop.f32.mrb[0].mxu0
      %v4561 = vpop.f32.mrb[0].mxu0
      %4562 = vdwg.mxu0
      %v4563 = vadd.f32 %v4522, %v4558
      %v4564 = vld [vmem:[#allocation2 + $0x2f] sm:$0x1]
      %v4565 = vpack.c.bf16 %v4564, %v4564
      %v4567 = vsel %vm594, %v4565, 0
      %4569 = vmatprep.subr.bf16.mxu0 0
      %4570 = vmatpush1.bf16.msra.mxu0 %v970
      %4571 = vmatprep.subr.bf16.mxu0 0
      %4572 = vmatpush1.bf16.msra.mxu0 0
      %4573 = vmatprep.subr.bf16.mxu0 0
      %4574 = vmatpush1.bf16.msra.mxu0 0
      %4575 = vmatprep.subr.bf16.mxu0 0
      %4576 = vmatpush1.bf16.msra.mxu0 0
      %4577 = vmatprep.subr.bf16.mxu0 0
      %4578 = vmatpush1.bf16.msra.mxu0 0
      %4579 = vmatprep.subr.bf16.mxu0 0
      %4580 = vmatpush1.bf16.msra.mxu0 0
      %4581 = vmatprep.subr.bf16.mxu0 0
      %4582 = vmatpush1.bf16.msra.mxu0 0
      %4583 = vmatprep.subr.bf16.mxu0 0
      %4584 = vmatpush1.bf16.msra.mxu0 0
      %4585 = vmatprep.subr.bf16.mxu0 0
      %4586 = vmatpush1.bf16.msra.mxu0 0
      %4587 = vmatprep.subr.bf16.mxu0 0
      %4588 = vmatpush1.bf16.msra.mxu0 0
      %4589 = vmatprep.subr.bf16.mxu0 0
      %4590 = vmatpush1.bf16.msra.mxu0 0
      %4591 = vmatprep.subr.bf16.mxu0 0
      %4592 = vmatpush1.bf16.msra.mxu0 0
      %4593 = vmatprep.subr.bf16.mxu0 0
      %4594 = vmatpush1.bf16.msra.mxu0 0
      %4595 = vmatprep.subr.bf16.mxu0 0
      %4596 = vmatpush1.bf16.msra.mxu0 0
      %4597 = vmatprep.subr.bf16.mxu0 0
      %4598 = vmatpush1.bf16.msra.mxu0 0
      %4599 = vmatprep.subr.bf16.mxu0 0
      %4600 = vmatpush1.bf16.msra.mxu0 0
      %4601 = vmatprep.mubr.bf16.mxu0 0
      %4602 = vmatmul.mubr.bf16.gmra.mrb[0].mxu0 %v4567
      %v4603 = vpop.f32.mrb[0].mxu0
      %v4604 = vadd.f32 0.0, %v4603
      %v4605 = vpop.f32.mrb[0].mxu0
      %v4606 = vpop.f32.mrb[0].mxu0
      %v4607 = vpop.f32.mrb[0].mxu0
      %4608 = vdwg.mxu0
      %v4609 = vadd.f32 %v4563, %v4604
      %v4610 = vld [vmem:[#allocation2 + $0x30] sm:$0x1]
      %v4611 = vpack.c.bf16 %v4610, %v4610
      %v4613 = vsel %vm594, %v4611, 0
      %4615 = vmatprep.subr.bf16.mxu0 0
      %4616 = vmatpush1.bf16.msra.mxu0 %v1021
      %4617 = vmatprep.subr.bf16.mxu0 0
      %4618 = vmatpush1.bf16.msra.mxu0 0
      %4619 = vmatprep.subr.bf16.mxu0 0
      %4620 = vmatpush1.bf16.msra.mxu0 0
      %4621 = vmatprep.subr.bf16.mxu0 0
      %4622 = vmatpush1.bf16.msra.mxu0 0
      %4623 = vmatprep.subr.bf16.mxu0 0
      %4624 = vmatpush1.bf16.msra.mxu0 0
      %4625 = vmatprep.subr.bf16.mxu0 0
      %4626 = vmatpush1.bf16.msra.mxu0 0
      %4627 = vmatprep.subr.bf16.mxu0 0
      %4628 = vmatpush1.bf16.msra.mxu0 0
      %4629 = vmatprep.subr.bf16.mxu0 0
      %4630 = vmatpush1.bf16.msra.mxu0 0
      %4631 = vmatprep.subr.bf16.mxu0 0
      %4632 = vmatpush1.bf16.msra.mxu0 0
      %4633 = vmatprep.subr.bf16.mxu0 0
      %4634 = vmatpush1.bf16.msra.mxu0 0
      %4635 = vmatprep.subr.bf16.mxu0 0
      %4636 = vmatpush1.bf16.msra.mxu0 0
      %4637 = vmatprep.subr.bf16.mxu0 0
      %4638 = vmatpush1.bf16.msra.mxu0 0
      %4639 = vmatprep.subr.bf16.mxu0 0
      %4640 = vmatpush1.bf16.msra.mxu0 0
      %4641 = vmatprep.subr.bf16.mxu0 0
      %4642 = vmatpush1.bf16.msra.mxu0 0
      %4643 = vmatprep.subr.bf16.mxu0 0
      %4644 = vmatpush1.bf16.msra.mxu0 0
      %4645 = vmatprep.subr.bf16.mxu0 0
      %4646 = vmatpush1.bf16.msra.mxu0 0
      %4647 = vmatprep.mubr.bf16.mxu0 0
      %4648 = vmatmul.mubr.bf16.gmra.mrb[0].mxu0 %v4613
      %v4649 = vpop.f32.mrb[0].mxu0
      %v4650 = vadd.f32 0.0, %v4649
      %v4651 = vpop.f32.mrb[0].mxu0
      %v4652 = vpop.f32.mrb[0].mxu0
      %v4653 = vpop.f32.mrb[0].mxu0
      %4654 = vdwg.mxu0
      %v4655 = vadd.f32 %v4609, %v4650
      %v4656 = vmax.f32 %v4655, 0.0
      %v4657 = vpack.c.bf16 %v4656, %v4656
      %s4658 = scalar_lea.vmem %s6, 64
      %v4659 = vld [vmem:[%s4658] sm:$0xf]
      %v4660 = vld [vmem:[%s4658 + $0x4] sm:$0xf]
      %v4663 = vunpack.c.l.b16 %v4659
      %v4664 = vunpack.c.l.b16 %v4660
      %v4665 = vpack.c.b16 %v4664, %v4663
      %v4668 = vsel %vm1074, %v4657, 0
      %4670 = vmatprep.subr.bf16.mxu0 0
      %4671 = vmatpush1.bf16.msra.mxu0 %v4665
      %4672 = vmatprep.subr.bf16.mxu0 0
      %4673 = vmatpush1.bf16.msra.mxu0 0
      %4674 = vmatprep.subr.bf16.mxu0 0
      %4675 = vmatpush1.bf16.msra.mxu0 0
      %4676 = vmatprep.subr.bf16.mxu0 0
      %4677 = vmatpush1.bf16.msra.mxu0 0
      %4678 = vmatprep.subr.bf16.mxu0 0
      %4679 = vmatpush1.bf16.msra.mxu0 0
      %4680 = vmatprep.subr.bf16.mxu0 0
      %4681 = vmatpush1.bf16.msra.mxu0 0
      %4682 = vmatprep.subr.bf16.mxu0 0
      %4683 = vmatpush1.bf16.msra.mxu0 0
      %4684 = vmatprep.subr.bf16.mxu0 0
      %4685 = vmatpush1.bf16.msra.mxu0 0
      %4686 = vmatprep.subr.bf16.mxu0 0
      %4687 = vmatpush1.bf16.msra.mxu0 0
      %4688 = vmatprep.subr.bf16.mxu0 0
      %4689 = vmatpush1.bf16.msra.mxu0 0
      %4690 = vmatprep.subr.bf16.mxu0 0
      %4691 = vmatpush1.bf16.msra.mxu0 0
      %4692 = vmatprep.subr.bf16.mxu0 0
      %4693 = vmatpush1.bf16.msra.mxu0 0
      %4694 = vmatprep.subr.bf16.mxu0 0
      %4695 = vmatpush1.bf16.msra.mxu0 0
      %4696 = vmatprep.subr.bf16.mxu0 0
      %4697 = vmatpush1.bf16.msra.mxu0 0
      %4698 = vmatprep.subr.bf16.mxu0 0
      %4699 = vmatpush1.bf16.msra.mxu0 0
      %4700 = vmatprep.subr.bf16.mxu0 0
      %4701 = vmatpush1.bf16.msra.mxu0 0
      %4702 = vmatprep.mubr.bf16.mxu0 0
      %4703 = vmatmul.mubr.bf16.gmra.mrb[0].mxu0 %v4668
      %v4704 = vpop.f32.mrb[0].mxu0
      %v4705 = vadd.f32 0.0, %v4704
      %v4706 = vpop.f32.mrb[0].mxu0
      %v4707 = vpop.f32.mrb[0].mxu0
      %v4708 = vpop.f32.mrb[0].mxu0
      %4709 = vdwg.mxu0
      %v4710 = vadd.f32 %v4266, %v4705
      %v4711 = vmax.f32 %v4710, 0.0
      %v4712 = vpack.c.bf16 %v4711, %v4711
      %v4713 = vld [vmem:[%s8] sm:$0xf]
      %v4714 = vld [vmem:[%s8 + $0x4] sm:$0xf]
      %v4715 = vld [vmem:[%s8 + $0x8] sm:$0xf]
      %v4716 = vld [vmem:[%s8 + $0xc] sm:$0xf]
      %v4717 = vld [vmem:[%s8 + $0x10] sm:$0xf]
      %v4718 = vld [vmem:[%s8 + $0x14] sm:$0xf]
      %v4719 = vld [vmem:[%s8 + $0x18] sm:$0xf]
      %v4720 = vld [vmem:[%s8 + $0x1c] sm:$0xf]
      %v4721 = vld [vmem:[%s8 + $0x20] sm:$0xf]
      %v4722 = vld [vmem:[%s8 + $0x24] sm:$0xf]
      %v4723 = vld [vmem:[%s8 + $0x28] sm:$0xf]
      %v4724 = vld [vmem:[%s8 + $0x2c] sm:$0xf]
      %v4725 = vld [vmem:[%s8 + $0x30] sm:$0xf]
      %v4726 = vld [vmem:[%s8 + $0x34] sm:$0xf]
      %v4727 = vld [vmem:[%s8 + $0x38] sm:$0xf]
      %v4728 = vld [vmem:[%s8 + $0x3c] sm:$0xf]
      %v4729 = vld [vmem:[%s449] sm:$0x1]
      %v4730 = vpack.c.bf16 %v4729, %v4729
      %v4731 = vld [vmem:[%s9] sm:$0xf]
      %v4733 = vsel %vm594, %v4730, 0
      %v4736 = vsel %vm611, %v4731, 0
      %4738 = vmatprep.subr.bf16.mxu0 0
      %4739 = vmatpush1.bf16.msra.mxu0 %v4736
      %4740 = vmatprep.subr.bf16.mxu0 0
      %4741 = vmatpush1.bf16.msra.mxu0 0
      %4742 = vmatprep.subr.bf16.mxu0 0
      %4743 = vmatpush1.bf16.msra.mxu0 0
      %4744 = vmatprep.subr.bf16.mxu0 0
      %4745 = vmatpush1.bf16.msra.mxu0 0
      %4746 = vmatprep.subr.bf16.mxu0 0
      %4747 = vmatpush1.bf16.msra.mxu0 0
      %4748 = vmatprep.subr.bf16.mxu0 0
      %4749 = vmatpush1.bf16.msra.mxu0 0
      %4750 = vmatprep.subr.bf16.mxu0 0
      %4751 = vmatpush1.bf16.msra.mxu0 0
      %4752 = vmatprep.subr.bf16.mxu0 0
      %4753 = vmatpush1.bf16.msra.mxu0 0
      %4754 = vmatprep.subr.bf16.mxu0 0
      %4755 = vmatpush1.bf16.msra.mxu0 0
      %4756 = vmatprep.subr.bf16.mxu0 0
      %4757 = vmatpush1.bf16.msra.mxu0 0
      %4758 = vmatprep.subr.bf16.mxu0 0
      %4759 = vmatpush1.bf16.msra.mxu0 0
      %4760 = vmatprep.subr.bf16.mxu0 0
      %4761 = vmatpush1.bf16.msra.mxu0 0
      %4762 = vmatprep.subr.bf16.mxu0 0
      %4763 = vmatpush1.bf16.msra.mxu0 0
      %4764 = vmatprep.subr.bf16.mxu0 0
      %4765 = vmatpush1.bf16.msra.mxu0 0
      %4766 = vmatprep.subr.bf16.mxu0 0
      %4767 = vmatpush1.bf16.msra.mxu0 0
      %4768 = vmatprep.subr.bf16.mxu0 0
      %4769 = vmatpush1.bf16.msra.mxu0 0
      %4770 = vmatprep.mubr.bf16.mxu0 0
      %4771 = vmatmul.mubr.bf16.gmra.mrb[0].mxu0 %v4733
      %v4772 = vpop.f32.mrb[0].mxu0
      %v4773 = vadd.f32 0.0, %v4772
      %v4774 = vpop.f32.mrb[0].mxu0
      %v4775 = vpop.f32.mrb[0].mxu0
      %v4776 = vpop.f32.mrb[0].mxu0
      %4777 = vdwg.mxu0
      %v4794 = vunpack.c.l.b16 %v4713
      %v4795 = vunpack.c.l.b16 %v4714
      %v4796 = vunpack.c.l.b16 %v4715
      %v4797 = vunpack.c.l.b16 %v4716
      %v4798 = vunpack.c.l.b16 %v4717
      %v4799 = vunpack.c.l.b16 %v4718
      %v4800 = vunpack.c.l.b16 %v4719
      %v4801 = vunpack.c.l.b16 %v4720
      %v4802 = vunpack.c.l.b16 %v4721
      %v4803 = vunpack.c.l.b16 %v4722
      %v4804 = vunpack.c.l.b16 %v4723
      %v4805 = vunpack.c.l.b16 %v4724
      %v4806 = vunpack.c.l.b16 %v4725
      %v4807 = vunpack.c.l.b16 %v4726
      %v4808 = vunpack.c.l.b16 %v4727
      %v4809 = vunpack.c.l.b16 %v4728
      %v4810 = vpack.c.b16 %v4795, %v4794
      %v4811 = vpack.c.b16 %v4797, %v4796
      %v4812 = vpack.c.b16 %v4799, %v4798
      %v4813 = vpack.c.b16 %v4801, %v4800
      %v4814 = vpack.c.b16 %v4803, %v4802
      %v4815 = vpack.c.b16 %v4805, %v4804
      %v4816 = vpack.c.b16 %v4807, %v4806
      %v4817 = vpack.c.b16 %v4809, %v4808
      %4826 = vmatprep.subr.bf16.mxu0 0
      %4827 = vmatpush1.bf16.msra.mxu0 %v4810
      %4828 = vmatprep.subr.bf16.mxu0 0
      %4829 = vmatpush1.bf16.msra.mxu0 %v4811
      %4830 = vmatprep.subr.bf16.mxu0 0
      %4831 = vmatpush1.bf16.msra.mxu0 %v4812
      %4832 = vmatprep.subr.bf16.mxu0 0
      %4833 = vmatpush1.bf16.msra.mxu0 %v4813
      %4834 = vmatprep.subr.bf16.mxu0 0
      %4835 = vmatpush1.bf16.msra.mxu0 %v4814
      %4836 = vmatprep.subr.bf16.mxu0 0
      %4837 = vmatpush1.bf16.msra.mxu0 %v4815
      %4838 = vmatprep.subr.bf16.mxu0 0
      %4839 = vmatpush1.bf16.msra.mxu0 %v4816
      %4840 = vmatprep.subr.bf16.mxu0 0
      %4841 = vmatpush1.bf16.msra.mxu0 %v4817
      %4842 = vmatprep.subr.bf16.mxu0 0
      %4843 = vmatpush1.bf16.msra.mxu0 0
      %4844 = vmatprep.subr.bf16.mxu0 0
      %4845 = vmatpush1.bf16.msra.mxu0 0
      %4846 = vmatprep.subr.bf16.mxu0 0
      %4847 = vmatpush1.bf16.msra.mxu0 0
      %4848 = vmatprep.subr.bf16.mxu0 0
      %4849 = vmatpush1.bf16.msra.mxu0 0
      %4850 = vmatprep.subr.bf16.mxu0 0
      %4851 = vmatpush1.bf16.msra.mxu0 0
      %4852 = vmatprep.subr.bf16.mxu0 0
      %4853 = vmatpush1.bf16.msra.mxu0 0
      %4854 = vmatprep.subr.bf16.mxu0 0
      %4855 = vmatpush1.bf16.msra.mxu0 0
      %4856 = vmatprep.subr.bf16.mxu0 0
      %4857 = vmatpush1.bf16.msra.mxu0 0
      %4858 = vmatprep.mubr.bf16.mxu0 0
      %4859 = vmatmul.mubr.bf16.gmra.mrb[0].mxu0 %v4712
      %v4860 = vpop.f32.mrb[0].mxu0
      %v4861 = vadd.f32 %v4773, %v4860
      %v4862 = vpop.f32.mrb[0].mxu0
      %v4863 = vpop.f32.mrb[0].mxu0
      %v4864 = vpop.f32.mrb[0].mxu0
      %4865 = vdwg.mxu0
      %v4866 = vld [vmem:[%s10] sm:$0x1]
      %v4867 = vadd.f32 %v4861, %v4866
      %v4868 = vmax.f32 %v4867, 0.0
      %v4869 = vld [vmem:[%s11] sm:$0x1]
      %v4870 = vmul.f32 %v4868, %v4869
      %vm4871 = vcmask 516096
      %v4872 = vsel %vm4871, %v4870, 0.0
      %4873 = vadd.xlane.f32.xlu0 %v4872
      %v4874 = vpop.xlane.xlu0 %4873
      %v4875 = vld [vmem:[#allocation3] sm:$0x1]
      %v4876 = vadd.f32 %v4874, %v4875
      %v4877 = vxor.u32 %v4876, 2147483648
      %v4878 = vmul.f32 %v4877, 1.442695
      %v4879 = vpow.pop %v4878
      %v4880 = vadd.f32 %v4879, 1.0
      %v4881 = vrcp.pop %v4880
      %v4882 = vmul.f32 1.0, %v4881
      %vm4883 = vcmask 0
      %4884 = vst.msk [vmem:[%s452] sm:$0x1] %vm4883, %v4882
      %p4885 = scmp.lt.s32.totalorder %s26, 1
      %s4886 = scalar_select %p4885, %s26, 1
      %s4887 = scalar_lea.vmem %s13, %s4886
      // Predicated region
      $region73: #{discriminator_forward.1} parent=71 // pred_check
        %p4888 = pneg %p327
      $region74: #{discriminator_forward.1} parent=71 // pred_check_branch
        %4890 = sbr.rel (%p4888) target = $region76
      $region75: #{discriminator_forward.1} parent=71 // pred_region
        _
      $region76: #{discriminator_forward.1} parent=71 // pred_fallthru
        _
    $region72: #{discriminator_forward.1} parent=5 // pred_fallthru
      _
    %p4891 = scmp.le.s32.totalorder 2, %s21
    // Predicated region
    $region77: #{discriminator_forward.1} parent=5 // pred_check
      %p4892 = pneg %p4891
    $region78: #{discriminator_forward.1} parent=5 // pred_check_branch
      %4894 = sbr.rel (%p4892) target = $region80
    $region79: #{discriminator_forward.1} parent=5 // pred_region
      %s4895 = ssub.s32 %s21, 2
      // Predicated region
      $region81: #{discriminator_forward.1} parent=79 // pred_check
        %p4896 = pneg %p333
      $region82: #{discriminator_forward.1} parent=79 // pred_check_branch
        %4898 = sbr.rel (%p4896) target = $region84
      $region83: #{discriminator_forward.1} parent=79 // pred_region
        %p4899 = scmp.lt.s32.totalorder %s27, 1
        %s4900 = scalar_select %p4899, %s27, 1
        %s4901 = scalar_lea.vmem %s13, %s4900
      $region84: #{discriminator_forward.1} parent=79 // pred_fallthru
        _
    $region80: #{discriminator_forward.1} parent=5 // pred_fallthru
      _
  $region6: #{discriminator_forward.1} parent=0 // loop_footer
    %s25 = sadd.s32 1, %s21
  $region7: #{discriminator_forward.1} parent=0 // loop_footer_branch
    %20 = sbr.rel target = $region3
  $region8: #{discriminator_forward.1} parent=0 // loop_exit
    _

</llo_original>
